<compile_context>
chip_gen: v7x
topology: tpu7x:2x2x1
jax: 0.10.0
libtpu: 0.0.40
codegen_flags: <defaults>
</compile_context>

<pallas_src>
import functools
import math

import jax
import jax.numpy as jnp
from jax.experimental import pallas as pl
from jax.experimental.pallas import tpu as pltpu

# ------------------------- model configuration (small) -------------------------
IN_CHANNELS = 3
PATCH = 4
BASE_IMG = 16                     # base input resolution (== smallest s2 scale)
S2_SCALES = [16, 32]              # config.s2_scales
MAX_SPLIT = 16                    # config.s2_max_split_size
RESIZE_OUTPUT_TO_IDX = 0          # config.s2_resize_output_to_scale_idx
HIDDEN = 32
NUM_HEADS = 4
HEAD_DIM = HIDDEN // NUM_HEADS
MLP_DIM = 64
NUM_LAYERS = 3
SELECT_LAYER = -2                 # mm_vision_select_layer
SELECT_FEATURE = "patch"          # mm_vision_select_feature
GRID = MAX_SPLIT // PATCH         # 4x4 patches per sub-image
NPATCH = GRID * GRID              # 16 patch tokens per sub-image
SEQ = NPATCH + 1                  # +CLS token
S_PAD = 24                        # SEQ padded up to a multiple of 8 sublanes
PATCH_DIM = IN_CHANNELS * PATCH * PATCH   # 48


# ------------------------------ fused tower kernel ------------------------------
def _ln(x, g, b, eps=1e-5):
    x = x.astype(jnp.float32)
    mu = jnp.mean(x, axis=-1, keepdims=True)
    var = jnp.mean(jnp.square(x - mu), axis=-1, keepdims=True)
    return (x - mu) * jax.lax.rsqrt(var + eps) * g + b


def _fused_tower_kernel(x_ref, emb_ref, mask_ref, pw_ref, plg_ref, plb_ref,
                        ln1g_ref, ln1b_ref, wqkv_ref, bqkv_ref, wo_ref, bo_ref,
                        ln2g_ref, ln2b_ref, w1_ref, b1_ref, w2_ref, b2_ref,
                        o_ref, *, n_layers):
    """One grid step = the whole synthetic ViT applied to one chunk of sub-images.

    x_ref rows per sub-image: [CLS slot (zero pixels), 16 patch rows, 7 zero pad
    rows]; emb_ref carries cls+pos[0] / pos[1:]+patch_bias / 0 per row; mask_ref
    is the additive block-diagonal attention mask (0 keep / -1e30 drop)."""
    scale = 1.0 / math.sqrt(HEAD_DIM)

    # -------- patch-embed + CLS/pos templates + pre-LN --------------------------
    pe = jnp.dot(x_ref[0], pw_ref[...], preferred_element_type=jnp.float32)
    h = _ln(pe + emb_ref[...], plg_ref[...], plb_ref[...])   # (rows, HIDDEN) f32
    mask = mask_ref[...]                                      # (rows, rows) f32

    # -------- encoder layers (static unroll; only the ones feeding SELECT_LAYER) -
    for l in range(n_layers):
        x1 = _ln(h, ln1g_ref[l], ln1b_ref[l])
        qkv = jnp.dot(x1, wqkv_ref[l],
                      preferred_element_type=jnp.float32) + bqkv_ref[l]
        q = qkv[:, :HIDDEN]
        k = qkv[:, HIDDEN:2 * HIDDEN]
        v = qkv[:, 2 * HIDDEN:]

        heads = []
        for hd in range(NUM_HEADS):                 # 4 heads, fully unrolled
            c = hd * HEAD_DIM
            qh = q[:, c:c + HEAD_DIM]
            kh = k[:, c:c + HEAD_DIM]
            vh = v[:, c:c + HEAD_DIM]
            # all sub-images of the chunk at once; cross-sub-image / padded-key
            # positions are killed by the additive block-diagonal mask
            s = jax.lax.dot_general(qh, kh, (((1,), (1,)), ((), ())),
                                    preferred_element_type=jnp.float32)
            s = s * scale + mask
            s = s - jnp.max(s, axis=-1, keepdims=True)
            p = jnp.exp(s)
            p = p * pl.reciprocal(jnp.sum(p, axis=-1, keepdims=True), approx=True)
            heads.append(jnp.dot(p, vh, preferred_element_type=jnp.float32))
        a = jnp.concatenate(heads, axis=-1)                   # (rows, HIDDEN)

        h = h + jnp.dot(a, wo_ref[l], preferred_element_type=jnp.float32) + bo_ref[l]
        x2 = _ln(h, ln2g_ref[l], ln2b_ref[l])
        m = jnp.dot(x2, w1_ref[l], preferred_element_type=jnp.float32) + b1_ref[l]
        m = jax.nn.gelu(m, approximate=True)
        h = h + jnp.dot(m, w2_ref[l], preferred_element_type=jnp.float32) + b2_ref[l]

    # dense (rows, HIDDEN) store; CLS/pad-row dropping happens in the wrapper
    o_ref[0] = h.astype(o_ref.dtype)


def vision_tower_forward_fused(sub_images, params):
    """Synthetic CLIP-style ViT, whole forward in a single pallas_call.

    Returns hidden_states[SELECT_LAYER] with CLS dropped: (N, NPATCH, HIDDEN)."""
    N = sub_images.shape[0]
    # hidden_states[SELECT_LAYER] only needs this many layers; deeper layers do
    # not affect the selected output, so they are skipped (identical result).
    n_layers = NUM_LAYERS + 1 + SELECT_LAYER
    assert n_layers >= 1
    num_chunks = 2 if N % 2 == 0 else 1        # parallel grid axis (v7x megacore)
    npc = N // num_chunks                      # sub-images per chunk
    rows = npc * S_PAD

    # patch extraction: (N, C, H, W) -> (N, NPATCH, C*P*P), row-major patch order
    x = sub_images.reshape(N, IN_CHANNELS, GRID, PATCH, GRID, PATCH)
    x = x.transpose(0, 2, 4, 1, 3, 5).reshape(N, NPATCH, PATCH_DIM).astype(jnp.float32)
    # scatter patch pixels into padded per-sub-image token slots
    # (row 0 = CLS slot, rows 1..16 = patches, rows 17..23 = pad -> zero pixels)
    x_scat = jnp.zeros((N, S_PAD, PATCH_DIM), jnp.float32)
    x_scat = x_scat.at[:, 1:1 + NPATCH, :].set(x)
    x_scat = x_scat.reshape(num_chunks, rows, PATCH_DIM)

    # additive embedding template (same for every sub-image of a chunk)
    emb = jnp.zeros((S_PAD, HIDDEN), jnp.float32)
    emb = emb.at[0, :].set(params["cls"].reshape(HIDDEN) + params["pos"][0, 0])
    emb = emb.at[1:SEQ, :].set(params["pos"][0, 1:] + params["patch_b"][None, :])
    emb_full = jnp.tile(emb, (npc, 1))                         # (rows, HIDDEN)

    # additive block-diagonal attention mask, built once in XLA (0 keep / -1e30
    # drop): token i may attend token j iff same sub-image and j is not a pad slot
    rid = jnp.arange(rows)
    same_img = (rid[:, None] // S_PAD) == (rid[None, :] // S_PAD)
    key_valid = (rid[None, :] % S_PAD) < SEQ
    attn_mask = jnp.where(same_img & key_valid, 0.0, -1e30).astype(jnp.float32)

    # stacked per-layer weights, QKV fused into one (HIDDEN, 3*HIDDEN) matmul
    lp = params["layers"][:n_layers]
    stk = lambda key: jnp.stack([p[key] for p in lp])
    ln1_g = stk("ln1_g").reshape(n_layers, 1, HIDDEN)
    ln1_b = stk("ln1_b").reshape(n_layers, 1, HIDDEN)
    wqkv = jnp.stack([jnp.concatenate([p["wq"], p["wk"], p["wv"]], axis=1) for p in lp])
    bqkv = jnp.stack([jnp.concatenate([p["bq"], p["bk"], p["bv"]]) for p in lp])
    bqkv = bqkv.reshape(n_layers, 1, 3 * HIDDEN)
    wo = stk("wo")
    bo = stk("bo").reshape(n_layers, 1, HIDDEN)
    ln2_g = stk("ln2_g").reshape(n_layers, 1, HIDDEN)
    ln2_b = stk("ln2_b").reshape(n_layers, 1, HIDDEN)
    w1 = stk("w1")
    b1 = stk("b1").reshape(n_layers, 1, MLP_DIM)
    w2 = stk("w2")
    b2 = stk("b2").reshape(n_layers, 1, HIDDEN)

    const2 = lambda shape: pl.BlockSpec(shape, lambda b: (0, 0))
    const3 = lambda shape: pl.BlockSpec(shape, lambda b: (0, 0, 0))

    out = pl.pallas_call(
        functools.partial(_fused_tower_kernel, n_layers=n_layers),
        out_shape=jax.ShapeDtypeStruct((num_chunks, rows, HIDDEN),
                                       sub_images.dtype),
        grid=(num_chunks,),
        in_specs=[
            pl.BlockSpec((1, rows, PATCH_DIM), lambda b: (b, 0, 0)),      # x_scat
            const2((rows, HIDDEN)),                                        # emb_full
            const2((rows, rows)),                                          # attn_mask
            const2((PATCH_DIM, HIDDEN)),                                   # patch_w
            const2((1, HIDDEN)),                                           # pre_ln_g
            const2((1, HIDDEN)),                                           # pre_ln_b
            const3((n_layers, 1, HIDDEN)),                                 # ln1_g
            const3((n_layers, 1, HIDDEN)),                                 # ln1_b
            const3((n_layers, HIDDEN, 3 * HIDDEN)),                        # wqkv
            const3((n_layers, 1, 3 * HIDDEN)),                             # bqkv
            const3((n_layers, HIDDEN, HIDDEN)),                            # wo
            const3((n_layers, 1, HIDDEN)),                                 # bo
            const3((n_layers, 1, HIDDEN)),                                 # ln2_g
            const3((n_layers, 1, HIDDEN)),                                 # ln2_b
            const3((n_layers, HIDDEN, MLP_DIM)),                           # w1
            const3((n_layers, 1, MLP_DIM)),                                # b1
            const3((n_layers, MLP_DIM, HIDDEN)),                           # w2
            const3((n_layers, 1, HIDDEN)),                                 # b2
        ],
        out_specs=pl.BlockSpec((1, rows, HIDDEN), lambda b: (b, 0, 0)),
        compiler_params=pltpu.CompilerParams(
            dimension_semantics=("parallel",)),
    )(x_scat, emb_full, attn_mask, params["patch_w"],
      params["pre_ln_g"].reshape(1, HIDDEN), params["pre_ln_b"].reshape(1, HIDDEN),
      ln1_g, ln1_b, wqkv, bqkv, wo, bo, ln2_g, ln2_b, w1, b1, w2, b2)

    # 'patch' feature select: drop CLS row and pad rows (tiny XLA gather)
    h = out.reshape(N, S_PAD, HIDDEN)[:, 1:1 + NPATCH, :]
    return h


# ---------------------------- s2wrapper glue (XLA) -----------------------------
def split_chessboard(x, num_split):
    B, C, H, W = x.shape
    h, w = H // num_split, W // num_split
    blocks = [x[:, :, i * h:(i + 1) * h, j * w:(j + 1) * w]
              for i in range(num_split) for j in range(num_split)]
    return jnp.concatenate(blocks, axis=0)


def merge_chessboard(x, num_split):
    B, C, H, W = x.shape
    b = B // (num_split ** 2)
    rows = []
    for i in range(num_split):
        row = jnp.concatenate(
            [x[(i * num_split + j) * b:(i * num_split + j + 1) * b]
             for j in range(num_split)], axis=-1)
        rows.append(row)
    return jnp.concatenate(rows, axis=-2)


def area_resize(x, out_size):
    """Area interpolation of feature maps (plain XLA mean; tiny op)."""
    B, C, H, W = x.shape
    if H == out_size and W == out_size:
        return x
    # TODO(synk): only integer-factor downsampling supported (the default
    # s2_resize_output_to_scale_idx=0 path); torch-style area upsample is not.
    f = H // out_size
    return x.reshape(B, C, out_size, f, out_size, f).mean(axis=(3, 5)).astype(x.dtype)


def vision_tower_s2_forward(images, params):
    b, c, _, _ = images.shape
    num_splits = [max(1, int(math.ceil(s / MAX_SPLIT))) for s in S2_SCALES]

    # Build all base-resolution sub-images for every scale, then run the fused
    # tower ONCE over the whole multi-scale batch.
    subs, counts = [], []
    for size, ns in zip(S2_SCALES, num_splits):
        x = images
        if size != images.shape[-1]:
            # TODO(synk): bicubic resize kept in XLA (jax.image.resize); not a
            # bit-exact match for torch F.interpolate(mode='bicubic').
            x = jax.image.resize(images.astype(jnp.float32), (b, c, size, size),
                                 method="bicubic").astype(images.dtype)
        s = split_chessboard(x, ns)
        subs.append(s)
        counts.append(s.shape[0])
    all_subs = jnp.concatenate(subs, axis=0)                   # (N_total, C, 16, 16)
    feats = vision_tower_forward_fused(all_subs, params)       # (N_total, 16, HIDDEN)

    outs, off = [], 0
    for ns, cnt in zip(num_splits, counts):
        f = feats[off:off + cnt]
        off += cnt
        hh = int(round(math.sqrt(f.shape[1])))
        fmap = f.transpose(0, 2, 1).reshape(cnt, HIDDEN, hh, hh)
        outs.append(merge_chessboard(fmap, ns))                # (b, D, hh*ns, hh*ns)
    out_size = outs[RESIZE_OUTPUT_TO_IDX].shape[-2]
    outs = [area_resize(o, out_size) for o in outs]
    out = jnp.concatenate(outs, axis=1)                        # (b, D*n_scales, ho, wo)
    B, CC, Ho, Wo = out.shape
    return out.transpose(0, 2, 3, 1).reshape(B, Ho * Wo, CC)   # 'b c h w -> b (hw) c'


# ------------------------------ deterministic init -----------------------------
def init_params(key):
    scale = 0.02
    keys = jax.random.split(key, 3 + NUM_LAYERS)
    params = dict(
        patch_w=jax.random.normal(keys[0], (PATCH_DIM, HIDDEN)) * scale,
        patch_b=jnp.zeros((HIDDEN,), jnp.float32),
        cls=jax.random.normal(keys[1], (1, 1, HIDDEN)) * scale,
        pos=jax.random.normal(keys[2], (1, SEQ, HIDDEN)) * scale,
        pre_ln_g=jnp.ones((HIDDEN,), jnp.float32),
        pre_ln_b=jnp.zeros((HIDDEN,), jnp.float32),
        layers=[],
    )
    for l in range(NUM_LAYERS):
        lk = jax.random.split(keys[3 + l], 6)
        params["layers"].append(dict(
            ln1_g=jnp.ones((HIDDEN,), jnp.float32), ln1_b=jnp.zeros((HIDDEN,), jnp.float32),
            wq=jax.random.normal(lk[0], (HIDDEN, HIDDEN)) * scale, bq=jnp.zeros((HIDDEN,)),
            wk=jax.random.normal(lk[1], (HIDDEN, HIDDEN)) * scale, bk=jnp.zeros((HIDDEN,)),
            wv=jax.random.normal(lk[2], (HIDDEN, HIDDEN)) * scale, bv=jnp.zeros((HIDDEN,)),
            wo=jax.random.normal(lk[3], (HIDDEN, HIDDEN)) * scale, bo=jnp.zeros((HIDDEN,)),
            ln2_g=jnp.ones((HIDDEN,), jnp.float32), ln2_b=jnp.zeros((HIDDEN,), jnp.float32),
            w1=jax.random.normal(lk[4], (HIDDEN, MLP_DIM)) * scale, b1=jnp.zeros((MLP_DIM,)),
            w2=jax.random.normal(lk[5], (MLP_DIM, HIDDEN)) * scale, b2=jnp.zeros((HIDDEN,)),
        ))
    return params


# ------------------------------------ main -------------------------------------
if __name__ == "__main__":
    key = jax.random.PRNGKey(0)
    k_img, k_par = jax.random.split(key)
    B = 2
    images = jax.random.normal(k_img, (B, IN_CHANNELS, BASE_IMG, BASE_IMG),
                               dtype=jnp.float32)
    params = init_params(k_par)

    fwd = jax.jit(vision_tower_s2_forward)
    out = jax.block_until_ready(fwd(images, params))

    n_patches_out = (S2_SCALES[RESIZE_OUTPUT_TO_IDX] // PATCH) ** 2
    expected = (B, n_patches_out, HIDDEN * len(S2_SCALES))
    assert out.shape == expected, (out.shape, expected)
    assert out.dtype == images.dtype
    assert bool(jnp.all(jnp.isfinite(out)))
    print("KERNEL_OK")
</pallas_src>

<mosaic_0001>
module attributes {stable_mosaic.version = 11 : i64} {
  func.func @_fused_tower_kernel(%arg0: i32, %arg1: memref<1x120x48xf32, #tpu.memory_space<vmem>>, %arg2: memref<120x32xf32, #tpu.memory_space<vmem>>, %arg3: memref<120x120xf32, #tpu.memory_space<vmem>>, %arg4: memref<48x32xf32, #tpu.memory_space<vmem>>, %arg5: memref<1x32xf32, #tpu.memory_space<vmem>>, %arg6: memref<1x32xf32, #tpu.memory_space<vmem>>, %arg7: memref<2x1x32xf32, #tpu.memory_space<vmem>>, %arg8: memref<2x1x32xf32, #tpu.memory_space<vmem>>, %arg9: memref<2x32x96xf32, #tpu.memory_space<vmem>>, %arg10: memref<2x1x96xf32, #tpu.memory_space<vmem>>, %arg11: memref<2x32x32xf32, #tpu.memory_space<vmem>>, %arg12: memref<2x1x32xf32, #tpu.memory_space<vmem>>, %arg13: memref<2x1x32xf32, #tpu.memory_space<vmem>>, %arg14: memref<2x1x32xf32, #tpu.memory_space<vmem>>, %arg15: memref<2x32x64xf32, #tpu.memory_space<vmem>>, %arg16: memref<2x1x64xf32, #tpu.memory_space<vmem>>, %arg17: memref<2x64x32xf32, #tpu.memory_space<vmem>>, %arg18: memref<2x1x32xf32, #tpu.memory_space<vmem>>, %arg19: memref<1x120x32xf32, #tpu.memory_space<vmem>>) attributes {dimension_semantics = [#tpu.dimension_semantics<parallel>], iteration_bounds = array<i64: 2>, scalar_prefetch = 0 : i64, scratch_operands = 0 : i64, tpu.core_type = #tpu.core_type<tc>, window_params = [{transform_indices = @transform_0, window_bounds = array<i64: 1, 120, 48>}, {pipeline_mode = #tpu.pipeline_mode<synchronous>, transform_indices = @transform_1, window_bounds = array<i64: 120, 32>}, {pipeline_mode = #tpu.pipeline_mode<synchronous>, transform_indices = @transform_2, window_bounds = array<i64: 120, 120>}, {pipeline_mode = #tpu.pipeline_mode<synchronous>, transform_indices = @transform_3, window_bounds = array<i64: 48, 32>}, {pipeline_mode = #tpu.pipeline_mode<synchronous>, transform_indices = @transform_4, window_bounds = array<i64: 1, 32>}, {pipeline_mode = #tpu.pipeline_mode<synchronous>, transform_indices = @transform_5, window_bounds = array<i64: 1, 32>}, {pipeline_mode = #tpu.pipeline_mode<synchronous>, transform_indices = @transform_6, window_bounds = array<i64: 2, 1, 32>}, {pipeline_mode = #tpu.pipeline_mode<synchronous>, transform_indices = @transform_7, window_bounds = array<i64: 2, 1, 32>}, {pipeline_mode = #tpu.pipeline_mode<synchronous>, transform_indices = @transform_8, window_bounds = array<i64: 2, 32, 96>}, {pipeline_mode = #tpu.pipeline_mode<synchronous>, transform_indices = @transform_9, window_bounds = array<i64: 2, 1, 96>}, {pipeline_mode = #tpu.pipeline_mode<synchronous>, transform_indices = @transform_10, window_bounds = array<i64: 2, 32, 32>}, {pipeline_mode = #tpu.pipeline_mode<synchronous>, transform_indices = @transform_11, window_bounds = array<i64: 2, 1, 32>}, {pipeline_mode = #tpu.pipeline_mode<synchronous>, transform_indices = @transform_12, window_bounds = array<i64: 2, 1, 32>}, {pipeline_mode = #tpu.pipeline_mode<synchronous>, transform_indices = @transform_13, window_bounds = array<i64: 2, 1, 32>}, {pipeline_mode = #tpu.pipeline_mode<synchronous>, transform_indices = @transform_14, window_bounds = array<i64: 2, 32, 64>}, {pipeline_mode = #tpu.pipeline_mode<synchronous>, transform_indices = @transform_15, window_bounds = array<i64: 2, 1, 64>}, {pipeline_mode = #tpu.pipeline_mode<synchronous>, transform_indices = @transform_16, window_bounds = array<i64: 2, 64, 32>}, {pipeline_mode = #tpu.pipeline_mode<synchronous>, transform_indices = @transform_17, window_bounds = array<i64: 2, 1, 32>}, {transform_indices = @transform_18, window_bounds = array<i64: 1, 120, 32>}]} {
    %c0 = arith.constant 0 : index
    %c0_0 = arith.constant 0 : index
    %c0_1 = arith.constant 0 : index
    %0 = vector.load %arg1[%c0, %c0_0, %c0_1] : memref<1x120x48xf32, #tpu.memory_space<vmem>>, vector<1x120x48xf32>
    %1 = vector.shape_cast %0 : vector<1x120x48xf32> to vector<120x48xf32>
    %c0_2 = arith.constant 0 : index
    %c0_3 = arith.constant 0 : index
    %2 = vector.load %arg4[%c0_2, %c0_3] : memref<48x32xf32, #tpu.memory_space<vmem>>, vector<48x32xf32>
    %cst = arith.constant dense<0.000000e+00> : vector<120x32xf32>
    %3 = tpu.matmul %1, %2, %cst {dimension_numbers = #tpu.dot_dimension_numbers<[1], [0], [0], [1], [0, 0, 1, 1], [], []>} : vector<120x48xf32>, vector<48x32xf32>, vector<120x32xf32> -> vector<120x32xf32>
    %c0_4 = arith.constant 0 : index
    %c0_5 = arith.constant 0 : index
    %4 = vector.load %arg2[%c0_4, %c0_5] : memref<120x32xf32, #tpu.memory_space<vmem>>, vector<120x32xf32>
    %5 = arith.addf %3, %4 : vector<120x32xf32>
    %c0_6 = arith.constant 0 : index
    %c0_7 = arith.constant 0 : index
    %6 = vector.load %arg5[%c0_6, %c0_7] : memref<1x32xf32, #tpu.memory_space<vmem>>, vector<1x32xf32>
    %c0_8 = arith.constant 0 : index
    %c0_9 = arith.constant 0 : index
    %7 = vector.load %arg6[%c0_8, %c0_9] : memref<1x32xf32, #tpu.memory_space<vmem>>, vector<1x32xf32>
    %cst_10 = arith.constant dense<0.000000e+00> : vector<120xf32>
    %8 = vector.multi_reduction <add>, %5, %cst_10 [1] : vector<120x32xf32> to vector<120xf32>
    %9 = vector.shape_cast %8 : vector<120xf32> to vector<120x1xf32>
    %cst_11 = arith.constant 3.200000e+01 : f32
    %10 = vector.broadcast %cst_11 : f32 to vector<120x1xf32>
    %11 = arith.divf %9, %10 : vector<120x1xf32>
    %12 = vector.broadcast %11 : vector<120x1xf32> to vector<120x32xf32>
    %13 = arith.subf %5, %12 : vector<120x32xf32>
    %14 = arith.mulf %13, %13 : vector<120x32xf32>
    %cst_12 = arith.constant dense<0.000000e+00> : vector<120xf32>
    %15 = vector.multi_reduction <add>, %14, %cst_12 [1] : vector<120x32xf32> to vector<120xf32>
    %16 = vector.shape_cast %15 : vector<120xf32> to vector<120x1xf32>
    %cst_13 = arith.constant 3.200000e+01 : f32
    %17 = vector.broadcast %cst_13 : f32 to vector<120x1xf32>
    %18 = arith.divf %16, %17 : vector<120x1xf32>
    %19 = vector.broadcast %11 : vector<120x1xf32> to vector<120x32xf32>
    %20 = arith.subf %5, %19 : vector<120x32xf32>
    %cst_14 = arith.constant 9.99999974E-6 : f32
    %21 = vector.broadcast %cst_14 : f32 to vector<120x1xf32>
    %22 = arith.addf %18, %21 : vector<120x1xf32>
    %23 = math.rsqrt %22 : vector<120x1xf32>
    %24 = vector.broadcast %23 : vector<120x1xf32> to vector<120x32xf32>
    %25 = arith.mulf %20, %24 : vector<120x32xf32>
    %26 = vector.broadcast %6 : vector<1x32xf32> to vector<120x32xf32>
    %27 = arith.mulf %25, %26 : vector<120x32xf32>
    %28 = vector.broadcast %7 : vector<1x32xf32> to vector<120x32xf32>
    %29 = arith.addf %27, %28 : vector<120x32xf32>
    %c0_15 = arith.constant 0 : index
    %c0_16 = arith.constant 0 : index
    %30 = vector.load %arg3[%c0_15, %c0_16] : memref<120x120xf32, #tpu.memory_space<vmem>>, vector<120x120xf32>
    %c0_17 = arith.constant 0 : index
    %c0_18 = arith.constant 0 : index
    %c0_19 = arith.constant 0 : index
    %31 = vector.load %arg7[%c0_17, %c0_18, %c0_19] : memref<2x1x32xf32, #tpu.memory_space<vmem>>, vector<1x1x32xf32>
    %32 = vector.shape_cast %31 : vector<1x1x32xf32> to vector<1x32xf32>
    %c0_20 = arith.constant 0 : index
    %c0_21 = arith.constant 0 : index
    %c0_22 = arith.constant 0 : index
    %33 = vector.load %arg8[%c0_20, %c0_21, %c0_22] : memref<2x1x32xf32, #tpu.memory_space<vmem>>, vector<1x1x32xf32>
    %34 = vector.shape_cast %33 : vector<1x1x32xf32> to vector<1x32xf32>
    %cst_23 = arith.constant dense<0.000000e+00> : vector<120xf32>
    %35 = vector.multi_reduction <add>, %29, %cst_23 [1] : vector<120x32xf32> to vector<120xf32>
    %36 = vector.shape_cast %35 : vector<120xf32> to vector<120x1xf32>
    %cst_24 = arith.constant 3.200000e+01 : f32
    %37 = vector.broadcast %cst_24 : f32 to vector<120x1xf32>
    %38 = arith.divf %36, %37 : vector<120x1xf32>
    %39 = vector.broadcast %38 : vector<120x1xf32> to vector<120x32xf32>
    %40 = arith.subf %29, %39 : vector<120x32xf32>
    %41 = arith.mulf %40, %40 : vector<120x32xf32>
    %cst_25 = arith.constant dense<0.000000e+00> : vector<120xf32>
    %42 = vector.multi_reduction <add>, %41, %cst_25 [1] : vector<120x32xf32> to vector<120xf32>
    %43 = vector.shape_cast %42 : vector<120xf32> to vector<120x1xf32>
    %cst_26 = arith.constant 3.200000e+01 : f32
    %44 = vector.broadcast %cst_26 : f32 to vector<120x1xf32>
    %45 = arith.divf %43, %44 : vector<120x1xf32>
    %46 = vector.broadcast %38 : vector<120x1xf32> to vector<120x32xf32>
    %47 = arith.subf %29, %46 : vector<120x32xf32>
    %cst_27 = arith.constant 9.99999974E-6 : f32
    %48 = vector.broadcast %cst_27 : f32 to vector<120x1xf32>
    %49 = arith.addf %45, %48 : vector<120x1xf32>
    %50 = math.rsqrt %49 : vector<120x1xf32>
    %51 = vector.broadcast %50 : vector<120x1xf32> to vector<120x32xf32>
    %52 = arith.mulf %47, %51 : vector<120x32xf32>
    %53 = vector.broadcast %32 : vector<1x32xf32> to vector<120x32xf32>
    %54 = arith.mulf %52, %53 : vector<120x32xf32>
    %55 = vector.broadcast %34 : vector<1x32xf32> to vector<120x32xf32>
    %56 = arith.addf %54, %55 : vector<120x32xf32>
    %c0_28 = arith.constant 0 : index
    %c0_29 = arith.constant 0 : index
    %c0_30 = arith.constant 0 : index
    %57 = vector.load %arg9[%c0_28, %c0_29, %c0_30] : memref<2x32x96xf32, #tpu.memory_space<vmem>>, vector<1x32x96xf32>
    %58 = vector.shape_cast %57 : vector<1x32x96xf32> to vector<32x96xf32>
    %cst_31 = arith.constant dense<0.000000e+00> : vector<120x96xf32>
    %59 = tpu.matmul %56, %58, %cst_31 {dimension_numbers = #tpu.dot_dimension_numbers<[1], [0], [0], [1], [0, 0, 1, 1], [], []>} : vector<120x32xf32>, vector<32x96xf32>, vector<120x96xf32> -> vector<120x96xf32>
    %c0_32 = arith.constant 0 : index
    %c0_33 = arith.constant 0 : index
    %c0_34 = arith.constant 0 : index
    %60 = vector.load %arg10[%c0_32, %c0_33, %c0_34] : memref<2x1x96xf32, #tpu.memory_space<vmem>>, vector<1x1x96xf32>
    %61 = vector.shape_cast %60 : vector<1x1x96xf32> to vector<1x96xf32>
    %62 = vector.broadcast %61 : vector<1x96xf32> to vector<120x96xf32>
    %63 = arith.addf %59, %62 : vector<120x96xf32>
    %64 = vector.extract_strided_slice %63 {offsets = [0, 0], sizes = [120, 32], strides = [1, 1]} : vector<120x96xf32> to vector<120x32xf32>
    %65 = vector.extract_strided_slice %63 {offsets = [0, 32], sizes = [120, 32], strides = [1, 1]} : vector<120x96xf32> to vector<120x32xf32>
    %66 = vector.extract_strided_slice %63 {offsets = [0, 64], sizes = [120, 32], strides = [1, 1]} : vector<120x96xf32> to vector<120x32xf32>
    %67 = vector.extract_strided_slice %64 {offsets = [0, 0], sizes = [120, 8], strides = [1, 1]} : vector<120x32xf32> to vector<120x8xf32>
    %68 = vector.extract_strided_slice %65 {offsets = [0, 0], sizes = [120, 8], strides = [1, 1]} : vector<120x32xf32> to vector<120x8xf32>
    %69 = vector.extract_strided_slice %66 {offsets = [0, 0], sizes = [120, 8], strides = [1, 1]} : vector<120x32xf32> to vector<120x8xf32>
    %cst_35 = arith.constant dense<0.000000e+00> : vector<120x120xf32>
    %70 = tpu.matmul %67, %68, %cst_35 {dimension_numbers = #tpu.dot_dimension_numbers<[1], [1], [0], [0], [0, 0, 1, 0], [], []>} : vector<120x8xf32>, vector<120x8xf32>, vector<120x120xf32> -> vector<120x120xf32>
    %cst_36 = arith.constant 0.353553385 : f32
    %71 = vector.broadcast %cst_36 : f32 to vector<120x120xf32>
    %72 = arith.mulf %70, %71 : vector<120x120xf32>
    %73 = arith.addf %72, %30 : vector<120x120xf32>
    %cst_37 = arith.constant dense<0xFF800000> : vector<120xf32>
    %74 = vector.multi_reduction <maximumf>, %73, %cst_37 [1] : vector<120x120xf32> to vector<120xf32>
    %75 = vector.shape_cast %74 : vector<120xf32> to vector<120x1xf32>
    %76 = vector.broadcast %75 : vector<120x1xf32> to vector<120x120xf32>
    %77 = arith.subf %73, %76 : vector<120x120xf32>
    %78 = math.exp %77 : vector<120x120xf32>
    %cst_38 = arith.constant dense<0.000000e+00> : vector<120xf32>
    %79 = vector.multi_reduction <add>, %78, %cst_38 [1] : vector<120x120xf32> to vector<120xf32>
    %80 = vector.shape_cast %79 : vector<120xf32> to vector<120x1xf32>
    %81 = tpu.reciprocal %80 {approx = true} : vector<120x1xf32> -> vector<120x1xf32>
    %82 = vector.broadcast %81 : vector<120x1xf32> to vector<120x120xf32>
    %83 = arith.mulf %78, %82 : vector<120x120xf32>
    %cst_39 = arith.constant dense<0.000000e+00> : vector<120x8xf32>
    %84 = tpu.matmul %83, %69, %cst_39 {dimension_numbers = #tpu.dot_dimension_numbers<[1], [0], [0], [1], [0, 0, 1, 1], [], []>} : vector<120x120xf32>, vector<120x8xf32>, vector<120x8xf32> -> vector<120x8xf32>
    %85 = vector.extract_strided_slice %64 {offsets = [0, 8], sizes = [120, 8], strides = [1, 1]} : vector<120x32xf32> to vector<120x8xf32>
    %86 = vector.extract_strided_slice %65 {offsets = [0, 8], sizes = [120, 8], strides = [1, 1]} : vector<120x32xf32> to vector<120x8xf32>
    %87 = vector.extract_strided_slice %66 {offsets = [0, 8], sizes = [120, 8], strides = [1, 1]} : vector<120x32xf32> to vector<120x8xf32>
    %cst_40 = arith.constant dense<0.000000e+00> : vector<120x120xf32>
    %88 = tpu.matmul %85, %86, %cst_40 {dimension_numbers = #tpu.dot_dimension_numbers<[1], [1], [0], [0], [0, 0, 1, 0], [], []>} : vector<120x8xf32>, vector<120x8xf32>, vector<120x120xf32> -> vector<120x120xf32>
    %cst_41 = arith.constant 0.353553385 : f32
    %89 = vector.broadcast %cst_41 : f32 to vector<120x120xf32>
    %90 = arith.mulf %88, %89 : vector<120x120xf32>
    %91 = arith.addf %90, %30 : vector<120x120xf32>
    %cst_42 = arith.constant dense<0xFF800000> : vector<120xf32>
    %92 = vector.multi_reduction <maximumf>, %91, %cst_42 [1] : vector<120x120xf32> to vector<120xf32>
    %93 = vector.shape_cast %92 : vector<120xf32> to vector<120x1xf32>
    %94 = vector.broadcast %93 : vector<120x1xf32> to vector<120x120xf32>
    %95 = arith.subf %91, %94 : vector<120x120xf32>
    %96 = math.exp %95 : vector<120x120xf32>
    %cst_43 = arith.constant dense<0.000000e+00> : vector<120xf32>
    %97 = vector.multi_reduction <add>, %96, %cst_43 [1] : vector<120x120xf32> to vector<120xf32>
    %98 = vector.shape_cast %97 : vector<120xf32> to vector<120x1xf32>
    %99 = tpu.reciprocal %98 {approx = true} : vector<120x1xf32> -> vector<120x1xf32>
    %100 = vector.broadcast %99 : vector<120x1xf32> to vector<120x120xf32>
    %101 = arith.mulf %96, %100 : vector<120x120xf32>
    %cst_44 = arith.constant dense<0.000000e+00> : vector<120x8xf32>
    %102 = tpu.matmul %101, %87, %cst_44 {dimension_numbers = #tpu.dot_dimension_numbers<[1], [0], [0], [1], [0, 0, 1, 1], [], []>} : vector<120x120xf32>, vector<120x8xf32>, vector<120x8xf32> -> vector<120x8xf32>
    %103 = vector.extract_strided_slice %64 {offsets = [0, 16], sizes = [120, 8], strides = [1, 1]} : vector<120x32xf32> to vector<120x8xf32>
    %104 = vector.extract_strided_slice %65 {offsets = [0, 16], sizes = [120, 8], strides = [1, 1]} : vector<120x32xf32> to vector<120x8xf32>
    %105 = vector.extract_strided_slice %66 {offsets = [0, 16], sizes = [120, 8], strides = [1, 1]} : vector<120x32xf32> to vector<120x8xf32>
    %cst_45 = arith.constant dense<0.000000e+00> : vector<120x120xf32>
    %106 = tpu.matmul %103, %104, %cst_45 {dimension_numbers = #tpu.dot_dimension_numbers<[1], [1], [0], [0], [0, 0, 1, 0], [], []>} : vector<120x8xf32>, vector<120x8xf32>, vector<120x120xf32> -> vector<120x120xf32>
    %cst_46 = arith.constant 0.353553385 : f32
    %107 = vector.broadcast %cst_46 : f32 to vector<120x120xf32>
    %108 = arith.mulf %106, %107 : vector<120x120xf32>
    %109 = arith.addf %108, %30 : vector<120x120xf32>
    %cst_47 = arith.constant dense<0xFF800000> : vector<120xf32>
    %110 = vector.multi_reduction <maximumf>, %109, %cst_47 [1] : vector<120x120xf32> to vector<120xf32>
    %111 = vector.shape_cast %110 : vector<120xf32> to vector<120x1xf32>
    %112 = vector.broadcast %111 : vector<120x1xf32> to vector<120x120xf32>
    %113 = arith.subf %109, %112 : vector<120x120xf32>
    %114 = math.exp %113 : vector<120x120xf32>
    %cst_48 = arith.constant dense<0.000000e+00> : vector<120xf32>
    %115 = vector.multi_reduction <add>, %114, %cst_48 [1] : vector<120x120xf32> to vector<120xf32>
    %116 = vector.shape_cast %115 : vector<120xf32> to vector<120x1xf32>
    %117 = tpu.reciprocal %116 {approx = true} : vector<120x1xf32> -> vector<120x1xf32>
    %118 = vector.broadcast %117 : vector<120x1xf32> to vector<120x120xf32>
    %119 = arith.mulf %114, %118 : vector<120x120xf32>
    %cst_49 = arith.constant dense<0.000000e+00> : vector<120x8xf32>
    %120 = tpu.matmul %119, %105, %cst_49 {dimension_numbers = #tpu.dot_dimension_numbers<[1], [0], [0], [1], [0, 0, 1, 1], [], []>} : vector<120x120xf32>, vector<120x8xf32>, vector<120x8xf32> -> vector<120x8xf32>
    %121 = vector.extract_strided_slice %64 {offsets = [0, 24], sizes = [120, 8], strides = [1, 1]} : vector<120x32xf32> to vector<120x8xf32>
    %122 = vector.extract_strided_slice %65 {offsets = [0, 24], sizes = [120, 8], strides = [1, 1]} : vector<120x32xf32> to vector<120x8xf32>
    %123 = vector.extract_strided_slice %66 {offsets = [0, 24], sizes = [120, 8], strides = [1, 1]} : vector<120x32xf32> to vector<120x8xf32>
    %cst_50 = arith.constant dense<0.000000e+00> : vector<120x120xf32>
    %124 = tpu.matmul %121, %122, %cst_50 {dimension_numbers = #tpu.dot_dimension_numbers<[1], [1], [0], [0], [0, 0, 1, 0], [], []>} : vector<120x8xf32>, vector<120x8xf32>, vector<120x120xf32> -> vector<120x120xf32>
    %cst_51 = arith.constant 0.353553385 : f32
    %125 = vector.broadcast %cst_51 : f32 to vector<120x120xf32>
    %126 = arith.mulf %124, %125 : vector<120x120xf32>
    %127 = arith.addf %126, %30 : vector<120x120xf32>
    %cst_52 = arith.constant dense<0xFF800000> : vector<120xf32>
    %128 = vector.multi_reduction <maximumf>, %127, %cst_52 [1] : vector<120x120xf32> to vector<120xf32>
    %129 = vector.shape_cast %128 : vector<120xf32> to vector<120x1xf32>
    %130 = vector.broadcast %129 : vector<120x1xf32> to vector<120x120xf32>
    %131 = arith.subf %127, %130 : vector<120x120xf32>
    %132 = math.exp %131 : vector<120x120xf32>
    %cst_53 = arith.constant dense<0.000000e+00> : vector<120xf32>
    %133 = vector.multi_reduction <add>, %132, %cst_53 [1] : vector<120x120xf32> to vector<120xf32>
    %134 = vector.shape_cast %133 : vector<120xf32> to vector<120x1xf32>
    %135 = tpu.reciprocal %134 {approx = true} : vector<120x1xf32> -> vector<120x1xf32>
    %136 = vector.broadcast %135 : vector<120x1xf32> to vector<120x120xf32>
    %137 = arith.mulf %132, %136 : vector<120x120xf32>
    %cst_54 = arith.constant dense<0.000000e+00> : vector<120x8xf32>
    %138 = tpu.matmul %137, %123, %cst_54 {dimension_numbers = #tpu.dot_dimension_numbers<[1], [0], [0], [1], [0, 0, 1, 1], [], []>} : vector<120x120xf32>, vector<120x8xf32>, vector<120x8xf32> -> vector<120x8xf32>
    %139 = tpu.concatenate %84, %102, %120, %138 in 1 : vector<120x8xf32>, vector<120x8xf32>, vector<120x8xf32>, vector<120x8xf32> -> vector<120x32xf32>
    %c0_55 = arith.constant 0 : index
    %c0_56 = arith.constant 0 : index
    %c0_57 = arith.constant 0 : index
    %140 = vector.load %arg11[%c0_55, %c0_56, %c0_57] : memref<2x32x32xf32, #tpu.memory_space<vmem>>, vector<1x32x32xf32>
    %141 = vector.shape_cast %140 : vector<1x32x32xf32> to vector<32x32xf32>
    %cst_58 = arith.constant dense<0.000000e+00> : vector<120x32xf32>
    %142 = tpu.matmul %139, %141, %cst_58 {dimension_numbers = #tpu.dot_dimension_numbers<[1], [0], [0], [1], [0, 0, 1, 1], [], []>} : vector<120x32xf32>, vector<32x32xf32>, vector<120x32xf32> -> vector<120x32xf32>
    %143 = arith.addf %29, %142 : vector<120x32xf32>
    %c0_59 = arith.constant 0 : index
    %c0_60 = arith.constant 0 : index
    %c0_61 = arith.constant 0 : index
    %144 = vector.load %arg12[%c0_59, %c0_60, %c0_61] : memref<2x1x32xf32, #tpu.memory_space<vmem>>, vector<1x1x32xf32>
    %145 = vector.shape_cast %144 : vector<1x1x32xf32> to vector<1x32xf32>
    %146 = vector.broadcast %145 : vector<1x32xf32> to vector<120x32xf32>
    %147 = arith.addf %143, %146 : vector<120x32xf32>
    %c0_62 = arith.constant 0 : index
    %c0_63 = arith.constant 0 : index
    %c0_64 = arith.constant 0 : index
    %148 = vector.load %arg13[%c0_62, %c0_63, %c0_64] : memref<2x1x32xf32, #tpu.memory_space<vmem>>, vector<1x1x32xf32>
    %149 = vector.shape_cast %148 : vector<1x1x32xf32> to vector<1x32xf32>
    %c0_65 = arith.constant 0 : index
    %c0_66 = arith.constant 0 : index
    %c0_67 = arith.constant 0 : index
    %150 = vector.load %arg14[%c0_65, %c0_66, %c0_67] : memref<2x1x32xf32, #tpu.memory_space<vmem>>, vector<1x1x32xf32>
    %151 = vector.shape_cast %150 : vector<1x1x32xf32> to vector<1x32xf32>
    %cst_68 = arith.constant dense<0.000000e+00> : vector<120xf32>
    %152 = vector.multi_reduction <add>, %147, %cst_68 [1] : vector<120x32xf32> to vector<120xf32>
    %153 = vector.shape_cast %152 : vector<120xf32> to vector<120x1xf32>
    %cst_69 = arith.constant 3.200000e+01 : f32
    %154 = vector.broadcast %cst_69 : f32 to vector<120x1xf32>
    %155 = arith.divf %153, %154 : vector<120x1xf32>
    %156 = vector.broadcast %155 : vector<120x1xf32> to vector<120x32xf32>
    %157 = arith.subf %147, %156 : vector<120x32xf32>
    %158 = arith.mulf %157, %157 : vector<120x32xf32>
    %cst_70 = arith.constant dense<0.000000e+00> : vector<120xf32>
    %159 = vector.multi_reduction <add>, %158, %cst_70 [1] : vector<120x32xf32> to vector<120xf32>
    %160 = vector.shape_cast %159 : vector<120xf32> to vector<120x1xf32>
    %cst_71 = arith.constant 3.200000e+01 : f32
    %161 = vector.broadcast %cst_71 : f32 to vector<120x1xf32>
    %162 = arith.divf %160, %161 : vector<120x1xf32>
    %163 = vector.broadcast %155 : vector<120x1xf32> to vector<120x32xf32>
    %164 = arith.subf %147, %163 : vector<120x32xf32>
    %cst_72 = arith.constant 9.99999974E-6 : f32
    %165 = vector.broadcast %cst_72 : f32 to vector<120x1xf32>
    %166 = arith.addf %162, %165 : vector<120x1xf32>
    %167 = math.rsqrt %166 : vector<120x1xf32>
    %168 = vector.broadcast %167 : vector<120x1xf32> to vector<120x32xf32>
    %169 = arith.mulf %164, %168 : vector<120x32xf32>
    %170 = vector.broadcast %149 : vector<1x32xf32> to vector<120x32xf32>
    %171 = arith.mulf %169, %170 : vector<120x32xf32>
    %172 = vector.broadcast %151 : vector<1x32xf32> to vector<120x32xf32>
    %173 = arith.addf %171, %172 : vector<120x32xf32>
    %c0_73 = arith.constant 0 : index
    %c0_74 = arith.constant 0 : index
    %c0_75 = arith.constant 0 : index
    %174 = vector.load %arg15[%c0_73, %c0_74, %c0_75] : memref<2x32x64xf32, #tpu.memory_space<vmem>>, vector<1x32x64xf32>
    %175 = vector.shape_cast %174 : vector<1x32x64xf32> to vector<32x64xf32>
    %cst_76 = arith.constant dense<0.000000e+00> : vector<120x64xf32>
    %176 = tpu.matmul %173, %175, %cst_76 {dimension_numbers = #tpu.dot_dimension_numbers<[1], [0], [0], [1], [0, 0, 1, 1], [], []>} : vector<120x32xf32>, vector<32x64xf32>, vector<120x64xf32> -> vector<120x64xf32>
    %c0_77 = arith.constant 0 : index
    %c0_78 = arith.constant 0 : index
    %c0_79 = arith.constant 0 : index
    %177 = vector.load %arg16[%c0_77, %c0_78, %c0_79] : memref<2x1x64xf32, #tpu.memory_space<vmem>>, vector<1x1x64xf32>
    %178 = vector.shape_cast %177 : vector<1x1x64xf32> to vector<1x64xf32>
    %179 = vector.broadcast %178 : vector<1x64xf32> to vector<120x64xf32>
    %180 = arith.addf %176, %179 : vector<120x64xf32>
    %181 = arith.mulf %180, %180 : vector<120x64xf32>
    %182 = arith.mulf %180, %181 : vector<120x64xf32>
    %cst_80 = arith.constant 4.471500e-02 : f32
    %183 = vector.broadcast %cst_80 : f32 to vector<120x64xf32>
    %184 = arith.mulf %183, %182 : vector<120x64xf32>
    %185 = arith.addf %180, %184 : vector<120x64xf32>
    %cst_81 = arith.constant 0.797884583 : f32
    %186 = vector.broadcast %cst_81 : f32 to vector<120x64xf32>
    %187 = arith.mulf %186, %185 : vector<120x64xf32>
    %188 = math.tanh %187 : vector<120x64xf32>
    %cst_82 = arith.constant 1.000000e+00 : f32
    %189 = vector.broadcast %cst_82 : f32 to vector<120x64xf32>
    %190 = arith.addf %189, %188 : vector<120x64xf32>
    %cst_83 = arith.constant 5.000000e-01 : f32
    %191 = vector.broadcast %cst_83 : f32 to vector<120x64xf32>
    %192 = arith.mulf %191, %190 : vector<120x64xf32>
    %193 = arith.mulf %180, %192 : vector<120x64xf32>
    %c0_84 = arith.constant 0 : index
    %c0_85 = arith.constant 0 : index
    %c0_86 = arith.constant 0 : index
    %194 = vector.load %arg17[%c0_84, %c0_85, %c0_86] : memref<2x64x32xf32, #tpu.memory_space<vmem>>, vector<1x64x32xf32>
    %195 = vector.shape_cast %194 : vector<1x64x32xf32> to vector<64x32xf32>
    %cst_87 = arith.constant dense<0.000000e+00> : vector<120x32xf32>
    %196 = tpu.matmul %193, %195, %cst_87 {dimension_numbers = #tpu.dot_dimension_numbers<[1], [0], [0], [1], [0, 0, 1, 1], [], []>} : vector<120x64xf32>, vector<64x32xf32>, vector<120x32xf32> -> vector<120x32xf32>
    %197 = arith.addf %147, %196 : vector<120x32xf32>
    %c0_88 = arith.constant 0 : index
    %c0_89 = arith.constant 0 : index
    %c0_90 = arith.constant 0 : index
    %198 = vector.load %arg18[%c0_88, %c0_89, %c0_90] : memref<2x1x32xf32, #tpu.memory_space<vmem>>, vector<1x1x32xf32>
    %199 = vector.shape_cast %198 : vector<1x1x32xf32> to vector<1x32xf32>
    %200 = vector.broadcast %199 : vector<1x32xf32> to vector<120x32xf32>
    %201 = arith.addf %197, %200 : vector<120x32xf32>
    %c1 = arith.constant 1 : index
    %c0_91 = arith.constant 0 : index
    %c0_92 = arith.constant 0 : index
    %202 = vector.load %arg7[%c1, %c0_91, %c0_92] : memref<2x1x32xf32, #tpu.memory_space<vmem>>, vector<1x1x32xf32>
    %203 = vector.shape_cast %202 : vector<1x1x32xf32> to vector<1x32xf32>
    %c1_93 = arith.constant 1 : index
    %c0_94 = arith.constant 0 : index
    %c0_95 = arith.constant 0 : index
    %204 = vector.load %arg8[%c1_93, %c0_94, %c0_95] : memref<2x1x32xf32, #tpu.memory_space<vmem>>, vector<1x1x32xf32>
    %205 = vector.shape_cast %204 : vector<1x1x32xf32> to vector<1x32xf32>
    %cst_96 = arith.constant dense<0.000000e+00> : vector<120xf32>
    %206 = vector.multi_reduction <add>, %201, %cst_96 [1] : vector<120x32xf32> to vector<120xf32>
    %207 = vector.shape_cast %206 : vector<120xf32> to vector<120x1xf32>
    %cst_97 = arith.constant 3.200000e+01 : f32
    %208 = vector.broadcast %cst_97 : f32 to vector<120x1xf32>
    %209 = arith.divf %207, %208 : vector<120x1xf32>
    %210 = vector.broadcast %209 : vector<120x1xf32> to vector<120x32xf32>
    %211 = arith.subf %201, %210 : vector<120x32xf32>
    %212 = arith.mulf %211, %211 : vector<120x32xf32>
    %cst_98 = arith.constant dense<0.000000e+00> : vector<120xf32>
    %213 = vector.multi_reduction <add>, %212, %cst_98 [1] : vector<120x32xf32> to vector<120xf32>
    %214 = vector.shape_cast %213 : vector<120xf32> to vector<120x1xf32>
    %cst_99 = arith.constant 3.200000e+01 : f32
    %215 = vector.broadcast %cst_99 : f32 to vector<120x1xf32>
    %216 = arith.divf %214, %215 : vector<120x1xf32>
    %217 = vector.broadcast %209 : vector<120x1xf32> to vector<120x32xf32>
    %218 = arith.subf %201, %217 : vector<120x32xf32>
    %cst_100 = arith.constant 9.99999974E-6 : f32
    %219 = vector.broadcast %cst_100 : f32 to vector<120x1xf32>
    %220 = arith.addf %216, %219 : vector<120x1xf32>
    %221 = math.rsqrt %220 : vector<120x1xf32>
    %222 = vector.broadcast %221 : vector<120x1xf32> to vector<120x32xf32>
    %223 = arith.mulf %218, %222 : vector<120x32xf32>
    %224 = vector.broadcast %203 : vector<1x32xf32> to vector<120x32xf32>
    %225 = arith.mulf %223, %224 : vector<120x32xf32>
    %226 = vector.broadcast %205 : vector<1x32xf32> to vector<120x32xf32>
    %227 = arith.addf %225, %226 : vector<120x32xf32>
    %c1_101 = arith.constant 1 : index
    %c0_102 = arith.constant 0 : index
    %c0_103 = arith.constant 0 : index
    %228 = vector.load %arg9[%c1_101, %c0_102, %c0_103] : memref<2x32x96xf32, #tpu.memory_space<vmem>>, vector<1x32x96xf32>
    %229 = vector.shape_cast %228 : vector<1x32x96xf32> to vector<32x96xf32>
    %cst_104 = arith.constant dense<0.000000e+00> : vector<120x96xf32>
    %230 = tpu.matmul %227, %229, %cst_104 {dimension_numbers = #tpu.dot_dimension_numbers<[1], [0], [0], [1], [0, 0, 1, 1], [], []>} : vector<120x32xf32>, vector<32x96xf32>, vector<120x96xf32> -> vector<120x96xf32>
    %c1_105 = arith.constant 1 : index
    %c0_106 = arith.constant 0 : index
    %c0_107 = arith.constant 0 : index
    %231 = vector.load %arg10[%c1_105, %c0_106, %c0_107] : memref<2x1x96xf32, #tpu.memory_space<vmem>>, vector<1x1x96xf32>
    %232 = vector.shape_cast %231 : vector<1x1x96xf32> to vector<1x96xf32>
    %233 = vector.broadcast %232 : vector<1x96xf32> to vector<120x96xf32>
    %234 = arith.addf %230, %233 : vector<120x96xf32>
    %235 = vector.extract_strided_slice %234 {offsets = [0, 0], sizes = [120, 32], strides = [1, 1]} : vector<120x96xf32> to vector<120x32xf32>
    %236 = vector.extract_strided_slice %234 {offsets = [0, 32], sizes = [120, 32], strides = [1, 1]} : vector<120x96xf32> to vector<120x32xf32>
    %237 = vector.extract_strided_slice %234 {offsets = [0, 64], sizes = [120, 32], strides = [1, 1]} : vector<120x96xf32> to vector<120x32xf32>
    %238 = vector.extract_strided_slice %235 {offsets = [0, 0], sizes = [120, 8], strides = [1, 1]} : vector<120x32xf32> to vector<120x8xf32>
    %239 = vector.extract_strided_slice %236 {offsets = [0, 0], sizes = [120, 8], strides = [1, 1]} : vector<120x32xf32> to vector<120x8xf32>
    %240 = vector.extract_strided_slice %237 {offsets = [0, 0], sizes = [120, 8], strides = [1, 1]} : vector<120x32xf32> to vector<120x8xf32>
    %cst_108 = arith.constant dense<0.000000e+00> : vector<120x120xf32>
    %241 = tpu.matmul %238, %239, %cst_108 {dimension_numbers = #tpu.dot_dimension_numbers<[1], [1], [0], [0], [0, 0, 1, 0], [], []>} : vector<120x8xf32>, vector<120x8xf32>, vector<120x120xf32> -> vector<120x120xf32>
    %cst_109 = arith.constant 0.353553385 : f32
    %242 = vector.broadcast %cst_109 : f32 to vector<120x120xf32>
    %243 = arith.mulf %241, %242 : vector<120x120xf32>
    %244 = arith.addf %243, %30 : vector<120x120xf32>
    %cst_110 = arith.constant dense<0xFF800000> : vector<120xf32>
    %245 = vector.multi_reduction <maximumf>, %244, %cst_110 [1] : vector<120x120xf32> to vector<120xf32>
    %246 = vector.shape_cast %245 : vector<120xf32> to vector<120x1xf32>
    %247 = vector.broadcast %246 : vector<120x1xf32> to vector<120x120xf32>
    %248 = arith.subf %244, %247 : vector<120x120xf32>
    %249 = math.exp %248 : vector<120x120xf32>
    %cst_111 = arith.constant dense<0.000000e+00> : vector<120xf32>
    %250 = vector.multi_reduction <add>, %249, %cst_111 [1] : vector<120x120xf32> to vector<120xf32>
    %251 = vector.shape_cast %250 : vector<120xf32> to vector<120x1xf32>
    %252 = tpu.reciprocal %251 {approx = true} : vector<120x1xf32> -> vector<120x1xf32>
    %253 = vector.broadcast %252 : vector<120x1xf32> to vector<120x120xf32>
    %254 = arith.mulf %249, %253 : vector<120x120xf32>
    %cst_112 = arith.constant dense<0.000000e+00> : vector<120x8xf32>
    %255 = tpu.matmul %254, %240, %cst_112 {dimension_numbers = #tpu.dot_dimension_numbers<[1], [0], [0], [1], [0, 0, 1, 1], [], []>} : vector<120x120xf32>, vector<120x8xf32>, vector<120x8xf32> -> vector<120x8xf32>
    %256 = vector.extract_strided_slice %235 {offsets = [0, 8], sizes = [120, 8], strides = [1, 1]} : vector<120x32xf32> to vector<120x8xf32>
    %257 = vector.extract_strided_slice %236 {offsets = [0, 8], sizes = [120, 8], strides = [1, 1]} : vector<120x32xf32> to vector<120x8xf32>
    %258 = vector.extract_strided_slice %237 {offsets = [0, 8], sizes = [120, 8], strides = [1, 1]} : vector<120x32xf32> to vector<120x8xf32>
    %cst_113 = arith.constant dense<0.000000e+00> : vector<120x120xf32>
    %259 = tpu.matmul %256, %257, %cst_113 {dimension_numbers = #tpu.dot_dimension_numbers<[1], [1], [0], [0], [0, 0, 1, 0], [], []>} : vector<120x8xf32>, vector<120x8xf32>, vector<120x120xf32> -> vector<120x120xf32>
    %cst_114 = arith.constant 0.353553385 : f32
    %260 = vector.broadcast %cst_114 : f32 to vector<120x120xf32>
    %261 = arith.mulf %259, %260 : vector<120x120xf32>
    %262 = arith.addf %261, %30 : vector<120x120xf32>
    %cst_115 = arith.constant dense<0xFF800000> : vector<120xf32>
    %263 = vector.multi_reduction <maximumf>, %262, %cst_115 [1] : vector<120x120xf32> to vector<120xf32>
    %264 = vector.shape_cast %263 : vector<120xf32> to vector<120x1xf32>
    %265 = vector.broadcast %264 : vector<120x1xf32> to vector<120x120xf32>
    %266 = arith.subf %262, %265 : vector<120x120xf32>
    %267 = math.exp %266 : vector<120x120xf32>
    %cst_116 = arith.constant dense<0.000000e+00> : vector<120xf32>
    %268 = vector.multi_reduction <add>, %267, %cst_116 [1] : vector<120x120xf32> to vector<120xf32>
    %269 = vector.shape_cast %268 : vector<120xf32> to vector<120x1xf32>
    %270 = tpu.reciprocal %269 {approx = true} : vector<120x1xf32> -> vector<120x1xf32>
    %271 = vector.broadcast %270 : vector<120x1xf32> to vector<120x120xf32>
    %272 = arith.mulf %267, %271 : vector<120x120xf32>
    %cst_117 = arith.constant dense<0.000000e+00> : vector<120x8xf32>
    %273 = tpu.matmul %272, %258, %cst_117 {dimension_numbers = #tpu.dot_dimension_numbers<[1], [0], [0], [1], [0, 0, 1, 1], [], []>} : vector<120x120xf32>, vector<120x8xf32>, vector<120x8xf32> -> vector<120x8xf32>
    %274 = vector.extract_strided_slice %235 {offsets = [0, 16], sizes = [120, 8], strides = [1, 1]} : vector<120x32xf32> to vector<120x8xf32>
    %275 = vector.extract_strided_slice %236 {offsets = [0, 16], sizes = [120, 8], strides = [1, 1]} : vector<120x32xf32> to vector<120x8xf32>
    %276 = vector.extract_strided_slice %237 {offsets = [0, 16], sizes = [120, 8], strides = [1, 1]} : vector<120x32xf32> to vector<120x8xf32>
    %cst_118 = arith.constant dense<0.000000e+00> : vector<120x120xf32>
    %277 = tpu.matmul %274, %275, %cst_118 {dimension_numbers = #tpu.dot_dimension_numbers<[1], [1], [0], [0], [0, 0, 1, 0], [], []>} : vector<120x8xf32>, vector<120x8xf32>, vector<120x120xf32> -> vector<120x120xf32>
    %cst_119 = arith.constant 0.353553385 : f32
    %278 = vector.broadcast %cst_119 : f32 to vector<120x120xf32>
    %279 = arith.mulf %277, %278 : vector<120x120xf32>
    %280 = arith.addf %279, %30 : vector<120x120xf32>
    %cst_120 = arith.constant dense<0xFF800000> : vector<120xf32>
    %281 = vector.multi_reduction <maximumf>, %280, %cst_120 [1] : vector<120x120xf32> to vector<120xf32>
    %282 = vector.shape_cast %281 : vector<120xf32> to vector<120x1xf32>
    %283 = vector.broadcast %282 : vector<120x1xf32> to vector<120x120xf32>
    %284 = arith.subf %280, %283 : vector<120x120xf32>
    %285 = math.exp %284 : vector<120x120xf32>
    %cst_121 = arith.constant dense<0.000000e+00> : vector<120xf32>
    %286 = vector.multi_reduction <add>, %285, %cst_121 [1] : vector<120x120xf32> to vector<120xf32>
    %287 = vector.shape_cast %286 : vector<120xf32> to vector<120x1xf32>
    %288 = tpu.reciprocal %287 {approx = true} : vector<120x1xf32> -> vector<120x1xf32>
    %289 = vector.broadcast %288 : vector<120x1xf32> to vector<120x120xf32>
    %290 = arith.mulf %285, %289 : vector<120x120xf32>
    %cst_122 = arith.constant dense<0.000000e+00> : vector<120x8xf32>
    %291 = tpu.matmul %290, %276, %cst_122 {dimension_numbers = #tpu.dot_dimension_numbers<[1], [0], [0], [1], [0, 0, 1, 1], [], []>} : vector<120x120xf32>, vector<120x8xf32>, vector<120x8xf32> -> vector<120x8xf32>
    %292 = vector.extract_strided_slice %235 {offsets = [0, 24], sizes = [120, 8], strides = [1, 1]} : vector<120x32xf32> to vector<120x8xf32>
    %293 = vector.extract_strided_slice %236 {offsets = [0, 24], sizes = [120, 8], strides = [1, 1]} : vector<120x32xf32> to vector<120x8xf32>
    %294 = vector.extract_strided_slice %237 {offsets = [0, 24], sizes = [120, 8], strides = [1, 1]} : vector<120x32xf32> to vector<120x8xf32>
    %cst_123 = arith.constant dense<0.000000e+00> : vector<120x120xf32>
    %295 = tpu.matmul %292, %293, %cst_123 {dimension_numbers = #tpu.dot_dimension_numbers<[1], [1], [0], [0], [0, 0, 1, 0], [], []>} : vector<120x8xf32>, vector<120x8xf32>, vector<120x120xf32> -> vector<120x120xf32>
    %cst_124 = arith.constant 0.353553385 : f32
    %296 = vector.broadcast %cst_124 : f32 to vector<120x120xf32>
    %297 = arith.mulf %295, %296 : vector<120x120xf32>
    %298 = arith.addf %297, %30 : vector<120x120xf32>
    %cst_125 = arith.constant dense<0xFF800000> : vector<120xf32>
    %299 = vector.multi_reduction <maximumf>, %298, %cst_125 [1] : vector<120x120xf32> to vector<120xf32>
    %300 = vector.shape_cast %299 : vector<120xf32> to vector<120x1xf32>
    %301 = vector.broadcast %300 : vector<120x1xf32> to vector<120x120xf32>
    %302 = arith.subf %298, %301 : vector<120x120xf32>
    %303 = math.exp %302 : vector<120x120xf32>
    %cst_126 = arith.constant dense<0.000000e+00> : vector<120xf32>
    %304 = vector.multi_reduction <add>, %303, %cst_126 [1] : vector<120x120xf32> to vector<120xf32>
    %305 = vector.shape_cast %304 : vector<120xf32> to vector<120x1xf32>
    %306 = tpu.reciprocal %305 {approx = true} : vector<120x1xf32> -> vector<120x1xf32>
    %307 = vector.broadcast %306 : vector<120x1xf32> to vector<120x120xf32>
    %308 = arith.mulf %303, %307 : vector<120x120xf32>
    %cst_127 = arith.constant dense<0.000000e+00> : vector<120x8xf32>
    %309 = tpu.matmul %308, %294, %cst_127 {dimension_numbers = #tpu.dot_dimension_numbers<[1], [0], [0], [1], [0, 0, 1, 1], [], []>} : vector<120x120xf32>, vector<120x8xf32>, vector<120x8xf32> -> vector<120x8xf32>
    %310 = tpu.concatenate %255, %273, %291, %309 in 1 : vector<120x8xf32>, vector<120x8xf32>, vector<120x8xf32>, vector<120x8xf32> -> vector<120x32xf32>
    %c1_128 = arith.constant 1 : index
    %c0_129 = arith.constant 0 : index
    %c0_130 = arith.constant 0 : index
    %311 = vector.load %arg11[%c1_128, %c0_129, %c0_130] : memref<2x32x32xf32, #tpu.memory_space<vmem>>, vector<1x32x32xf32>
    %312 = vector.shape_cast %311 : vector<1x32x32xf32> to vector<32x32xf32>
    %cst_131 = arith.constant dense<0.000000e+00> : vector<120x32xf32>
    %313 = tpu.matmul %310, %312, %cst_131 {dimension_numbers = #tpu.dot_dimension_numbers<[1], [0], [0], [1], [0, 0, 1, 1], [], []>} : vector<120x32xf32>, vector<32x32xf32>, vector<120x32xf32> -> vector<120x32xf32>
    %314 = arith.addf %201, %313 : vector<120x32xf32>
    %c1_132 = arith.constant 1 : index
    %c0_133 = arith.constant 0 : index
    %c0_134 = arith.constant 0 : index
    %315 = vector.load %arg12[%c1_132, %c0_133, %c0_134] : memref<2x1x32xf32, #tpu.memory_space<vmem>>, vector<1x1x32xf32>
    %316 = vector.shape_cast %315 : vector<1x1x32xf32> to vector<1x32xf32>
    %317 = vector.broadcast %316 : vector<1x32xf32> to vector<120x32xf32>
    %318 = arith.addf %314, %317 : vector<120x32xf32>
    %c1_135 = arith.constant 1 : index
    %c0_136 = arith.constant 0 : index
    %c0_137 = arith.constant 0 : index
    %319 = vector.load %arg13[%c1_135, %c0_136, %c0_137] : memref<2x1x32xf32, #tpu.memory_space<vmem>>, vector<1x1x32xf32>
    %320 = vector.shape_cast %319 : vector<1x1x32xf32> to vector<1x32xf32>
    %c1_138 = arith.constant 1 : index
    %c0_139 = arith.constant 0 : index
    %c0_140 = arith.constant 0 : index
    %321 = vector.load %arg14[%c1_138, %c0_139, %c0_140] : memref<2x1x32xf32, #tpu.memory_space<vmem>>, vector<1x1x32xf32>
    %322 = vector.shape_cast %321 : vector<1x1x32xf32> to vector<1x32xf32>
    %cst_141 = arith.constant dense<0.000000e+00> : vector<120xf32>
    %323 = vector.multi_reduction <add>, %318, %cst_141 [1] : vector<120x32xf32> to vector<120xf32>
    %324 = vector.shape_cast %323 : vector<120xf32> to vector<120x1xf32>
    %cst_142 = arith.constant 3.200000e+01 : f32
    %325 = vector.broadcast %cst_142 : f32 to vector<120x1xf32>
    %326 = arith.divf %324, %325 : vector<120x1xf32>
    %327 = vector.broadcast %326 : vector<120x1xf32> to vector<120x32xf32>
    %328 = arith.subf %318, %327 : vector<120x32xf32>
    %329 = arith.mulf %328, %328 : vector<120x32xf32>
    %cst_143 = arith.constant dense<0.000000e+00> : vector<120xf32>
    %330 = vector.multi_reduction <add>, %329, %cst_143 [1] : vector<120x32xf32> to vector<120xf32>
    %331 = vector.shape_cast %330 : vector<120xf32> to vector<120x1xf32>
    %cst_144 = arith.constant 3.200000e+01 : f32
    %332 = vector.broadcast %cst_144 : f32 to vector<120x1xf32>
    %333 = arith.divf %331, %332 : vector<120x1xf32>
    %334 = vector.broadcast %326 : vector<120x1xf32> to vector<120x32xf32>
    %335 = arith.subf %318, %334 : vector<120x32xf32>
    %cst_145 = arith.constant 9.99999974E-6 : f32
    %336 = vector.broadcast %cst_145 : f32 to vector<120x1xf32>
    %337 = arith.addf %333, %336 : vector<120x1xf32>
    %338 = math.rsqrt %337 : vector<120x1xf32>
    %339 = vector.broadcast %338 : vector<120x1xf32> to vector<120x32xf32>
    %340 = arith.mulf %335, %339 : vector<120x32xf32>
    %341 = vector.broadcast %320 : vector<1x32xf32> to vector<120x32xf32>
    %342 = arith.mulf %340, %341 : vector<120x32xf32>
    %343 = vector.broadcast %322 : vector<1x32xf32> to vector<120x32xf32>
    %344 = arith.addf %342, %343 : vector<120x32xf32>
    %c1_146 = arith.constant 1 : index
    %c0_147 = arith.constant 0 : index
    %c0_148 = arith.constant 0 : index
    %345 = vector.load %arg15[%c1_146, %c0_147, %c0_148] : memref<2x32x64xf32, #tpu.memory_space<vmem>>, vector<1x32x64xf32>
    %346 = vector.shape_cast %345 : vector<1x32x64xf32> to vector<32x64xf32>
    %cst_149 = arith.constant dense<0.000000e+00> : vector<120x64xf32>
    %347 = tpu.matmul %344, %346, %cst_149 {dimension_numbers = #tpu.dot_dimension_numbers<[1], [0], [0], [1], [0, 0, 1, 1], [], []>} : vector<120x32xf32>, vector<32x64xf32>, vector<120x64xf32> -> vector<120x64xf32>
    %c1_150 = arith.constant 1 : index
    %c0_151 = arith.constant 0 : index
    %c0_152 = arith.constant 0 : index
    %348 = vector.load %arg16[%c1_150, %c0_151, %c0_152] : memref<2x1x64xf32, #tpu.memory_space<vmem>>, vector<1x1x64xf32>
    %349 = vector.shape_cast %348 : vector<1x1x64xf32> to vector<1x64xf32>
    %350 = vector.broadcast %349 : vector<1x64xf32> to vector<120x64xf32>
    %351 = arith.addf %347, %350 : vector<120x64xf32>
    %352 = arith.mulf %351, %351 : vector<120x64xf32>
    %353 = arith.mulf %351, %352 : vector<120x64xf32>
    %cst_153 = arith.constant 4.471500e-02 : f32
    %354 = vector.broadcast %cst_153 : f32 to vector<120x64xf32>
    %355 = arith.mulf %354, %353 : vector<120x64xf32>
    %356 = arith.addf %351, %355 : vector<120x64xf32>
    %cst_154 = arith.constant 0.797884583 : f32
    %357 = vector.broadcast %cst_154 : f32 to vector<120x64xf32>
    %358 = arith.mulf %357, %356 : vector<120x64xf32>
    %359 = math.tanh %358 : vector<120x64xf32>
    %cst_155 = arith.constant 1.000000e+00 : f32
    %360 = vector.broadcast %cst_155 : f32 to vector<120x64xf32>
    %361 = arith.addf %360, %359 : vector<120x64xf32>
    %cst_156 = arith.constant 5.000000e-01 : f32
    %362 = vector.broadcast %cst_156 : f32 to vector<120x64xf32>
    %363 = arith.mulf %362, %361 : vector<120x64xf32>
    %364 = arith.mulf %351, %363 : vector<120x64xf32>
    %c1_157 = arith.constant 1 : index
    %c0_158 = arith.constant 0 : index
    %c0_159 = arith.constant 0 : index
    %365 = vector.load %arg17[%c1_157, %c0_158, %c0_159] : memref<2x64x32xf32, #tpu.memory_space<vmem>>, vector<1x64x32xf32>
    %366 = vector.shape_cast %365 : vector<1x64x32xf32> to vector<64x32xf32>
    %cst_160 = arith.constant dense<0.000000e+00> : vector<120x32xf32>
    %367 = tpu.matmul %364, %366, %cst_160 {dimension_numbers = #tpu.dot_dimension_numbers<[1], [0], [0], [1], [0, 0, 1, 1], [], []>} : vector<120x64xf32>, vector<64x32xf32>, vector<120x32xf32> -> vector<120x32xf32>
    %368 = arith.addf %318, %367 : vector<120x32xf32>
    %c1_161 = arith.constant 1 : index
    %c0_162 = arith.constant 0 : index
    %c0_163 = arith.constant 0 : index
    %369 = vector.load %arg18[%c1_161, %c0_162, %c0_163] : memref<2x1x32xf32, #tpu.memory_space<vmem>>, vector<1x1x32xf32>
    %370 = vector.shape_cast %369 : vector<1x1x32xf32> to vector<1x32xf32>
    %371 = vector.broadcast %370 : vector<1x32xf32> to vector<120x32xf32>
    %372 = arith.addf %368, %371 : vector<120x32xf32>
    %c0_164 = arith.constant 0 : index
    %c0_165 = arith.constant 0 : index
    %c0_166 = arith.constant 0 : index
    %373 = vector.load %arg19[%c0_164, %c0_165, %c0_166] : memref<1x120x32xf32, #tpu.memory_space<vmem>>, vector<1x120x32xf32>
    %374 = vector.shape_cast %373 : vector<1x120x32xf32> to vector<120x32xf32>
    %375 = vector.shape_cast %372 : vector<120x32xf32> to vector<1x120x32xf32>
    tpu.vector_store %arg19[%c0_164, %c0_165, %c0_166], %375 {strides = array<i32>} : memref<1x120x32xf32, #tpu.memory_space<vmem>>, vector<1x120x32xf32>,
    return
  }
  func.func @transform_0(%arg0: i32) -> (i32, i32, i32) {
    %c0_i32 = arith.constant 0 : i32
    %c0_i32_0 = arith.constant 0 : i32
    %c0_i32_1 = arith.constant 0 : i32
    return %arg0, %c0_i32, %c0_i32_0 : i32, i32, i32
  }
  func.func @transform_1(%arg0: i32) -> (i32, i32) {
    %c0_i32 = arith.constant 0 : i32
    %c0_i32_0 = arith.constant 0 : i32
    %c0_i32_1 = arith.constant 0 : i32
    return %c0_i32, %c0_i32_0 : i32, i32
  }
  func.func @transform_2(%arg0: i32) -> (i32, i32) {
    %c0_i32 = arith.constant 0 : i32
    %c0_i32_0 = arith.constant 0 : i32
    %c0_i32_1 = arith.constant 0 : i32
    return %c0_i32, %c0_i32_0 : i32, i32
  }
  func.func @transform_3(%arg0: i32) -> (i32, i32) {
    %c0_i32 = arith.constant 0 : i32
    %c0_i32_0 = arith.constant 0 : i32
    %c0_i32_1 = arith.constant 0 : i32
    return %c0_i32, %c0_i32_0 : i32, i32
  }
  func.func @transform_4(%arg0: i32) -> (i32, i32) {
    %c0_i32 = arith.constant 0 : i32
    %c0_i32_0 = arith.constant 0 : i32
    %c0_i32_1 = arith.constant 0 : i32
    return %c0_i32, %c0_i32_0 : i32, i32
  }
  func.func @transform_5(%arg0: i32) -> (i32, i32) {
    %c0_i32 = arith.constant 0 : i32
    %c0_i32_0 = arith.constant 0 : i32
    %c0_i32_1 = arith.constant 0 : i32
    return %c0_i32, %c0_i32_0 : i32, i32
  }
  func.func @transform_6(%arg0: i32) -> (i32, i32, i32) {
    %c0_i32 = arith.constant 0 : i32
    %c0_i32_0 = arith.constant 0 : i32
    %c0_i32_1 = arith.constant 0 : i32
    %c0_i32_2 = arith.constant 0 : i32
    return %c0_i32, %c0_i32_0, %c0_i32_1 : i32, i32, i32
  }
  func.func @transform_7(%arg0: i32) -> (i32, i32, i32) {
    %c0_i32 = arith.constant 0 : i32
    %c0_i32_0 = arith.constant 0 : i32
    %c0_i32_1 = arith.constant 0 : i32
    %c0_i32_2 = arith.constant 0 : i32
    return %c0_i32, %c0_i32_0, %c0_i32_1 : i32, i32, i32
  }
  func.func @transform_8(%arg0: i32) -> (i32, i32, i32) {
    %c0_i32 = arith.constant 0 : i32
    %c0_i32_0 = arith.constant 0 : i32
    %c0_i32_1 = arith.constant 0 : i32
    %c0_i32_2 = arith.constant 0 : i32
    return %c0_i32, %c0_i32_0, %c0_i32_1 : i32, i32, i32
  }
  func.func @transform_9(%arg0: i32) -> (i32, i32, i32) {
    %c0_i32 = arith.constant 0 : i32
    %c0_i32_0 = arith.constant 0 : i32
    %c0_i32_1 = arith.constant 0 : i32
    %c0_i32_2 = arith.constant 0 : i32
    return %c0_i32, %c0_i32_0, %c0_i32_1 : i32, i32, i32
  }
  func.func @transform_10(%arg0: i32) -> (i32, i32, i32) {
    %c0_i32 = arith.constant 0 : i32
    %c0_i32_0 = arith.constant 0 : i32
    %c0_i32_1 = arith.constant 0 : i32
    %c0_i32_2 = arith.constant 0 : i32
    return %c0_i32, %c0_i32_0, %c0_i32_1 : i32, i32, i32
  }
  func.func @transform_11(%arg0: i32) -> (i32, i32, i32) {
    %c0_i32 = arith.constant 0 : i32
    %c0_i32_0 = arith.constant 0 : i32
    %c0_i32_1 = arith.constant 0 : i32
    %c0_i32_2 = arith.constant 0 : i32
    return %c0_i32, %c0_i32_0, %c0_i32_1 : i32, i32, i32
  }
  func.func @transform_12(%arg0: i32) -> (i32, i32, i32) {
    %c0_i32 = arith.constant 0 : i32
    %c0_i32_0 = arith.constant 0 : i32
    %c0_i32_1 = arith.constant 0 : i32
    %c0_i32_2 = arith.constant 0 : i32
    return %c0_i32, %c0_i32_0, %c0_i32_1 : i32, i32, i32
  }
  func.func @transform_13(%arg0: i32) -> (i32, i32, i32) {
    %c0_i32 = arith.constant 0 : i32
    %c0_i32_0 = arith.constant 0 : i32
    %c0_i32_1 = arith.constant 0 : i32
    %c0_i32_2 = arith.constant 0 : i32
    return %c0_i32, %c0_i32_0, %c0_i32_1 : i32, i32, i32
  }
  func.func @transform_14(%arg0: i32) -> (i32, i32, i32) {
    %c0_i32 = arith.constant 0 : i32
    %c0_i32_0 = arith.constant 0 : i32
    %c0_i32_1 = arith.constant 0 : i32
    %c0_i32_2 = arith.constant 0 : i32
    return %c0_i32, %c0_i32_0, %c0_i32_1 : i32, i32, i32
  }
  func.func @transform_15(%arg0: i32) -> (i32, i32, i32) {
    %c0_i32 = arith.constant 0 : i32
    %c0_i32_0 = arith.constant 0 : i32
    %c0_i32_1 = arith.constant 0 : i32
    %c0_i32_2 = arith.constant 0 : i32
    return %c0_i32, %c0_i32_0, %c0_i32_1 : i32, i32, i32
  }
  func.func @transform_16(%arg0: i32) -> (i32, i32, i32) {
    %c0_i32 = arith.constant 0 : i32
    %c0_i32_0 = arith.constant 0 : i32
    %c0_i32_1 = arith.constant 0 : i32
    %c0_i32_2 = arith.constant 0 : i32
    return %c0_i32, %c0_i32_0, %c0_i32_1 : i32, i32, i32
  }
  func.func @transform_17(%arg0: i32) -> (i32, i32, i32) {
    %c0_i32 = arith.constant 0 : i32
    %c0_i32_0 = arith.constant 0 : i32
    %c0_i32_1 = arith.constant 0 : i32
    %c0_i32_2 = arith.constant 0 : i32
    return %c0_i32, %c0_i32_0, %c0_i32_1 : i32, i32, i32
  }
  func.func @transform_18(%arg0: i32) -> (i32, i32, i32) {
    %c0_i32 = arith.constant 0 : i32
    %c0_i32_0 = arith.constant 0 : i32
    %c0_i32_1 = arith.constant 0 : i32
    return %arg0, %c0_i32, %c0_i32_0 : i32, i32, i32
  }
}

</mosaic_0001>

<llo_original>
// kernel: vision_tower_s2_forward.1
$region0: #{vision_tower_s2_forward.1}
  #allocation0 [shape = 'u32[]', space=smem, size = 0x4, offset = 0x4, fixed_abs, tag = 'smem constant byte address 0x4 - core index']
  #allocation1 [shape = 'u32[144,128]{1,0:T(1,128)}', space=vmem, size = 0x12000, scoped, tag = 'internal scratch']
  %s0 = inlined_call_operand.vmem [shape: f32[2,120,48], index: 0, kind: input, shape index: {}]
  %s1 = inlined_call_operand.vmem [shape: f32[120,32], index: 1, kind: input, shape index: {}]
  %s2 = inlined_call_operand.vmem [shape: f32[120,120], index: 2, kind: input, shape index: {}]
  %s3 = inlined_call_operand.vmem [shape: f32[48,32], index: 3, kind: input, shape index: {}]
  %s4 = inlined_call_operand.vmem [shape: f32[1,32], index: 4, kind: input, shape index: {}]
  %s5 = inlined_call_operand.vmem [shape: f32[1,32], index: 5, kind: input, shape index: {}]
  %s6 = inlined_call_operand.vmem [shape: f32[2,1,32], index: 6, kind: input, shape index: {}]
  %s7 = inlined_call_operand.vmem [shape: f32[2,1,32], index: 7, kind: input, shape index: {}]
  %s8 = inlined_call_operand.vmem [shape: f32[2,32,96], index: 8, kind: input, shape index: {}]
  %s9 = inlined_call_operand.vmem [shape: f32[2,1,96], index: 9, kind: input, shape index: {}]
  %s10 = inlined_call_operand.vmem [shape: f32[2,32,32], index: 10, kind: input, shape index: {}]
  %s11 = inlined_call_operand.vmem [shape: f32[2,1,32], index: 11, kind: input, shape index: {}]
  %s12 = inlined_call_operand.vmem [shape: f32[2,1,32], index: 12, kind: input, shape index: {}]
  %s13 = inlined_call_operand.vmem [shape: f32[2,1,32], index: 13, kind: input, shape index: {}]
  %s14 = inlined_call_operand.vmem [shape: f32[2,32,64], index: 14, kind: input, shape index: {}]
  %s15 = inlined_call_operand.vmem [shape: f32[2,1,64], index: 15, kind: input, shape index: {}]
  %s16 = inlined_call_operand.vmem [shape: f32[2,64,32], index: 16, kind: input, shape index: {}]
  %s17 = inlined_call_operand.vmem [shape: f32[2,1,32], index: 17, kind: input, shape index: {}]
  %s18 = inlined_call_operand.vmem [shape: f32[2,120,32], index: 18, kind: output, shape index: {}]
  %s19 = sld [smem:[#allocation0]]
  $region105: #{vision_tower_s2_forward.1} parent=0
    _
  %s21 = ssub.s32 1, %s19
  %s22 = scalar_select 0, %s21, %s19
  loop: start=0, step=1, limit=4
  $region2: #{vision_tower_s2_forward.1} parent=0 // loop_pre_header
    _
  $region3: #{vision_tower_s2_forward.1} parent=0 // loop_header
    %s24 = sphi 0, %s28
    %p25 = scmp.ge.s32.totalorder %s24, 4
    %s34 = sphi 0, %s36
    %s37 = sphi 0, %s34
    %s38 = sphi 0, %s37
    %s54 = sphi 0, %s38
    %s58 = sphi 0, %s58
    %s60 = sphi 0, %s58
    %s61 = sphi 0, %s60
    %s75 = sphi 0, %s61
    %s79 = sphi 0, %s79
    %s81 = sphi 0, %s79
    %s82 = sphi 0, %s81
    %s96 = sphi 0, %s82
    %s100 = sphi 0, %s100
    %s102 = sphi 0, %s100
    %s103 = sphi 0, %s102
    %s117 = sphi 0, %s103
    %s121 = sphi 0, %s121
    %s123 = sphi 0, %s121
    %s124 = sphi 0, %s123
    %s138 = sphi 0, %s124
    %s142 = sphi 0, %s142
    %s144 = sphi 0, %s142
    %s145 = sphi 0, %s144
    %s159 = sphi 0, %s145
    %s163 = sphi 0, %s163
    %s165 = sphi 0, %s163
    %s166 = sphi 0, %s165
    %s180 = sphi 0, %s166
    %s184 = sphi 0, %s184
    %s186 = sphi 0, %s184
    %s187 = sphi 0, %s186
    %s201 = sphi 0, %s187
    %s205 = sphi 0, %s205
    %s207 = sphi 0, %s205
    %s208 = sphi 0, %s207
    %s222 = sphi 0, %s208
    %s226 = sphi 0, %s226
    %s228 = sphi 0, %s226
    %s229 = sphi 0, %s228
    %s243 = sphi 0, %s229
    %s247 = sphi 0, %s247
    %s249 = sphi 0, %s247
    %s250 = sphi 0, %s249
    %s264 = sphi 0, %s250
    %s268 = sphi 0, %s268
    %s270 = sphi 0, %s268
    %s271 = sphi 0, %s270
    %s285 = sphi 0, %s271
    %s289 = sphi 0, %s289
    %s291 = sphi 0, %s289
    %s292 = sphi 0, %s291
    %s306 = sphi 0, %s292
    %s310 = sphi 0, %s310
    %s312 = sphi 0, %s310
    %s313 = sphi 0, %s312
    %s327 = sphi 0, %s313
    %s331 = sphi 0, %s331
    %s333 = sphi 0, %s331
    %s334 = sphi 0, %s333
    %s348 = sphi 0, %s334
    %s352 = sphi 0, %s352
    %s354 = sphi 0, %s352
    %s355 = sphi 0, %s354
    %s369 = sphi 0, %s355
    %s373 = sphi 0, %s373
    %s375 = sphi 0, %s373
    %s376 = sphi 0, %s375
    %s390 = sphi 0, %s376
    %s394 = sphi 0, %s394
    %s396 = sphi 0, %s394
    %s397 = sphi 0, %s396
    %s411 = sphi 0, %s397
    %s417 = sphi 0, %s419
    %s420 = sphi 0, %s417
    %s421 = sphi 0, %s420
    %s437 = sphi 0, %s421
  $region4: #{vision_tower_s2_forward.1} parent=0 // loop_header_branch
    %27 = sbr.rel (%p25) target = $region8
  $region5: #{vision_tower_s2_forward.1} parent=0 // loop_body
    %s29 = ssub.s32 %s24, 1
    %s30 = ssub.s32 %s24, 2
    %s31 = sadd.s32 %s24, 1
    %s32 = ssub.s32 %s24, %s31
    %p33 = scmp.eq.s32.totalorder %s32, 0
    %s35 = sadd.s32 %s34, 1
    %s36 = scalar_select %p33, %s34, %s35
    %p39 = pneg %p33
    %p40 = scmp.eq.s32.totalorder %s24, 1
    %p41 = por %p39, %p40
    %p42 = scmp.ne.s32.totalorder %s34, %s37
    %p43 = scmp.eq.s32.totalorder %s24, 0
    %p44 = por %p42, %p43
    %p45 = scmp.ne.s32.totalorder %s34, %s37
    %p46 = scmp.eq.s32.totalorder %s29, 1
    %p47 = por %p45, %p46
    %p48 = scmp.ne.s32.totalorder %s37, %s38
    %p49 = scmp.eq.s32.totalorder %s29, 0
    %p50 = por %p48, %p49
    %p51 = scmp.ne.s32.totalorder %s37, %s38
    %p52 = scmp.eq.s32.totalorder %s30, 1
    %p53 = por %p51, %p52
    %p55 = scmp.ne.s32.totalorder %s38, %s54
    %p56 = scmp.eq.s32.totalorder %s30, 0
    %p57 = por %p55, %p56
    %s59 = sadd.s32 %s58, 1
    %p62 = scmp.eq.s32.totalorder %s24, 1
    %p63 = scmp.ne.s32.totalorder %s58, %s60
    %p64 = scmp.eq.s32.totalorder %s24, 0
    %p65 = por %p63, %p64
    %p66 = scmp.ne.s32.totalorder %s58, %s60
    %p67 = scmp.eq.s32.totalorder %s29, 1
    %p68 = por %p66, %p67
    %p69 = scmp.ne.s32.totalorder %s60, %s61
    %p70 = scmp.eq.s32.totalorder %s29, 0
    %p71 = por %p69, %p70
    %p72 = scmp.ne.s32.totalorder %s60, %s61
    %p73 = scmp.eq.s32.totalorder %s30, 1
    %p74 = por %p72, %p73
    %p76 = scmp.ne.s32.totalorder %s61, %s75
    %p77 = scmp.eq.s32.totalorder %s30, 0
    %p78 = por %p76, %p77
    %s80 = sadd.s32 %s79, 1
    %p83 = scmp.eq.s32.totalorder %s24, 1
    %p84 = scmp.ne.s32.totalorder %s79, %s81
    %p85 = scmp.eq.s32.totalorder %s24, 0
    %p86 = por %p84, %p85
    %p87 = scmp.ne.s32.totalorder %s79, %s81
    %p88 = scmp.eq.s32.totalorder %s29, 1
    %p89 = por %p87, %p88
    %p90 = scmp.ne.s32.totalorder %s81, %s82
    %p91 = scmp.eq.s32.totalorder %s29, 0
    %p92 = por %p90, %p91
    %p93 = scmp.ne.s32.totalorder %s81, %s82
    %p94 = scmp.eq.s32.totalorder %s30, 1
    %p95 = por %p93, %p94
    %p97 = scmp.ne.s32.totalorder %s82, %s96
    %p98 = scmp.eq.s32.totalorder %s30, 0
    %p99 = por %p97, %p98
    %s101 = sadd.s32 %s100, 1
    %p104 = scmp.eq.s32.totalorder %s24, 1
    %p105 = scmp.ne.s32.totalorder %s100, %s102
    %p106 = scmp.eq.s32.totalorder %s24, 0
    %p107 = por %p105, %p106
    %p108 = scmp.ne.s32.totalorder %s100, %s102
    %p109 = scmp.eq.s32.totalorder %s29, 1
    %p110 = por %p108, %p109
    %p111 = scmp.ne.s32.totalorder %s102, %s103
    %p112 = scmp.eq.s32.totalorder %s29, 0
    %p113 = por %p111, %p112
    %p114 = scmp.ne.s32.totalorder %s102, %s103
    %p115 = scmp.eq.s32.totalorder %s30, 1
    %p116 = por %p114, %p115
    %p118 = scmp.ne.s32.totalorder %s103, %s117
    %p119 = scmp.eq.s32.totalorder %s30, 0
    %p120 = por %p118, %p119
    %s122 = sadd.s32 %s121, 1
    %p125 = scmp.eq.s32.totalorder %s24, 1
    %p126 = scmp.ne.s32.totalorder %s121, %s123
    %p127 = scmp.eq.s32.totalorder %s24, 0
    %p128 = por %p126, %p127
    %p129 = scmp.ne.s32.totalorder %s121, %s123
    %p130 = scmp.eq.s32.totalorder %s29, 1
    %p131 = por %p129, %p130
    %p132 = scmp.ne.s32.totalorder %s123, %s124
    %p133 = scmp.eq.s32.totalorder %s29, 0
    %p134 = por %p132, %p133
    %p135 = scmp.ne.s32.totalorder %s123, %s124
    %p136 = scmp.eq.s32.totalorder %s30, 1
    %p137 = por %p135, %p136
    %p139 = scmp.ne.s32.totalorder %s124, %s138
    %p140 = scmp.eq.s32.totalorder %s30, 0
    %p141 = por %p139, %p140
    %s143 = sadd.s32 %s142, 1
    %p146 = scmp.eq.s32.totalorder %s24, 1
    %p147 = scmp.ne.s32.totalorder %s142, %s144
    %p148 = scmp.eq.s32.totalorder %s24, 0
    %p149 = por %p147, %p148
    %p150 = scmp.ne.s32.totalorder %s142, %s144
    %p151 = scmp.eq.s32.totalorder %s29, 1
    %p152 = por %p150, %p151
    %p153 = scmp.ne.s32.totalorder %s144, %s145
    %p154 = scmp.eq.s32.totalorder %s29, 0
    %p155 = por %p153, %p154
    %p156 = scmp.ne.s32.totalorder %s144, %s145
    %p157 = scmp.eq.s32.totalorder %s30, 1
    %p158 = por %p156, %p157
    %p160 = scmp.ne.s32.totalorder %s145, %s159
    %p161 = scmp.eq.s32.totalorder %s30, 0
    %p162 = por %p160, %p161
    %s164 = sadd.s32 %s163, 1
    %p167 = scmp.eq.s32.totalorder %s24, 1
    %p168 = scmp.ne.s32.totalorder %s163, %s165
    %p169 = scmp.eq.s32.totalorder %s24, 0
    %p170 = por %p168, %p169
    %p171 = scmp.ne.s32.totalorder %s163, %s165
    %p172 = scmp.eq.s32.totalorder %s29, 1
    %p173 = por %p171, %p172
    %p174 = scmp.ne.s32.totalorder %s165, %s166
    %p175 = scmp.eq.s32.totalorder %s29, 0
    %p176 = por %p174, %p175
    %p177 = scmp.ne.s32.totalorder %s165, %s166
    %p178 = scmp.eq.s32.totalorder %s30, 1
    %p179 = por %p177, %p178
    %p181 = scmp.ne.s32.totalorder %s166, %s180
    %p182 = scmp.eq.s32.totalorder %s30, 0
    %p183 = por %p181, %p182
    %s185 = sadd.s32 %s184, 1
    %p188 = scmp.eq.s32.totalorder %s24, 1
    %p189 = scmp.ne.s32.totalorder %s184, %s186
    %p190 = scmp.eq.s32.totalorder %s24, 0
    %p191 = por %p189, %p190
    %p192 = scmp.ne.s32.totalorder %s184, %s186
    %p193 = scmp.eq.s32.totalorder %s29, 1
    %p194 = por %p192, %p193
    %p195 = scmp.ne.s32.totalorder %s186, %s187
    %p196 = scmp.eq.s32.totalorder %s29, 0
    %p197 = por %p195, %p196
    %p198 = scmp.ne.s32.totalorder %s186, %s187
    %p199 = scmp.eq.s32.totalorder %s30, 1
    %p200 = por %p198, %p199
    %p202 = scmp.ne.s32.totalorder %s187, %s201
    %p203 = scmp.eq.s32.totalorder %s30, 0
    %p204 = por %p202, %p203
    %s206 = sadd.s32 %s205, 1
    %p209 = scmp.eq.s32.totalorder %s24, 1
    %p210 = scmp.ne.s32.totalorder %s205, %s207
    %p211 = scmp.eq.s32.totalorder %s24, 0
    %p212 = por %p210, %p211
    %p213 = scmp.ne.s32.totalorder %s205, %s207
    %p214 = scmp.eq.s32.totalorder %s29, 1
    %p215 = por %p213, %p214
    %p216 = scmp.ne.s32.totalorder %s207, %s208
    %p217 = scmp.eq.s32.totalorder %s29, 0
    %p218 = por %p216, %p217
    %p219 = scmp.ne.s32.totalorder %s207, %s208
    %p220 = scmp.eq.s32.totalorder %s30, 1
    %p221 = por %p219, %p220
    %p223 = scmp.ne.s32.totalorder %s208, %s222
    %p224 = scmp.eq.s32.totalorder %s30, 0
    %p225 = por %p223, %p224
    %s227 = sadd.s32 %s226, 1
    %p230 = scmp.eq.s32.totalorder %s24, 1
    %p231 = scmp.ne.s32.totalorder %s226, %s228
    %p232 = scmp.eq.s32.totalorder %s24, 0
    %p233 = por %p231, %p232
    %p234 = scmp.ne.s32.totalorder %s226, %s228
    %p235 = scmp.eq.s32.totalorder %s29, 1
    %p236 = por %p234, %p235
    %p237 = scmp.ne.s32.totalorder %s228, %s229
    %p238 = scmp.eq.s32.totalorder %s29, 0
    %p239 = por %p237, %p238
    %p240 = scmp.ne.s32.totalorder %s228, %s229
    %p241 = scmp.eq.s32.totalorder %s30, 1
    %p242 = por %p240, %p241
    %p244 = scmp.ne.s32.totalorder %s229, %s243
    %p245 = scmp.eq.s32.totalorder %s30, 0
    %p246 = por %p244, %p245
    %s248 = sadd.s32 %s247, 1
    %p251 = scmp.eq.s32.totalorder %s24, 1
    %p252 = scmp.ne.s32.totalorder %s247, %s249
    %p253 = scmp.eq.s32.totalorder %s24, 0
    %p254 = por %p252, %p253
    %p255 = scmp.ne.s32.totalorder %s247, %s249
    %p256 = scmp.eq.s32.totalorder %s29, 1
    %p257 = por %p255, %p256
    %p258 = scmp.ne.s32.totalorder %s249, %s250
    %p259 = scmp.eq.s32.totalorder %s29, 0
    %p260 = por %p258, %p259
    %p261 = scmp.ne.s32.totalorder %s249, %s250
    %p262 = scmp.eq.s32.totalorder %s30, 1
    %p263 = por %p261, %p262
    %p265 = scmp.ne.s32.totalorder %s250, %s264
    %p266 = scmp.eq.s32.totalorder %s30, 0
    %p267 = por %p265, %p266
    %s269 = sadd.s32 %s268, 1
    %p272 = scmp.eq.s32.totalorder %s24, 1
    %p273 = scmp.ne.s32.totalorder %s268, %s270
    %p274 = scmp.eq.s32.totalorder %s24, 0
    %p275 = por %p273, %p274
    %p276 = scmp.ne.s32.totalorder %s268, %s270
    %p277 = scmp.eq.s32.totalorder %s29, 1
    %p278 = por %p276, %p277
    %p279 = scmp.ne.s32.totalorder %s270, %s271
    %p280 = scmp.eq.s32.totalorder %s29, 0
    %p281 = por %p279, %p280
    %p282 = scmp.ne.s32.totalorder %s270, %s271
    %p283 = scmp.eq.s32.totalorder %s30, 1
    %p284 = por %p282, %p283
    %p286 = scmp.ne.s32.totalorder %s271, %s285
    %p287 = scmp.eq.s32.totalorder %s30, 0
    %p288 = por %p286, %p287
    %s290 = sadd.s32 %s289, 1
    %p293 = scmp.eq.s32.totalorder %s24, 1
    %p294 = scmp.ne.s32.totalorder %s289, %s291
    %p295 = scmp.eq.s32.totalorder %s24, 0
    %p296 = por %p294, %p295
    %p297 = scmp.ne.s32.totalorder %s289, %s291
    %p298 = scmp.eq.s32.totalorder %s29, 1
    %p299 = por %p297, %p298
    %p300 = scmp.ne.s32.totalorder %s291, %s292
    %p301 = scmp.eq.s32.totalorder %s29, 0
    %p302 = por %p300, %p301
    %p303 = scmp.ne.s32.totalorder %s291, %s292
    %p304 = scmp.eq.s32.totalorder %s30, 1
    %p305 = por %p303, %p304
    %p307 = scmp.ne.s32.totalorder %s292, %s306
    %p308 = scmp.eq.s32.totalorder %s30, 0
    %p309 = por %p307, %p308
    %s311 = sadd.s32 %s310, 1
    %p314 = scmp.eq.s32.totalorder %s24, 1
    %p315 = scmp.ne.s32.totalorder %s310, %s312
    %p316 = scmp.eq.s32.totalorder %s24, 0
    %p317 = por %p315, %p316
    %p318 = scmp.ne.s32.totalorder %s310, %s312
    %p319 = scmp.eq.s32.totalorder %s29, 1
    %p320 = por %p318, %p319
    %p321 = scmp.ne.s32.totalorder %s312, %s313
    %p322 = scmp.eq.s32.totalorder %s29, 0
    %p323 = por %p321, %p322
    %p324 = scmp.ne.s32.totalorder %s312, %s313
    %p325 = scmp.eq.s32.totalorder %s30, 1
    %p326 = por %p324, %p325
    %p328 = scmp.ne.s32.totalorder %s313, %s327
    %p329 = scmp.eq.s32.totalorder %s30, 0
    %p330 = por %p328, %p329
    %s332 = sadd.s32 %s331, 1
    %p335 = scmp.eq.s32.totalorder %s24, 1
    %p336 = scmp.ne.s32.totalorder %s331, %s333
    %p337 = scmp.eq.s32.totalorder %s24, 0
    %p338 = por %p336, %p337
    %p339 = scmp.ne.s32.totalorder %s331, %s333
    %p340 = scmp.eq.s32.totalorder %s29, 1
    %p341 = por %p339, %p340
    %p342 = scmp.ne.s32.totalorder %s333, %s334
    %p343 = scmp.eq.s32.totalorder %s29, 0
    %p344 = por %p342, %p343
    %p345 = scmp.ne.s32.totalorder %s333, %s334
    %p346 = scmp.eq.s32.totalorder %s30, 1
    %p347 = por %p345, %p346
    %p349 = scmp.ne.s32.totalorder %s334, %s348
    %p350 = scmp.eq.s32.totalorder %s30, 0
    %p351 = por %p349, %p350
    %s353 = sadd.s32 %s352, 1
    %p356 = scmp.eq.s32.totalorder %s24, 1
    %p357 = scmp.ne.s32.totalorder %s352, %s354
    %p358 = scmp.eq.s32.totalorder %s24, 0
    %p359 = por %p357, %p358
    %p360 = scmp.ne.s32.totalorder %s352, %s354
    %p361 = scmp.eq.s32.totalorder %s29, 1
    %p362 = por %p360, %p361
    %p363 = scmp.ne.s32.totalorder %s354, %s355
    %p364 = scmp.eq.s32.totalorder %s29, 0
    %p365 = por %p363, %p364
    %p366 = scmp.ne.s32.totalorder %s354, %s355
    %p367 = scmp.eq.s32.totalorder %s30, 1
    %p368 = por %p366, %p367
    %p370 = scmp.ne.s32.totalorder %s355, %s369
    %p371 = scmp.eq.s32.totalorder %s30, 0
    %p372 = por %p370, %p371
    %s374 = sadd.s32 %s373, 1
    %p377 = scmp.eq.s32.totalorder %s24, 1
    %p378 = scmp.ne.s32.totalorder %s373, %s375
    %p379 = scmp.eq.s32.totalorder %s24, 0
    %p380 = por %p378, %p379
    %p381 = scmp.ne.s32.totalorder %s373, %s375
    %p382 = scmp.eq.s32.totalorder %s29, 1
    %p383 = por %p381, %p382
    %p384 = scmp.ne.s32.totalorder %s375, %s376
    %p385 = scmp.eq.s32.totalorder %s29, 0
    %p386 = por %p384, %p385
    %p387 = scmp.ne.s32.totalorder %s375, %s376
    %p388 = scmp.eq.s32.totalorder %s30, 1
    %p389 = por %p387, %p388
    %p391 = scmp.ne.s32.totalorder %s376, %s390
    %p392 = scmp.eq.s32.totalorder %s30, 0
    %p393 = por %p391, %p392
    %s395 = sadd.s32 %s394, 1
    %p398 = scmp.eq.s32.totalorder %s24, 1
    %p399 = scmp.ne.s32.totalorder %s394, %s396
    %p400 = scmp.eq.s32.totalorder %s24, 0
    %p401 = por %p399, %p400
    %p402 = scmp.ne.s32.totalorder %s394, %s396
    %p403 = scmp.eq.s32.totalorder %s29, 1
    %p404 = por %p402, %p403
    %p405 = scmp.ne.s32.totalorder %s396, %s397
    %p406 = scmp.eq.s32.totalorder %s29, 0
    %p407 = por %p405, %p406
    %p408 = scmp.ne.s32.totalorder %s396, %s397
    %p409 = scmp.eq.s32.totalorder %s30, 1
    %p410 = por %p408, %p409
    %p412 = scmp.ne.s32.totalorder %s397, %s411
    %p413 = scmp.eq.s32.totalorder %s30, 0
    %p414 = por %p412, %p413
    %s415 = ssub.s32 %s24, %s31
    %p416 = scmp.eq.s32.totalorder %s415, 0
    %s418 = sadd.s32 %s417, 1
    %s419 = scalar_select %p416, %s417, %s418
    %p422 = pneg %p416
    %p423 = scmp.eq.s32.totalorder %s24, 1
    %p424 = por %p422, %p423
    %p425 = scmp.ne.s32.totalorder %s417, %s420
    %p426 = scmp.eq.s32.totalorder %s24, 0
    %p427 = por %p425, %p426
    %p428 = scmp.ne.s32.totalorder %s417, %s420
    %p429 = scmp.eq.s32.totalorder %s29, 1
    %p430 = por %p428, %p429
    %p431 = scmp.ne.s32.totalorder %s420, %s421
    %p432 = scmp.eq.s32.totalorder %s29, 0
    %p433 = por %p431, %p432
    %p434 = scmp.ne.s32.totalorder %s420, %s421
    %p435 = scmp.eq.s32.totalorder %s30, 1
    %p436 = por %p434, %p435
    %p438 = scmp.ne.s32.totalorder %s421, %s437
    %p439 = scmp.eq.s32.totalorder %s30, 0
    %p440 = por %p438, %p439
    %p441 = scmp.le.s32.totalorder 1, %s24
    %p442 = scmp.lt.s32.totalorder %s24, 3
    %p443 = pnand %p441, %p442
    %p444 = pneg %p443
    // Predicated region
    $region9: #{vision_tower_s2_forward.1} parent=5 // pred_check
      _
    $region10: #{vision_tower_s2_forward.1} parent=5 // pred_check_branch
      %446 = sbr.rel (%p443) target = $region12
    $region11: #{vision_tower_s2_forward.1} parent=5 // pred_region
      %s447 = ssub.s32 %s24, 1
      // Predicated region
      $region13: #{vision_tower_s2_forward.1} parent=11 // pred_check
        %p448 = pneg %p71
      $region14: #{vision_tower_s2_forward.1} parent=11 // pred_check_branch
        %450 = sbr.rel (%p448) target = $region16
      $region15: #{vision_tower_s2_forward.1} parent=11 // pred_region
        _
      $region16: #{vision_tower_s2_forward.1} parent=11 // pred_fallthru
        _
      // Predicated region
      $region17: #{vision_tower_s2_forward.1} parent=11 // pred_check
        %p451 = pneg %p92
      $region18: #{vision_tower_s2_forward.1} parent=11 // pred_check_branch
        %453 = sbr.rel (%p451) target = $region20
      $region19: #{vision_tower_s2_forward.1} parent=11 // pred_region
        _
      $region20: #{vision_tower_s2_forward.1} parent=11 // pred_fallthru
        _
      // Predicated region
      $region21: #{vision_tower_s2_forward.1} parent=11 // pred_check
        %p454 = pneg %p113
      $region22: #{vision_tower_s2_forward.1} parent=11 // pred_check_branch
        %456 = sbr.rel (%p454) target = $region24
      $region23: #{vision_tower_s2_forward.1} parent=11 // pred_region
        _
      $region24: #{vision_tower_s2_forward.1} parent=11 // pred_fallthru
        _
      // Predicated region
      $region25: #{vision_tower_s2_forward.1} parent=11 // pred_check
        %p457 = pneg %p134
      $region26: #{vision_tower_s2_forward.1} parent=11 // pred_check_branch
        %459 = sbr.rel (%p457) target = $region28
      $region27: #{vision_tower_s2_forward.1} parent=11 // pred_region
        _
      $region28: #{vision_tower_s2_forward.1} parent=11 // pred_fallthru
        _
      // Predicated region
      $region29: #{vision_tower_s2_forward.1} parent=11 // pred_check
        %p460 = pneg %p155
      $region30: #{vision_tower_s2_forward.1} parent=11 // pred_check_branch
        %462 = sbr.rel (%p460) target = $region32
      $region31: #{vision_tower_s2_forward.1} parent=11 // pred_region
        _
      $region32: #{vision_tower_s2_forward.1} parent=11 // pred_fallthru
        _
      // Predicated region
      $region33: #{vision_tower_s2_forward.1} parent=11 // pred_check
        %p463 = pneg %p176
      $region34: #{vision_tower_s2_forward.1} parent=11 // pred_check_branch
        %465 = sbr.rel (%p463) target = $region36
      $region35: #{vision_tower_s2_forward.1} parent=11 // pred_region
        _
      $region36: #{vision_tower_s2_forward.1} parent=11 // pred_fallthru
        _
      // Predicated region
      $region37: #{vision_tower_s2_forward.1} parent=11 // pred_check
        %p466 = pneg %p197
      $region38: #{vision_tower_s2_forward.1} parent=11 // pred_check_branch
        %468 = sbr.rel (%p466) target = $region40
      $region39: #{vision_tower_s2_forward.1} parent=11 // pred_region
        _
      $region40: #{vision_tower_s2_forward.1} parent=11 // pred_fallthru
        _
      // Predicated region
      $region41: #{vision_tower_s2_forward.1} parent=11 // pred_check
        %p469 = pneg %p218
      $region42: #{vision_tower_s2_forward.1} parent=11 // pred_check_branch
        %471 = sbr.rel (%p469) target = $region44
      $region43: #{vision_tower_s2_forward.1} parent=11 // pred_region
        _
      $region44: #{vision_tower_s2_forward.1} parent=11 // pred_fallthru
        _
      // Predicated region
      $region45: #{vision_tower_s2_forward.1} parent=11 // pred_check
        %p472 = pneg %p239
      $region46: #{vision_tower_s2_forward.1} parent=11 // pred_check_branch
        %474 = sbr.rel (%p472) target = $region48
      $region47: #{vision_tower_s2_forward.1} parent=11 // pred_region
        _
      $region48: #{vision_tower_s2_forward.1} parent=11 // pred_fallthru
        _
      // Predicated region
      $region49: #{vision_tower_s2_forward.1} parent=11 // pred_check
        %p475 = pneg %p260
      $region50: #{vision_tower_s2_forward.1} parent=11 // pred_check_branch
        %477 = sbr.rel (%p475) target = $region52
      $region51: #{vision_tower_s2_forward.1} parent=11 // pred_region
        _
      $region52: #{vision_tower_s2_forward.1} parent=11 // pred_fallthru
        _
      // Predicated region
      $region53: #{vision_tower_s2_forward.1} parent=11 // pred_check
        %p478 = pneg %p281
      $region54: #{vision_tower_s2_forward.1} parent=11 // pred_check_branch
        %480 = sbr.rel (%p478) target = $region56
      $region55: #{vision_tower_s2_forward.1} parent=11 // pred_region
        _
      $region56: #{vision_tower_s2_forward.1} parent=11 // pred_fallthru
        _
      // Predicated region
      $region57: #{vision_tower_s2_forward.1} parent=11 // pred_check
        %p481 = pneg %p302
      $region58: #{vision_tower_s2_forward.1} parent=11 // pred_check_branch
        %483 = sbr.rel (%p481) target = $region60
      $region59: #{vision_tower_s2_forward.1} parent=11 // pred_region
        _
      $region60: #{vision_tower_s2_forward.1} parent=11 // pred_fallthru
        _
      // Predicated region
      $region61: #{vision_tower_s2_forward.1} parent=11 // pred_check
        %p484 = pneg %p323
      $region62: #{vision_tower_s2_forward.1} parent=11 // pred_check_branch
        %486 = sbr.rel (%p484) target = $region64
      $region63: #{vision_tower_s2_forward.1} parent=11 // pred_region
        _
      $region64: #{vision_tower_s2_forward.1} parent=11 // pred_fallthru
        _
      // Predicated region
      $region65: #{vision_tower_s2_forward.1} parent=11 // pred_check
        %p487 = pneg %p344
      $region66: #{vision_tower_s2_forward.1} parent=11 // pred_check_branch
        %489 = sbr.rel (%p487) target = $region68
      $region67: #{vision_tower_s2_forward.1} parent=11 // pred_region
        _
      $region68: #{vision_tower_s2_forward.1} parent=11 // pred_fallthru
        _
      // Predicated region
      $region69: #{vision_tower_s2_forward.1} parent=11 // pred_check
        %p490 = pneg %p365
      $region70: #{vision_tower_s2_forward.1} parent=11 // pred_check_branch
        %492 = sbr.rel (%p490) target = $region72
      $region71: #{vision_tower_s2_forward.1} parent=11 // pred_region
        _
      $region72: #{vision_tower_s2_forward.1} parent=11 // pred_fallthru
        _
      // Predicated region
      $region73: #{vision_tower_s2_forward.1} parent=11 // pred_check
        %p493 = pneg %p386
      $region74: #{vision_tower_s2_forward.1} parent=11 // pred_check_branch
        %495 = sbr.rel (%p493) target = $region76
      $region75: #{vision_tower_s2_forward.1} parent=11 // pred_region
        _
      $region76: #{vision_tower_s2_forward.1} parent=11 // pred_fallthru
        _
      // Predicated region
      $region77: #{vision_tower_s2_forward.1} parent=11 // pred_check
        %p496 = pneg %p407
      $region78: #{vision_tower_s2_forward.1} parent=11 // pred_check_branch
        %498 = sbr.rel (%p496) target = $region80
      $region79: #{vision_tower_s2_forward.1} parent=11 // pred_region
        _
      $region80: #{vision_tower_s2_forward.1} parent=11 // pred_fallthru
        _
    $region12: #{vision_tower_s2_forward.1} parent=5 // pred_fallthru
      _
    %p499 = scmp.lt.s32.totalorder %s24, 2
    // Predicated region
    $region81: #{vision_tower_s2_forward.1} parent=5 // pred_check
      %p500 = pneg %p499
    $region82: #{vision_tower_s2_forward.1} parent=5 // pred_check_branch
      %502 = sbr.rel (%p500) target = $region84
    $region83: #{vision_tower_s2_forward.1} parent=5 // pred_region
      // Predicated region
      $region85: #{vision_tower_s2_forward.1} parent=83 // pred_check
        %p503 = pneg %p44
      $region86: #{vision_tower_s2_forward.1} parent=83 // pred_check_branch
        %505 = sbr.rel (%p503) target = $region88
      $region87: #{vision_tower_s2_forward.1} parent=83 // pred_region
        %p506 = scmp.lt.s32.totalorder %s24, 1
        %s507 = scalar_select %p506, %s24, 1
        %s508 = smul.addr %s507, 15
        %s509 = smul.addr %s508, 8
        %s510 = scalar_lea.vmem %s0, %s509
      $region88: #{vision_tower_s2_forward.1} parent=83 // pred_fallthru
        _
    $region84: #{vision_tower_s2_forward.1} parent=5 // pred_fallthru
      _
    %p511 = scmp.le.s32.totalorder 1, %s24
    %p512 = scmp.lt.s32.totalorder %s24, 3
    %p513 = pnand %p511, %p512
    %p514 = pneg %p513
    // Predicated region
    $region89: #{vision_tower_s2_forward.1} parent=5 // pred_check
      _
    $region90: #{vision_tower_s2_forward.1} parent=5 // pred_check_branch
      %516 = sbr.rel (%p513) target = $region92
    $region91: #{vision_tower_s2_forward.1} parent=5 // pred_region
      %s517 = ssub.s32 %s24, 1
      %p518 = scmp.lt.s32.totalorder %s29, 1
      %s519 = scalar_select %p518, %s29, 1
      %s520 = smul.addr %s519, 15
      %s521 = smul.addr %s520, 8
      %s522 = scalar_lea.vmem %s0, %s521
      %p523 = pneg %p50
      %p524 = pneg %p47
      %p525 = pneg %p71
      %p526 = pneg %p68
      %p527 = pneg %p92
      %p528 = pneg %p89
      %p529 = pneg %p113
      %p530 = pneg %p110
      %p531 = pneg %p134
      %p532 = pneg %p131
      %p533 = pneg %p155
      %p534 = pneg %p152
      %p535 = pneg %p176
      %p536 = pneg %p173
      %p537 = pneg %p197
      %p538 = pneg %p194
      %p539 = pneg %p218
      %p540 = pneg %p215
      %p541 = pneg %p239
      %p542 = pneg %p236
      %p543 = pneg %p260
      %p544 = pneg %p257
      %p545 = pneg %p281
      %p546 = pneg %p278
      %p547 = pneg %p302
      %p548 = pneg %p299
      %p549 = pneg %p323
      %p550 = pneg %p320
      %p551 = pneg %p344
      %p552 = pneg %p341
      %p553 = pneg %p365
      %p554 = pneg %p362
      %p555 = pneg %p386
      %p556 = pneg %p383
      %p557 = pneg %p407
      %p558 = pneg %p404
      %p559 = pneg %p433
      %p560 = pneg %p430
      %p561 = scmp.lt.s32.totalorder %s29, 1
      %s562 = scalar_select %p561, %s29, 1
      %s563 = smul.addr %s562, 15
      %s564 = smul.addr %s563, 8
      %s565 = scalar_lea.vmem %s18, %s564
      %p566 = scmp.lt.s32.totalorder %s29, 1
      %s567 = scalar_select %p566, %s29, 1
      %s568 = smul.addr %s567, 15
      %s569 = smul.addr %s568, 8
      %s570 = scalar_lea.vmem %s0, %s569
      %p571 = scmp.lt.s32.totalorder %s29, 1
      %s572 = scalar_select %p571, %s29, 1
      %s573 = smul.addr %s572, 15
      %s574 = smul.addr %s573, 8
      %s575 = scalar_lea.vmem %s18, %s574
      %v576 = vld [vmem:[%s570] sm:$0xff]
      %v577 = vld [vmem:[%s570 + $0x8] sm:$0xff]
      %v578 = vld [vmem:[%s570 + $0x10] sm:$0xff]
      %v579 = vld [vmem:[%s570 + $0x18] sm:$0xff]
      %v580 = vld [vmem:[%s570 + $0x20] sm:$0xff]
      %v581 = vld [vmem:[%s570 + $0x28] sm:$0xff]
      %v582 = vld [vmem:[%s570 + $0x30] sm:$0xff]
      %v583 = vld [vmem:[%s570 + $0x38] sm:$0xff]
      %v584 = vld [vmem:[%s570 + $0x40] sm:$0xff]
      %v585 = vld [vmem:[%s570 + $0x48] sm:$0xff]
      %v586 = vld [vmem:[%s570 + $0x50] sm:$0xff]
      %v587 = vld [vmem:[%s570 + $0x58] sm:$0xff]
      %v588 = vld [vmem:[%s570 + $0x60] sm:$0xff]
      %v589 = vld [vmem:[%s570 + $0x68] sm:$0xff]
      %v590 = vld [vmem:[%s570 + $0x70] sm:$0xff]
      %v591 = vld [vmem:[%s3] sm:$0xff]
      %v592 = vld [vmem:[%s3 + $0x8] sm:$0xff]
      %v593 = vld [vmem:[%s3 + $0x10] sm:$0xff]
      %v594 = vld [vmem:[%s3 + $0x18] sm:$0xff]
      %v595 = vld [vmem:[%s3 + $0x20] sm:$0xff]
      %v596 = vld [vmem:[%s3 + $0x28] sm:$0xff]
      %v597 = vld [vmem:[%s1] sm:$0xff]
      %v598 = vld [vmem:[%s1 + $0x8] sm:$0xff]
      %v599 = vld [vmem:[%s1 + $0x10] sm:$0xff]
      %v600 = vld [vmem:[%s1 + $0x18] sm:$0xff]
      %v601 = vld [vmem:[%s1 + $0x20] sm:$0xff]
      %v602 = vld [vmem:[%s1 + $0x28] sm:$0xff]
      %v603 = vld [vmem:[%s1 + $0x30] sm:$0xff]
      %v604 = vld [vmem:[%s1 + $0x38] sm:$0xff]
      %v605 = vld [vmem:[%s1 + $0x40] sm:$0xff]
      %v606 = vld [vmem:[%s1 + $0x48] sm:$0xff]
      %v607 = vld [vmem:[%s1 + $0x50] sm:$0xff]
      %v608 = vld [vmem:[%s1 + $0x58] sm:$0xff]
      %v609 = vld [vmem:[%s1 + $0x60] sm:$0xff]
      %v610 = vld [vmem:[%s1 + $0x68] sm:$0xff]
      %v611 = vld [vmem:[%s1 + $0x70] sm:$0xff]
      %vm612 = vcmask 392192
      %v614 = vsel %vm612, %v576, 0
      %v617 = vsel %vm612, %v577, 0
      %v620 = vsel %vm612, %v578, 0
      %v623 = vsel %vm612, %v579, 0
      %v626 = vsel %vm612, %v580, 0
      %v629 = vsel %vm612, %v581, 0
      %v632 = vsel %vm612, %v582, 0
      %v635 = vsel %vm612, %v583, 0
      %v638 = vsel %vm612, %v584, 0
      %v641 = vsel %vm612, %v585, 0
      %v644 = vsel %vm612, %v586, 0
      %v647 = vsel %vm612, %v587, 0
      %v650 = vsel %vm612, %v588, 0
      %v653 = vsel %vm612, %v589, 0
      %v656 = vsel %vm612, %v590, 0
      %658 = vmatprep.subr.mxu0 0.0
      %659 = vmatpush1.msra.mxu0 %v591
      %660 = vmatprep.subr.mxu0 0.0
      %661 = vmatpush1.msra.mxu0 %v592
      %662 = vmatprep.subr.mxu0 0.0
      %663 = vmatpush1.msra.mxu0 %v593
      %664 = vmatprep.subr.mxu0 0.0
      %665 = vmatpush1.msra.mxu0 %v594
      %666 = vmatprep.subr.mxu0 0.0
      %667 = vmatpush1.msra.mxu0 %v595
      %668 = vmatprep.subr.mxu0 0.0
      %669 = vmatpush1.msra.mxu0 %v596
      %670 = vmatprep.subr.mxu0 0.0
      %671 = vmatpush1.msra.mxu0 0.0
      %672 = vmatprep.subr.mxu0 0.0
      %673 = vmatpush1.msra.mxu0 0.0
      %674 = vmatprep.subr.mxu0 0.0
      %675 = vmatpush1.msra.mxu0 0.0
      %676 = vmatprep.subr.mxu0 0.0
      %677 = vmatpush1.msra.mxu0 0.0
      %678 = vmatprep.subr.mxu0 0.0
      %679 = vmatpush1.msra.mxu0 0.0
      %680 = vmatprep.subr.mxu0 0.0
      %681 = vmatpush1.msra.mxu0 0.0
      %682 = vmatprep.subr.mxu0 0.0
      %683 = vmatpush1.msra.mxu0 0.0
      %684 = vmatprep.subr.mxu0 0.0
      %685 = vmatpush1.msra.mxu0 0.0
      %686 = vmatprep.subr.mxu0 0.0
      %687 = vmatpush1.msra.mxu0 0.0
      %688 = vmatprep.subr.mxu0 0.0
      %689 = vmatpush1.msra.mxu0 0.0
      %690 = vmatprep.subr.mxu0 0.0
      %691 = vmatpush1.msra.mxu0 0.0
      %692 = vmatprep.subr.mxu0 0.0
      %693 = vmatpush1.msra.mxu0 0.0
      %694 = vmatprep.subr.mxu0 0.0
      %695 = vmatpush1.msra.mxu0 0.0
      %696 = vmatprep.subr.mxu0 0.0
      %697 = vmatpush1.msra.mxu0 0.0
      %698 = vmatprep.subr.mxu0 0.0
      %699 = vmatpush1.msra.mxu0 0.0
      %700 = vmatprep.subr.mxu0 0.0
      %701 = vmatpush1.msra.mxu0 0.0
      %702 = vmatprep.subr.mxu0 0.0
      %703 = vmatpush1.msra.mxu0 0.0
      %704 = vmatprep.subr.mxu0 0.0
      %705 = vmatpush1.msra.mxu0 0.0
      %706 = vmatprep.subr.mxu0 0.0
      %707 = vmatpush1.msra.mxu0 0.0
      %708 = vmatprep.subr.mxu0 0.0
      %709 = vmatpush1.msra.mxu0 0.0
      %710 = vmatprep.subr.mxu0 0.0
      %711 = vmatpush1.msra.mxu0 0.0
      %712 = vmatprep.subr.mxu0 0.0
      %713 = vmatpush1.msra.mxu0 0.0
      %714 = vmatprep.subr.mxu0 0.0
      %715 = vmatpush1.msra.mxu0 0.0
      %716 = vmatprep.subr.mxu0 0.0
      %717 = vmatpush1.msra.mxu0 0.0
      %718 = vmatprep.subr.mxu0 0.0
      %719 = vmatpush1.msra.mxu0 0.0
      %720 = vmatprep.subr.mxu0 0.0
      %721 = vmatpush1.msra.mxu0 0.0
      %722 = vmatprep.mubr.f32.mxu0 0.0
      %723 = vmatmul.mubr.f32.gmra.mrb[0].mxu0 %v614
      %v724 = vpop.f32.mrb[0].mxu0
      %v725 = vadd.f32 %v597, %v724
      %v726 = vpop.f32.mrb[0].mxu0
      %727 = vmatprep.mubr.f32.mxu0 0.0
      %728 = vmatmul.mubr.f32.gmra.mrb[0].mxu0 %v617
      %v729 = vpop.f32.mrb[0].mxu0
      %v730 = vadd.f32 %v598, %v729
      %v731 = vpop.f32.mrb[0].mxu0
      %732 = vmatprep.mubr.f32.mxu0 0.0
      %733 = vmatmul.mubr.f32.gmra.mrb[0].mxu0 %v620
      %v734 = vpop.f32.mrb[0].mxu0
      %v735 = vadd.f32 %v599, %v734
      %v736 = vpop.f32.mrb[0].mxu0
      %737 = vmatprep.mubr.f32.mxu0 0.0
      %738 = vmatmul.mubr.f32.gmra.mrb[0].mxu0 %v623
      %v739 = vpop.f32.mrb[0].mxu0
      %v740 = vadd.f32 %v600, %v739
      %v741 = vpop.f32.mrb[0].mxu0
      %742 = vmatprep.mubr.f32.mxu0 0.0
      %743 = vmatmul.mubr.f32.gmra.mrb[0].mxu0 %v626
      %v744 = vpop.f32.mrb[0].mxu0
      %v745 = vadd.f32 %v601, %v744
      %v746 = vpop.f32.mrb[0].mxu0
      %747 = vmatprep.mubr.f32.mxu0 0.0
      %748 = vmatmul.mubr.f32.gmra.mrb[0].mxu0 %v629
      %v749 = vpop.f32.mrb[0].mxu0
      %v750 = vadd.f32 %v602, %v749
      %v751 = vpop.f32.mrb[0].mxu0
      %752 = vmatprep.mubr.f32.mxu0 0.0
      %753 = vmatmul.mubr.f32.gmra.mrb[0].mxu0 %v632
      %v754 = vpop.f32.mrb[0].mxu0
      %v755 = vadd.f32 %v603, %v754
      %v756 = vpop.f32.mrb[0].mxu0
      %757 = vmatprep.mubr.f32.mxu0 0.0
      %758 = vmatmul.mubr.f32.gmra.mrb[0].mxu0 %v635
      %v759 = vpop.f32.mrb[0].mxu0
      %v760 = vadd.f32 %v604, %v759
      %v761 = vpop.f32.mrb[0].mxu0
      %762 = vmatprep.mubr.f32.mxu0 0.0
      %763 = vmatmul.mubr.f32.gmra.mrb[0].mxu0 %v638
      %v764 = vpop.f32.mrb[0].mxu0
      %v765 = vadd.f32 %v605, %v764
      %v766 = vpop.f32.mrb[0].mxu0
      %767 = vmatprep.mubr.f32.mxu0 0.0
      %768 = vmatmul.mubr.f32.gmra.mrb[0].mxu0 %v641
      %v769 = vpop.f32.mrb[0].mxu0
      %v770 = vadd.f32 %v606, %v769
      %v771 = vpop.f32.mrb[0].mxu0
      %772 = vmatprep.mubr.f32.mxu0 0.0
      %773 = vmatmul.mubr.f32.gmra.mrb[0].mxu0 %v644
      %v774 = vpop.f32.mrb[0].mxu0
      %v775 = vadd.f32 %v607, %v774
      %v776 = vpop.f32.mrb[0].mxu0
      %777 = vmatprep.mubr.f32.mxu0 0.0
      %778 = vmatmul.mubr.f32.gmra.mrb[0].mxu0 %v647
      %v779 = vpop.f32.mrb[0].mxu0
      %v780 = vadd.f32 %v608, %v779
      %v781 = vpop.f32.mrb[0].mxu0
      %782 = vmatprep.mubr.f32.mxu0 0.0
      %783 = vmatmul.mubr.f32.gmra.mrb[0].mxu0 %v650
      %v784 = vpop.f32.mrb[0].mxu0
      %v785 = vadd.f32 %v609, %v784
      %v786 = vpop.f32.mrb[0].mxu0
      %787 = vmatprep.mubr.f32.mxu0 0.0
      %788 = vmatmul.mubr.f32.gmra.mrb[0].mxu0 %v653
      %v789 = vpop.f32.mrb[0].mxu0
      %v790 = vadd.f32 %v610, %v789
      %v791 = vpop.f32.mrb[0].mxu0
      %792 = vmatprep.mubr.f32.mxu0 0.0
      %793 = vmatmul.mubr.f32.gmra.mrb[0].mxu0 %v656
      %v794 = vpop.f32.mrb[0].mxu0
      %v795 = vadd.f32 %v611, %v794
      %v796 = vpop.f32.mrb[0].mxu0
      %797 = vdwg.mxu0
      %v798 = vld [vmem:[%s4] sm:$0x1]
      %v799 = vld [vmem:[%s5] sm:$0x1]
      %vm800 = vcmask 261120
      %v801 = vsel %vm800, %v725, 0.0
      %802 = vadd.xlane.f32.xlu0 %v801
      %v803 = vpop.xlane.xlu0 %802
      %v804 = vsel %vm800, %v730, 0.0
      %805 = vadd.xlane.f32.xlu0 %v804
      %v806 = vpop.xlane.xlu0 %805
      %v807 = vsel %vm800, %v735, 0.0
      %808 = vadd.xlane.f32.xlu0 %v807
      %v809 = vpop.xlane.xlu0 %808
      %v810 = vsel %vm800, %v740, 0.0
      %811 = vadd.xlane.f32.xlu0 %v810
      %v812 = vpop.xlane.xlu0 %811
      %v813 = vsel %vm800, %v745, 0.0
      %814 = vadd.xlane.f32.xlu0 %v813
      %v815 = vpop.xlane.xlu0 %814
      %v816 = vsel %vm800, %v750, 0.0
      %817 = vadd.xlane.f32.xlu0 %v816
      %v818 = vpop.xlane.xlu0 %817
      %v819 = vsel %vm800, %v755, 0.0
      %820 = vadd.xlane.f32.xlu0 %v819
      %v821 = vpop.xlane.xlu0 %820
      %v822 = vsel %vm800, %v760, 0.0
      %823 = vadd.xlane.f32.xlu0 %v822
      %v824 = vpop.xlane.xlu0 %823
      %v825 = vsel %vm800, %v765, 0.0
      %826 = vadd.xlane.f32.xlu0 %v825
      %v827 = vpop.xlane.xlu0 %826
      %v828 = vsel %vm800, %v770, 0.0
      %829 = vadd.xlane.f32.xlu0 %v828
      %v830 = vpop.xlane.xlu0 %829
      %v831 = vsel %vm800, %v775, 0.0
      %832 = vadd.xlane.f32.xlu0 %v831
      %v833 = vpop.xlane.xlu0 %832
      %v834 = vsel %vm800, %v780, 0.0
      %835 = vadd.xlane.f32.xlu0 %v834
      %v836 = vpop.xlane.xlu0 %835
      %v837 = vsel %vm800, %v785, 0.0
      %838 = vadd.xlane.f32.xlu0 %v837
      %v839 = vpop.xlane.xlu0 %838
      %v840 = vsel %vm800, %v790, 0.0
      %841 = vadd.xlane.f32.xlu0 %v840
      %v842 = vpop.xlane.xlu0 %841
      %v843 = vsel %vm800, %v795, 0.0
      %844 = vadd.xlane.f32.xlu0 %v843
      %v845 = vpop.xlane.xlu0 %844
      %v846 = vrcp.pop 32.0
      %v847 = vmul.f32 %v803, %v846
      %v848 = vmul.f32 %v806, %v846
      %v849 = vmul.f32 %v809, %v846
      %v850 = vmul.f32 %v812, %v846
      %v851 = vmul.f32 %v815, %v846
      %v852 = vmul.f32 %v818, %v846
      %v853 = vmul.f32 %v821, %v846
      %v854 = vmul.f32 %v824, %v846
      %v855 = vmul.f32 %v827, %v846
      %v856 = vmul.f32 %v830, %v846
      %v857 = vmul.f32 %v833, %v846
      %v858 = vmul.f32 %v836, %v846
      %v859 = vmul.f32 %v839, %v846
      %v860 = vmul.f32 %v842, %v846
      %v861 = vmul.f32 %v845, %v846
      %v862 = vsub.f32 %v725, %v847
      %v863 = vsub.f32 %v730, %v848
      %v864 = vsub.f32 %v735, %v849
      %v865 = vsub.f32 %v740, %v850
      %v866 = vsub.f32 %v745, %v851
      %v867 = vsub.f32 %v750, %v852
      %v868 = vsub.f32 %v755, %v853
      %v869 = vsub.f32 %v760, %v854
      %v870 = vsub.f32 %v765, %v855
      %v871 = vsub.f32 %v770, %v856
      %v872 = vsub.f32 %v775, %v857
      %v873 = vsub.f32 %v780, %v858
      %v874 = vsub.f32 %v785, %v859
      %v875 = vsub.f32 %v790, %v860
      %v876 = vsub.f32 %v795, %v861
      %v877 = vmul.f32 %v862, %v862
      %v878 = vmul.f32 %v863, %v863
      %v879 = vmul.f32 %v864, %v864
      %v880 = vmul.f32 %v865, %v865
      %v881 = vmul.f32 %v866, %v866
      %v882 = vmul.f32 %v867, %v867
      %v883 = vmul.f32 %v868, %v868
      %v884 = vmul.f32 %v869, %v869
      %v885 = vmul.f32 %v870, %v870
      %v886 = vmul.f32 %v871, %v871
      %v887 = vmul.f32 %v872, %v872
      %v888 = vmul.f32 %v873, %v873
      %v889 = vmul.f32 %v874, %v874
      %v890 = vmul.f32 %v875, %v875
      %v891 = vmul.f32 %v876, %v876
      %v892 = vsel %vm800, %v877, 0.0
      %893 = vadd.xlane.f32.xlu0 %v892
      %v894 = vpop.xlane.xlu0 %893
      %v895 = vsel %vm800, %v878, 0.0
      %896 = vadd.xlane.f32.xlu0 %v895
      %v897 = vpop.xlane.xlu0 %896
      %v898 = vsel %vm800, %v879, 0.0
      %899 = vadd.xlane.f32.xlu0 %v898
      %v900 = vpop.xlane.xlu0 %899
      %v901 = vsel %vm800, %v880, 0.0
      %902 = vadd.xlane.f32.xlu0 %v901
      %v903 = vpop.xlane.xlu0 %902
      %v904 = vsel %vm800, %v881, 0.0
      %905 = vadd.xlane.f32.xlu0 %v904
      %v906 = vpop.xlane.xlu0 %905
      %v907 = vsel %vm800, %v882, 0.0
      %908 = vadd.xlane.f32.xlu0 %v907
      %v909 = vpop.xlane.xlu0 %908
      %v910 = vsel %vm800, %v883, 0.0
      %911 = vadd.xlane.f32.xlu0 %v910
      %v912 = vpop.xlane.xlu0 %911
      %v913 = vsel %vm800, %v884, 0.0
      %914 = vadd.xlane.f32.xlu0 %v913
      %v915 = vpop.xlane.xlu0 %914
      %v916 = vsel %vm800, %v885, 0.0
      %917 = vadd.xlane.f32.xlu0 %v916
      %v918 = vpop.xlane.xlu0 %917
      %v919 = vsel %vm800, %v886, 0.0
      %920 = vadd.xlane.f32.xlu0 %v919
      %v921 = vpop.xlane.xlu0 %920
      %v922 = vsel %vm800, %v887, 0.0
      %923 = vadd.xlane.f32.xlu0 %v922
      %v924 = vpop.xlane.xlu0 %923
      %v925 = vsel %vm800, %v888, 0.0
      %926 = vadd.xlane.f32.xlu0 %v925
      %v927 = vpop.xlane.xlu0 %926
      %v928 = vsel %vm800, %v889, 0.0
      %929 = vadd.xlane.f32.xlu0 %v928
      %v930 = vpop.xlane.xlu0 %929
      %v931 = vsel %vm800, %v890, 0.0
      %932 = vadd.xlane.f32.xlu0 %v931
      %v933 = vpop.xlane.xlu0 %932
      %v934 = vsel %vm800, %v891, 0.0
      %935 = vadd.xlane.f32.xlu0 %v934
      %v936 = vpop.xlane.xlu0 %935
      %v937 = vmul.f32 %v894, %v846
      %v938 = vmul.f32 %v897, %v846
      %v939 = vmul.f32 %v900, %v846
      %v940 = vmul.f32 %v903, %v846
      %v941 = vmul.f32 %v906, %v846
      %v942 = vmul.f32 %v909, %v846
      %v943 = vmul.f32 %v912, %v846
      %v944 = vmul.f32 %v915, %v846
      %v945 = vmul.f32 %v918, %v846
      %v946 = vmul.f32 %v921, %v846
      %v947 = vmul.f32 %v924, %v846
      %v948 = vmul.f32 %v927, %v846
      %v949 = vmul.f32 %v930, %v846
      %v950 = vmul.f32 %v933, %v846
      %v951 = vmul.f32 %v936, %v846
      %v952 = vadd.f32 %v937, 1e-05
      %v953 = vadd.f32 %v938, 1e-05
      %v954 = vadd.f32 %v939, 1e-05
      %v955 = vadd.f32 %v940, 1e-05
      %v956 = vadd.f32 %v941, 1e-05
      %v957 = vadd.f32 %v942, 1e-05
      %v958 = vadd.f32 %v943, 1e-05
      %v959 = vadd.f32 %v944, 1e-05
      %v960 = vadd.f32 %v945, 1e-05
      %v961 = vadd.f32 %v946, 1e-05
      %v962 = vadd.f32 %v947, 1e-05
      %v963 = vadd.f32 %v948, 1e-05
      %v964 = vadd.f32 %v949, 1e-05
      %v965 = vadd.f32 %v950, 1e-05
      %v966 = vadd.f32 %v951, 1e-05
      %v967 = vrsqrt.pop %v952
      %v968 = vrsqrt.pop %v953
      %v969 = vrsqrt.pop %v954
      %v970 = vrsqrt.pop %v955
      %v971 = vrsqrt.pop %v956
      %v972 = vrsqrt.pop %v957
      %v973 = vrsqrt.pop %v958
      %v974 = vrsqrt.pop %v959
      %v975 = vrsqrt.pop %v960
      %v976 = vrsqrt.pop %v961
      %v977 = vrsqrt.pop %v962
      %v978 = vrsqrt.pop %v963
      %v979 = vrsqrt.pop %v964
      %v980 = vrsqrt.pop %v965
      %v981 = vrsqrt.pop %v966
      %v982 = vmul.f32 %v862, %v967
      %v983 = vmul.f32 %v863, %v968
      %v984 = vmul.f32 %v864, %v969
      %v985 = vmul.f32 %v865, %v970
      %v986 = vmul.f32 %v866, %v971
      %v987 = vmul.f32 %v867, %v972
      %v988 = vmul.f32 %v868, %v973
      %v989 = vmul.f32 %v869, %v974
      %v990 = vmul.f32 %v870, %v975
      %v991 = vmul.f32 %v871, %v976
      %v992 = vmul.f32 %v872, %v977
      %v993 = vmul.f32 %v873, %v978
      %v994 = vmul.f32 %v874, %v979
      %v995 = vmul.f32 %v875, %v980
      %v996 = vmul.f32 %v876, %v981
      %v998 = vlaneseq
      %v999 = vshrl.u32 %v998, 7
      %v1000 = vsub.s32 0, %v999
      %v1001 = vrot.slane %v798, %v1000
      %v1003 = vmul.f32 %v982, %v1001
      %v1004 = vmul.f32 %v983, %v1001
      %v1005 = vmul.f32 %v984, %v1001
      %v1006 = vmul.f32 %v985, %v1001
      %v1007 = vmul.f32 %v986, %v1001
      %v1008 = vmul.f32 %v987, %v1001
      %v1009 = vmul.f32 %v988, %v1001
      %v1010 = vmul.f32 %v989, %v1001
      %v1011 = vmul.f32 %v990, %v1001
      %v1012 = vmul.f32 %v991, %v1001
      %v1013 = vmul.f32 %v992, %v1001
      %v1014 = vmul.f32 %v993, %v1001
      %v1015 = vmul.f32 %v994, %v1001
      %v1016 = vmul.f32 %v995, %v1001
      %v1017 = vmul.f32 %v996, %v1001
      %v1019 = vlaneseq
      %v1020 = vshrl.u32 %v1019, 7
      %v1021 = vsub.s32 0, %v1020
      %v1022 = vrot.slane %v799, %v1021
      %v1024 = vadd.f32 %v1003, %v1022
      %v1025 = vadd.f32 %v1004, %v1022
      %v1026 = vadd.f32 %v1005, %v1022
      %v1027 = vadd.f32 %v1006, %v1022
      %v1028 = vadd.f32 %v1007, %v1022
      %v1029 = vadd.f32 %v1008, %v1022
      %v1030 = vadd.f32 %v1009, %v1022
      %v1031 = vadd.f32 %v1010, %v1022
      %v1032 = vadd.f32 %v1011, %v1022
      %v1033 = vadd.f32 %v1012, %v1022
      %v1034 = vadd.f32 %v1013, %v1022
      %v1035 = vadd.f32 %v1014, %v1022
      %v1036 = vadd.f32 %v1015, %v1022
      %v1037 = vadd.f32 %v1016, %v1022
      %v1038 = vadd.f32 %v1017, %v1022
      %v1039 = vld [vmem:[%s2] sm:$0xff]
      %v1040 = vld [vmem:[%s2 + $0x8] sm:$0xff]
      %v1041 = vld [vmem:[%s2 + $0x10] sm:$0xff]
      %v1042 = vld [vmem:[%s2 + $0x18] sm:$0xff]
      %v1043 = vld [vmem:[%s2 + $0x20] sm:$0xff]
      %v1044 = vld [vmem:[%s2 + $0x28] sm:$0xff]
      %v1045 = vld [vmem:[%s2 + $0x30] sm:$0xff]
      %v1046 = vld [vmem:[%s2 + $0x38] sm:$0xff]
      %v1047 = vld [vmem:[%s2 + $0x40] sm:$0xff]
      %v1048 = vld [vmem:[%s2 + $0x48] sm:$0xff]
      %v1049 = vld [vmem:[%s2 + $0x50] sm:$0xff]
      %v1050 = vld [vmem:[%s2 + $0x58] sm:$0xff]
      %v1051 = vld [vmem:[%s2 + $0x60] sm:$0xff]
      %v1052 = vld [vmem:[%s2 + $0x68] sm:$0xff]
      %v1053 = vld [vmem:[%s2 + $0x70] sm:$0xff]
      %v1054 = vld [vmem:[%s6] sm:$0x1]
      %v1055 = vld [vmem:[%s7] sm:$0x1]
      %v1056 = vsel %vm800, %v1024, 0.0
      %1057 = vadd.xlane.f32.xlu0 %v1056
      %v1058 = vpop.xlane.xlu0 %1057
      %v1059 = vsel %vm800, %v1025, 0.0
      %1060 = vadd.xlane.f32.xlu0 %v1059
      %v1061 = vpop.xlane.xlu0 %1060
      %v1062 = vsel %vm800, %v1026, 0.0
      %1063 = vadd.xlane.f32.xlu0 %v1062
      %v1064 = vpop.xlane.xlu0 %1063
      %v1065 = vsel %vm800, %v1027, 0.0
      %1066 = vadd.xlane.f32.xlu0 %v1065
      %v1067 = vpop.xlane.xlu0 %1066
      %v1068 = vsel %vm800, %v1028, 0.0
      %1069 = vadd.xlane.f32.xlu0 %v1068
      %v1070 = vpop.xlane.xlu0 %1069
      %v1071 = vsel %vm800, %v1029, 0.0
      %1072 = vadd.xlane.f32.xlu0 %v1071
      %v1073 = vpop.xlane.xlu0 %1072
      %v1074 = vsel %vm800, %v1030, 0.0
      %1075 = vadd.xlane.f32.xlu0 %v1074
      %v1076 = vpop.xlane.xlu0 %1075
      %v1077 = vsel %vm800, %v1031, 0.0
      %1078 = vadd.xlane.f32.xlu0 %v1077
      %v1079 = vpop.xlane.xlu0 %1078
      %v1080 = vsel %vm800, %v1032, 0.0
      %1081 = vadd.xlane.f32.xlu0 %v1080
      %v1082 = vpop.xlane.xlu0 %1081
      %v1083 = vsel %vm800, %v1033, 0.0
      %1084 = vadd.xlane.f32.xlu0 %v1083
      %v1085 = vpop.xlane.xlu0 %1084
      %v1086 = vsel %vm800, %v1034, 0.0
      %1087 = vadd.xlane.f32.xlu0 %v1086
      %v1088 = vpop.xlane.xlu0 %1087
      %v1089 = vsel %vm800, %v1035, 0.0
      %1090 = vadd.xlane.f32.xlu0 %v1089
      %v1091 = vpop.xlane.xlu0 %1090
      %v1092 = vsel %vm800, %v1036, 0.0
      %1093 = vadd.xlane.f32.xlu0 %v1092
      %v1094 = vpop.xlane.xlu0 %1093
      %v1095 = vsel %vm800, %v1037, 0.0
      %1096 = vadd.xlane.f32.xlu0 %v1095
      %v1097 = vpop.xlane.xlu0 %1096
      %v1098 = vsel %vm800, %v1038, 0.0
      %1099 = vadd.xlane.f32.xlu0 %v1098
      %v1100 = vpop.xlane.xlu0 %1099
      %v1101 = vmul.f32 %v1058, %v846
      %v1102 = vmul.f32 %v1061, %v846
      %v1103 = vmul.f32 %v1064, %v846
      %v1104 = vmul.f32 %v1067, %v846
      %v1105 = vmul.f32 %v1070, %v846
      %v1106 = vmul.f32 %v1073, %v846
      %v1107 = vmul.f32 %v1076, %v846
      %v1108 = vmul.f32 %v1079, %v846
      %v1109 = vmul.f32 %v1082, %v846
      %v1110 = vmul.f32 %v1085, %v846
      %v1111 = vmul.f32 %v1088, %v846
      %v1112 = vmul.f32 %v1091, %v846
      %v1113 = vmul.f32 %v1094, %v846
      %v1114 = vmul.f32 %v1097, %v846
      %v1115 = vmul.f32 %v1100, %v846
      %v1116 = vsub.f32 %v1024, %v1101
      %v1117 = vsub.f32 %v1025, %v1102
      %v1118 = vsub.f32 %v1026, %v1103
      %v1119 = vsub.f32 %v1027, %v1104
      %v1120 = vsub.f32 %v1028, %v1105
      %v1121 = vsub.f32 %v1029, %v1106
      %v1122 = vsub.f32 %v1030, %v1107
      %v1123 = vsub.f32 %v1031, %v1108
      %v1124 = vsub.f32 %v1032, %v1109
      %v1125 = vsub.f32 %v1033, %v1110
      %v1126 = vsub.f32 %v1034, %v1111
      %v1127 = vsub.f32 %v1035, %v1112
      %v1128 = vsub.f32 %v1036, %v1113
      %v1129 = vsub.f32 %v1037, %v1114
      %v1130 = vsub.f32 %v1038, %v1115
      %v1131 = vmul.f32 %v1116, %v1116
      %v1132 = vmul.f32 %v1117, %v1117
      %v1133 = vmul.f32 %v1118, %v1118
      %v1134 = vmul.f32 %v1119, %v1119
      %v1135 = vmul.f32 %v1120, %v1120
      %v1136 = vmul.f32 %v1121, %v1121
      %v1137 = vmul.f32 %v1122, %v1122
      %v1138 = vmul.f32 %v1123, %v1123
      %v1139 = vmul.f32 %v1124, %v1124
      %v1140 = vmul.f32 %v1125, %v1125
      %v1141 = vmul.f32 %v1126, %v1126
      %v1142 = vmul.f32 %v1127, %v1127
      %v1143 = vmul.f32 %v1128, %v1128
      %v1144 = vmul.f32 %v1129, %v1129
      %v1145 = vmul.f32 %v1130, %v1130
      %v1146 = vsel %vm800, %v1131, 0.0
      %1147 = vadd.xlane.f32.xlu0 %v1146
      %v1148 = vpop.xlane.xlu0 %1147
      %v1149 = vsel %vm800, %v1132, 0.0
      %1150 = vadd.xlane.f32.xlu0 %v1149
      %v1151 = vpop.xlane.xlu0 %1150
      %v1152 = vsel %vm800, %v1133, 0.0
      %1153 = vadd.xlane.f32.xlu0 %v1152
      %v1154 = vpop.xlane.xlu0 %1153
      %v1155 = vsel %vm800, %v1134, 0.0
      %1156 = vadd.xlane.f32.xlu0 %v1155
      %v1157 = vpop.xlane.xlu0 %1156
      %v1158 = vsel %vm800, %v1135, 0.0
      %1159 = vadd.xlane.f32.xlu0 %v1158
      %v1160 = vpop.xlane.xlu0 %1159
      %v1161 = vsel %vm800, %v1136, 0.0
      %1162 = vadd.xlane.f32.xlu0 %v1161
      %v1163 = vpop.xlane.xlu0 %1162
      %v1164 = vsel %vm800, %v1137, 0.0
      %1165 = vadd.xlane.f32.xlu0 %v1164
      %v1166 = vpop.xlane.xlu0 %1165
      %v1167 = vsel %vm800, %v1138, 0.0
      %1168 = vadd.xlane.f32.xlu0 %v1167
      %v1169 = vpop.xlane.xlu0 %1168
      %v1170 = vsel %vm800, %v1139, 0.0
      %1171 = vadd.xlane.f32.xlu0 %v1170
      %v1172 = vpop.xlane.xlu0 %1171
      %v1173 = vsel %vm800, %v1140, 0.0
      %1174 = vadd.xlane.f32.xlu0 %v1173
      %v1175 = vpop.xlane.xlu0 %1174
      %v1176 = vsel %vm800, %v1141, 0.0
      %1177 = vadd.xlane.f32.xlu0 %v1176
      %v1178 = vpop.xlane.xlu0 %1177
      %v1179 = vsel %vm800, %v1142, 0.0
      %1180 = vadd.xlane.f32.xlu0 %v1179
      %v1181 = vpop.xlane.xlu0 %1180
      %v1182 = vsel %vm800, %v1143, 0.0
      %1183 = vadd.xlane.f32.xlu0 %v1182
      %v1184 = vpop.xlane.xlu0 %1183
      %v1185 = vsel %vm800, %v1144, 0.0
      %1186 = vadd.xlane.f32.xlu0 %v1185
      %v1187 = vpop.xlane.xlu0 %1186
      %v1188 = vsel %vm800, %v1145, 0.0
      %1189 = vadd.xlane.f32.xlu0 %v1188
      %v1190 = vpop.xlane.xlu0 %1189
      %v1191 = vmul.f32 %v1148, %v846
      %v1192 = vmul.f32 %v1151, %v846
      %v1193 = vmul.f32 %v1154, %v846
      %v1194 = vmul.f32 %v1157, %v846
      %v1195 = vmul.f32 %v1160, %v846
      %v1196 = vmul.f32 %v1163, %v846
      %v1197 = vmul.f32 %v1166, %v846
      %v1198 = vmul.f32 %v1169, %v846
      %v1199 = vmul.f32 %v1172, %v846
      %v1200 = vmul.f32 %v1175, %v846
      %v1201 = vmul.f32 %v1178, %v846
      %v1202 = vmul.f32 %v1181, %v846
      %v1203 = vmul.f32 %v1184, %v846
      %v1204 = vmul.f32 %v1187, %v846
      %v1205 = vmul.f32 %v1190, %v846
      %v1206 = vadd.f32 %v1191, 1e-05
      %v1207 = vadd.f32 %v1192, 1e-05
      %v1208 = vadd.f32 %v1193, 1e-05
      %v1209 = vadd.f32 %v1194, 1e-05
      %v1210 = vadd.f32 %v1195, 1e-05
      %v1211 = vadd.f32 %v1196, 1e-05
      %v1212 = vadd.f32 %v1197, 1e-05
      %v1213 = vadd.f32 %v1198, 1e-05
      %v1214 = vadd.f32 %v1199, 1e-05
      %v1215 = vadd.f32 %v1200, 1e-05
      %v1216 = vadd.f32 %v1201, 1e-05
      %v1217 = vadd.f32 %v1202, 1e-05
      %v1218 = vadd.f32 %v1203, 1e-05
      %v1219 = vadd.f32 %v1204, 1e-05
      %v1220 = vadd.f32 %v1205, 1e-05
      %v1221 = vrsqrt.pop %v1206
      %v1222 = vrsqrt.pop %v1207
      %v1223 = vrsqrt.pop %v1208
      %v1224 = vrsqrt.pop %v1209
      %v1225 = vrsqrt.pop %v1210
      %v1226 = vrsqrt.pop %v1211
      %v1227 = vrsqrt.pop %v1212
      %v1228 = vrsqrt.pop %v1213
      %v1229 = vrsqrt.pop %v1214
      %v1230 = vrsqrt.pop %v1215
      %v1231 = vrsqrt.pop %v1216
      %v1232 = vrsqrt.pop %v1217
      %v1233 = vrsqrt.pop %v1218
      %v1234 = vrsqrt.pop %v1219
      %v1235 = vrsqrt.pop %v1220
      %v1236 = vmul.f32 %v1116, %v1221
      %v1237 = vmul.f32 %v1117, %v1222
      %v1238 = vmul.f32 %v1118, %v1223
      %v1239 = vmul.f32 %v1119, %v1224
      %v1240 = vmul.f32 %v1120, %v1225
      %v1241 = vmul.f32 %v1121, %v1226
      %v1242 = vmul.f32 %v1122, %v1227
      %v1243 = vmul.f32 %v1123, %v1228
      %v1244 = vmul.f32 %v1124, %v1229
      %v1245 = vmul.f32 %v1125, %v1230
      %v1246 = vmul.f32 %v1126, %v1231
      %v1247 = vmul.f32 %v1127, %v1232
      %v1248 = vmul.f32 %v1128, %v1233
      %v1249 = vmul.f32 %v1129, %v1234
      %v1250 = vmul.f32 %v1130, %v1235
      %v1252 = vlaneseq
      %v1253 = vshrl.u32 %v1252, 7
      %v1254 = vsub.s32 0, %v1253
      %v1255 = vrot.slane %v1054, %v1254
      %v1257 = vmul.f32 %v1236, %v1255
      %v1258 = vmul.f32 %v1237, %v1255
      %v1259 = vmul.f32 %v1238, %v1255
      %v1260 = vmul.f32 %v1239, %v1255
      %v1261 = vmul.f32 %v1240, %v1255
      %v1262 = vmul.f32 %v1241, %v1255
      %v1263 = vmul.f32 %v1242, %v1255
      %v1264 = vmul.f32 %v1243, %v1255
      %v1265 = vmul.f32 %v1244, %v1255
      %v1266 = vmul.f32 %v1245, %v1255
      %v1267 = vmul.f32 %v1246, %v1255
      %v1268 = vmul.f32 %v1247, %v1255
      %v1269 = vmul.f32 %v1248, %v1255
      %v1270 = vmul.f32 %v1249, %v1255
      %v1271 = vmul.f32 %v1250, %v1255
      %v1273 = vlaneseq
      %v1274 = vshrl.u32 %v1273, 7
      %v1275 = vsub.s32 0, %v1274
      %v1276 = vrot.slane %v1055, %v1275
      %v1278 = vadd.f32 %v1257, %v1276
      %v1279 = vadd.f32 %v1258, %v1276
      %v1280 = vadd.f32 %v1259, %v1276
      %v1281 = vadd.f32 %v1260, %v1276
      %v1282 = vadd.f32 %v1261, %v1276
      %v1283 = vadd.f32 %v1262, %v1276
      %v1284 = vadd.f32 %v1263, %v1276
      %v1285 = vadd.f32 %v1264, %v1276
      %v1286 = vadd.f32 %v1265, %v1276
      %v1287 = vadd.f32 %v1266, %v1276
      %v1288 = vadd.f32 %v1267, %v1276
      %v1289 = vadd.f32 %v1268, %v1276
      %v1290 = vadd.f32 %v1269, %v1276
      %v1291 = vadd.f32 %v1270, %v1276
      %v1292 = vadd.f32 %v1271, %v1276
      %v1293 = vld [vmem:[%s8] sm:$0xff]
      %v1294 = vld [vmem:[%s8 + $0x8] sm:$0xff]
      %v1295 = vld [vmem:[%s8 + $0x10] sm:$0xff]
      %v1296 = vld [vmem:[%s8 + $0x18] sm:$0xff]
      %v1297 = vld [vmem:[%s9] sm:$0x1]
      %v1299 = vlaneseq
      %v1300 = vshrl.u32 %v1299, 7
      %v1301 = vsub.s32 0, %v1300
      %v1302 = vrot.slane %v1297, %v1301
      %v1305 = vsel %vm800, %v1278, 0
      %v1308 = vsel %vm800, %v1279, 0
      %v1311 = vsel %vm800, %v1280, 0
      %v1314 = vsel %vm800, %v1281, 0
      %v1317 = vsel %vm800, %v1282, 0
      %v1320 = vsel %vm800, %v1283, 0
      %v1323 = vsel %vm800, %v1284, 0
      %v1326 = vsel %vm800, %v1285, 0
      %v1329 = vsel %vm800, %v1286, 0
      %v1332 = vsel %vm800, %v1287, 0
      %v1335 = vsel %vm800, %v1288, 0
      %v1338 = vsel %vm800, %v1289, 0
      %v1341 = vsel %vm800, %v1290, 0
      %v1344 = vsel %vm800, %v1291, 0
      %v1347 = vsel %vm800, %v1292, 0
      %1349 = vmatprep.subr.mxu0 0.0
      %1350 = vmatpush1.msra.mxu0 %v1293
      %1351 = vmatprep.subr.mxu0 0.0
      %1352 = vmatpush1.msra.mxu0 %v1294
      %1353 = vmatprep.subr.mxu0 0.0
      %1354 = vmatpush1.msra.mxu0 %v1295
      %1355 = vmatprep.subr.mxu0 0.0
      %1356 = vmatpush1.msra.mxu0 %v1296
      %1357 = vmatprep.subr.mxu0 0.0
      %1358 = vmatpush1.msra.mxu0 0.0
      %1359 = vmatprep.subr.mxu0 0.0
      %1360 = vmatpush1.msra.mxu0 0.0
      %1361 = vmatprep.subr.mxu0 0.0
      %1362 = vmatpush1.msra.mxu0 0.0
      %1363 = vmatprep.subr.mxu0 0.0
      %1364 = vmatpush1.msra.mxu0 0.0
      %1365 = vmatprep.subr.mxu0 0.0
      %1366 = vmatpush1.msra.mxu0 0.0
      %1367 = vmatprep.subr.mxu0 0.0
      %1368 = vmatpush1.msra.mxu0 0.0
      %1369 = vmatprep.subr.mxu0 0.0
      %1370 = vmatpush1.msra.mxu0 0.0
      %1371 = vmatprep.subr.mxu0 0.0
      %1372 = vmatpush1.msra.mxu0 0.0
      %1373 = vmatprep.subr.mxu0 0.0
      %1374 = vmatpush1.msra.mxu0 0.0
      %1375 = vmatprep.subr.mxu0 0.0
      %1376 = vmatpush1.msra.mxu0 0.0
      %1377 = vmatprep.subr.mxu0 0.0
      %1378 = vmatpush1.msra.mxu0 0.0
      %1379 = vmatprep.subr.mxu0 0.0
      %1380 = vmatpush1.msra.mxu0 0.0
      %1381 = vmatprep.subr.mxu0 0.0
      %1382 = vmatpush1.msra.mxu0 0.0
      %1383 = vmatprep.subr.mxu0 0.0
      %1384 = vmatpush1.msra.mxu0 0.0
      %1385 = vmatprep.subr.mxu0 0.0
      %1386 = vmatpush1.msra.mxu0 0.0
      %1387 = vmatprep.subr.mxu0 0.0
      %1388 = vmatpush1.msra.mxu0 0.0
      %1389 = vmatprep.subr.mxu0 0.0
      %1390 = vmatpush1.msra.mxu0 0.0
      %1391 = vmatprep.subr.mxu0 0.0
      %1392 = vmatpush1.msra.mxu0 0.0
      %1393 = vmatprep.subr.mxu0 0.0
      %1394 = vmatpush1.msra.mxu0 0.0
      %1395 = vmatprep.subr.mxu0 0.0
      %1396 = vmatpush1.msra.mxu0 0.0
      %1397 = vmatprep.subr.mxu0 0.0
      %1398 = vmatpush1.msra.mxu0 0.0
      %1399 = vmatprep.subr.mxu0 0.0
      %1400 = vmatpush1.msra.mxu0 0.0
      %1401 = vmatprep.subr.mxu0 0.0
      %1402 = vmatpush1.msra.mxu0 0.0
      %1403 = vmatprep.subr.mxu0 0.0
      %1404 = vmatpush1.msra.mxu0 0.0
      %1405 = vmatprep.subr.mxu0 0.0
      %1406 = vmatpush1.msra.mxu0 0.0
      %1407 = vmatprep.subr.mxu0 0.0
      %1408 = vmatpush1.msra.mxu0 0.0
      %1409 = vmatprep.subr.mxu0 0.0
      %1410 = vmatpush1.msra.mxu0 0.0
      %1411 = vmatprep.subr.mxu0 0.0
      %1412 = vmatpush1.msra.mxu0 0.0
      %1413 = vmatprep.mubr.f32.mxu0 0.0
      %1414 = vmatmul.mubr.f32.gmra.mrb[0].mxu0 %v1305
      %v1415 = vpop.f32.mrb[0].mxu0
      %v1416 = vadd.f32 %v1302, %v1415
      %v1417 = vpop.f32.mrb[0].mxu0
      %1418 = vmatprep.mubr.f32.mxu0 0.0
      %1419 = vmatmul.mubr.f32.gmra.mrb[0].mxu0 %v1308
      %v1420 = vpop.f32.mrb[0].mxu0
      %v1421 = vadd.f32 %v1302, %v1420
      %v1422 = vpop.f32.mrb[0].mxu0
      %1423 = vmatprep.mubr.f32.mxu0 0.0
      %1424 = vmatmul.mubr.f32.gmra.mrb[0].mxu0 %v1311
      %v1425 = vpop.f32.mrb[0].mxu0
      %v1426 = vadd.f32 %v1302, %v1425
      %v1427 = vpop.f32.mrb[0].mxu0
      %1428 = vmatprep.mubr.f32.mxu0 0.0
      %1429 = vmatmul.mubr.f32.gmra.mrb[0].mxu0 %v1314
      %v1430 = vpop.f32.mrb[0].mxu0
      %v1431 = vadd.f32 %v1302, %v1430
      %v1432 = vpop.f32.mrb[0].mxu0
      %1433 = vmatprep.mubr.f32.mxu0 0.0
      %1434 = vmatmul.mubr.f32.gmra.mrb[0].mxu0 %v1317
      %v1435 = vpop.f32.mrb[0].mxu0
      %v1436 = vadd.f32 %v1302, %v1435
      %v1437 = vpop.f32.mrb[0].mxu0
      %1438 = vmatprep.mubr.f32.mxu0 0.0
      %1439 = vmatmul.mubr.f32.gmra.mrb[0].mxu0 %v1320
      %v1440 = vpop.f32.mrb[0].mxu0
      %v1441 = vadd.f32 %v1302, %v1440
      %v1442 = vpop.f32.mrb[0].mxu0
      %1443 = vmatprep.mubr.f32.mxu0 0.0
      %1444 = vmatmul.mubr.f32.gmra.mrb[0].mxu0 %v1323
      %v1445 = vpop.f32.mrb[0].mxu0
      %v1446 = vadd.f32 %v1302, %v1445
      %v1447 = vpop.f32.mrb[0].mxu0
      %1448 = vmatprep.mubr.f32.mxu0 0.0
      %1449 = vmatmul.mubr.f32.gmra.mrb[0].mxu0 %v1326
      %v1450 = vpop.f32.mrb[0].mxu0
      %v1451 = vadd.f32 %v1302, %v1450
      %v1452 = vpop.f32.mrb[0].mxu0
      %1453 = vmatprep.mubr.f32.mxu0 0.0
      %1454 = vmatmul.mubr.f32.gmra.mrb[0].mxu0 %v1329
      %v1455 = vpop.f32.mrb[0].mxu0
      %v1456 = vadd.f32 %v1302, %v1455
      %v1457 = vpop.f32.mrb[0].mxu0
      %1458 = vmatprep.mubr.f32.mxu0 0.0
      %1459 = vmatmul.mubr.f32.gmra.mrb[0].mxu0 %v1332
      %v1460 = vpop.f32.mrb[0].mxu0
      %v1461 = vadd.f32 %v1302, %v1460
      %v1462 = vpop.f32.mrb[0].mxu0
      %1463 = vmatprep.mubr.f32.mxu0 0.0
      %1464 = vmatmul.mubr.f32.gmra.mrb[0].mxu0 %v1335
      %v1465 = vpop.f32.mrb[0].mxu0
      %v1466 = vadd.f32 %v1302, %v1465
      %v1467 = vpop.f32.mrb[0].mxu0
      %1468 = vmatprep.mubr.f32.mxu0 0.0
      %1469 = vmatmul.mubr.f32.gmra.mrb[0].mxu0 %v1338
      %v1470 = vpop.f32.mrb[0].mxu0
      %v1471 = vadd.f32 %v1302, %v1470
      %v1472 = vpop.f32.mrb[0].mxu0
      %1473 = vmatprep.mubr.f32.mxu0 0.0
      %1474 = vmatmul.mubr.f32.gmra.mrb[0].mxu0 %v1341
      %v1475 = vpop.f32.mrb[0].mxu0
      %v1476 = vadd.f32 %v1302, %v1475
      %v1477 = vpop.f32.mrb[0].mxu0
      %1478 = vmatprep.mubr.f32.mxu0 0.0
      %1479 = vmatmul.mubr.f32.gmra.mrb[0].mxu0 %v1344
      %v1480 = vpop.f32.mrb[0].mxu0
      %v1481 = vadd.f32 %v1302, %v1480
      %v1482 = vpop.f32.mrb[0].mxu0
      %1483 = vmatprep.mubr.f32.mxu0 0.0
      %1484 = vmatmul.mubr.f32.gmra.mrb[0].mxu0 %v1347
      %v1485 = vpop.f32.mrb[0].mxu0
      %v1486 = vadd.f32 %v1302, %v1485
      %v1487 = vpop.f32.mrb[0].mxu0
      %1488 = vdwg.mxu0
      %1504 = vrot.lane.b32.xlu0 %v1416, 96
      %v1505 = vpop.permute.xlu0 %1504
      %1506 = vrot.lane.b32.xlu0 %v1421, 96
      %v1507 = vpop.permute.xlu0 %1506
      %1508 = vrot.lane.b32.xlu0 %v1426, 96
      %v1509 = vpop.permute.xlu0 %1508
      %1510 = vrot.lane.b32.xlu0 %v1431, 96
      %v1511 = vpop.permute.xlu0 %1510
      %1512 = vrot.lane.b32.xlu0 %v1436, 96
      %v1513 = vpop.permute.xlu0 %1512
      %1514 = vrot.lane.b32.xlu0 %v1441, 96
      %v1515 = vpop.permute.xlu0 %1514
      %1516 = vrot.lane.b32.xlu0 %v1446, 96
      %v1517 = vpop.permute.xlu0 %1516
      %1518 = vrot.lane.b32.xlu0 %v1451, 96
      %v1519 = vpop.permute.xlu0 %1518
      %1520 = vrot.lane.b32.xlu0 %v1456, 96
      %v1521 = vpop.permute.xlu0 %1520
      %1522 = vrot.lane.b32.xlu0 %v1461, 96
      %v1523 = vpop.permute.xlu0 %1522
      %1524 = vrot.lane.b32.xlu0 %v1466, 96
      %v1525 = vpop.permute.xlu0 %1524
      %1526 = vrot.lane.b32.xlu0 %v1471, 96
      %v1527 = vpop.permute.xlu0 %1526
      %1528 = vrot.lane.b32.xlu0 %v1476, 96
      %v1529 = vpop.permute.xlu0 %1528
      %1530 = vrot.lane.b32.xlu0 %v1481, 96
      %v1531 = vpop.permute.xlu0 %1530
      %1532 = vrot.lane.b32.xlu0 %v1486, 96
      %v1533 = vpop.permute.xlu0 %1532
      %vm1534 = vcmask 64512
      %v1535 = vsel %vm1534, %v1416, 0
      %v1537 = vsel %vm1534, %v1421, 0
      %v1539 = vsel %vm1534, %v1426, 0
      %v1541 = vsel %vm1534, %v1431, 0
      %v1543 = vsel %vm1534, %v1436, 0
      %v1545 = vsel %vm1534, %v1441, 0
      %v1547 = vsel %vm1534, %v1446, 0
      %v1549 = vsel %vm1534, %v1451, 0
      %v1551 = vsel %vm1534, %v1456, 0
      %v1553 = vsel %vm1534, %v1461, 0
      %v1555 = vsel %vm1534, %v1466, 0
      %v1557 = vsel %vm1534, %v1471, 0
      %v1559 = vsel %vm1534, %v1476, 0
      %v1561 = vsel %vm1534, %v1481, 0
      %v1563 = vsel %vm1534, %v1486, 0
      %v1565 = vsel %vm1534, %v1505, 0
      %v1567 = vsel %vm1534, %v1507, 0
      %v1569 = vsel %vm1534, %v1509, 0
      %v1571 = vsel %vm1534, %v1511, 0
      %v1573 = vsel %vm1534, %v1513, 0
      %v1575 = vsel %vm1534, %v1515, 0
      %v1577 = vsel %vm1534, %v1517, 0
      %v1579 = vsel %vm1534, %v1519, 0
      %v1581 = vsel %vm1534, %v1521, 0
      %v1583 = vsel %vm1534, %v1523, 0
      %v1585 = vsel %vm1534, %v1525, 0
      %v1587 = vsel %vm1534, %v1527, 0
      %v1589 = vsel %vm1534, %v1529, 0
      %v1591 = vsel %vm1534, %v1531, 0
      %v1593 = vsel %vm1534, %v1533, 0
      %1595 = vmatprep.subr.mxu0 0.0
      %1596 = vmatpush1.xpose.msra.mxu0 %v1565
      %1597 = vmatprep.subr.mxu0 0.0
      %1598 = vmatpush1.xpose.msra.mxu0 %v1567
      %1599 = vmatprep.subr.mxu0 0.0
      %1600 = vmatpush1.xpose.msra.mxu0 %v1569
      %1601 = vmatprep.subr.mxu0 0.0
      %1602 = vmatpush1.xpose.msra.mxu0 %v1571
      %1603 = vmatprep.subr.mxu0 0.0
      %1604 = vmatpush1.xpose.msra.mxu0 %v1573
      %1605 = vmatprep.subr.mxu0 0.0
      %1606 = vmatpush1.xpose.msra.mxu0 %v1575
      %1607 = vmatprep.subr.mxu0 0.0
      %1608 = vmatpush1.xpose.msra.mxu0 %v1577
      %1609 = vmatprep.subr.mxu0 0.0
      %1610 = vmatpush1.xpose.msra.mxu0 %v1579
      %1611 = vmatprep.subr.mxu0 0.0
      %1612 = vmatpush1.xpose.msra.mxu0 %v1581
      %1613 = vmatprep.subr.mxu0 0.0
      %1614 = vmatpush1.xpose.msra.mxu0 %v1583
      %1615 = vmatprep.subr.mxu0 0.0
      %1616 = vmatpush1.xpose.msra.mxu0 %v1585
      %1617 = vmatprep.subr.mxu0 0.0
      %1618 = vmatpush1.xpose.msra.mxu0 %v1587
      %1619 = vmatprep.subr.mxu0 0.0
      %1620 = vmatpush1.xpose.msra.mxu0 %v1589
      %1621 = vmatprep.subr.mxu0 0.0
      %1622 = vmatpush1.xpose.msra.mxu0 %v1591
      %1623 = vmatprep.subr.mxu0 0.0
      %1624 = vmatpush1.xpose.msra.mxu0 %v1593
      %1625 = vmatprep.subr.mxu0 0.0
      %1626 = vmatpush1.xpose.msra.mxu0 0.0
      %1627 = vmatprep.subr.mxu0 0.0
      %1628 = vmatpush1.xpose.msra.mxu0 0.0
      %1629 = vmatprep.subr.mxu0 0.0
      %1630 = vmatpush1.xpose.msra.mxu0 0.0
      %1631 = vmatprep.subr.mxu0 0.0
      %1632 = vmatpush1.xpose.msra.mxu0 0.0
      %1633 = vmatprep.subr.mxu0 0.0
      %1634 = vmatpush1.xpose.msra.mxu0 0.0
      %1635 = vmatprep.subr.mxu0 0.0
      %1636 = vmatpush1.xpose.msra.mxu0 0.0
      %1637 = vmatprep.subr.mxu0 0.0
      %1638 = vmatpush1.xpose.msra.mxu0 0.0
      %1639 = vmatprep.subr.mxu0 0.0
      %1640 = vmatpush1.xpose.msra.mxu0 0.0
      %1641 = vmatprep.subr.mxu0 0.0
      %1642 = vmatpush1.xpose.msra.mxu0 0.0
      %1643 = vmatprep.subr.mxu0 0.0
      %1644 = vmatpush1.xpose.msra.mxu0 0.0
      %1645 = vmatprep.subr.mxu0 0.0
      %1646 = vmatpush1.xpose.msra.mxu0 0.0
      %1647 = vmatprep.subr.mxu0 0.0
      %1648 = vmatpush1.xpose.msra.mxu0 0.0
      %1649 = vmatprep.subr.mxu0 0.0
      %1650 = vmatpush1.xpose.msra.mxu0 0.0
      %1651 = vmatprep.subr.mxu0 0.0
      %1652 = vmatpush1.xpose.msra.mxu0 0.0
      %1653 = vmatprep.subr.mxu0 0.0
      %1654 = vmatpush1.xpose.msra.mxu0 0.0
      %1655 = vmatprep.subr.mxu0 0.0
      %1656 = vmatpush1.xpose.msra.mxu0 0.0
      %1657 = vmatprep.subr.mxu0 0.0
      %1658 = vmatpush1.xpose.msra.mxu0 0.0
      %1659 = vmatprep.mubr.f32.mxu0 0.0
      %1660 = vmatmul.mubr.f32.gmra.mrb[0].mxu0 %v1535
      %v1661 = vpop.f32.mrb[0].mxu0
      %v1662 = vadd.f32 0.0, %v1661
      %v1663 = vpop.f32.mrb[0].mxu0
      %1664 = vmatprep.mubr.f32.mxu0 0.0
      %1665 = vmatmul.mubr.f32.gmra.mrb[0].mxu0 %v1537
      %v1666 = vpop.f32.mrb[0].mxu0
      %v1667 = vadd.f32 0.0, %v1666
      %v1668 = vpop.f32.mrb[0].mxu0
      %1669 = vmatprep.mubr.f32.mxu0 0.0
      %1670 = vmatmul.mubr.f32.gmra.mrb[0].mxu0 %v1539
      %v1671 = vpop.f32.mrb[0].mxu0
      %v1672 = vadd.f32 0.0, %v1671
      %v1673 = vpop.f32.mrb[0].mxu0
      %1674 = vmatprep.mubr.f32.mxu0 0.0
      %1675 = vmatmul.mubr.f32.gmra.mrb[0].mxu0 %v1541
      %v1676 = vpop.f32.mrb[0].mxu0
      %v1677 = vadd.f32 0.0, %v1676
      %v1678 = vpop.f32.mrb[0].mxu0
      %1679 = vmatprep.mubr.f32.mxu0 0.0
      %1680 = vmatmul.mubr.f32.gmra.mrb[0].mxu0 %v1543
      %v1681 = vpop.f32.mrb[0].mxu0
      %v1682 = vadd.f32 0.0, %v1681
      %v1683 = vpop.f32.mrb[0].mxu0
      %1684 = vmatprep.mubr.f32.mxu0 0.0
      %1685 = vmatmul.mubr.f32.gmra.mrb[0].mxu0 %v1545
      %v1686 = vpop.f32.mrb[0].mxu0
      %v1687 = vadd.f32 0.0, %v1686
      %v1688 = vpop.f32.mrb[0].mxu0
      %1689 = vmatprep.mubr.f32.mxu0 0.0
      %1690 = vmatmul.mubr.f32.gmra.mrb[0].mxu0 %v1547
      %v1691 = vpop.f32.mrb[0].mxu0
      %v1692 = vadd.f32 0.0, %v1691
      %v1693 = vpop.f32.mrb[0].mxu0
      %1694 = vmatprep.mubr.f32.mxu0 0.0
      %1695 = vmatmul.mubr.f32.gmra.mrb[0].mxu0 %v1549
      %v1696 = vpop.f32.mrb[0].mxu0
      %v1697 = vadd.f32 0.0, %v1696
      %v1698 = vpop.f32.mrb[0].mxu0
      %1699 = vmatprep.mubr.f32.mxu0 0.0
      %1700 = vmatmul.mubr.f32.gmra.mrb[0].mxu0 %v1551
      %v1701 = vpop.f32.mrb[0].mxu0
      %v1702 = vadd.f32 0.0, %v1701
      %v1703 = vpop.f32.mrb[0].mxu0
      %1704 = vmatprep.mubr.f32.mxu0 0.0
      %1705 = vmatmul.mubr.f32.gmra.mrb[0].mxu0 %v1553
      %v1706 = vpop.f32.mrb[0].mxu0
      %v1707 = vadd.f32 0.0, %v1706
      %v1708 = vpop.f32.mrb[0].mxu0
      %1709 = vmatprep.mubr.f32.mxu0 0.0
      %1710 = vmatmul.mubr.f32.gmra.mrb[0].mxu0 %v1555
      %v1711 = vpop.f32.mrb[0].mxu0
      %v1712 = vadd.f32 0.0, %v1711
      %v1713 = vpop.f32.mrb[0].mxu0
      %1714 = vmatprep.mubr.f32.mxu0 0.0
      %1715 = vmatmul.mubr.f32.gmra.mrb[0].mxu0 %v1557
      %v1716 = vpop.f32.mrb[0].mxu0
      %v1717 = vadd.f32 0.0, %v1716
      %v1718 = vpop.f32.mrb[0].mxu0
      %1719 = vmatprep.mubr.f32.mxu0 0.0
      %1720 = vmatmul.mubr.f32.gmra.mrb[0].mxu0 %v1559
      %v1721 = vpop.f32.mrb[0].mxu0
      %v1722 = vadd.f32 0.0, %v1721
      %v1723 = vpop.f32.mrb[0].mxu0
      %1724 = vmatprep.mubr.f32.mxu0 0.0
      %1725 = vmatmul.mubr.f32.gmra.mrb[0].mxu0 %v1561
      %v1726 = vpop.f32.mrb[0].mxu0
      %v1727 = vadd.f32 0.0, %v1726
      %v1728 = vpop.f32.mrb[0].mxu0
      %1729 = vmatprep.mubr.f32.mxu0 0.0
      %1730 = vmatmul.mubr.f32.gmra.mrb[0].mxu0 %v1563
      %v1731 = vpop.f32.mrb[0].mxu0
      %v1732 = vadd.f32 0.0, %v1731
      %v1733 = vpop.f32.mrb[0].mxu0
      %1734 = vdwg.mxu0
      %v1735 = vmul.f32 %v1662, 0.35355338
      %v1736 = vmul.f32 %v1667, 0.35355338
      %v1737 = vmul.f32 %v1672, 0.35355338
      %v1738 = vmul.f32 %v1677, 0.35355338
      %v1739 = vmul.f32 %v1682, 0.35355338
      %v1740 = vmul.f32 %v1687, 0.35355338
      %v1741 = vmul.f32 %v1692, 0.35355338
      %v1742 = vmul.f32 %v1697, 0.35355338
      %v1743 = vmul.f32 %v1702, 0.35355338
      %v1744 = vmul.f32 %v1707, 0.35355338
      %v1745 = vmul.f32 %v1712, 0.35355338
      %v1746 = vmul.f32 %v1717, 0.35355338
      %v1747 = vmul.f32 %v1722, 0.35355338
      %v1748 = vmul.f32 %v1727, 0.35355338
      %v1749 = vmul.f32 %v1732, 0.35355338
      %v1750 = vadd.f32 %v1735, %v1039
      %v1751 = vadd.f32 %v1736, %v1040
      %v1752 = vadd.f32 %v1737, %v1041
      %v1753 = vadd.f32 %v1738, %v1042
      %v1754 = vadd.f32 %v1739, %v1043
      %v1755 = vadd.f32 %v1740, %v1044
      %v1756 = vadd.f32 %v1741, %v1045
      %v1757 = vadd.f32 %v1742, %v1046
      %v1758 = vadd.f32 %v1743, %v1047
      %v1759 = vadd.f32 %v1744, %v1048
      %v1760 = vadd.f32 %v1745, %v1049
      %v1761 = vadd.f32 %v1746, %v1050
      %v1762 = vadd.f32 %v1747, %v1051
      %v1763 = vadd.f32 %v1748, %v1052
      %v1764 = vadd.f32 %v1749, %v1053
      %vm1765 = vcmask 982016
      %v1766 = vsel %vm1765, %v1750, -inf
      %1767 = vmax.xlane.f32.xlu0 %v1766
      %v1768 = vpop.xlane.xlu0 %1767
      %v1769 = vsel %vm1765, %v1751, -inf
      %1770 = vmax.xlane.f32.xlu0 %v1769
      %v1771 = vpop.xlane.xlu0 %1770
      %v1772 = vsel %vm1765, %v1752, -inf
      %1773 = vmax.xlane.f32.xlu0 %v1772
      %v1774 = vpop.xlane.xlu0 %1773
      %v1775 = vsel %vm1765, %v1753, -inf
      %1776 = vmax.xlane.f32.xlu0 %v1775
      %v1777 = vpop.xlane.xlu0 %1776
      %v1778 = vsel %vm1765, %v1754, -inf
      %1779 = vmax.xlane.f32.xlu0 %v1778
      %v1780 = vpop.xlane.xlu0 %1779
      %v1781 = vsel %vm1765, %v1755, -inf
      %1782 = vmax.xlane.f32.xlu0 %v1781
      %v1783 = vpop.xlane.xlu0 %1782
      %v1784 = vsel %vm1765, %v1756, -inf
      %1785 = vmax.xlane.f32.xlu0 %v1784
      %v1786 = vpop.xlane.xlu0 %1785
      %v1787 = vsel %vm1765, %v1757, -inf
      %1788 = vmax.xlane.f32.xlu0 %v1787
      %v1789 = vpop.xlane.xlu0 %1788
      %v1790 = vsel %vm1765, %v1758, -inf
      %1791 = vmax.xlane.f32.xlu0 %v1790
      %v1792 = vpop.xlane.xlu0 %1791
      %v1793 = vsel %vm1765, %v1759, -inf
      %1794 = vmax.xlane.f32.xlu0 %v1793
      %v1795 = vpop.xlane.xlu0 %1794
      %v1796 = vsel %vm1765, %v1760, -inf
      %1797 = vmax.xlane.f32.xlu0 %v1796
      %v1798 = vpop.xlane.xlu0 %1797
      %v1799 = vsel %vm1765, %v1761, -inf
      %1800 = vmax.xlane.f32.xlu0 %v1799
      %v1801 = vpop.xlane.xlu0 %1800
      %v1802 = vsel %vm1765, %v1762, -inf
      %1803 = vmax.xlane.f32.xlu0 %v1802
      %v1804 = vpop.xlane.xlu0 %1803
      %v1805 = vsel %vm1765, %v1763, -inf
      %1806 = vmax.xlane.f32.xlu0 %v1805
      %v1807 = vpop.xlane.xlu0 %1806
      %v1808 = vsel %vm1765, %v1764, -inf
      %1809 = vmax.xlane.f32.xlu0 %v1808
      %v1810 = vpop.xlane.xlu0 %1809
      %v1811 = vsub.f32 %v1750, %v1768
      %v1812 = vsub.f32 %v1751, %v1771
      %v1813 = vsub.f32 %v1752, %v1774
      %v1814 = vsub.f32 %v1753, %v1777
      %v1815 = vsub.f32 %v1754, %v1780
      %v1816 = vsub.f32 %v1755, %v1783
      %v1817 = vsub.f32 %v1756, %v1786
      %v1818 = vsub.f32 %v1757, %v1789
      %v1819 = vsub.f32 %v1758, %v1792
      %v1820 = vsub.f32 %v1759, %v1795
      %v1821 = vsub.f32 %v1760, %v1798
      %v1822 = vsub.f32 %v1761, %v1801
      %v1823 = vsub.f32 %v1762, %v1804
      %v1824 = vsub.f32 %v1763, %v1807
      %v1825 = vsub.f32 %v1764, %v1810
      %v1826 = vmul.f32 %v1811, 1.442695
      %v1827 = vpow.pop %v1826
      %v1828 = vmul.f32 %v1812, 1.442695
      %v1829 = vpow.pop %v1828
      %v1830 = vmul.f32 %v1813, 1.442695
      %v1831 = vpow.pop %v1830
      %v1832 = vmul.f32 %v1814, 1.442695
      %v1833 = vpow.pop %v1832
      %v1834 = vmul.f32 %v1815, 1.442695
      %v1835 = vpow.pop %v1834
      %v1836 = vmul.f32 %v1816, 1.442695
      %v1837 = vpow.pop %v1836
      %v1838 = vmul.f32 %v1817, 1.442695
      %v1839 = vpow.pop %v1838
      %v1840 = vmul.f32 %v1818, 1.442695
      %v1841 = vpow.pop %v1840
      %v1842 = vmul.f32 %v1819, 1.442695
      %v1843 = vpow.pop %v1842
      %v1844 = vmul.f32 %v1820, 1.442695
      %v1845 = vpow.pop %v1844
      %v1846 = vmul.f32 %v1821, 1.442695
      %v1847 = vpow.pop %v1846
      %v1848 = vmul.f32 %v1822, 1.442695
      %v1849 = vpow.pop %v1848
      %v1850 = vmul.f32 %v1823, 1.442695
      %v1851 = vpow.pop %v1850
      %v1852 = vmul.f32 %v1824, 1.442695
      %v1853 = vpow.pop %v1852
      %v1854 = vmul.f32 %v1825, 1.442695
      %v1855 = vpow.pop %v1854
      %v1856 = vsel %vm1765, %v1827, 0.0
      %1857 = vadd.xlane.f32.xlu0 %v1856
      %v1858 = vpop.xlane.xlu0 %1857
      %v1859 = vsel %vm1765, %v1829, 0.0
      %1860 = vadd.xlane.f32.xlu0 %v1859
      %v1861 = vpop.xlane.xlu0 %1860
      %v1862 = vsel %vm1765, %v1831, 0.0
      %1863 = vadd.xlane.f32.xlu0 %v1862
      %v1864 = vpop.xlane.xlu0 %1863
      %v1865 = vsel %vm1765, %v1833, 0.0
      %1866 = vadd.xlane.f32.xlu0 %v1865
      %v1867 = vpop.xlane.xlu0 %1866
      %v1868 = vsel %vm1765, %v1835, 0.0
      %1869 = vadd.xlane.f32.xlu0 %v1868
      %v1870 = vpop.xlane.xlu0 %1869
      %v1871 = vsel %vm1765, %v1837, 0.0
      %1872 = vadd.xlane.f32.xlu0 %v1871
      %v1873 = vpop.xlane.xlu0 %1872
      %v1874 = vsel %vm1765, %v1839, 0.0
      %1875 = vadd.xlane.f32.xlu0 %v1874
      %v1876 = vpop.xlane.xlu0 %1875
      %v1877 = vsel %vm1765, %v1841, 0.0
      %1878 = vadd.xlane.f32.xlu0 %v1877
      %v1879 = vpop.xlane.xlu0 %1878
      %v1880 = vsel %vm1765, %v1843, 0.0
      %1881 = vadd.xlane.f32.xlu0 %v1880
      %v1882 = vpop.xlane.xlu0 %1881
      %v1883 = vsel %vm1765, %v1845, 0.0
      %1884 = vadd.xlane.f32.xlu0 %v1883
      %v1885 = vpop.xlane.xlu0 %1884
      %v1886 = vsel %vm1765, %v1847, 0.0
      %1887 = vadd.xlane.f32.xlu0 %v1886
      %v1888 = vpop.xlane.xlu0 %1887
      %v1889 = vsel %vm1765, %v1849, 0.0
      %1890 = vadd.xlane.f32.xlu0 %v1889
      %v1891 = vpop.xlane.xlu0 %1890
      %v1892 = vsel %vm1765, %v1851, 0.0
      %1893 = vadd.xlane.f32.xlu0 %v1892
      %v1894 = vpop.xlane.xlu0 %1893
      %v1895 = vsel %vm1765, %v1853, 0.0
      %1896 = vadd.xlane.f32.xlu0 %v1895
      %v1897 = vpop.xlane.xlu0 %1896
      %v1898 = vsel %vm1765, %v1855, 0.0
      %1899 = vadd.xlane.f32.xlu0 %v1898
      %v1900 = vpop.xlane.xlu0 %1899
      %v1901 = vrcp.pop %v1858
      %v1902 = vrcp.pop %v1861
      %v1903 = vrcp.pop %v1864
      %v1904 = vrcp.pop %v1867
      %v1905 = vrcp.pop %v1870
      %v1906 = vrcp.pop %v1873
      %v1907 = vrcp.pop %v1876
      %v1908 = vrcp.pop %v1879
      %v1909 = vrcp.pop %v1882
      %v1910 = vrcp.pop %v1885
      %v1911 = vrcp.pop %v1888
      %v1912 = vrcp.pop %v1891
      %v1913 = vrcp.pop %v1894
      %v1914 = vrcp.pop %v1897
      %v1915 = vrcp.pop %v1900
      %v1916 = vmul.f32 %v1827, %v1901
      %v1917 = vmul.f32 %v1829, %v1902
      %v1918 = vmul.f32 %v1831, %v1903
      %v1919 = vmul.f32 %v1833, %v1904
      %v1920 = vmul.f32 %v1835, %v1905
      %v1921 = vmul.f32 %v1837, %v1906
      %v1922 = vmul.f32 %v1839, %v1907
      %v1923 = vmul.f32 %v1841, %v1908
      %v1924 = vmul.f32 %v1843, %v1909
      %v1925 = vmul.f32 %v1845, %v1910
      %v1926 = vmul.f32 %v1847, %v1911
      %v1927 = vmul.f32 %v1849, %v1912
      %v1928 = vmul.f32 %v1851, %v1913
      %v1929 = vmul.f32 %v1853, %v1914
      %v1930 = vmul.f32 %v1855, %v1915
      %1931 = vrot.lane.b32.xlu0 %v1416, 64
      %v1932 = vpop.permute.xlu0 %1931
      %1933 = vrot.lane.b32.xlu0 %v1421, 64
      %v1934 = vpop.permute.xlu0 %1933
      %1935 = vrot.lane.b32.xlu0 %v1426, 64
      %v1936 = vpop.permute.xlu0 %1935
      %1937 = vrot.lane.b32.xlu0 %v1431, 64
      %v1938 = vpop.permute.xlu0 %1937
      %1939 = vrot.lane.b32.xlu0 %v1436, 64
      %v1940 = vpop.permute.xlu0 %1939
      %1941 = vrot.lane.b32.xlu0 %v1441, 64
      %v1942 = vpop.permute.xlu0 %1941
      %1943 = vrot.lane.b32.xlu0 %v1446, 64
      %v1944 = vpop.permute.xlu0 %1943
      %1945 = vrot.lane.b32.xlu0 %v1451, 64
      %v1946 = vpop.permute.xlu0 %1945
      %1947 = vrot.lane.b32.xlu0 %v1456, 64
      %v1948 = vpop.permute.xlu0 %1947
      %1949 = vrot.lane.b32.xlu0 %v1461, 64
      %v1950 = vpop.permute.xlu0 %1949
      %1951 = vrot.lane.b32.xlu0 %v1466, 64
      %v1952 = vpop.permute.xlu0 %1951
      %1953 = vrot.lane.b32.xlu0 %v1471, 64
      %v1954 = vpop.permute.xlu0 %1953
      %1955 = vrot.lane.b32.xlu0 %v1476, 64
      %v1956 = vpop.permute.xlu0 %1955
      %1957 = vrot.lane.b32.xlu0 %v1481, 64
      %v1958 = vpop.permute.xlu0 %1957
      %1959 = vrot.lane.b32.xlu0 %v1486, 64
      %v1960 = vpop.permute.xlu0 %1959
      %v1977 = vsel %vm1765, %v1916, 0
      %v1980 = vsel %vm1765, %v1917, 0
      %v1983 = vsel %vm1765, %v1918, 0
      %v1986 = vsel %vm1765, %v1919, 0
      %v1989 = vsel %vm1765, %v1920, 0
      %v1992 = vsel %vm1765, %v1921, 0
      %v1995 = vsel %vm1765, %v1922, 0
      %v1998 = vsel %vm1765, %v1923, 0
      %v2001 = vsel %vm1765, %v1924, 0
      %v2004 = vsel %vm1765, %v1925, 0
      %v2007 = vsel %vm1765, %v1926, 0
      %v2010 = vsel %vm1765, %v1927, 0
      %v2013 = vsel %vm1765, %v1928, 0
      %v2016 = vsel %vm1765, %v1929, 0
      %v2019 = vsel %vm1765, %v1930, 0
      %2021 = vmatprep.subr.mxu0 0.0
      %2022 = vmatpush1.msra.mxu0 %v1932
      %2023 = vmatprep.subr.mxu0 0.0
      %2024 = vmatpush1.msra.mxu0 %v1934
      %2025 = vmatprep.subr.mxu0 0.0
      %2026 = vmatpush1.msra.mxu0 %v1936
      %2027 = vmatprep.subr.mxu0 0.0
      %2028 = vmatpush1.msra.mxu0 %v1938
      %2029 = vmatprep.subr.mxu0 0.0
      %2030 = vmatpush1.msra.mxu0 %v1940
      %2031 = vmatprep.subr.mxu0 0.0
      %2032 = vmatpush1.msra.mxu0 %v1942
      %2033 = vmatprep.subr.mxu0 0.0
      %2034 = vmatpush1.msra.mxu0 %v1944
      %2035 = vmatprep.subr.mxu0 0.0
      %2036 = vmatpush1.msra.mxu0 %v1946
      %2037 = vmatprep.subr.mxu0 0.0
      %2038 = vmatpush1.msra.mxu0 %v1948
      %2039 = vmatprep.subr.mxu0 0.0
      %2040 = vmatpush1.msra.mxu0 %v1950
      %2041 = vmatprep.subr.mxu0 0.0
      %2042 = vmatpush1.msra.mxu0 %v1952
      %2043 = vmatprep.subr.mxu0 0.0
      %2044 = vmatpush1.msra.mxu0 %v1954
      %2045 = vmatprep.subr.mxu0 0.0
      %2046 = vmatpush1.msra.mxu0 %v1956
      %2047 = vmatprep.subr.mxu0 0.0
      %2048 = vmatpush1.msra.mxu0 %v1958
      %2049 = vmatprep.subr.mxu0 0.0
      %2050 = vmatpush1.msra.mxu0 %v1960
      %2051 = vmatprep.subr.mxu0 0.0
      %2052 = vmatpush1.msra.mxu0 0.0
      %2053 = vmatprep.subr.mxu0 0.0
      %2054 = vmatpush1.msra.mxu0 0.0
      %2055 = vmatprep.subr.mxu0 0.0
      %2056 = vmatpush1.msra.mxu0 0.0
      %2057 = vmatprep.subr.mxu0 0.0
      %2058 = vmatpush1.msra.mxu0 0.0
      %2059 = vmatprep.subr.mxu0 0.0
      %2060 = vmatpush1.msra.mxu0 0.0
      %2061 = vmatprep.subr.mxu0 0.0
      %2062 = vmatpush1.msra.mxu0 0.0
      %2063 = vmatprep.subr.mxu0 0.0
      %2064 = vmatpush1.msra.mxu0 0.0
      %2065 = vmatprep.subr.mxu0 0.0
      %2066 = vmatpush1.msra.mxu0 0.0
      %2067 = vmatprep.subr.mxu0 0.0
      %2068 = vmatpush1.msra.mxu0 0.0
      %2069 = vmatprep.subr.mxu0 0.0
      %2070 = vmatpush1.msra.mxu0 0.0
      %2071 = vmatprep.subr.mxu0 0.0
      %2072 = vmatpush1.msra.mxu0 0.0
      %2073 = vmatprep.subr.mxu0 0.0
      %2074 = vmatpush1.msra.mxu0 0.0
      %2075 = vmatprep.subr.mxu0 0.0
      %2076 = vmatpush1.msra.mxu0 0.0
      %2077 = vmatprep.subr.mxu0 0.0
      %2078 = vmatpush1.msra.mxu0 0.0
      %2079 = vmatprep.subr.mxu0 0.0
      %2080 = vmatpush1.msra.mxu0 0.0
      %2081 = vmatprep.subr.mxu0 0.0
      %2082 = vmatpush1.msra.mxu0 0.0
      %2083 = vmatprep.subr.mxu0 0.0
      %2084 = vmatpush1.msra.mxu0 0.0
      %2085 = vmatprep.mubr.f32.mxu0 0.0
      %2086 = vmatmul.mubr.f32.gmra.mrb[0].mxu0 %v1977
      %v2087 = vpop.f32.mrb[0].mxu0
      %v2088 = vadd.f32 0.0, %v2087
      %v2089 = vpop.f32.mrb[0].mxu0
      %2090 = vmatprep.mubr.f32.mxu0 0.0
      %2091 = vmatmul.mubr.f32.gmra.mrb[0].mxu0 %v1980
      %v2092 = vpop.f32.mrb[0].mxu0
      %v2093 = vadd.f32 0.0, %v2092
      %v2094 = vpop.f32.mrb[0].mxu0
      %2095 = vmatprep.mubr.f32.mxu0 0.0
      %2096 = vmatmul.mubr.f32.gmra.mrb[0].mxu0 %v1983
      %v2097 = vpop.f32.mrb[0].mxu0
      %v2098 = vadd.f32 0.0, %v2097
      %v2099 = vpop.f32.mrb[0].mxu0
      %2100 = vmatprep.mubr.f32.mxu0 0.0
      %2101 = vmatmul.mubr.f32.gmra.mrb[0].mxu0 %v1986
      %v2102 = vpop.f32.mrb[0].mxu0
      %v2103 = vadd.f32 0.0, %v2102
      %v2104 = vpop.f32.mrb[0].mxu0
      %2105 = vmatprep.mubr.f32.mxu0 0.0
      %2106 = vmatmul.mubr.f32.gmra.mrb[0].mxu0 %v1989
      %v2107 = vpop.f32.mrb[0].mxu0
      %v2108 = vadd.f32 0.0, %v2107
      %v2109 = vpop.f32.mrb[0].mxu0
      %2110 = vmatprep.mubr.f32.mxu0 0.0
      %2111 = vmatmul.mubr.f32.gmra.mrb[0].mxu0 %v1992
      %v2112 = vpop.f32.mrb[0].mxu0
      %v2113 = vadd.f32 0.0, %v2112
      %v2114 = vpop.f32.mrb[0].mxu0
      %2115 = vmatprep.mubr.f32.mxu0 0.0
      %2116 = vmatmul.mubr.f32.gmra.mrb[0].mxu0 %v1995
      %v2117 = vpop.f32.mrb[0].mxu0
      %v2118 = vadd.f32 0.0, %v2117
      %v2119 = vpop.f32.mrb[0].mxu0
      %2120 = vmatprep.mubr.f32.mxu0 0.0
      %2121 = vmatmul.mubr.f32.gmra.mrb[0].mxu0 %v1998
      %v2122 = vpop.f32.mrb[0].mxu0
      %v2123 = vadd.f32 0.0, %v2122
      %v2124 = vpop.f32.mrb[0].mxu0
      %2125 = vmatprep.mubr.f32.mxu0 0.0
      %2126 = vmatmul.mubr.f32.gmra.mrb[0].mxu0 %v2001
      %v2127 = vpop.f32.mrb[0].mxu0
      %v2128 = vadd.f32 0.0, %v2127
      %v2129 = vpop.f32.mrb[0].mxu0
      %2130 = vmatprep.mubr.f32.mxu0 0.0
      %2131 = vmatmul.mubr.f32.gmra.mrb[0].mxu0 %v2004
      %v2132 = vpop.f32.mrb[0].mxu0
      %v2133 = vadd.f32 0.0, %v2132
      %v2134 = vpop.f32.mrb[0].mxu0
      %2135 = vmatprep.mubr.f32.mxu0 0.0
      %2136 = vmatmul.mubr.f32.gmra.mrb[0].mxu0 %v2007
      %v2137 = vpop.f32.mrb[0].mxu0
      %v2138 = vadd.f32 0.0, %v2137
      %v2139 = vpop.f32.mrb[0].mxu0
      %2140 = vmatprep.mubr.f32.mxu0 0.0
      %2141 = vmatmul.mubr.f32.gmra.mrb[0].mxu0 %v2010
      %v2142 = vpop.f32.mrb[0].mxu0
      %v2143 = vadd.f32 0.0, %v2142
      %v2144 = vpop.f32.mrb[0].mxu0
      %2145 = vmatprep.mubr.f32.mxu0 0.0
      %2146 = vmatmul.mubr.f32.gmra.mrb[0].mxu0 %v2013
      %v2147 = vpop.f32.mrb[0].mxu0
      %v2148 = vadd.f32 0.0, %v2147
      %v2149 = vpop.f32.mrb[0].mxu0
      %2150 = vmatprep.mubr.f32.mxu0 0.0
      %2151 = vmatmul.mubr.f32.gmra.mrb[0].mxu0 %v2016
      %v2152 = vpop.f32.mrb[0].mxu0
      %v2153 = vadd.f32 0.0, %v2152
      %v2154 = vpop.f32.mrb[0].mxu0
      %2155 = vmatprep.mubr.f32.mxu0 0.0
      %2156 = vmatmul.mubr.f32.gmra.mrb[0].mxu0 %v2019
      %v2157 = vpop.f32.mrb[0].mxu0
      %v2158 = vadd.f32 0.0, %v2157
      %v2159 = vpop.f32.mrb[0].mxu0
      %2160 = vdwg.mxu0
      %2161 = vrot.lane.b32.xlu0 %v1416, 120
      %v2162 = vpop.permute.xlu0 %2161
      %2163 = vrot.lane.b32.xlu0 %v1421, 120
      %v2164 = vpop.permute.xlu0 %2163
      %2165 = vrot.lane.b32.xlu0 %v1426, 120
      %v2166 = vpop.permute.xlu0 %2165
      %2167 = vrot.lane.b32.xlu0 %v1431, 120
      %v2168 = vpop.permute.xlu0 %2167
      %2169 = vrot.lane.b32.xlu0 %v1436, 120
      %v2170 = vpop.permute.xlu0 %2169
      %2171 = vrot.lane.b32.xlu0 %v1441, 120
      %v2172 = vpop.permute.xlu0 %2171
      %2173 = vrot.lane.b32.xlu0 %v1446, 120
      %v2174 = vpop.permute.xlu0 %2173
      %2175 = vrot.lane.b32.xlu0 %v1451, 120
      %v2176 = vpop.permute.xlu0 %2175
      %2177 = vrot.lane.b32.xlu0 %v1456, 120
      %v2178 = vpop.permute.xlu0 %2177
      %2179 = vrot.lane.b32.xlu0 %v1461, 120
      %v2180 = vpop.permute.xlu0 %2179
      %2181 = vrot.lane.b32.xlu0 %v1466, 120
      %v2182 = vpop.permute.xlu0 %2181
      %2183 = vrot.lane.b32.xlu0 %v1471, 120
      %v2184 = vpop.permute.xlu0 %2183
      %2185 = vrot.lane.b32.xlu0 %v1476, 120
      %v2186 = vpop.permute.xlu0 %2185
      %2187 = vrot.lane.b32.xlu0 %v1481, 120
      %v2188 = vpop.permute.xlu0 %2187
      %2189 = vrot.lane.b32.xlu0 %v1486, 120
      %v2190 = vpop.permute.xlu0 %2189
      %2191 = vrot.lane.b32.xlu0 %v1416, 88
      %v2192 = vpop.permute.xlu0 %2191
      %2193 = vrot.lane.b32.xlu0 %v1421, 88
      %v2194 = vpop.permute.xlu0 %2193
      %2195 = vrot.lane.b32.xlu0 %v1426, 88
      %v2196 = vpop.permute.xlu0 %2195
      %2197 = vrot.lane.b32.xlu0 %v1431, 88
      %v2198 = vpop.permute.xlu0 %2197
      %2199 = vrot.lane.b32.xlu0 %v1436, 88
      %v2200 = vpop.permute.xlu0 %2199
      %2201 = vrot.lane.b32.xlu0 %v1441, 88
      %v2202 = vpop.permute.xlu0 %2201
      %2203 = vrot.lane.b32.xlu0 %v1446, 88
      %v2204 = vpop.permute.xlu0 %2203
      %2205 = vrot.lane.b32.xlu0 %v1451, 88
      %v2206 = vpop.permute.xlu0 %2205
      %2207 = vrot.lane.b32.xlu0 %v1456, 88
      %v2208 = vpop.permute.xlu0 %2207
      %2209 = vrot.lane.b32.xlu0 %v1461, 88
      %v2210 = vpop.permute.xlu0 %2209
      %2211 = vrot.lane.b32.xlu0 %v1466, 88
      %v2212 = vpop.permute.xlu0 %2211
      %2213 = vrot.lane.b32.xlu0 %v1471, 88
      %v2214 = vpop.permute.xlu0 %2213
      %2215 = vrot.lane.b32.xlu0 %v1476, 88
      %v2216 = vpop.permute.xlu0 %2215
      %2217 = vrot.lane.b32.xlu0 %v1481, 88
      %v2218 = vpop.permute.xlu0 %2217
      %2219 = vrot.lane.b32.xlu0 %v1486, 88
      %v2220 = vpop.permute.xlu0 %2219
      %v2221 = vsel %vm1534, %v2162, 0
      %v2223 = vsel %vm1534, %v2164, 0
      %v2225 = vsel %vm1534, %v2166, 0
      %v2227 = vsel %vm1534, %v2168, 0
      %v2229 = vsel %vm1534, %v2170, 0
      %v2231 = vsel %vm1534, %v2172, 0
      %v2233 = vsel %vm1534, %v2174, 0
      %v2235 = vsel %vm1534, %v2176, 0
      %v2237 = vsel %vm1534, %v2178, 0
      %v2239 = vsel %vm1534, %v2180, 0
      %v2241 = vsel %vm1534, %v2182, 0
      %v2243 = vsel %vm1534, %v2184, 0
      %v2245 = vsel %vm1534, %v2186, 0
      %v2247 = vsel %vm1534, %v2188, 0
      %v2249 = vsel %vm1534, %v2190, 0
      %v2251 = vsel %vm1534, %v2192, 0
      %v2253 = vsel %vm1534, %v2194, 0
      %v2255 = vsel %vm1534, %v2196, 0
      %v2257 = vsel %vm1534, %v2198, 0
      %v2259 = vsel %vm1534, %v2200, 0
      %v2261 = vsel %vm1534, %v2202, 0
      %v2263 = vsel %vm1534, %v2204, 0
      %v2265 = vsel %vm1534, %v2206, 0
      %v2267 = vsel %vm1534, %v2208, 0
      %v2269 = vsel %vm1534, %v2210, 0
      %v2271 = vsel %vm1534, %v2212, 0
      %v2273 = vsel %vm1534, %v2214, 0
      %v2275 = vsel %vm1534, %v2216, 0
      %v2277 = vsel %vm1534, %v2218, 0
      %v2279 = vsel %vm1534, %v2220, 0
      %2281 = vmatprep.subr.mxu0 0.0
      %2282 = vmatpush1.xpose.msra.mxu0 %v2251
      %2283 = vmatprep.subr.mxu0 0.0
      %2284 = vmatpush1.xpose.msra.mxu0 %v2253
      %2285 = vmatprep.subr.mxu0 0.0
      %2286 = vmatpush1.xpose.msra.mxu0 %v2255
      %2287 = vmatprep.subr.mxu0 0.0
      %2288 = vmatpush1.xpose.msra.mxu0 %v2257
      %2289 = vmatprep.subr.mxu0 0.0
      %2290 = vmatpush1.xpose.msra.mxu0 %v2259
      %2291 = vmatprep.subr.mxu0 0.0
      %2292 = vmatpush1.xpose.msra.mxu0 %v2261
      %2293 = vmatprep.subr.mxu0 0.0
      %2294 = vmatpush1.xpose.msra.mxu0 %v2263
      %2295 = vmatprep.subr.mxu0 0.0
      %2296 = vmatpush1.xpose.msra.mxu0 %v2265
      %2297 = vmatprep.subr.mxu0 0.0
      %2298 = vmatpush1.xpose.msra.mxu0 %v2267
      %2299 = vmatprep.subr.mxu0 0.0
      %2300 = vmatpush1.xpose.msra.mxu0 %v2269
      %2301 = vmatprep.subr.mxu0 0.0
      %2302 = vmatpush1.xpose.msra.mxu0 %v2271
      %2303 = vmatprep.subr.mxu0 0.0
      %2304 = vmatpush1.xpose.msra.mxu0 %v2273
      %2305 = vmatprep.subr.mxu0 0.0
      %2306 = vmatpush1.xpose.msra.mxu0 %v2275
      %2307 = vmatprep.subr.mxu0 0.0
      %2308 = vmatpush1.xpose.msra.mxu0 %v2277
      %2309 = vmatprep.subr.mxu0 0.0
      %2310 = vmatpush1.xpose.msra.mxu0 %v2279
      %2311 = vmatprep.subr.mxu0 0.0
      %2312 = vmatpush1.xpose.msra.mxu0 0.0
      %2313 = vmatprep.subr.mxu0 0.0
      %2314 = vmatpush1.xpose.msra.mxu0 0.0
      %2315 = vmatprep.subr.mxu0 0.0
      %2316 = vmatpush1.xpose.msra.mxu0 0.0
      %2317 = vmatprep.subr.mxu0 0.0
      %2318 = vmatpush1.xpose.msra.mxu0 0.0
      %2319 = vmatprep.subr.mxu0 0.0
      %2320 = vmatpush1.xpose.msra.mxu0 0.0
      %2321 = vmatprep.subr.mxu0 0.0
      %2322 = vmatpush1.xpose.msra.mxu0 0.0
      %2323 = vmatprep.subr.mxu0 0.0
      %2324 = vmatpush1.xpose.msra.mxu0 0.0
      %2325 = vmatprep.subr.mxu0 0.0
      %2326 = vmatpush1.xpose.msra.mxu0 0.0
      %2327 = vmatprep.subr.mxu0 0.0
      %2328 = vmatpush1.xpose.msra.mxu0 0.0
      %2329 = vmatprep.subr.mxu0 0.0
      %2330 = vmatpush1.xpose.msra.mxu0 0.0
      %2331 = vmatprep.subr.mxu0 0.0
      %2332 = vmatpush1.xpose.msra.mxu0 0.0
      %2333 = vmatprep.subr.mxu0 0.0
      %2334 = vmatpush1.xpose.msra.mxu0 0.0
      %2335 = vmatprep.subr.mxu0 0.0
      %2336 = vmatpush1.xpose.msra.mxu0 0.0
      %2337 = vmatprep.subr.mxu0 0.0
      %2338 = vmatpush1.xpose.msra.mxu0 0.0
      %2339 = vmatprep.subr.mxu0 0.0
      %2340 = vmatpush1.xpose.msra.mxu0 0.0
      %2341 = vmatprep.subr.mxu0 0.0
      %2342 = vmatpush1.xpose.msra.mxu0 0.0
      %2343 = vmatprep.subr.mxu0 0.0
      %2344 = vmatpush1.xpose.msra.mxu0 0.0
      %2345 = vmatprep.mubr.f32.mxu0 0.0
      %2346 = vmatmul.mubr.f32.gmra.mrb[0].mxu0 %v2221
      %v2347 = vpop.f32.mrb[0].mxu0
      %v2348 = vadd.f32 0.0, %v2347
      %v2349 = vpop.f32.mrb[0].mxu0
      %2350 = vmatprep.mubr.f32.mxu0 0.0
      %2351 = vmatmul.mubr.f32.gmra.mrb[0].mxu0 %v2223
      %v2352 = vpop.f32.mrb[0].mxu0
      %v2353 = vadd.f32 0.0, %v2352
      %v2354 = vpop.f32.mrb[0].mxu0
      %2355 = vmatprep.mubr.f32.mxu0 0.0
      %2356 = vmatmul.mubr.f32.gmra.mrb[0].mxu0 %v2225
      %v2357 = vpop.f32.mrb[0].mxu0
      %v2358 = vadd.f32 0.0, %v2357
      %v2359 = vpop.f32.mrb[0].mxu0
      %2360 = vmatprep.mubr.f32.mxu0 0.0
      %2361 = vmatmul.mubr.f32.gmra.mrb[0].mxu0 %v2227
      %v2362 = vpop.f32.mrb[0].mxu0
      %v2363 = vadd.f32 0.0, %v2362
      %v2364 = vpop.f32.mrb[0].mxu0
      %2365 = vmatprep.mubr.f32.mxu0 0.0
      %2366 = vmatmul.mubr.f32.gmra.mrb[0].mxu0 %v2229
      %v2367 = vpop.f32.mrb[0].mxu0
      %v2368 = vadd.f32 0.0, %v2367
      %v2369 = vpop.f32.mrb[0].mxu0
      %2370 = vmatprep.mubr.f32.mxu0 0.0
      %2371 = vmatmul.mubr.f32.gmra.mrb[0].mxu0 %v2231
      %v2372 = vpop.f32.mrb[0].mxu0
      %v2373 = vadd.f32 0.0, %v2372
      %v2374 = vpop.f32.mrb[0].mxu0
      %2375 = vmatprep.mubr.f32.mxu0 0.0
      %2376 = vmatmul.mubr.f32.gmra.mrb[0].mxu0 %v2233
      %v2377 = vpop.f32.mrb[0].mxu0
      %v2378 = vadd.f32 0.0, %v2377
      %v2379 = vpop.f32.mrb[0].mxu0
      %2380 = vmatprep.mubr.f32.mxu0 0.0
      %2381 = vmatmul.mubr.f32.gmra.mrb[0].mxu0 %v2235
      %v2382 = vpop.f32.mrb[0].mxu0
      %v2383 = vadd.f32 0.0, %v2382
      %v2384 = vpop.f32.mrb[0].mxu0
      %2385 = vmatprep.mubr.f32.mxu0 0.0
      %2386 = vmatmul.mubr.f32.gmra.mrb[0].mxu0 %v2237
      %v2387 = vpop.f32.mrb[0].mxu0
      %v2388 = vadd.f32 0.0, %v2387
      %v2389 = vpop.f32.mrb[0].mxu0
      %2390 = vmatprep.mubr.f32.mxu0 0.0
      %2391 = vmatmul.mubr.f32.gmra.mrb[0].mxu0 %v2239
      %v2392 = vpop.f32.mrb[0].mxu0
      %v2393 = vadd.f32 0.0, %v2392
      %v2394 = vpop.f32.mrb[0].mxu0
      %2395 = vmatprep.mubr.f32.mxu0 0.0
      %2396 = vmatmul.mubr.f32.gmra.mrb[0].mxu0 %v2241
      %v2397 = vpop.f32.mrb[0].mxu0
      %v2398 = vadd.f32 0.0, %v2397
      %v2399 = vpop.f32.mrb[0].mxu0
      %2400 = vmatprep.mubr.f32.mxu0 0.0
      %2401 = vmatmul.mubr.f32.gmra.mrb[0].mxu0 %v2243
      %v2402 = vpop.f32.mrb[0].mxu0
      %v2403 = vadd.f32 0.0, %v2402
      %v2404 = vpop.f32.mrb[0].mxu0
      %2405 = vmatprep.mubr.f32.mxu0 0.0
      %2406 = vmatmul.mubr.f32.gmra.mrb[0].mxu0 %v2245
      %v2407 = vpop.f32.mrb[0].mxu0
      %v2408 = vadd.f32 0.0, %v2407
      %v2409 = vpop.f32.mrb[0].mxu0
      %2410 = vmatprep.mubr.f32.mxu0 0.0
      %2411 = vmatmul.mubr.f32.gmra.mrb[0].mxu0 %v2247
      %v2412 = vpop.f32.mrb[0].mxu0
      %v2413 = vadd.f32 0.0, %v2412
      %v2414 = vpop.f32.mrb[0].mxu0
      %2415 = vmatprep.mubr.f32.mxu0 0.0
      %2416 = vmatmul.mubr.f32.gmra.mrb[0].mxu0 %v2249
      %v2417 = vpop.f32.mrb[0].mxu0
      %v2418 = vadd.f32 0.0, %v2417
      %v2419 = vpop.f32.mrb[0].mxu0
      %2420 = vdwg.mxu0
      %v2421 = vmul.f32 %v2348, 0.35355338
      %v2422 = vmul.f32 %v2353, 0.35355338
      %v2423 = vmul.f32 %v2358, 0.35355338
      %v2424 = vmul.f32 %v2363, 0.35355338
      %v2425 = vmul.f32 %v2368, 0.35355338
      %v2426 = vmul.f32 %v2373, 0.35355338
      %v2427 = vmul.f32 %v2378, 0.35355338
      %v2428 = vmul.f32 %v2383, 0.35355338
      %v2429 = vmul.f32 %v2388, 0.35355338
      %v2430 = vmul.f32 %v2393, 0.35355338
      %v2431 = vmul.f32 %v2398, 0.35355338
      %v2432 = vmul.f32 %v2403, 0.35355338
      %v2433 = vmul.f32 %v2408, 0.35355338
      %v2434 = vmul.f32 %v2413, 0.35355338
      %v2435 = vmul.f32 %v2418, 0.35355338
      %v2436 = vadd.f32 %v2421, %v1039
      %v2437 = vadd.f32 %v2422, %v1040
      %v2438 = vadd.f32 %v2423, %v1041
      %v2439 = vadd.f32 %v2424, %v1042
      %v2440 = vadd.f32 %v2425, %v1043
      %v2441 = vadd.f32 %v2426, %v1044
      %v2442 = vadd.f32 %v2427, %v1045
      %v2443 = vadd.f32 %v2428, %v1046
      %v2444 = vadd.f32 %v2429, %v1047
      %v2445 = vadd.f32 %v2430, %v1048
      %v2446 = vadd.f32 %v2431, %v1049
      %v2447 = vadd.f32 %v2432, %v1050
      %v2448 = vadd.f32 %v2433, %v1051
      %v2449 = vadd.f32 %v2434, %v1052
      %v2450 = vadd.f32 %v2435, %v1053
      %v2451 = vsel %vm1765, %v2436, -inf
      %2452 = vmax.xlane.f32.xlu0 %v2451
      %v2453 = vpop.xlane.xlu0 %2452
      %v2454 = vsel %vm1765, %v2437, -inf
      %2455 = vmax.xlane.f32.xlu0 %v2454
      %v2456 = vpop.xlane.xlu0 %2455
      %v2457 = vsel %vm1765, %v2438, -inf
      %2458 = vmax.xlane.f32.xlu0 %v2457
      %v2459 = vpop.xlane.xlu0 %2458
      %v2460 = vsel %vm1765, %v2439, -inf
      %2461 = vmax.xlane.f32.xlu0 %v2460
      %v2462 = vpop.xlane.xlu0 %2461
      %v2463 = vsel %vm1765, %v2440, -inf
      %2464 = vmax.xlane.f32.xlu0 %v2463
      %v2465 = vpop.xlane.xlu0 %2464
      %v2466 = vsel %vm1765, %v2441, -inf
      %2467 = vmax.xlane.f32.xlu0 %v2466
      %v2468 = vpop.xlane.xlu0 %2467
      %v2469 = vsel %vm1765, %v2442, -inf
      %2470 = vmax.xlane.f32.xlu0 %v2469
      %v2471 = vpop.xlane.xlu0 %2470
      %v2472 = vsel %vm1765, %v2443, -inf
      %2473 = vmax.xlane.f32.xlu0 %v2472
      %v2474 = vpop.xlane.xlu0 %2473
      %v2475 = vsel %vm1765, %v2444, -inf
      %2476 = vmax.xlane.f32.xlu0 %v2475
      %v2477 = vpop.xlane.xlu0 %2476
      %v2478 = vsel %vm1765, %v2445, -inf
      %2479 = vmax.xlane.f32.xlu0 %v2478
      %v2480 = vpop.xlane.xlu0 %2479
      %v2481 = vsel %vm1765, %v2446, -inf
      %2482 = vmax.xlane.f32.xlu0 %v2481
      %v2483 = vpop.xlane.xlu0 %2482
      %v2484 = vsel %vm1765, %v2447, -inf
      %2485 = vmax.xlane.f32.xlu0 %v2484
      %v2486 = vpop.xlane.xlu0 %2485
      %v2487 = vsel %vm1765, %v2448, -inf
      %2488 = vmax.xlane.f32.xlu0 %v2487
      %v2489 = vpop.xlane.xlu0 %2488
      %v2490 = vsel %vm1765, %v2449, -inf
      %2491 = vmax.xlane.f32.xlu0 %v2490
      %v2492 = vpop.xlane.xlu0 %2491
      %v2493 = vsel %vm1765, %v2450, -inf
      %2494 = vmax.xlane.f32.xlu0 %v2493
      %v2495 = vpop.xlane.xlu0 %2494
      %v2496 = vsub.f32 %v2436, %v2453
      %v2497 = vsub.f32 %v2437, %v2456
      %v2498 = vsub.f32 %v2438, %v2459
      %v2499 = vsub.f32 %v2439, %v2462
      %v2500 = vsub.f32 %v2440, %v2465
      %v2501 = vsub.f32 %v2441, %v2468
      %v2502 = vsub.f32 %v2442, %v2471
      %v2503 = vsub.f32 %v2443, %v2474
      %v2504 = vsub.f32 %v2444, %v2477
      %v2505 = vsub.f32 %v2445, %v2480
      %v2506 = vsub.f32 %v2446, %v2483
      %v2507 = vsub.f32 %v2447, %v2486
      %v2508 = vsub.f32 %v2448, %v2489
      %v2509 = vsub.f32 %v2449, %v2492
      %v2510 = vsub.f32 %v2450, %v2495
      %v2511 = vmul.f32 %v2496, 1.442695
      %v2512 = vpow.pop %v2511
      %v2513 = vmul.f32 %v2497, 1.442695
      %v2514 = vpow.pop %v2513
      %v2515 = vmul.f32 %v2498, 1.442695
      %v2516 = vpow.pop %v2515
      %v2517 = vmul.f32 %v2499, 1.442695
      %v2518 = vpow.pop %v2517
      %v2519 = vmul.f32 %v2500, 1.442695
      %v2520 = vpow.pop %v2519
      %v2521 = vmul.f32 %v2501, 1.442695
      %v2522 = vpow.pop %v2521
      %v2523 = vmul.f32 %v2502, 1.442695
      %v2524 = vpow.pop %v2523
      %v2525 = vmul.f32 %v2503, 1.442695
      %v2526 = vpow.pop %v2525
      %v2527 = vmul.f32 %v2504, 1.442695
      %v2528 = vpow.pop %v2527
      %v2529 = vmul.f32 %v2505, 1.442695
      %v2530 = vpow.pop %v2529
      %v2531 = vmul.f32 %v2506, 1.442695
      %v2532 = vpow.pop %v2531
      %v2533 = vmul.f32 %v2507, 1.442695
      %v2534 = vpow.pop %v2533
      %v2535 = vmul.f32 %v2508, 1.442695
      %v2536 = vpow.pop %v2535
      %v2537 = vmul.f32 %v2509, 1.442695
      %v2538 = vpow.pop %v2537
      %v2539 = vmul.f32 %v2510, 1.442695
      %v2540 = vpow.pop %v2539
      %v2541 = vsel %vm1765, %v2512, 0.0
      %2542 = vadd.xlane.f32.xlu0 %v2541
      %v2543 = vpop.xlane.xlu0 %2542
      %v2544 = vsel %vm1765, %v2514, 0.0
      %2545 = vadd.xlane.f32.xlu0 %v2544
      %v2546 = vpop.xlane.xlu0 %2545
      %v2547 = vsel %vm1765, %v2516, 0.0
      %2548 = vadd.xlane.f32.xlu0 %v2547
      %v2549 = vpop.xlane.xlu0 %2548
      %v2550 = vsel %vm1765, %v2518, 0.0
      %2551 = vadd.xlane.f32.xlu0 %v2550
      %v2552 = vpop.xlane.xlu0 %2551
      %v2553 = vsel %vm1765, %v2520, 0.0
      %2554 = vadd.xlane.f32.xlu0 %v2553
      %v2555 = vpop.xlane.xlu0 %2554
      %v2556 = vsel %vm1765, %v2522, 0.0
      %2557 = vadd.xlane.f32.xlu0 %v2556
      %v2558 = vpop.xlane.xlu0 %2557
      %v2559 = vsel %vm1765, %v2524, 0.0
      %2560 = vadd.xlane.f32.xlu0 %v2559
      %v2561 = vpop.xlane.xlu0 %2560
      %v2562 = vsel %vm1765, %v2526, 0.0
      %2563 = vadd.xlane.f32.xlu0 %v2562
      %v2564 = vpop.xlane.xlu0 %2563
      %v2565 = vsel %vm1765, %v2528, 0.0
      %2566 = vadd.xlane.f32.xlu0 %v2565
      %v2567 = vpop.xlane.xlu0 %2566
      %v2568 = vsel %vm1765, %v2530, 0.0
      %2569 = vadd.xlane.f32.xlu0 %v2568
      %v2570 = vpop.xlane.xlu0 %2569
      %v2571 = vsel %vm1765, %v2532, 0.0
      %2572 = vadd.xlane.f32.xlu0 %v2571
      %v2573 = vpop.xlane.xlu0 %2572
      %v2574 = vsel %vm1765, %v2534, 0.0
      %2575 = vadd.xlane.f32.xlu0 %v2574
      %v2576 = vpop.xlane.xlu0 %2575
      %v2577 = vsel %vm1765, %v2536, 0.0
      %2578 = vadd.xlane.f32.xlu0 %v2577
      %v2579 = vpop.xlane.xlu0 %2578
      %v2580 = vsel %vm1765, %v2538, 0.0
      %2581 = vadd.xlane.f32.xlu0 %v2580
      %v2582 = vpop.xlane.xlu0 %2581
      %v2583 = vsel %vm1765, %v2540, 0.0
      %2584 = vadd.xlane.f32.xlu0 %v2583
      %v2585 = vpop.xlane.xlu0 %2584
      %v2586 = vrcp.pop %v2543
      %v2587 = vrcp.pop %v2546
      %v2588 = vrcp.pop %v2549
      %v2589 = vrcp.pop %v2552
      %v2590 = vrcp.pop %v2555
      %v2591 = vrcp.pop %v2558
      %v2592 = vrcp.pop %v2561
      %v2593 = vrcp.pop %v2564
      %v2594 = vrcp.pop %v2567
      %v2595 = vrcp.pop %v2570
      %v2596 = vrcp.pop %v2573
      %v2597 = vrcp.pop %v2576
      %v2598 = vrcp.pop %v2579
      %v2599 = vrcp.pop %v2582
      %v2600 = vrcp.pop %v2585
      %v2601 = vmul.f32 %v2512, %v2586
      %v2602 = vmul.f32 %v2514, %v2587
      %v2603 = vmul.f32 %v2516, %v2588
      %v2604 = vmul.f32 %v2518, %v2589
      %v2605 = vmul.f32 %v2520, %v2590
      %v2606 = vmul.f32 %v2522, %v2591
      %v2607 = vmul.f32 %v2524, %v2592
      %v2608 = vmul.f32 %v2526, %v2593
      %v2609 = vmul.f32 %v2528, %v2594
      %v2610 = vmul.f32 %v2530, %v2595
      %v2611 = vmul.f32 %v2532, %v2596
      %v2612 = vmul.f32 %v2534, %v2597
      %v2613 = vmul.f32 %v2536, %v2598
      %v2614 = vmul.f32 %v2538, %v2599
      %v2615 = vmul.f32 %v2540, %v2600
      %2616 = vrot.lane.b32.xlu0 %v1416, 56
      %v2617 = vpop.permute.xlu0 %2616
      %2618 = vrot.lane.b32.xlu0 %v1421, 56
      %v2619 = vpop.permute.xlu0 %2618
      %2620 = vrot.lane.b32.xlu0 %v1426, 56
      %v2621 = vpop.permute.xlu0 %2620
      %2622 = vrot.lane.b32.xlu0 %v1431, 56
      %v2623 = vpop.permute.xlu0 %2622
      %2624 = vrot.lane.b32.xlu0 %v1436, 56
      %v2625 = vpop.permute.xlu0 %2624
      %2626 = vrot.lane.b32.xlu0 %v1441, 56
      %v2627 = vpop.permute.xlu0 %2626
      %2628 = vrot.lane.b32.xlu0 %v1446, 56
      %v2629 = vpop.permute.xlu0 %2628
      %2630 = vrot.lane.b32.xlu0 %v1451, 56
      %v2631 = vpop.permute.xlu0 %2630
      %2632 = vrot.lane.b32.xlu0 %v1456, 56
      %v2633 = vpop.permute.xlu0 %2632
      %2634 = vrot.lane.b32.xlu0 %v1461, 56
      %v2635 = vpop.permute.xlu0 %2634
      %2636 = vrot.lane.b32.xlu0 %v1466, 56
      %v2637 = vpop.permute.xlu0 %2636
      %2638 = vrot.lane.b32.xlu0 %v1471, 56
      %v2639 = vpop.permute.xlu0 %2638
      %2640 = vrot.lane.b32.xlu0 %v1476, 56
      %v2641 = vpop.permute.xlu0 %2640
      %2642 = vrot.lane.b32.xlu0 %v1481, 56
      %v2643 = vpop.permute.xlu0 %2642
      %2644 = vrot.lane.b32.xlu0 %v1486, 56
      %v2645 = vpop.permute.xlu0 %2644
      %v2662 = vsel %vm1765, %v2601, 0
      %v2665 = vsel %vm1765, %v2602, 0
      %v2668 = vsel %vm1765, %v2603, 0
      %v2671 = vsel %vm1765, %v2604, 0
      %v2674 = vsel %vm1765, %v2605, 0
      %v2677 = vsel %vm1765, %v2606, 0
      %v2680 = vsel %vm1765, %v2607, 0
      %v2683 = vsel %vm1765, %v2608, 0
      %v2686 = vsel %vm1765, %v2609, 0
      %v2689 = vsel %vm1765, %v2610, 0
      %v2692 = vsel %vm1765, %v2611, 0
      %v2695 = vsel %vm1765, %v2612, 0
      %v2698 = vsel %vm1765, %v2613, 0
      %v2701 = vsel %vm1765, %v2614, 0
      %v2704 = vsel %vm1765, %v2615, 0
      %2706 = vmatprep.subr.mxu0 0.0
      %2707 = vmatpush1.msra.mxu0 %v2617
      %2708 = vmatprep.subr.mxu0 0.0
      %2709 = vmatpush1.msra.mxu0 %v2619
      %2710 = vmatprep.subr.mxu0 0.0
      %2711 = vmatpush1.msra.mxu0 %v2621
      %2712 = vmatprep.subr.mxu0 0.0
      %2713 = vmatpush1.msra.mxu0 %v2623
      %2714 = vmatprep.subr.mxu0 0.0
      %2715 = vmatpush1.msra.mxu0 %v2625
      %2716 = vmatprep.subr.mxu0 0.0
      %2717 = vmatpush1.msra.mxu0 %v2627
      %2718 = vmatprep.subr.mxu0 0.0
      %2719 = vmatpush1.msra.mxu0 %v2629
      %2720 = vmatprep.subr.mxu0 0.0
      %2721 = vmatpush1.msra.mxu0 %v2631
      %2722 = vmatprep.subr.mxu0 0.0
      %2723 = vmatpush1.msra.mxu0 %v2633
      %2724 = vmatprep.subr.mxu0 0.0
      %2725 = vmatpush1.msra.mxu0 %v2635
      %2726 = vmatprep.subr.mxu0 0.0
      %2727 = vmatpush1.msra.mxu0 %v2637
      %2728 = vmatprep.subr.mxu0 0.0
      %2729 = vmatpush1.msra.mxu0 %v2639
      %2730 = vmatprep.subr.mxu0 0.0
      %2731 = vmatpush1.msra.mxu0 %v2641
      %2732 = vmatprep.subr.mxu0 0.0
      %2733 = vmatpush1.msra.mxu0 %v2643
      %2734 = vmatprep.subr.mxu0 0.0
      %2735 = vmatpush1.msra.mxu0 %v2645
      %2736 = vmatprep.subr.mxu0 0.0
      %2737 = vmatpush1.msra.mxu0 0.0
      %2738 = vmatprep.subr.mxu0 0.0
      %2739 = vmatpush1.msra.mxu0 0.0
      %2740 = vmatprep.subr.mxu0 0.0
      %2741 = vmatpush1.msra.mxu0 0.0
      %2742 = vmatprep.subr.mxu0 0.0
      %2743 = vmatpush1.msra.mxu0 0.0
      %2744 = vmatprep.subr.mxu0 0.0
      %2745 = vmatpush1.msra.mxu0 0.0
      %2746 = vmatprep.subr.mxu0 0.0
      %2747 = vmatpush1.msra.mxu0 0.0
      %2748 = vmatprep.subr.mxu0 0.0
      %2749 = vmatpush1.msra.mxu0 0.0
      %2750 = vmatprep.subr.mxu0 0.0
      %2751 = vmatpush1.msra.mxu0 0.0
      %2752 = vmatprep.subr.mxu0 0.0
      %2753 = vmatpush1.msra.mxu0 0.0
      %2754 = vmatprep.subr.mxu0 0.0
      %2755 = vmatpush1.msra.mxu0 0.0
      %2756 = vmatprep.subr.mxu0 0.0
      %2757 = vmatpush1.msra.mxu0 0.0
      %2758 = vmatprep.subr.mxu0 0.0
      %2759 = vmatpush1.msra.mxu0 0.0
      %2760 = vmatprep.subr.mxu0 0.0
      %2761 = vmatpush1.msra.mxu0 0.0
      %2762 = vmatprep.subr.mxu0 0.0
      %2763 = vmatpush1.msra.mxu0 0.0
      %2764 = vmatprep.subr.mxu0 0.0
      %2765 = vmatpush1.msra.mxu0 0.0
      %2766 = vmatprep.subr.mxu0 0.0
      %2767 = vmatpush1.msra.mxu0 0.0
      %2768 = vmatprep.subr.mxu0 0.0
      %2769 = vmatpush1.msra.mxu0 0.0
      %2770 = vmatprep.mubr.f32.mxu0 0.0
      %2771 = vmatmul.mubr.f32.gmra.mrb[0].mxu0 %v2662
      %v2772 = vpop.f32.mrb[0].mxu0
      %v2773 = vadd.f32 0.0, %v2772
      %v2774 = vpop.f32.mrb[0].mxu0
      %2775 = vmatprep.mubr.f32.mxu0 0.0
      %2776 = vmatmul.mubr.f32.gmra.mrb[0].mxu0 %v2665
      %v2777 = vpop.f32.mrb[0].mxu0
      %v2778 = vadd.f32 0.0, %v2777
      %v2779 = vpop.f32.mrb[0].mxu0
      %2780 = vmatprep.mubr.f32.mxu0 0.0
      %2781 = vmatmul.mubr.f32.gmra.mrb[0].mxu0 %v2668
      %v2782 = vpop.f32.mrb[0].mxu0
      %v2783 = vadd.f32 0.0, %v2782
      %v2784 = vpop.f32.mrb[0].mxu0
      %2785 = vmatprep.mubr.f32.mxu0 0.0
      %2786 = vmatmul.mubr.f32.gmra.mrb[0].mxu0 %v2671
      %v2787 = vpop.f32.mrb[0].mxu0
      %v2788 = vadd.f32 0.0, %v2787
      %v2789 = vpop.f32.mrb[0].mxu0
      %2790 = vmatprep.mubr.f32.mxu0 0.0
      %2791 = vmatmul.mubr.f32.gmra.mrb[0].mxu0 %v2674
      %v2792 = vpop.f32.mrb[0].mxu0
      %v2793 = vadd.f32 0.0, %v2792
      %v2794 = vpop.f32.mrb[0].mxu0
      %2795 = vmatprep.mubr.f32.mxu0 0.0
      %2796 = vmatmul.mubr.f32.gmra.mrb[0].mxu0 %v2677
      %v2797 = vpop.f32.mrb[0].mxu0
      %v2798 = vadd.f32 0.0, %v2797
      %v2799 = vpop.f32.mrb[0].mxu0
      %2800 = vmatprep.mubr.f32.mxu0 0.0
      %2801 = vmatmul.mubr.f32.gmra.mrb[0].mxu0 %v2680
      %v2802 = vpop.f32.mrb[0].mxu0
      %v2803 = vadd.f32 0.0, %v2802
      %v2804 = vpop.f32.mrb[0].mxu0
      %2805 = vmatprep.mubr.f32.mxu0 0.0
      %2806 = vmatmul.mubr.f32.gmra.mrb[0].mxu0 %v2683
      %v2807 = vpop.f32.mrb[0].mxu0
      %v2808 = vadd.f32 0.0, %v2807
      %v2809 = vpop.f32.mrb[0].mxu0
      %2810 = vmatprep.mubr.f32.mxu0 0.0
      %2811 = vmatmul.mubr.f32.gmra.mrb[0].mxu0 %v2686
      %v2812 = vpop.f32.mrb[0].mxu0
      %v2813 = vadd.f32 0.0, %v2812
      %v2814 = vpop.f32.mrb[0].mxu0
      %2815 = vmatprep.mubr.f32.mxu0 0.0
      %2816 = vmatmul.mubr.f32.gmra.mrb[0].mxu0 %v2689
      %v2817 = vpop.f32.mrb[0].mxu0
      %v2818 = vadd.f32 0.0, %v2817
      %v2819 = vpop.f32.mrb[0].mxu0
      %2820 = vmatprep.mubr.f32.mxu0 0.0
      %2821 = vmatmul.mubr.f32.gmra.mrb[0].mxu0 %v2692
      %v2822 = vpop.f32.mrb[0].mxu0
      %v2823 = vadd.f32 0.0, %v2822
      %v2824 = vpop.f32.mrb[0].mxu0
      %2825 = vmatprep.mubr.f32.mxu0 0.0
      %2826 = vmatmul.mubr.f32.gmra.mrb[0].mxu0 %v2695
      %v2827 = vpop.f32.mrb[0].mxu0
      %v2828 = vadd.f32 0.0, %v2827
      %v2829 = vpop.f32.mrb[0].mxu0
      %2830 = vmatprep.mubr.f32.mxu0 0.0
      %2831 = vmatmul.mubr.f32.gmra.mrb[0].mxu0 %v2698
      %v2832 = vpop.f32.mrb[0].mxu0
      %v2833 = vadd.f32 0.0, %v2832
      %v2834 = vpop.f32.mrb[0].mxu0
      %2835 = vmatprep.mubr.f32.mxu0 0.0
      %2836 = vmatmul.mubr.f32.gmra.mrb[0].mxu0 %v2701
      %v2837 = vpop.f32.mrb[0].mxu0
      %v2838 = vadd.f32 0.0, %v2837
      %v2839 = vpop.f32.mrb[0].mxu0
      %2840 = vmatprep.mubr.f32.mxu0 0.0
      %2841 = vmatmul.mubr.f32.gmra.mrb[0].mxu0 %v2704
      %v2842 = vpop.f32.mrb[0].mxu0
      %v2843 = vadd.f32 0.0, %v2842
      %v2844 = vpop.f32.mrb[0].mxu0
      %2845 = vdwg.mxu0
      %2846 = vrot.lane.b32.xlu0 %v1416, 112
      %v2847 = vpop.permute.xlu0 %2846
      %2848 = vrot.lane.b32.xlu0 %v1421, 112
      %v2849 = vpop.permute.xlu0 %2848
      %2850 = vrot.lane.b32.xlu0 %v1426, 112
      %v2851 = vpop.permute.xlu0 %2850
      %2852 = vrot.lane.b32.xlu0 %v1431, 112
      %v2853 = vpop.permute.xlu0 %2852
      %2854 = vrot.lane.b32.xlu0 %v1436, 112
      %v2855 = vpop.permute.xlu0 %2854
      %2856 = vrot.lane.b32.xlu0 %v1441, 112
      %v2857 = vpop.permute.xlu0 %2856
      %2858 = vrot.lane.b32.xlu0 %v1446, 112
      %v2859 = vpop.permute.xlu0 %2858
      %2860 = vrot.lane.b32.xlu0 %v1451, 112
      %v2861 = vpop.permute.xlu0 %2860
      %2862 = vrot.lane.b32.xlu0 %v1456, 112
      %v2863 = vpop.permute.xlu0 %2862
      %2864 = vrot.lane.b32.xlu0 %v1461, 112
      %v2865 = vpop.permute.xlu0 %2864
      %2866 = vrot.lane.b32.xlu0 %v1466, 112
      %v2867 = vpop.permute.xlu0 %2866
      %2868 = vrot.lane.b32.xlu0 %v1471, 112
      %v2869 = vpop.permute.xlu0 %2868
      %2870 = vrot.lane.b32.xlu0 %v1476, 112
      %v2871 = vpop.permute.xlu0 %2870
      %2872 = vrot.lane.b32.xlu0 %v1481, 112
      %v2873 = vpop.permute.xlu0 %2872
      %2874 = vrot.lane.b32.xlu0 %v1486, 112
      %v2875 = vpop.permute.xlu0 %2874
      %2876 = vrot.lane.b32.xlu0 %v1416, 80
      %v2877 = vpop.permute.xlu0 %2876
      %2878 = vrot.lane.b32.xlu0 %v1421, 80
      %v2879 = vpop.permute.xlu0 %2878
      %2880 = vrot.lane.b32.xlu0 %v1426, 80
      %v2881 = vpop.permute.xlu0 %2880
      %2882 = vrot.lane.b32.xlu0 %v1431, 80
      %v2883 = vpop.permute.xlu0 %2882
      %2884 = vrot.lane.b32.xlu0 %v1436, 80
      %v2885 = vpop.permute.xlu0 %2884
      %2886 = vrot.lane.b32.xlu0 %v1441, 80
      %v2887 = vpop.permute.xlu0 %2886
      %2888 = vrot.lane.b32.xlu0 %v1446, 80
      %v2889 = vpop.permute.xlu0 %2888
      %2890 = vrot.lane.b32.xlu0 %v1451, 80
      %v2891 = vpop.permute.xlu0 %2890
      %2892 = vrot.lane.b32.xlu0 %v1456, 80
      %v2893 = vpop.permute.xlu0 %2892
      %2894 = vrot.lane.b32.xlu0 %v1461, 80
      %v2895 = vpop.permute.xlu0 %2894
      %2896 = vrot.lane.b32.xlu0 %v1466, 80
      %v2897 = vpop.permute.xlu0 %2896
      %2898 = vrot.lane.b32.xlu0 %v1471, 80
      %v2899 = vpop.permute.xlu0 %2898
      %2900 = vrot.lane.b32.xlu0 %v1476, 80
      %v2901 = vpop.permute.xlu0 %2900
      %2902 = vrot.lane.b32.xlu0 %v1481, 80
      %v2903 = vpop.permute.xlu0 %2902
      %2904 = vrot.lane.b32.xlu0 %v1486, 80
      %v2905 = vpop.permute.xlu0 %2904
      %v2906 = vsel %vm1534, %v2847, 0
      %v2908 = vsel %vm1534, %v2849, 0
      %v2910 = vsel %vm1534, %v2851, 0
      %v2912 = vsel %vm1534, %v2853, 0
      %v2914 = vsel %vm1534, %v2855, 0
      %v2916 = vsel %vm1534, %v2857, 0
      %v2918 = vsel %vm1534, %v2859, 0
      %v2920 = vsel %vm1534, %v2861, 0
      %v2922 = vsel %vm1534, %v2863, 0
      %v2924 = vsel %vm1534, %v2865, 0
      %v2926 = vsel %vm1534, %v2867, 0
      %v2928 = vsel %vm1534, %v2869, 0
      %v2930 = vsel %vm1534, %v2871, 0
      %v2932 = vsel %vm1534, %v2873, 0
      %v2934 = vsel %vm1534, %v2875, 0
      %v2936 = vsel %vm1534, %v2877, 0
      %v2938 = vsel %vm1534, %v2879, 0
      %v2940 = vsel %vm1534, %v2881, 0
      %v2942 = vsel %vm1534, %v2883, 0
      %v2944 = vsel %vm1534, %v2885, 0
      %v2946 = vsel %vm1534, %v2887, 0
      %v2948 = vsel %vm1534, %v2889, 0
      %v2950 = vsel %vm1534, %v2891, 0
      %v2952 = vsel %vm1534, %v2893, 0
      %v2954 = vsel %vm1534, %v2895, 0
      %v2956 = vsel %vm1534, %v2897, 0
      %v2958 = vsel %vm1534, %v2899, 0
      %v2960 = vsel %vm1534, %v2901, 0
      %v2962 = vsel %vm1534, %v2903, 0
      %v2964 = vsel %vm1534, %v2905, 0
      %2966 = vmatprep.subr.mxu0 0.0
      %2967 = vmatpush1.xpose.msra.mxu0 %v2936
      %2968 = vmatprep.subr.mxu0 0.0
      %2969 = vmatpush1.xpose.msra.mxu0 %v2938
      %2970 = vmatprep.subr.mxu0 0.0
      %2971 = vmatpush1.xpose.msra.mxu0 %v2940
      %2972 = vmatprep.subr.mxu0 0.0
      %2973 = vmatpush1.xpose.msra.mxu0 %v2942
      %2974 = vmatprep.subr.mxu0 0.0
      %2975 = vmatpush1.xpose.msra.mxu0 %v2944
      %2976 = vmatprep.subr.mxu0 0.0
      %2977 = vmatpush1.xpose.msra.mxu0 %v2946
      %2978 = vmatprep.subr.mxu0 0.0
      %2979 = vmatpush1.xpose.msra.mxu0 %v2948
      %2980 = vmatprep.subr.mxu0 0.0
      %2981 = vmatpush1.xpose.msra.mxu0 %v2950
      %2982 = vmatprep.subr.mxu0 0.0
      %2983 = vmatpush1.xpose.msra.mxu0 %v2952
      %2984 = vmatprep.subr.mxu0 0.0
      %2985 = vmatpush1.xpose.msra.mxu0 %v2954
      %2986 = vmatprep.subr.mxu0 0.0
      %2987 = vmatpush1.xpose.msra.mxu0 %v2956
      %2988 = vmatprep.subr.mxu0 0.0
      %2989 = vmatpush1.xpose.msra.mxu0 %v2958
      %2990 = vmatprep.subr.mxu0 0.0
      %2991 = vmatpush1.xpose.msra.mxu0 %v2960
      %2992 = vmatprep.subr.mxu0 0.0
      %2993 = vmatpush1.xpose.msra.mxu0 %v2962
      %2994 = vmatprep.subr.mxu0 0.0
      %2995 = vmatpush1.xpose.msra.mxu0 %v2964
      %2996 = vmatprep.subr.mxu0 0.0
      %2997 = vmatpush1.xpose.msra.mxu0 0.0
      %2998 = vmatprep.subr.mxu0 0.0
      %2999 = vmatpush1.xpose.msra.mxu0 0.0
      %3000 = vmatprep.subr.mxu0 0.0
      %3001 = vmatpush1.xpose.msra.mxu0 0.0
      %3002 = vmatprep.subr.mxu0 0.0
      %3003 = vmatpush1.xpose.msra.mxu0 0.0
      %3004 = vmatprep.subr.mxu0 0.0
      %3005 = vmatpush1.xpose.msra.mxu0 0.0
      %3006 = vmatprep.subr.mxu0 0.0
      %3007 = vmatpush1.xpose.msra.mxu0 0.0
      %3008 = vmatprep.subr.mxu0 0.0
      %3009 = vmatpush1.xpose.msra.mxu0 0.0
      %3010 = vmatprep.subr.mxu0 0.0
      %3011 = vmatpush1.xpose.msra.mxu0 0.0
      %3012 = vmatprep.subr.mxu0 0.0
      %3013 = vmatpush1.xpose.msra.mxu0 0.0
      %3014 = vmatprep.subr.mxu0 0.0
      %3015 = vmatpush1.xpose.msra.mxu0 0.0
      %3016 = vmatprep.subr.mxu0 0.0
      %3017 = vmatpush1.xpose.msra.mxu0 0.0
      %3018 = vmatprep.subr.mxu0 0.0
      %3019 = vmatpush1.xpose.msra.mxu0 0.0
      %3020 = vmatprep.subr.mxu0 0.0
      %3021 = vmatpush1.xpose.msra.mxu0 0.0
      %3022 = vmatprep.subr.mxu0 0.0
      %3023 = vmatpush1.xpose.msra.mxu0 0.0
      %3024 = vmatprep.subr.mxu0 0.0
      %3025 = vmatpush1.xpose.msra.mxu0 0.0
      %3026 = vmatprep.subr.mxu0 0.0
      %3027 = vmatpush1.xpose.msra.mxu0 0.0
      %3028 = vmatprep.subr.mxu0 0.0
      %3029 = vmatpush1.xpose.msra.mxu0 0.0
      %3030 = vmatprep.mubr.f32.mxu0 0.0
      %3031 = vmatmul.mubr.f32.gmra.mrb[0].mxu0 %v2906
      %v3032 = vpop.f32.mrb[0].mxu0
      %v3033 = vadd.f32 0.0, %v3032
      %v3034 = vpop.f32.mrb[0].mxu0
      %3035 = vmatprep.mubr.f32.mxu0 0.0
      %3036 = vmatmul.mubr.f32.gmra.mrb[0].mxu0 %v2908
      %v3037 = vpop.f32.mrb[0].mxu0
      %v3038 = vadd.f32 0.0, %v3037
      %v3039 = vpop.f32.mrb[0].mxu0
      %3040 = vmatprep.mubr.f32.mxu0 0.0
      %3041 = vmatmul.mubr.f32.gmra.mrb[0].mxu0 %v2910
      %v3042 = vpop.f32.mrb[0].mxu0
      %v3043 = vadd.f32 0.0, %v3042
      %v3044 = vpop.f32.mrb[0].mxu0
      %3045 = vmatprep.mubr.f32.mxu0 0.0
      %3046 = vmatmul.mubr.f32.gmra.mrb[0].mxu0 %v2912
      %v3047 = vpop.f32.mrb[0].mxu0
      %v3048 = vadd.f32 0.0, %v3047
      %v3049 = vpop.f32.mrb[0].mxu0
      %3050 = vmatprep.mubr.f32.mxu0 0.0
      %3051 = vmatmul.mubr.f32.gmra.mrb[0].mxu0 %v2914
      %v3052 = vpop.f32.mrb[0].mxu0
      %v3053 = vadd.f32 0.0, %v3052
      %v3054 = vpop.f32.mrb[0].mxu0
      %3055 = vmatprep.mubr.f32.mxu0 0.0
      %3056 = vmatmul.mubr.f32.gmra.mrb[0].mxu0 %v2916
      %v3057 = vpop.f32.mrb[0].mxu0
      %v3058 = vadd.f32 0.0, %v3057
      %v3059 = vpop.f32.mrb[0].mxu0
      %3060 = vmatprep.mubr.f32.mxu0 0.0
      %3061 = vmatmul.mubr.f32.gmra.mrb[0].mxu0 %v2918
      %v3062 = vpop.f32.mrb[0].mxu0
      %v3063 = vadd.f32 0.0, %v3062
      %v3064 = vpop.f32.mrb[0].mxu0
      %3065 = vmatprep.mubr.f32.mxu0 0.0
      %3066 = vmatmul.mubr.f32.gmra.mrb[0].mxu0 %v2920
      %v3067 = vpop.f32.mrb[0].mxu0
      %v3068 = vadd.f32 0.0, %v3067
      %v3069 = vpop.f32.mrb[0].mxu0
      %3070 = vmatprep.mubr.f32.mxu0 0.0
      %3071 = vmatmul.mubr.f32.gmra.mrb[0].mxu0 %v2922
      %v3072 = vpop.f32.mrb[0].mxu0
      %v3073 = vadd.f32 0.0, %v3072
      %v3074 = vpop.f32.mrb[0].mxu0
      %3075 = vmatprep.mubr.f32.mxu0 0.0
      %3076 = vmatmul.mubr.f32.gmra.mrb[0].mxu0 %v2924
      %v3077 = vpop.f32.mrb[0].mxu0
      %v3078 = vadd.f32 0.0, %v3077
      %v3079 = vpop.f32.mrb[0].mxu0
      %3080 = vmatprep.mubr.f32.mxu0 0.0
      %3081 = vmatmul.mubr.f32.gmra.mrb[0].mxu0 %v2926
      %v3082 = vpop.f32.mrb[0].mxu0
      %v3083 = vadd.f32 0.0, %v3082
      %v3084 = vpop.f32.mrb[0].mxu0
      %3085 = vmatprep.mubr.f32.mxu0 0.0
      %3086 = vmatmul.mubr.f32.gmra.mrb[0].mxu0 %v2928
      %v3087 = vpop.f32.mrb[0].mxu0
      %v3088 = vadd.f32 0.0, %v3087
      %v3089 = vpop.f32.mrb[0].mxu0
      %3090 = vmatprep.mubr.f32.mxu0 0.0
      %3091 = vmatmul.mubr.f32.gmra.mrb[0].mxu0 %v2930
      %v3092 = vpop.f32.mrb[0].mxu0
      %v3093 = vadd.f32 0.0, %v3092
      %v3094 = vpop.f32.mrb[0].mxu0
      %3095 = vmatprep.mubr.f32.mxu0 0.0
      %3096 = vmatmul.mubr.f32.gmra.mrb[0].mxu0 %v2932
      %v3097 = vpop.f32.mrb[0].mxu0
      %v3098 = vadd.f32 0.0, %v3097
      %v3099 = vpop.f32.mrb[0].mxu0
      %3100 = vmatprep.mubr.f32.mxu0 0.0
      %3101 = vmatmul.mubr.f32.gmra.mrb[0].mxu0 %v2934
      %v3102 = vpop.f32.mrb[0].mxu0
      %v3103 = vadd.f32 0.0, %v3102
      %v3104 = vpop.f32.mrb[0].mxu0
      %3105 = vdwg.mxu0
      %v3106 = vmul.f32 %v3033, 0.35355338
      %v3107 = vmul.f32 %v3038, 0.35355338
      %v3108 = vmul.f32 %v3043, 0.35355338
      %v3109 = vmul.f32 %v3048, 0.35355338
      %v3110 = vmul.f32 %v3053, 0.35355338
      %v3111 = vmul.f32 %v3058, 0.35355338
      %v3112 = vmul.f32 %v3063, 0.35355338
      %v3113 = vmul.f32 %v3068, 0.35355338
      %v3114 = vmul.f32 %v3073, 0.35355338
      %v3115 = vmul.f32 %v3078, 0.35355338
      %v3116 = vmul.f32 %v3083, 0.35355338
      %v3117 = vmul.f32 %v3088, 0.35355338
      %v3118 = vmul.f32 %v3093, 0.35355338
      %v3119 = vmul.f32 %v3098, 0.35355338
      %v3120 = vmul.f32 %v3103, 0.35355338
      %v3121 = vadd.f32 %v3106, %v1039
      %v3122 = vadd.f32 %v3107, %v1040
      %v3123 = vadd.f32 %v3108, %v1041
      %v3124 = vadd.f32 %v3109, %v1042
      %v3125 = vadd.f32 %v3110, %v1043
      %v3126 = vadd.f32 %v3111, %v1044
      %v3127 = vadd.f32 %v3112, %v1045
      %v3128 = vadd.f32 %v3113, %v1046
      %v3129 = vadd.f32 %v3114, %v1047
      %v3130 = vadd.f32 %v3115, %v1048
      %v3131 = vadd.f32 %v3116, %v1049
      %v3132 = vadd.f32 %v3117, %v1050
      %v3133 = vadd.f32 %v3118, %v1051
      %v3134 = vadd.f32 %v3119, %v1052
      %v3135 = vadd.f32 %v3120, %v1053
      %v3136 = vsel %vm1765, %v3121, -inf
      %3137 = vmax.xlane.f32.xlu0 %v3136
      %v3138 = vpop.xlane.xlu0 %3137
      %v3139 = vsel %vm1765, %v3122, -inf
      %3140 = vmax.xlane.f32.xlu0 %v3139
      %v3141 = vpop.xlane.xlu0 %3140
      %v3142 = vsel %vm1765, %v3123, -inf
      %3143 = vmax.xlane.f32.xlu0 %v3142
      %v3144 = vpop.xlane.xlu0 %3143
      %v3145 = vsel %vm1765, %v3124, -inf
      %3146 = vmax.xlane.f32.xlu0 %v3145
      %v3147 = vpop.xlane.xlu0 %3146
      %v3148 = vsel %vm1765, %v3125, -inf
      %3149 = vmax.xlane.f32.xlu0 %v3148
      %v3150 = vpop.xlane.xlu0 %3149
      %v3151 = vsel %vm1765, %v3126, -inf
      %3152 = vmax.xlane.f32.xlu0 %v3151
      %v3153 = vpop.xlane.xlu0 %3152
      %v3154 = vsel %vm1765, %v3127, -inf
      %3155 = vmax.xlane.f32.xlu0 %v3154
      %v3156 = vpop.xlane.xlu0 %3155
      %v3157 = vsel %vm1765, %v3128, -inf
      %3158 = vmax.xlane.f32.xlu0 %v3157
      %v3159 = vpop.xlane.xlu0 %3158
      %v3160 = vsel %vm1765, %v3129, -inf
      %3161 = vmax.xlane.f32.xlu0 %v3160
      %v3162 = vpop.xlane.xlu0 %3161
      %v3163 = vsel %vm1765, %v3130, -inf
      %3164 = vmax.xlane.f32.xlu0 %v3163
      %v3165 = vpop.xlane.xlu0 %3164
      %v3166 = vsel %vm1765, %v3131, -inf
      %3167 = vmax.xlane.f32.xlu0 %v3166
      %v3168 = vpop.xlane.xlu0 %3167
      %v3169 = vsel %vm1765, %v3132, -inf
      %3170 = vmax.xlane.f32.xlu0 %v3169
      %v3171 = vpop.xlane.xlu0 %3170
      %v3172 = vsel %vm1765, %v3133, -inf
      %3173 = vmax.xlane.f32.xlu0 %v3172
      %v3174 = vpop.xlane.xlu0 %3173
      %v3175 = vsel %vm1765, %v3134, -inf
      %3176 = vmax.xlane.f32.xlu0 %v3175
      %v3177 = vpop.xlane.xlu0 %3176
      %v3178 = vsel %vm1765, %v3135, -inf
      %3179 = vmax.xlane.f32.xlu0 %v3178
      %v3180 = vpop.xlane.xlu0 %3179
      %v3181 = vsub.f32 %v3121, %v3138
      %v3182 = vsub.f32 %v3122, %v3141
      %v3183 = vsub.f32 %v3123, %v3144
      %v3184 = vsub.f32 %v3124, %v3147
      %v3185 = vsub.f32 %v3125, %v3150
      %v3186 = vsub.f32 %v3126, %v3153
      %v3187 = vsub.f32 %v3127, %v3156
      %v3188 = vsub.f32 %v3128, %v3159
      %v3189 = vsub.f32 %v3129, %v3162
      %v3190 = vsub.f32 %v3130, %v3165
      %v3191 = vsub.f32 %v3131, %v3168
      %v3192 = vsub.f32 %v3132, %v3171
      %v3193 = vsub.f32 %v3133, %v3174
      %v3194 = vsub.f32 %v3134, %v3177
      %v3195 = vsub.f32 %v3135, %v3180
      %v3196 = vmul.f32 %v3181, 1.442695
      %v3197 = vpow.pop %v3196
      %v3198 = vmul.f32 %v3182, 1.442695
      %v3199 = vpow.pop %v3198
      %v3200 = vmul.f32 %v3183, 1.442695
      %v3201 = vpow.pop %v3200
      %v3202 = vmul.f32 %v3184, 1.442695
      %v3203 = vpow.pop %v3202
      %v3204 = vmul.f32 %v3185, 1.442695
      %v3205 = vpow.pop %v3204
      %v3206 = vmul.f32 %v3186, 1.442695
      %v3207 = vpow.pop %v3206
      %v3208 = vmul.f32 %v3187, 1.442695
      %v3209 = vpow.pop %v3208
      %v3210 = vmul.f32 %v3188, 1.442695
      %v3211 = vpow.pop %v3210
      %v3212 = vmul.f32 %v3189, 1.442695
      %v3213 = vpow.pop %v3212
      %v3214 = vmul.f32 %v3190, 1.442695
      %v3215 = vpow.pop %v3214
      %v3216 = vmul.f32 %v3191, 1.442695
      %v3217 = vpow.pop %v3216
      %v3218 = vmul.f32 %v3192, 1.442695
      %v3219 = vpow.pop %v3218
      %v3220 = vmul.f32 %v3193, 1.442695
      %v3221 = vpow.pop %v3220
      %v3222 = vmul.f32 %v3194, 1.442695
      %v3223 = vpow.pop %v3222
      %v3224 = vmul.f32 %v3195, 1.442695
      %v3225 = vpow.pop %v3224
      %v3226 = vsel %vm1765, %v3197, 0.0
      %3227 = vadd.xlane.f32.xlu0 %v3226
      %v3228 = vpop.xlane.xlu0 %3227
      %v3229 = vsel %vm1765, %v3199, 0.0
      %3230 = vadd.xlane.f32.xlu0 %v3229
      %v3231 = vpop.xlane.xlu0 %3230
      %v3232 = vsel %vm1765, %v3201, 0.0
      %3233 = vadd.xlane.f32.xlu0 %v3232
      %v3234 = vpop.xlane.xlu0 %3233
      %v3235 = vsel %vm1765, %v3203, 0.0
      %3236 = vadd.xlane.f32.xlu0 %v3235
      %v3237 = vpop.xlane.xlu0 %3236
      %v3238 = vsel %vm1765, %v3205, 0.0
      %3239 = vadd.xlane.f32.xlu0 %v3238
      %v3240 = vpop.xlane.xlu0 %3239
      %v3241 = vsel %vm1765, %v3207, 0.0
      %3242 = vadd.xlane.f32.xlu0 %v3241
      %v3243 = vpop.xlane.xlu0 %3242
      %v3244 = vsel %vm1765, %v3209, 0.0
      %3245 = vadd.xlane.f32.xlu0 %v3244
      %v3246 = vpop.xlane.xlu0 %3245
      %v3247 = vsel %vm1765, %v3211, 0.0
      %3248 = vadd.xlane.f32.xlu0 %v3247
      %v3249 = vpop.xlane.xlu0 %3248
      %v3250 = vsel %vm1765, %v3213, 0.0
      %3251 = vadd.xlane.f32.xlu0 %v3250
      %v3252 = vpop.xlane.xlu0 %3251
      %v3253 = vsel %vm1765, %v3215, 0.0
      %3254 = vadd.xlane.f32.xlu0 %v3253
      %v3255 = vpop.xlane.xlu0 %3254
      %v3256 = vsel %vm1765, %v3217, 0.0
      %3257 = vadd.xlane.f32.xlu0 %v3256
      %v3258 = vpop.xlane.xlu0 %3257
      %v3259 = vsel %vm1765, %v3219, 0.0
      %3260 = vadd.xlane.f32.xlu0 %v3259
      %v3261 = vpop.xlane.xlu0 %3260
      %v3262 = vsel %vm1765, %v3221, 0.0
      %3263 = vadd.xlane.f32.xlu0 %v3262
      %v3264 = vpop.xlane.xlu0 %3263
      %v3265 = vsel %vm1765, %v3223, 0.0
      %3266 = vadd.xlane.f32.xlu0 %v3265
      %v3267 = vpop.xlane.xlu0 %3266
      %v3268 = vsel %vm1765, %v3225, 0.0
      %3269 = vadd.xlane.f32.xlu0 %v3268
      %v3270 = vpop.xlane.xlu0 %3269
      %v3271 = vrcp.pop %v3228
      %v3272 = vrcp.pop %v3231
      %v3273 = vrcp.pop %v3234
      %v3274 = vrcp.pop %v3237
      %v3275 = vrcp.pop %v3240
      %v3276 = vrcp.pop %v3243
      %v3277 = vrcp.pop %v3246
      %v3278 = vrcp.pop %v3249
      %v3279 = vrcp.pop %v3252
      %v3280 = vrcp.pop %v3255
      %v3281 = vrcp.pop %v3258
      %v3282 = vrcp.pop %v3261
      %v3283 = vrcp.pop %v3264
      %v3284 = vrcp.pop %v3267
      %v3285 = vrcp.pop %v3270
      %v3286 = vmul.f32 %v3197, %v3271
      %v3287 = vmul.f32 %v3199, %v3272
      %v3288 = vmul.f32 %v3201, %v3273
      %v3289 = vmul.f32 %v3203, %v3274
      %v3290 = vmul.f32 %v3205, %v3275
      %v3291 = vmul.f32 %v3207, %v3276
      %v3292 = vmul.f32 %v3209, %v3277
      %v3293 = vmul.f32 %v3211, %v3278
      %v3294 = vmul.f32 %v3213, %v3279
      %v3295 = vmul.f32 %v3215, %v3280
      %v3296 = vmul.f32 %v3217, %v3281
      %v3297 = vmul.f32 %v3219, %v3282
      %v3298 = vmul.f32 %v3221, %v3283
      %v3299 = vmul.f32 %v3223, %v3284
      %v3300 = vmul.f32 %v3225, %v3285
      %3301 = vrot.lane.b32.xlu0 %v1416, 48
      %v3302 = vpop.permute.xlu0 %3301
      %3303 = vrot.lane.b32.xlu0 %v1421, 48
      %v3304 = vpop.permute.xlu0 %3303
      %3305 = vrot.lane.b32.xlu0 %v1426, 48
      %v3306 = vpop.permute.xlu0 %3305
      %3307 = vrot.lane.b32.xlu0 %v1431, 48
      %v3308 = vpop.permute.xlu0 %3307
      %3309 = vrot.lane.b32.xlu0 %v1436, 48
      %v3310 = vpop.permute.xlu0 %3309
      %3311 = vrot.lane.b32.xlu0 %v1441, 48
      %v3312 = vpop.permute.xlu0 %3311
      %3313 = vrot.lane.b32.xlu0 %v1446, 48
      %v3314 = vpop.permute.xlu0 %3313
      %3315 = vrot.lane.b32.xlu0 %v1451, 48
      %v3316 = vpop.permute.xlu0 %3315
      %3317 = vrot.lane.b32.xlu0 %v1456, 48
      %v3318 = vpop.permute.xlu0 %3317
      %3319 = vrot.lane.b32.xlu0 %v1461, 48
      %v3320 = vpop.permute.xlu0 %3319
      %3321 = vrot.lane.b32.xlu0 %v1466, 48
      %v3322 = vpop.permute.xlu0 %3321
      %3323 = vrot.lane.b32.xlu0 %v1471, 48
      %v3324 = vpop.permute.xlu0 %3323
      %3325 = vrot.lane.b32.xlu0 %v1476, 48
      %v3326 = vpop.permute.xlu0 %3325
      %3327 = vrot.lane.b32.xlu0 %v1481, 48
      %v3328 = vpop.permute.xlu0 %3327
      %3329 = vrot.lane.b32.xlu0 %v1486, 48
      %v3330 = vpop.permute.xlu0 %3329
      %v3347 = vsel %vm1765, %v3286, 0
      %v3350 = vsel %vm1765, %v3287, 0
      %v3353 = vsel %vm1765, %v3288, 0
      %v3356 = vsel %vm1765, %v3289, 0
      %v3359 = vsel %vm1765, %v3290, 0
      %v3362 = vsel %vm1765, %v3291, 0
      %v3365 = vsel %vm1765, %v3292, 0
      %v3368 = vsel %vm1765, %v3293, 0
      %v3371 = vsel %vm1765, %v3294, 0
      %v3374 = vsel %vm1765, %v3295, 0
      %v3377 = vsel %vm1765, %v3296, 0
      %v3380 = vsel %vm1765, %v3297, 0
      %v3383 = vsel %vm1765, %v3298, 0
      %v3386 = vsel %vm1765, %v3299, 0
      %v3389 = vsel %vm1765, %v3300, 0
      %3391 = vmatprep.subr.mxu0 0.0
      %3392 = vmatpush1.msra.mxu0 %v3302
      %3393 = vmatprep.subr.mxu0 0.0
      %3394 = vmatpush1.msra.mxu0 %v3304
      %3395 = vmatprep.subr.mxu0 0.0
      %3396 = vmatpush1.msra.mxu0 %v3306
      %3397 = vmatprep.subr.mxu0 0.0
      %3398 = vmatpush1.msra.mxu0 %v3308
      %3399 = vmatprep.subr.mxu0 0.0
      %3400 = vmatpush1.msra.mxu0 %v3310
      %3401 = vmatprep.subr.mxu0 0.0
      %3402 = vmatpush1.msra.mxu0 %v3312
      %3403 = vmatprep.subr.mxu0 0.0
      %3404 = vmatpush1.msra.mxu0 %v3314
      %3405 = vmatprep.subr.mxu0 0.0
      %3406 = vmatpush1.msra.mxu0 %v3316
      %3407 = vmatprep.subr.mxu0 0.0
      %3408 = vmatpush1.msra.mxu0 %v3318
      %3409 = vmatprep.subr.mxu0 0.0
      %3410 = vmatpush1.msra.mxu0 %v3320
      %3411 = vmatprep.subr.mxu0 0.0
      %3412 = vmatpush1.msra.mxu0 %v3322
      %3413 = vmatprep.subr.mxu0 0.0
      %3414 = vmatpush1.msra.mxu0 %v3324
      %3415 = vmatprep.subr.mxu0 0.0
      %3416 = vmatpush1.msra.mxu0 %v3326
      %3417 = vmatprep.subr.mxu0 0.0
      %3418 = vmatpush1.msra.mxu0 %v3328
      %3419 = vmatprep.subr.mxu0 0.0
      %3420 = vmatpush1.msra.mxu0 %v3330
      %3421 = vmatprep.subr.mxu0 0.0
      %3422 = vmatpush1.msra.mxu0 0.0
      %3423 = vmatprep.subr.mxu0 0.0
      %3424 = vmatpush1.msra.mxu0 0.0
      %3425 = vmatprep.subr.mxu0 0.0
      %3426 = vmatpush1.msra.mxu0 0.0
      %3427 = vmatprep.subr.mxu0 0.0
      %3428 = vmatpush1.msra.mxu0 0.0
      %3429 = vmatprep.subr.mxu0 0.0
      %3430 = vmatpush1.msra.mxu0 0.0
      %3431 = vmatprep.subr.mxu0 0.0
      %3432 = vmatpush1.msra.mxu0 0.0
      %3433 = vmatprep.subr.mxu0 0.0
      %3434 = vmatpush1.msra.mxu0 0.0
      %3435 = vmatprep.subr.mxu0 0.0
      %3436 = vmatpush1.msra.mxu0 0.0
      %3437 = vmatprep.subr.mxu0 0.0
      %3438 = vmatpush1.msra.mxu0 0.0
      %3439 = vmatprep.subr.mxu0 0.0
      %3440 = vmatpush1.msra.mxu0 0.0
      %3441 = vmatprep.subr.mxu0 0.0
      %3442 = vmatpush1.msra.mxu0 0.0
      %3443 = vmatprep.subr.mxu0 0.0
      %3444 = vmatpush1.msra.mxu0 0.0
      %3445 = vmatprep.subr.mxu0 0.0
      %3446 = vmatpush1.msra.mxu0 0.0
      %3447 = vmatprep.subr.mxu0 0.0
      %3448 = vmatpush1.msra.mxu0 0.0
      %3449 = vmatprep.subr.mxu0 0.0
      %3450 = vmatpush1.msra.mxu0 0.0
      %3451 = vmatprep.subr.mxu0 0.0
      %3452 = vmatpush1.msra.mxu0 0.0
      %3453 = vmatprep.subr.mxu0 0.0
      %3454 = vmatpush1.msra.mxu0 0.0
      %3455 = vmatprep.mubr.f32.mxu0 0.0
      %3456 = vmatmul.mubr.f32.gmra.mrb[0].mxu0 %v3347
      %v3457 = vpop.f32.mrb[0].mxu0
      %v3458 = vadd.f32 0.0, %v3457
      %v3459 = vpop.f32.mrb[0].mxu0
      %3460 = vmatprep.mubr.f32.mxu0 0.0
      %3461 = vmatmul.mubr.f32.gmra.mrb[0].mxu0 %v3350
      %v3462 = vpop.f32.mrb[0].mxu0
      %v3463 = vadd.f32 0.0, %v3462
      %v3464 = vpop.f32.mrb[0].mxu0
      %3465 = vmatprep.mubr.f32.mxu0 0.0
      %3466 = vmatmul.mubr.f32.gmra.mrb[0].mxu0 %v3353
      %v3467 = vpop.f32.mrb[0].mxu0
      %v3468 = vadd.f32 0.0, %v3467
      %v3469 = vpop.f32.mrb[0].mxu0
      %3470 = vmatprep.mubr.f32.mxu0 0.0
      %3471 = vmatmul.mubr.f32.gmra.mrb[0].mxu0 %v3356
      %v3472 = vpop.f32.mrb[0].mxu0
      %v3473 = vadd.f32 0.0, %v3472
      %v3474 = vpop.f32.mrb[0].mxu0
      %3475 = vmatprep.mubr.f32.mxu0 0.0
      %3476 = vmatmul.mubr.f32.gmra.mrb[0].mxu0 %v3359
      %v3477 = vpop.f32.mrb[0].mxu0
      %v3478 = vadd.f32 0.0, %v3477
      %v3479 = vpop.f32.mrb[0].mxu0
      %3480 = vmatprep.mubr.f32.mxu0 0.0
      %3481 = vmatmul.mubr.f32.gmra.mrb[0].mxu0 %v3362
      %v3482 = vpop.f32.mrb[0].mxu0
      %v3483 = vadd.f32 0.0, %v3482
      %v3484 = vpop.f32.mrb[0].mxu0
      %3485 = vmatprep.mubr.f32.mxu0 0.0
      %3486 = vmatmul.mubr.f32.gmra.mrb[0].mxu0 %v3365
      %v3487 = vpop.f32.mrb[0].mxu0
      %v3488 = vadd.f32 0.0, %v3487
      %v3489 = vpop.f32.mrb[0].mxu0
      %3490 = vmatprep.mubr.f32.mxu0 0.0
      %3491 = vmatmul.mubr.f32.gmra.mrb[0].mxu0 %v3368
      %v3492 = vpop.f32.mrb[0].mxu0
      %v3493 = vadd.f32 0.0, %v3492
      %v3494 = vpop.f32.mrb[0].mxu0
      %3495 = vmatprep.mubr.f32.mxu0 0.0
      %3496 = vmatmul.mubr.f32.gmra.mrb[0].mxu0 %v3371
      %v3497 = vpop.f32.mrb[0].mxu0
      %v3498 = vadd.f32 0.0, %v3497
      %v3499 = vpop.f32.mrb[0].mxu0
      %3500 = vmatprep.mubr.f32.mxu0 0.0
      %3501 = vmatmul.mubr.f32.gmra.mrb[0].mxu0 %v3374
      %v3502 = vpop.f32.mrb[0].mxu0
      %v3503 = vadd.f32 0.0, %v3502
      %v3504 = vpop.f32.mrb[0].mxu0
      %3505 = vmatprep.mubr.f32.mxu0 0.0
      %3506 = vmatmul.mubr.f32.gmra.mrb[0].mxu0 %v3377
      %v3507 = vpop.f32.mrb[0].mxu0
      %v3508 = vadd.f32 0.0, %v3507
      %v3509 = vpop.f32.mrb[0].mxu0
      %3510 = vmatprep.mubr.f32.mxu0 0.0
      %3511 = vmatmul.mubr.f32.gmra.mrb[0].mxu0 %v3380
      %v3512 = vpop.f32.mrb[0].mxu0
      %v3513 = vadd.f32 0.0, %v3512
      %v3514 = vpop.f32.mrb[0].mxu0
      %3515 = vmatprep.mubr.f32.mxu0 0.0
      %3516 = vmatmul.mubr.f32.gmra.mrb[0].mxu0 %v3383
      %v3517 = vpop.f32.mrb[0].mxu0
      %v3518 = vadd.f32 0.0, %v3517
      %v3519 = vpop.f32.mrb[0].mxu0
      %3520 = vmatprep.mubr.f32.mxu0 0.0
      %3521 = vmatmul.mubr.f32.gmra.mrb[0].mxu0 %v3386
      %v3522 = vpop.f32.mrb[0].mxu0
      %v3523 = vadd.f32 0.0, %v3522
      %v3524 = vpop.f32.mrb[0].mxu0
      %3525 = vmatprep.mubr.f32.mxu0 0.0
      %3526 = vmatmul.mubr.f32.gmra.mrb[0].mxu0 %v3389
      %v3527 = vpop.f32.mrb[0].mxu0
      %v3528 = vadd.f32 0.0, %v3527
      %v3529 = vpop.f32.mrb[0].mxu0
      %3530 = vdwg.mxu0
      %3531 = vrot.lane.b32.xlu0 %v1416, 104
      %v3532 = vpop.permute.xlu0 %3531
      %3533 = vrot.lane.b32.xlu0 %v1421, 104
      %v3534 = vpop.permute.xlu0 %3533
      %3535 = vrot.lane.b32.xlu0 %v1426, 104
      %v3536 = vpop.permute.xlu0 %3535
      %3537 = vrot.lane.b32.xlu0 %v1431, 104
      %v3538 = vpop.permute.xlu0 %3537
      %3539 = vrot.lane.b32.xlu0 %v1436, 104
      %v3540 = vpop.permute.xlu0 %3539
      %3541 = vrot.lane.b32.xlu0 %v1441, 104
      %v3542 = vpop.permute.xlu0 %3541
      %3543 = vrot.lane.b32.xlu0 %v1446, 104
      %v3544 = vpop.permute.xlu0 %3543
      %3545 = vrot.lane.b32.xlu0 %v1451, 104
      %v3546 = vpop.permute.xlu0 %3545
      %3547 = vrot.lane.b32.xlu0 %v1456, 104
      %v3548 = vpop.permute.xlu0 %3547
      %3549 = vrot.lane.b32.xlu0 %v1461, 104
      %v3550 = vpop.permute.xlu0 %3549
      %3551 = vrot.lane.b32.xlu0 %v1466, 104
      %v3552 = vpop.permute.xlu0 %3551
      %3553 = vrot.lane.b32.xlu0 %v1471, 104
      %v3554 = vpop.permute.xlu0 %3553
      %3555 = vrot.lane.b32.xlu0 %v1476, 104
      %v3556 = vpop.permute.xlu0 %3555
      %3557 = vrot.lane.b32.xlu0 %v1481, 104
      %v3558 = vpop.permute.xlu0 %3557
      %3559 = vrot.lane.b32.xlu0 %v1486, 104
      %v3560 = vpop.permute.xlu0 %3559
      %3561 = vrot.lane.b32.xlu0 %v1416, 72
      %v3562 = vpop.permute.xlu0 %3561
      %3563 = vrot.lane.b32.xlu0 %v1421, 72
      %v3564 = vpop.permute.xlu0 %3563
      %3565 = vrot.lane.b32.xlu0 %v1426, 72
      %v3566 = vpop.permute.xlu0 %3565
      %3567 = vrot.lane.b32.xlu0 %v1431, 72
      %v3568 = vpop.permute.xlu0 %3567
      %3569 = vrot.lane.b32.xlu0 %v1436, 72
      %v3570 = vpop.permute.xlu0 %3569
      %3571 = vrot.lane.b32.xlu0 %v1441, 72
      %v3572 = vpop.permute.xlu0 %3571
      %3573 = vrot.lane.b32.xlu0 %v1446, 72
      %v3574 = vpop.permute.xlu0 %3573
      %3575 = vrot.lane.b32.xlu0 %v1451, 72
      %v3576 = vpop.permute.xlu0 %3575
      %3577 = vrot.lane.b32.xlu0 %v1456, 72
      %v3578 = vpop.permute.xlu0 %3577
      %3579 = vrot.lane.b32.xlu0 %v1461, 72
      %v3580 = vpop.permute.xlu0 %3579
      %3581 = vrot.lane.b32.xlu0 %v1466, 72
      %v3582 = vpop.permute.xlu0 %3581
      %3583 = vrot.lane.b32.xlu0 %v1471, 72
      %v3584 = vpop.permute.xlu0 %3583
      %3585 = vrot.lane.b32.xlu0 %v1476, 72
      %v3586 = vpop.permute.xlu0 %3585
      %3587 = vrot.lane.b32.xlu0 %v1481, 72
      %v3588 = vpop.permute.xlu0 %3587
      %3589 = vrot.lane.b32.xlu0 %v1486, 72
      %v3590 = vpop.permute.xlu0 %3589
      %v3591 = vsel %vm1534, %v3532, 0
      %v3593 = vsel %vm1534, %v3534, 0
      %v3595 = vsel %vm1534, %v3536, 0
      %v3597 = vsel %vm1534, %v3538, 0
      %v3599 = vsel %vm1534, %v3540, 0
      %v3601 = vsel %vm1534, %v3542, 0
      %v3603 = vsel %vm1534, %v3544, 0
      %v3605 = vsel %vm1534, %v3546, 0
      %v3607 = vsel %vm1534, %v3548, 0
      %v3609 = vsel %vm1534, %v3550, 0
      %v3611 = vsel %vm1534, %v3552, 0
      %v3613 = vsel %vm1534, %v3554, 0
      %v3615 = vsel %vm1534, %v3556, 0
      %v3617 = vsel %vm1534, %v3558, 0
      %v3619 = vsel %vm1534, %v3560, 0
      %v3621 = vsel %vm1534, %v3562, 0
      %v3623 = vsel %vm1534, %v3564, 0
      %v3625 = vsel %vm1534, %v3566, 0
      %v3627 = vsel %vm1534, %v3568, 0
      %v3629 = vsel %vm1534, %v3570, 0
      %v3631 = vsel %vm1534, %v3572, 0
      %v3633 = vsel %vm1534, %v3574, 0
      %v3635 = vsel %vm1534, %v3576, 0
      %v3637 = vsel %vm1534, %v3578, 0
      %v3639 = vsel %vm1534, %v3580, 0
      %v3641 = vsel %vm1534, %v3582, 0
      %v3643 = vsel %vm1534, %v3584, 0
      %v3645 = vsel %vm1534, %v3586, 0
      %v3647 = vsel %vm1534, %v3588, 0
      %v3649 = vsel %vm1534, %v3590, 0
      %3651 = vmatprep.subr.mxu0 0.0
      %3652 = vmatpush1.xpose.msra.mxu0 %v3621
      %3653 = vmatprep.subr.mxu0 0.0
      %3654 = vmatpush1.xpose.msra.mxu0 %v3623
      %3655 = vmatprep.subr.mxu0 0.0
      %3656 = vmatpush1.xpose.msra.mxu0 %v3625
      %3657 = vmatprep.subr.mxu0 0.0
      %3658 = vmatpush1.xpose.msra.mxu0 %v3627
      %3659 = vmatprep.subr.mxu0 0.0
      %3660 = vmatpush1.xpose.msra.mxu0 %v3629
      %3661 = vmatprep.subr.mxu0 0.0
      %3662 = vmatpush1.xpose.msra.mxu0 %v3631
      %3663 = vmatprep.subr.mxu0 0.0
      %3664 = vmatpush1.xpose.msra.mxu0 %v3633
      %3665 = vmatprep.subr.mxu0 0.0
      %3666 = vmatpush1.xpose.msra.mxu0 %v3635
      %3667 = vmatprep.subr.mxu0 0.0
      %3668 = vmatpush1.xpose.msra.mxu0 %v3637
      %3669 = vmatprep.subr.mxu0 0.0
      %3670 = vmatpush1.xpose.msra.mxu0 %v3639
      %3671 = vmatprep.subr.mxu0 0.0
      %3672 = vmatpush1.xpose.msra.mxu0 %v3641
      %3673 = vmatprep.subr.mxu0 0.0
      %3674 = vmatpush1.xpose.msra.mxu0 %v3643
      %3675 = vmatprep.subr.mxu0 0.0
      %3676 = vmatpush1.xpose.msra.mxu0 %v3645
      %3677 = vmatprep.subr.mxu0 0.0
      %3678 = vmatpush1.xpose.msra.mxu0 %v3647
      %3679 = vmatprep.subr.mxu0 0.0
      %3680 = vmatpush1.xpose.msra.mxu0 %v3649
      %3681 = vmatprep.subr.mxu0 0.0
      %3682 = vmatpush1.xpose.msra.mxu0 0.0
      %3683 = vmatprep.subr.mxu0 0.0
      %3684 = vmatpush1.xpose.msra.mxu0 0.0
      %3685 = vmatprep.subr.mxu0 0.0
      %3686 = vmatpush1.xpose.msra.mxu0 0.0
      %3687 = vmatprep.subr.mxu0 0.0
      %3688 = vmatpush1.xpose.msra.mxu0 0.0
      %3689 = vmatprep.subr.mxu0 0.0
      %3690 = vmatpush1.xpose.msra.mxu0 0.0
      %3691 = vmatprep.subr.mxu0 0.0
      %3692 = vmatpush1.xpose.msra.mxu0 0.0
      %3693 = vmatprep.subr.mxu0 0.0
      %3694 = vmatpush1.xpose.msra.mxu0 0.0
      %3695 = vmatprep.subr.mxu0 0.0
      %3696 = vmatpush1.xpose.msra.mxu0 0.0
      %3697 = vmatprep.subr.mxu0 0.0
      %3698 = vmatpush1.xpose.msra.mxu0 0.0
      %3699 = vmatprep.subr.mxu0 0.0
      %3700 = vmatpush1.xpose.msra.mxu0 0.0
      %3701 = vmatprep.subr.mxu0 0.0
      %3702 = vmatpush1.xpose.msra.mxu0 0.0
      %3703 = vmatprep.subr.mxu0 0.0
      %3704 = vmatpush1.xpose.msra.mxu0 0.0
      %3705 = vmatprep.subr.mxu0 0.0
      %3706 = vmatpush1.xpose.msra.mxu0 0.0
      %3707 = vmatprep.subr.mxu0 0.0
      %3708 = vmatpush1.xpose.msra.mxu0 0.0
      %3709 = vmatprep.subr.mxu0 0.0
      %3710 = vmatpush1.xpose.msra.mxu0 0.0
      %3711 = vmatprep.subr.mxu0 0.0
      %3712 = vmatpush1.xpose.msra.mxu0 0.0
      %3713 = vmatprep.subr.mxu0 0.0
      %3714 = vmatpush1.xpose.msra.mxu0 0.0
      %3715 = vmatprep.mubr.f32.mxu0 0.0
      %3716 = vmatmul.mubr.f32.gmra.mrb[0].mxu0 %v3591
      %v3717 = vpop.f32.mrb[0].mxu0
      %v3718 = vadd.f32 0.0, %v3717
      %v3719 = vpop.f32.mrb[0].mxu0
      %3720 = vmatprep.mubr.f32.mxu0 0.0
      %3721 = vmatmul.mubr.f32.gmra.mrb[0].mxu0 %v3593
      %v3722 = vpop.f32.mrb[0].mxu0
      %v3723 = vadd.f32 0.0, %v3722
      %v3724 = vpop.f32.mrb[0].mxu0
      %3725 = vmatprep.mubr.f32.mxu0 0.0
      %3726 = vmatmul.mubr.f32.gmra.mrb[0].mxu0 %v3595
      %v3727 = vpop.f32.mrb[0].mxu0
      %v3728 = vadd.f32 0.0, %v3727
      %v3729 = vpop.f32.mrb[0].mxu0
      %3730 = vmatprep.mubr.f32.mxu0 0.0
      %3731 = vmatmul.mubr.f32.gmra.mrb[0].mxu0 %v3597
      %v3732 = vpop.f32.mrb[0].mxu0
      %v3733 = vadd.f32 0.0, %v3732
      %v3734 = vpop.f32.mrb[0].mxu0
      %3735 = vmatprep.mubr.f32.mxu0 0.0
      %3736 = vmatmul.mubr.f32.gmra.mrb[0].mxu0 %v3599
      %v3737 = vpop.f32.mrb[0].mxu0
      %v3738 = vadd.f32 0.0, %v3737
      %v3739 = vpop.f32.mrb[0].mxu0
      %3740 = vmatprep.mubr.f32.mxu0 0.0
      %3741 = vmatmul.mubr.f32.gmra.mrb[0].mxu0 %v3601
      %v3742 = vpop.f32.mrb[0].mxu0
      %v3743 = vadd.f32 0.0, %v3742
      %v3744 = vpop.f32.mrb[0].mxu0
      %3745 = vmatprep.mubr.f32.mxu0 0.0
      %3746 = vmatmul.mubr.f32.gmra.mrb[0].mxu0 %v3603
      %v3747 = vpop.f32.mrb[0].mxu0
      %v3748 = vadd.f32 0.0, %v3747
      %v3749 = vpop.f32.mrb[0].mxu0
      %3750 = vmatprep.mubr.f32.mxu0 0.0
      %3751 = vmatmul.mubr.f32.gmra.mrb[0].mxu0 %v3605
      %v3752 = vpop.f32.mrb[0].mxu0
      %v3753 = vadd.f32 0.0, %v3752
      %v3754 = vpop.f32.mrb[0].mxu0
      %3755 = vmatprep.mubr.f32.mxu0 0.0
      %3756 = vmatmul.mubr.f32.gmra.mrb[0].mxu0 %v3607
      %v3757 = vpop.f32.mrb[0].mxu0
      %v3758 = vadd.f32 0.0, %v3757
      %v3759 = vpop.f32.mrb[0].mxu0
      %3760 = vmatprep.mubr.f32.mxu0 0.0
      %3761 = vmatmul.mubr.f32.gmra.mrb[0].mxu0 %v3609
      %v3762 = vpop.f32.mrb[0].mxu0
      %v3763 = vadd.f32 0.0, %v3762
      %v3764 = vpop.f32.mrb[0].mxu0
      %3765 = vmatprep.mubr.f32.mxu0 0.0
      %3766 = vmatmul.mubr.f32.gmra.mrb[0].mxu0 %v3611
      %v3767 = vpop.f32.mrb[0].mxu0
      %v3768 = vadd.f32 0.0, %v3767
      %v3769 = vpop.f32.mrb[0].mxu0
      %3770 = vmatprep.mubr.f32.mxu0 0.0
      %3771 = vmatmul.mubr.f32.gmra.mrb[0].mxu0 %v3613
      %v3772 = vpop.f32.mrb[0].mxu0
      %v3773 = vadd.f32 0.0, %v3772
      %v3774 = vpop.f32.mrb[0].mxu0
      %3775 = vmatprep.mubr.f32.mxu0 0.0
      %3776 = vmatmul.mubr.f32.gmra.mrb[0].mxu0 %v3615
      %v3777 = vpop.f32.mrb[0].mxu0
      %v3778 = vadd.f32 0.0, %v3777
      %v3779 = vpop.f32.mrb[0].mxu0
      %3780 = vmatprep.mubr.f32.mxu0 0.0
      %3781 = vmatmul.mubr.f32.gmra.mrb[0].mxu0 %v3617
      %v3782 = vpop.f32.mrb[0].mxu0
      %v3783 = vadd.f32 0.0, %v3782
      %v3784 = vpop.f32.mrb[0].mxu0
      %3785 = vmatprep.mubr.f32.mxu0 0.0
      %3786 = vmatmul.mubr.f32.gmra.mrb[0].mxu0 %v3619
      %v3787 = vpop.f32.mrb[0].mxu0
      %v3788 = vadd.f32 0.0, %v3787
      %v3789 = vpop.f32.mrb[0].mxu0
      %3790 = vdwg.mxu0
      %v3791 = vmul.f32 %v3718, 0.35355338
      %v3792 = vmul.f32 %v3723, 0.35355338
      %v3793 = vmul.f32 %v3728, 0.35355338
      %v3794 = vmul.f32 %v3733, 0.35355338
      %v3795 = vmul.f32 %v3738, 0.35355338
      %v3796 = vmul.f32 %v3743, 0.35355338
      %v3797 = vmul.f32 %v3748, 0.35355338
      %v3798 = vmul.f32 %v3753, 0.35355338
      %v3799 = vmul.f32 %v3758, 0.35355338
      %v3800 = vmul.f32 %v3763, 0.35355338
      %v3801 = vmul.f32 %v3768, 0.35355338
      %v3802 = vmul.f32 %v3773, 0.35355338
      %v3803 = vmul.f32 %v3778, 0.35355338
      %v3804 = vmul.f32 %v3783, 0.35355338
      %v3805 = vmul.f32 %v3788, 0.35355338
      %v3806 = vadd.f32 %v3791, %v1039
      %v3807 = vadd.f32 %v3792, %v1040
      %v3808 = vadd.f32 %v3793, %v1041
      %v3809 = vadd.f32 %v3794, %v1042
      %v3810 = vadd.f32 %v3795, %v1043
      %v3811 = vadd.f32 %v3796, %v1044
      %v3812 = vadd.f32 %v3797, %v1045
      %v3813 = vadd.f32 %v3798, %v1046
      %v3814 = vadd.f32 %v3799, %v1047
      %v3815 = vadd.f32 %v3800, %v1048
      %v3816 = vadd.f32 %v3801, %v1049
      %v3817 = vadd.f32 %v3802, %v1050
      %v3818 = vadd.f32 %v3803, %v1051
      %v3819 = vadd.f32 %v3804, %v1052
      %v3820 = vadd.f32 %v3805, %v1053
      %v3821 = vsel %vm1765, %v3806, -inf
      %3822 = vmax.xlane.f32.xlu0 %v3821
      %v3823 = vpop.xlane.xlu0 %3822
      %v3824 = vsel %vm1765, %v3807, -inf
      %3825 = vmax.xlane.f32.xlu0 %v3824
      %v3826 = vpop.xlane.xlu0 %3825
      %v3827 = vsel %vm1765, %v3808, -inf
      %3828 = vmax.xlane.f32.xlu0 %v3827
      %v3829 = vpop.xlane.xlu0 %3828
      %v3830 = vsel %vm1765, %v3809, -inf
      %3831 = vmax.xlane.f32.xlu0 %v3830
      %v3832 = vpop.xlane.xlu0 %3831
      %v3833 = vsel %vm1765, %v3810, -inf
      %3834 = vmax.xlane.f32.xlu0 %v3833
      %v3835 = vpop.xlane.xlu0 %3834
      %v3836 = vsel %vm1765, %v3811, -inf
      %3837 = vmax.xlane.f32.xlu0 %v3836
      %v3838 = vpop.xlane.xlu0 %3837
      %v3839 = vsel %vm1765, %v3812, -inf
      %3840 = vmax.xlane.f32.xlu0 %v3839
      %v3841 = vpop.xlane.xlu0 %3840
      %v3842 = vsel %vm1765, %v3813, -inf
      %3843 = vmax.xlane.f32.xlu0 %v3842
      %v3844 = vpop.xlane.xlu0 %3843
      %v3845 = vsel %vm1765, %v3814, -inf
      %3846 = vmax.xlane.f32.xlu0 %v3845
      %v3847 = vpop.xlane.xlu0 %3846
      %v3848 = vsel %vm1765, %v3815, -inf
      %3849 = vmax.xlane.f32.xlu0 %v3848
      %v3850 = vpop.xlane.xlu0 %3849
      %v3851 = vsel %vm1765, %v3816, -inf
      %3852 = vmax.xlane.f32.xlu0 %v3851
      %v3853 = vpop.xlane.xlu0 %3852
      %v3854 = vsel %vm1765, %v3817, -inf
      %3855 = vmax.xlane.f32.xlu0 %v3854
      %v3856 = vpop.xlane.xlu0 %3855
      %v3857 = vsel %vm1765, %v3818, -inf
      %3858 = vmax.xlane.f32.xlu0 %v3857
      %v3859 = vpop.xlane.xlu0 %3858
      %v3860 = vsel %vm1765, %v3819, -inf
      %3861 = vmax.xlane.f32.xlu0 %v3860
      %v3862 = vpop.xlane.xlu0 %3861
      %v3863 = vsel %vm1765, %v3820, -inf
      %3864 = vmax.xlane.f32.xlu0 %v3863
      %v3865 = vpop.xlane.xlu0 %3864
      %v3866 = vsub.f32 %v3806, %v3823
      %v3867 = vsub.f32 %v3807, %v3826
      %v3868 = vsub.f32 %v3808, %v3829
      %v3869 = vsub.f32 %v3809, %v3832
      %v3870 = vsub.f32 %v3810, %v3835
      %v3871 = vsub.f32 %v3811, %v3838
      %v3872 = vsub.f32 %v3812, %v3841
      %v3873 = vsub.f32 %v3813, %v3844
      %v3874 = vsub.f32 %v3814, %v3847
      %v3875 = vsub.f32 %v3815, %v3850
      %v3876 = vsub.f32 %v3816, %v3853
      %v3877 = vsub.f32 %v3817, %v3856
      %v3878 = vsub.f32 %v3818, %v3859
      %v3879 = vsub.f32 %v3819, %v3862
      %v3880 = vsub.f32 %v3820, %v3865
      %v3881 = vmul.f32 %v3866, 1.442695
      %v3882 = vpow.pop %v3881
      %v3883 = vmul.f32 %v3867, 1.442695
      %v3884 = vpow.pop %v3883
      %v3885 = vmul.f32 %v3868, 1.442695
      %v3886 = vpow.pop %v3885
      %v3887 = vmul.f32 %v3869, 1.442695
      %v3888 = vpow.pop %v3887
      %v3889 = vmul.f32 %v3870, 1.442695
      %v3890 = vpow.pop %v3889
      %v3891 = vmul.f32 %v3871, 1.442695
      %v3892 = vpow.pop %v3891
      %v3893 = vmul.f32 %v3872, 1.442695
      %v3894 = vpow.pop %v3893
      %v3895 = vmul.f32 %v3873, 1.442695
      %v3896 = vpow.pop %v3895
      %v3897 = vmul.f32 %v3874, 1.442695
      %v3898 = vpow.pop %v3897
      %v3899 = vmul.f32 %v3875, 1.442695
      %v3900 = vpow.pop %v3899
      %v3901 = vmul.f32 %v3876, 1.442695
      %v3902 = vpow.pop %v3901
      %v3903 = vmul.f32 %v3877, 1.442695
      %v3904 = vpow.pop %v3903
      %v3905 = vmul.f32 %v3878, 1.442695
      %v3906 = vpow.pop %v3905
      %v3907 = vmul.f32 %v3879, 1.442695
      %v3908 = vpow.pop %v3907
      %v3909 = vmul.f32 %v3880, 1.442695
      %v3910 = vpow.pop %v3909
      %v3911 = vsel %vm1765, %v3882, 0.0
      %3912 = vadd.xlane.f32.xlu0 %v3911
      %v3913 = vpop.xlane.xlu0 %3912
      %v3914 = vsel %vm1765, %v3884, 0.0
      %3915 = vadd.xlane.f32.xlu0 %v3914
      %v3916 = vpop.xlane.xlu0 %3915
      %v3917 = vsel %vm1765, %v3886, 0.0
      %3918 = vadd.xlane.f32.xlu0 %v3917
      %v3919 = vpop.xlane.xlu0 %3918
      %v3920 = vsel %vm1765, %v3888, 0.0
      %3921 = vadd.xlane.f32.xlu0 %v3920
      %v3922 = vpop.xlane.xlu0 %3921
      %v3923 = vsel %vm1765, %v3890, 0.0
      %3924 = vadd.xlane.f32.xlu0 %v3923
      %v3925 = vpop.xlane.xlu0 %3924
      %v3926 = vsel %vm1765, %v3892, 0.0
      %3927 = vadd.xlane.f32.xlu0 %v3926
      %v3928 = vpop.xlane.xlu0 %3927
      %v3929 = vsel %vm1765, %v3894, 0.0
      %3930 = vadd.xlane.f32.xlu0 %v3929
      %v3931 = vpop.xlane.xlu0 %3930
      %v3932 = vsel %vm1765, %v3896, 0.0
      %3933 = vadd.xlane.f32.xlu0 %v3932
      %v3934 = vpop.xlane.xlu0 %3933
      %v3935 = vsel %vm1765, %v3898, 0.0
      %3936 = vadd.xlane.f32.xlu0 %v3935
      %v3937 = vpop.xlane.xlu0 %3936
      %v3938 = vsel %vm1765, %v3900, 0.0
      %3939 = vadd.xlane.f32.xlu0 %v3938
      %v3940 = vpop.xlane.xlu0 %3939
      %v3941 = vsel %vm1765, %v3902, 0.0
      %3942 = vadd.xlane.f32.xlu0 %v3941
      %v3943 = vpop.xlane.xlu0 %3942
      %v3944 = vsel %vm1765, %v3904, 0.0
      %3945 = vadd.xlane.f32.xlu0 %v3944
      %v3946 = vpop.xlane.xlu0 %3945
      %v3947 = vsel %vm1765, %v3906, 0.0
      %3948 = vadd.xlane.f32.xlu0 %v3947
      %v3949 = vpop.xlane.xlu0 %3948
      %v3950 = vsel %vm1765, %v3908, 0.0
      %3951 = vadd.xlane.f32.xlu0 %v3950
      %v3952 = vpop.xlane.xlu0 %3951
      %v3953 = vsel %vm1765, %v3910, 0.0
      %3954 = vadd.xlane.f32.xlu0 %v3953
      %v3955 = vpop.xlane.xlu0 %3954
      %v3956 = vrcp.pop %v3913
      %v3957 = vrcp.pop %v3916
      %v3958 = vrcp.pop %v3919
      %v3959 = vrcp.pop %v3922
      %v3960 = vrcp.pop %v3925
      %v3961 = vrcp.pop %v3928
      %v3962 = vrcp.pop %v3931
      %v3963 = vrcp.pop %v3934
      %v3964 = vrcp.pop %v3937
      %v3965 = vrcp.pop %v3940
      %v3966 = vrcp.pop %v3943
      %v3967 = vrcp.pop %v3946
      %v3968 = vrcp.pop %v3949
      %v3969 = vrcp.pop %v3952
      %v3970 = vrcp.pop %v3955
      %v3971 = vmul.f32 %v3882, %v3956
      %v3972 = vmul.f32 %v3884, %v3957
      %v3973 = vmul.f32 %v3886, %v3958
      %v3974 = vmul.f32 %v3888, %v3959
      %v3975 = vmul.f32 %v3890, %v3960
      %v3976 = vmul.f32 %v3892, %v3961
      %v3977 = vmul.f32 %v3894, %v3962
      %v3978 = vmul.f32 %v3896, %v3963
      %v3979 = vmul.f32 %v3898, %v3964
      %v3980 = vmul.f32 %v3900, %v3965
      %v3981 = vmul.f32 %v3902, %v3966
      %v3982 = vmul.f32 %v3904, %v3967
      %v3983 = vmul.f32 %v3906, %v3968
      %v3984 = vmul.f32 %v3908, %v3969
      %v3985 = vmul.f32 %v3910, %v3970
      %3986 = vrot.lane.b32.xlu0 %v1416, 40
      %v3987 = vpop.permute.xlu0 %3986
      %3988 = vrot.lane.b32.xlu0 %v1421, 40
      %v3989 = vpop.permute.xlu0 %3988
      %3990 = vrot.lane.b32.xlu0 %v1426, 40
      %v3991 = vpop.permute.xlu0 %3990
      %3992 = vrot.lane.b32.xlu0 %v1431, 40
      %v3993 = vpop.permute.xlu0 %3992
      %3994 = vrot.lane.b32.xlu0 %v1436, 40
      %v3995 = vpop.permute.xlu0 %3994
      %3996 = vrot.lane.b32.xlu0 %v1441, 40
      %v3997 = vpop.permute.xlu0 %3996
      %3998 = vrot.lane.b32.xlu0 %v1446, 40
      %v3999 = vpop.permute.xlu0 %3998
      %4000 = vrot.lane.b32.xlu0 %v1451, 40
      %v4001 = vpop.permute.xlu0 %4000
      %4002 = vrot.lane.b32.xlu0 %v1456, 40
      %v4003 = vpop.permute.xlu0 %4002
      %4004 = vrot.lane.b32.xlu0 %v1461, 40
      %v4005 = vpop.permute.xlu0 %4004
      %4006 = vrot.lane.b32.xlu0 %v1466, 40
      %v4007 = vpop.permute.xlu0 %4006
      %4008 = vrot.lane.b32.xlu0 %v1471, 40
      %v4009 = vpop.permute.xlu0 %4008
      %4010 = vrot.lane.b32.xlu0 %v1476, 40
      %v4011 = vpop.permute.xlu0 %4010
      %4012 = vrot.lane.b32.xlu0 %v1481, 40
      %v4013 = vpop.permute.xlu0 %4012
      %4014 = vrot.lane.b32.xlu0 %v1486, 40
      %v4015 = vpop.permute.xlu0 %4014
      %v4032 = vsel %vm1765, %v3971, 0
      %v4035 = vsel %vm1765, %v3972, 0
      %v4038 = vsel %vm1765, %v3973, 0
      %v4041 = vsel %vm1765, %v3974, 0
      %v4044 = vsel %vm1765, %v3975, 0
      %v4047 = vsel %vm1765, %v3976, 0
      %v4050 = vsel %vm1765, %v3977, 0
      %v4053 = vsel %vm1765, %v3978, 0
      %v4056 = vsel %vm1765, %v3979, 0
      %v4059 = vsel %vm1765, %v3980, 0
      %v4062 = vsel %vm1765, %v3981, 0
      %v4065 = vsel %vm1765, %v3982, 0
      %v4068 = vsel %vm1765, %v3983, 0
      %v4071 = vsel %vm1765, %v3984, 0
      %v4074 = vsel %vm1765, %v3985, 0
      %4076 = vmatprep.subr.mxu0 0.0
      %4077 = vmatpush1.msra.mxu0 %v3987
      %4078 = vmatprep.subr.mxu0 0.0
      %4079 = vmatpush1.msra.mxu0 %v3989
      %4080 = vmatprep.subr.mxu0 0.0
      %4081 = vmatpush1.msra.mxu0 %v3991
      %4082 = vmatprep.subr.mxu0 0.0
      %4083 = vmatpush1.msra.mxu0 %v3993
      %4084 = vmatprep.subr.mxu0 0.0
      %4085 = vmatpush1.msra.mxu0 %v3995
      %4086 = vmatprep.subr.mxu0 0.0
      %4087 = vmatpush1.msra.mxu0 %v3997
      %4088 = vmatprep.subr.mxu0 0.0
      %4089 = vmatpush1.msra.mxu0 %v3999
      %4090 = vmatprep.subr.mxu0 0.0
      %4091 = vmatpush1.msra.mxu0 %v4001
      %4092 = vmatprep.subr.mxu0 0.0
      %4093 = vmatpush1.msra.mxu0 %v4003
      %4094 = vmatprep.subr.mxu0 0.0
      %4095 = vmatpush1.msra.mxu0 %v4005
      %4096 = vmatprep.subr.mxu0 0.0
      %4097 = vmatpush1.msra.mxu0 %v4007
      %4098 = vmatprep.subr.mxu0 0.0
      %4099 = vmatpush1.msra.mxu0 %v4009
      %4100 = vmatprep.subr.mxu0 0.0
      %4101 = vmatpush1.msra.mxu0 %v4011
      %4102 = vmatprep.subr.mxu0 0.0
      %4103 = vmatpush1.msra.mxu0 %v4013
      %4104 = vmatprep.subr.mxu0 0.0
      %4105 = vmatpush1.msra.mxu0 %v4015
      %4106 = vmatprep.subr.mxu0 0.0
      %4107 = vmatpush1.msra.mxu0 0.0
      %4108 = vmatprep.subr.mxu0 0.0
      %4109 = vmatpush1.msra.mxu0 0.0
      %4110 = vmatprep.subr.mxu0 0.0
      %4111 = vmatpush1.msra.mxu0 0.0
      %4112 = vmatprep.subr.mxu0 0.0
      %4113 = vmatpush1.msra.mxu0 0.0
      %4114 = vmatprep.subr.mxu0 0.0
      %4115 = vmatpush1.msra.mxu0 0.0
      %4116 = vmatprep.subr.mxu0 0.0
      %4117 = vmatpush1.msra.mxu0 0.0
      %4118 = vmatprep.subr.mxu0 0.0
      %4119 = vmatpush1.msra.mxu0 0.0
      %4120 = vmatprep.subr.mxu0 0.0
      %4121 = vmatpush1.msra.mxu0 0.0
      %4122 = vmatprep.subr.mxu0 0.0
      %4123 = vmatpush1.msra.mxu0 0.0
      %4124 = vmatprep.subr.mxu0 0.0
      %4125 = vmatpush1.msra.mxu0 0.0
      %4126 = vmatprep.subr.mxu0 0.0
      %4127 = vmatpush1.msra.mxu0 0.0
      %4128 = vmatprep.subr.mxu0 0.0
      %4129 = vmatpush1.msra.mxu0 0.0
      %4130 = vmatprep.subr.mxu0 0.0
      %4131 = vmatpush1.msra.mxu0 0.0
      %4132 = vmatprep.subr.mxu0 0.0
      %4133 = vmatpush1.msra.mxu0 0.0
      %4134 = vmatprep.subr.mxu0 0.0
      %4135 = vmatpush1.msra.mxu0 0.0
      %4136 = vmatprep.subr.mxu0 0.0
      %4137 = vmatpush1.msra.mxu0 0.0
      %4138 = vmatprep.subr.mxu0 0.0
      %4139 = vmatpush1.msra.mxu0 0.0
      %4140 = vmatprep.mubr.f32.mxu0 0.0
      %4141 = vmatmul.mubr.f32.gmra.mrb[0].mxu0 %v4032
      %v4142 = vpop.f32.mrb[0].mxu0
      %v4143 = vadd.f32 0.0, %v4142
      %v4144 = vpop.f32.mrb[0].mxu0
      %4145 = vmatprep.mubr.f32.mxu0 0.0
      %4146 = vmatmul.mubr.f32.gmra.mrb[0].mxu0 %v4035
      %v4147 = vpop.f32.mrb[0].mxu0
      %v4148 = vadd.f32 0.0, %v4147
      %v4149 = vpop.f32.mrb[0].mxu0
      %4150 = vmatprep.mubr.f32.mxu0 0.0
      %4151 = vmatmul.mubr.f32.gmra.mrb[0].mxu0 %v4038
      %v4152 = vpop.f32.mrb[0].mxu0
      %v4153 = vadd.f32 0.0, %v4152
      %v4154 = vpop.f32.mrb[0].mxu0
      %4155 = vmatprep.mubr.f32.mxu0 0.0
      %4156 = vmatmul.mubr.f32.gmra.mrb[0].mxu0 %v4041
      %v4157 = vpop.f32.mrb[0].mxu0
      %v4158 = vadd.f32 0.0, %v4157
      %v4159 = vpop.f32.mrb[0].mxu0
      %4160 = vmatprep.mubr.f32.mxu0 0.0
      %4161 = vmatmul.mubr.f32.gmra.mrb[0].mxu0 %v4044
      %v4162 = vpop.f32.mrb[0].mxu0
      %v4163 = vadd.f32 0.0, %v4162
      %v4164 = vpop.f32.mrb[0].mxu0
      %4165 = vmatprep.mubr.f32.mxu0 0.0
      %4166 = vmatmul.mubr.f32.gmra.mrb[0].mxu0 %v4047
      %v4167 = vpop.f32.mrb[0].mxu0
      %v4168 = vadd.f32 0.0, %v4167
      %v4169 = vpop.f32.mrb[0].mxu0
      %4170 = vmatprep.mubr.f32.mxu0 0.0
      %4171 = vmatmul.mubr.f32.gmra.mrb[0].mxu0 %v4050
      %v4172 = vpop.f32.mrb[0].mxu0
      %v4173 = vadd.f32 0.0, %v4172
      %v4174 = vpop.f32.mrb[0].mxu0
      %4175 = vmatprep.mubr.f32.mxu0 0.0
      %4176 = vmatmul.mubr.f32.gmra.mrb[0].mxu0 %v4053
      %v4177 = vpop.f32.mrb[0].mxu0
      %v4178 = vadd.f32 0.0, %v4177
      %v4179 = vpop.f32.mrb[0].mxu0
      %4180 = vmatprep.mubr.f32.mxu0 0.0
      %4181 = vmatmul.mubr.f32.gmra.mrb[0].mxu0 %v4056
      %v4182 = vpop.f32.mrb[0].mxu0
      %v4183 = vadd.f32 0.0, %v4182
      %v4184 = vpop.f32.mrb[0].mxu0
      %4185 = vmatprep.mubr.f32.mxu0 0.0
      %4186 = vmatmul.mubr.f32.gmra.mrb[0].mxu0 %v4059
      %v4187 = vpop.f32.mrb[0].mxu0
      %v4188 = vadd.f32 0.0, %v4187
      %v4189 = vpop.f32.mrb[0].mxu0
      %4190 = vmatprep.mubr.f32.mxu0 0.0
      %4191 = vmatmul.mubr.f32.gmra.mrb[0].mxu0 %v4062
      %v4192 = vpop.f32.mrb[0].mxu0
      %v4193 = vadd.f32 0.0, %v4192
      %v4194 = vpop.f32.mrb[0].mxu0
      %4195 = vmatprep.mubr.f32.mxu0 0.0
      %4196 = vmatmul.mubr.f32.gmra.mrb[0].mxu0 %v4065
      %v4197 = vpop.f32.mrb[0].mxu0
      %v4198 = vadd.f32 0.0, %v4197
      %v4199 = vpop.f32.mrb[0].mxu0
      %4200 = vmatprep.mubr.f32.mxu0 0.0
      %4201 = vmatmul.mubr.f32.gmra.mrb[0].mxu0 %v4068
      %v4202 = vpop.f32.mrb[0].mxu0
      %v4203 = vadd.f32 0.0, %v4202
      %v4204 = vpop.f32.mrb[0].mxu0
      %4205 = vmatprep.mubr.f32.mxu0 0.0
      %4206 = vmatmul.mubr.f32.gmra.mrb[0].mxu0 %v4071
      %v4207 = vpop.f32.mrb[0].mxu0
      %v4208 = vadd.f32 0.0, %v4207
      %v4209 = vpop.f32.mrb[0].mxu0
      %4210 = vmatprep.mubr.f32.mxu0 0.0
      %4211 = vmatmul.mubr.f32.gmra.mrb[0].mxu0 %v4074
      %v4212 = vpop.f32.mrb[0].mxu0
      %v4213 = vadd.f32 0.0, %v4212
      %v4214 = vpop.f32.mrb[0].mxu0
      %4215 = vdwg.mxu0
      %4231 = vrot.lane.b32.xlu0 %v2773, 8
      %v4232 = vpop.permute.xlu0 %4231
      %4233 = vrot.lane.b32.xlu0 %v2778, 8
      %v4234 = vpop.permute.xlu0 %4233
      %4235 = vrot.lane.b32.xlu0 %v2783, 8
      %v4236 = vpop.permute.xlu0 %4235
      %4237 = vrot.lane.b32.xlu0 %v2788, 8
      %v4238 = vpop.permute.xlu0 %4237
      %4239 = vrot.lane.b32.xlu0 %v2793, 8
      %v4240 = vpop.permute.xlu0 %4239
      %4241 = vrot.lane.b32.xlu0 %v2798, 8
      %v4242 = vpop.permute.xlu0 %4241
      %4243 = vrot.lane.b32.xlu0 %v2803, 8
      %v4244 = vpop.permute.xlu0 %4243
      %4245 = vrot.lane.b32.xlu0 %v2808, 8
      %v4246 = vpop.permute.xlu0 %4245
      %4247 = vrot.lane.b32.xlu0 %v2813, 8
      %v4248 = vpop.permute.xlu0 %4247
      %4249 = vrot.lane.b32.xlu0 %v2818, 8
      %v4250 = vpop.permute.xlu0 %4249
      %4251 = vrot.lane.b32.xlu0 %v2823, 8
      %v4252 = vpop.permute.xlu0 %4251
      %4253 = vrot.lane.b32.xlu0 %v2828, 8
      %v4254 = vpop.permute.xlu0 %4253
      %4255 = vrot.lane.b32.xlu0 %v2833, 8
      %v4256 = vpop.permute.xlu0 %4255
      %4257 = vrot.lane.b32.xlu0 %v2838, 8
      %v4258 = vpop.permute.xlu0 %4257
      %4259 = vrot.lane.b32.xlu0 %v2843, 8
      %v4260 = vpop.permute.xlu0 %4259
      %4291 = vrot.lane.b32.xlu0 %v3458, 16
      %v4292 = vpop.permute.xlu0 %4291
      %4293 = vrot.lane.b32.xlu0 %v3463, 16
      %v4294 = vpop.permute.xlu0 %4293
      %4295 = vrot.lane.b32.xlu0 %v3468, 16
      %v4296 = vpop.permute.xlu0 %4295
      %4297 = vrot.lane.b32.xlu0 %v3473, 16
      %v4298 = vpop.permute.xlu0 %4297
      %4299 = vrot.lane.b32.xlu0 %v3478, 16
      %v4300 = vpop.permute.xlu0 %4299
      %4301 = vrot.lane.b32.xlu0 %v3483, 16
      %v4302 = vpop.permute.xlu0 %4301
      %4303 = vrot.lane.b32.xlu0 %v3488, 16
      %v4304 = vpop.permute.xlu0 %4303
      %4305 = vrot.lane.b32.xlu0 %v3493, 16
      %v4306 = vpop.permute.xlu0 %4305
      %4307 = vrot.lane.b32.xlu0 %v3498, 16
      %v4308 = vpop.permute.xlu0 %4307
      %4309 = vrot.lane.b32.xlu0 %v3503, 16
      %v4310 = vpop.permute.xlu0 %4309
      %4311 = vrot.lane.b32.xlu0 %v3508, 16
      %v4312 = vpop.permute.xlu0 %4311
      %4313 = vrot.lane.b32.xlu0 %v3513, 16
      %v4314 = vpop.permute.xlu0 %4313
      %4315 = vrot.lane.b32.xlu0 %v3518, 16
      %v4316 = vpop.permute.xlu0 %4315
      %4317 = vrot.lane.b32.xlu0 %v3523, 16
      %v4318 = vpop.permute.xlu0 %4317
      %4319 = vrot.lane.b32.xlu0 %v3528, 16
      %v4320 = vpop.permute.xlu0 %4319
      %4351 = vrot.lane.b32.xlu0 %v4143, 24
      %v4352 = vpop.permute.xlu0 %4351
      %4353 = vrot.lane.b32.xlu0 %v4148, 24
      %v4354 = vpop.permute.xlu0 %4353
      %4355 = vrot.lane.b32.xlu0 %v4153, 24
      %v4356 = vpop.permute.xlu0 %4355
      %4357 = vrot.lane.b32.xlu0 %v4158, 24
      %v4358 = vpop.permute.xlu0 %4357
      %4359 = vrot.lane.b32.xlu0 %v4163, 24
      %v4360 = vpop.permute.xlu0 %4359
      %4361 = vrot.lane.b32.xlu0 %v4168, 24
      %v4362 = vpop.permute.xlu0 %4361
      %4363 = vrot.lane.b32.xlu0 %v4173, 24
      %v4364 = vpop.permute.xlu0 %4363
      %4365 = vrot.lane.b32.xlu0 %v4178, 24
      %v4366 = vpop.permute.xlu0 %4365
      %4367 = vrot.lane.b32.xlu0 %v4183, 24
      %v4368 = vpop.permute.xlu0 %4367
      %4369 = vrot.lane.b32.xlu0 %v4188, 24
      %v4370 = vpop.permute.xlu0 %4369
      %4371 = vrot.lane.b32.xlu0 %v4193, 24
      %v4372 = vpop.permute.xlu0 %4371
      %4373 = vrot.lane.b32.xlu0 %v4198, 24
      %v4374 = vpop.permute.xlu0 %4373
      %4375 = vrot.lane.b32.xlu0 %v4203, 24
      %v4376 = vpop.permute.xlu0 %4375
      %4377 = vrot.lane.b32.xlu0 %v4208, 24
      %v4378 = vpop.permute.xlu0 %4377
      %4379 = vrot.lane.b32.xlu0 %v4213, 24
      %v4380 = vpop.permute.xlu0 %4379
      %v4396 = vsel %vm1534, %v2088, %v4232
      %v4397 = vsel %vm1534, %v2093, %v4234
      %v4398 = vsel %vm1534, %v2098, %v4236
      %v4399 = vsel %vm1534, %v2103, %v4238
      %v4400 = vsel %vm1534, %v2108, %v4240
      %v4401 = vsel %vm1534, %v2113, %v4242
      %v4402 = vsel %vm1534, %v2118, %v4244
      %v4403 = vsel %vm1534, %v2123, %v4246
      %v4404 = vsel %vm1534, %v2128, %v4248
      %v4405 = vsel %vm1534, %v2133, %v4250
      %v4406 = vsel %vm1534, %v2138, %v4252
      %v4407 = vsel %vm1534, %v2143, %v4254
      %v4408 = vsel %vm1534, %v2148, %v4256
      %v4409 = vsel %vm1534, %v2153, %v4258
      %v4410 = vsel %vm1534, %v2158, %v4260
      %vm4411 = vcmask 130048
      %v4412 = vsel %vm4411, %v4396, %v4292
      %v4413 = vsel %vm4411, %v4397, %v4294
      %v4414 = vsel %vm4411, %v4398, %v4296
      %v4415 = vsel %vm4411, %v4399, %v4298
      %v4416 = vsel %vm4411, %v4400, %v4300
      %v4417 = vsel %vm4411, %v4401, %v4302
      %v4418 = vsel %vm4411, %v4402, %v4304
      %v4419 = vsel %vm4411, %v4403, %v4306
      %v4420 = vsel %vm4411, %v4404, %v4308
      %v4421 = vsel %vm4411, %v4405, %v4310
      %v4422 = vsel %vm4411, %v4406, %v4312
      %v4423 = vsel %vm4411, %v4407, %v4314
      %v4424 = vsel %vm4411, %v4408, %v4316
      %v4425 = vsel %vm4411, %v4409, %v4318
      %v4426 = vsel %vm4411, %v4410, %v4320
      %vm4427 = vcmask 195584
      %v4428 = vsel %vm4427, %v4412, %v4352
      %v4429 = vsel %vm4427, %v4413, %v4354
      %v4430 = vsel %vm4427, %v4414, %v4356
      %v4431 = vsel %vm4427, %v4415, %v4358
      %v4432 = vsel %vm4427, %v4416, %v4360
      %v4433 = vsel %vm4427, %v4417, %v4362
      %v4434 = vsel %vm4427, %v4418, %v4364
      %v4435 = vsel %vm4427, %v4419, %v4366
      %v4436 = vsel %vm4427, %v4420, %v4368
      %v4437 = vsel %vm4427, %v4421, %v4370
      %v4438 = vsel %vm4427, %v4422, %v4372
      %v4439 = vsel %vm4427, %v4423, %v4374
      %v4440 = vsel %vm4427, %v4424, %v4376
      %v4441 = vsel %vm4427, %v4425, %v4378
      %v4442 = vsel %vm4427, %v4426, %v4380
      %v4443 = vld [vmem:[%s10] sm:$0xff]
      %v4444 = vld [vmem:[%s10 + $0x8] sm:$0xff]
      %v4445 = vld [vmem:[%s10 + $0x10] sm:$0xff]
      %v4446 = vld [vmem:[%s10 + $0x18] sm:$0xff]
      %v4448 = vsel %vm800, %v4428, 0
      %v4451 = vsel %vm800, %v4429, 0
      %v4454 = vsel %vm800, %v4430, 0
      %v4457 = vsel %vm800, %v4431, 0
      %v4460 = vsel %vm800, %v4432, 0
      %v4463 = vsel %vm800, %v4433, 0
      %v4466 = vsel %vm800, %v4434, 0
      %v4469 = vsel %vm800, %v4435, 0
      %v4472 = vsel %vm800, %v4436, 0
      %v4475 = vsel %vm800, %v4437, 0
      %v4478 = vsel %vm800, %v4438, 0
      %v4481 = vsel %vm800, %v4439, 0
      %v4484 = vsel %vm800, %v4440, 0
      %v4487 = vsel %vm800, %v4441, 0
      %v4490 = vsel %vm800, %v4442, 0
      %4492 = vmatprep.subr.mxu0 0.0
      %4493 = vmatpush1.msra.mxu0 %v4443
      %4494 = vmatprep.subr.mxu0 0.0
      %4495 = vmatpush1.msra.mxu0 %v4444
      %4496 = vmatprep.subr.mxu0 0.0
      %4497 = vmatpush1.msra.mxu0 %v4445
      %4498 = vmatprep.subr.mxu0 0.0
      %4499 = vmatpush1.msra.mxu0 %v4446
      %4500 = vmatprep.subr.mxu0 0.0
      %4501 = vmatpush1.msra.mxu0 0.0
      %4502 = vmatprep.subr.mxu0 0.0
      %4503 = vmatpush1.msra.mxu0 0.0
      %4504 = vmatprep.subr.mxu0 0.0
      %4505 = vmatpush1.msra.mxu0 0.0
      %4506 = vmatprep.subr.mxu0 0.0
      %4507 = vmatpush1.msra.mxu0 0.0
      %4508 = vmatprep.subr.mxu0 0.0
      %4509 = vmatpush1.msra.mxu0 0.0
      %4510 = vmatprep.subr.mxu0 0.0
      %4511 = vmatpush1.msra.mxu0 0.0
      %4512 = vmatprep.subr.mxu0 0.0
      %4513 = vmatpush1.msra.mxu0 0.0
      %4514 = vmatprep.subr.mxu0 0.0
      %4515 = vmatpush1.msra.mxu0 0.0
      %4516 = vmatprep.subr.mxu0 0.0
      %4517 = vmatpush1.msra.mxu0 0.0
      %4518 = vmatprep.subr.mxu0 0.0
      %4519 = vmatpush1.msra.mxu0 0.0
      %4520 = vmatprep.subr.mxu0 0.0
      %4521 = vmatpush1.msra.mxu0 0.0
      %4522 = vmatprep.subr.mxu0 0.0
      %4523 = vmatpush1.msra.mxu0 0.0
      %4524 = vmatprep.subr.mxu0 0.0
      %4525 = vmatpush1.msra.mxu0 0.0
      %4526 = vmatprep.subr.mxu0 0.0
      %4527 = vmatpush1.msra.mxu0 0.0
      %4528 = vmatprep.subr.mxu0 0.0
      %4529 = vmatpush1.msra.mxu0 0.0
      %4530 = vmatprep.subr.mxu0 0.0
      %4531 = vmatpush1.msra.mxu0 0.0
      %4532 = vmatprep.subr.mxu0 0.0
      %4533 = vmatpush1.msra.mxu0 0.0
      %4534 = vmatprep.subr.mxu0 0.0
      %4535 = vmatpush1.msra.mxu0 0.0
      %4536 = vmatprep.subr.mxu0 0.0
      %4537 = vmatpush1.msra.mxu0 0.0
      %4538 = vmatprep.subr.mxu0 0.0
      %4539 = vmatpush1.msra.mxu0 0.0
      %4540 = vmatprep.subr.mxu0 0.0
      %4541 = vmatpush1.msra.mxu0 0.0
      %4542 = vmatprep.subr.mxu0 0.0
      %4543 = vmatpush1.msra.mxu0 0.0
      %4544 = vmatprep.subr.mxu0 0.0
      %4545 = vmatpush1.msra.mxu0 0.0
      %4546 = vmatprep.subr.mxu0 0.0
      %4547 = vmatpush1.msra.mxu0 0.0
      %4548 = vmatprep.subr.mxu0 0.0
      %4549 = vmatpush1.msra.mxu0 0.0
      %4550 = vmatprep.subr.mxu0 0.0
      %4551 = vmatpush1.msra.mxu0 0.0
      %4552 = vmatprep.subr.mxu0 0.0
      %4553 = vmatpush1.msra.mxu0 0.0
      %4554 = vmatprep.subr.mxu0 0.0
      %4555 = vmatpush1.msra.mxu0 0.0
      %4556 = vmatprep.mubr.f32.mxu0 0.0
      %4557 = vmatmul.mubr.f32.gmra.mrb[0].mxu0 %v4448
      %v4558 = vpop.f32.mrb[0].mxu0
      %v4559 = vadd.f32 0.0, %v4558
      %v4560 = vpop.f32.mrb[0].mxu0
      %4561 = vmatprep.mubr.f32.mxu0 0.0
      %4562 = vmatmul.mubr.f32.gmra.mrb[0].mxu0 %v4451
      %v4563 = vpop.f32.mrb[0].mxu0
      %v4564 = vadd.f32 0.0, %v4563
      %v4565 = vpop.f32.mrb[0].mxu0
      %4566 = vmatprep.mubr.f32.mxu0 0.0
      %4567 = vmatmul.mubr.f32.gmra.mrb[0].mxu0 %v4454
      %v4568 = vpop.f32.mrb[0].mxu0
      %v4569 = vadd.f32 0.0, %v4568
      %v4570 = vpop.f32.mrb[0].mxu0
      %4571 = vmatprep.mubr.f32.mxu0 0.0
      %4572 = vmatmul.mubr.f32.gmra.mrb[0].mxu0 %v4457
      %v4573 = vpop.f32.mrb[0].mxu0
      %v4574 = vadd.f32 0.0, %v4573
      %v4575 = vpop.f32.mrb[0].mxu0
      %4576 = vmatprep.mubr.f32.mxu0 0.0
      %4577 = vmatmul.mubr.f32.gmra.mrb[0].mxu0 %v4460
      %v4578 = vpop.f32.mrb[0].mxu0
      %v4579 = vadd.f32 0.0, %v4578
      %v4580 = vpop.f32.mrb[0].mxu0
      %4581 = vmatprep.mubr.f32.mxu0 0.0
      %4582 = vmatmul.mubr.f32.gmra.mrb[0].mxu0 %v4463
      %v4583 = vpop.f32.mrb[0].mxu0
      %v4584 = vadd.f32 0.0, %v4583
      %v4585 = vpop.f32.mrb[0].mxu0
      %4586 = vmatprep.mubr.f32.mxu0 0.0
      %4587 = vmatmul.mubr.f32.gmra.mrb[0].mxu0 %v4466
      %v4588 = vpop.f32.mrb[0].mxu0
      %v4589 = vadd.f32 0.0, %v4588
      %v4590 = vpop.f32.mrb[0].mxu0
      %4591 = vmatprep.mubr.f32.mxu0 0.0
      %4592 = vmatmul.mubr.f32.gmra.mrb[0].mxu0 %v4469
      %v4593 = vpop.f32.mrb[0].mxu0
      %v4594 = vadd.f32 0.0, %v4593
      %v4595 = vpop.f32.mrb[0].mxu0
      %4596 = vmatprep.mubr.f32.mxu0 0.0
      %4597 = vmatmul.mubr.f32.gmra.mrb[0].mxu0 %v4472
      %v4598 = vpop.f32.mrb[0].mxu0
      %v4599 = vadd.f32 0.0, %v4598
      %v4600 = vpop.f32.mrb[0].mxu0
      %4601 = vmatprep.mubr.f32.mxu0 0.0
      %4602 = vmatmul.mubr.f32.gmra.mrb[0].mxu0 %v4475
      %v4603 = vpop.f32.mrb[0].mxu0
      %v4604 = vadd.f32 0.0, %v4603
      %v4605 = vpop.f32.mrb[0].mxu0
      %4606 = vmatprep.mubr.f32.mxu0 0.0
      %4607 = vmatmul.mubr.f32.gmra.mrb[0].mxu0 %v4478
      %v4608 = vpop.f32.mrb[0].mxu0
      %v4609 = vadd.f32 0.0, %v4608
      %v4610 = vpop.f32.mrb[0].mxu0
      %4611 = vmatprep.mubr.f32.mxu0 0.0
      %4612 = vmatmul.mubr.f32.gmra.mrb[0].mxu0 %v4481
      %v4613 = vpop.f32.mrb[0].mxu0
      %v4614 = vadd.f32 0.0, %v4613
      %v4615 = vpop.f32.mrb[0].mxu0
      %4616 = vmatprep.mubr.f32.mxu0 0.0
      %4617 = vmatmul.mubr.f32.gmra.mrb[0].mxu0 %v4484
      %v4618 = vpop.f32.mrb[0].mxu0
      %v4619 = vadd.f32 0.0, %v4618
      %v4620 = vpop.f32.mrb[0].mxu0
      %4621 = vmatprep.mubr.f32.mxu0 0.0
      %4622 = vmatmul.mubr.f32.gmra.mrb[0].mxu0 %v4487
      %v4623 = vpop.f32.mrb[0].mxu0
      %v4624 = vadd.f32 0.0, %v4623
      %v4625 = vpop.f32.mrb[0].mxu0
      %4626 = vmatprep.mubr.f32.mxu0 0.0
      %4627 = vmatmul.mubr.f32.gmra.mrb[0].mxu0 %v4490
      %v4628 = vpop.f32.mrb[0].mxu0
      %v4629 = vadd.f32 0.0, %v4628
      %v4630 = vpop.f32.mrb[0].mxu0
      %4631 = vdwg.mxu0
      %v4632 = vadd.f32 %v1024, %v4559
      %v4633 = vadd.f32 %v1025, %v4564
      %v4634 = vadd.f32 %v1026, %v4569
      %v4635 = vadd.f32 %v1027, %v4574
      %v4636 = vadd.f32 %v1028, %v4579
      %v4637 = vadd.f32 %v1029, %v4584
      %v4638 = vadd.f32 %v1030, %v4589
      %v4639 = vadd.f32 %v1031, %v4594
      %v4640 = vadd.f32 %v1032, %v4599
      %v4641 = vadd.f32 %v1033, %v4604
      %v4642 = vadd.f32 %v1034, %v4609
      %v4643 = vadd.f32 %v1035, %v4614
      %v4644 = vadd.f32 %v1036, %v4619
      %v4645 = vadd.f32 %v1037, %v4624
      %v4646 = vadd.f32 %v1038, %v4629
      %v4647 = vld [vmem:[%s11] sm:$0x1]
      %v4649 = vlaneseq
      %v4650 = vshrl.u32 %v4649, 7
      %v4651 = vsub.s32 0, %v4650
      %v4652 = vrot.slane %v4647, %v4651
      %v4654 = vadd.f32 %v4632, %v4652
      %v4655 = vadd.f32 %v4633, %v4652
      %v4656 = vadd.f32 %v4634, %v4652
      %v4657 = vadd.f32 %v4635, %v4652
      %v4658 = vadd.f32 %v4636, %v4652
      %v4659 = vadd.f32 %v4637, %v4652
      %v4660 = vadd.f32 %v4638, %v4652
      %v4661 = vadd.f32 %v4639, %v4652
      %v4662 = vadd.f32 %v4640, %v4652
      %v4663 = vadd.f32 %v4641, %v4652
      %v4664 = vadd.f32 %v4642, %v4652
      %v4665 = vadd.f32 %v4643, %v4652
      %v4666 = vadd.f32 %v4644, %v4652
      %v4667 = vadd.f32 %v4645, %v4652
      %v4668 = vadd.f32 %v4646, %v4652
      %v4669 = vld [vmem:[%s12] sm:$0x1]
      %v4670 = vld [vmem:[%s13] sm:$0x1]
      %v4671 = vsel %vm800, %v4654, 0.0
      %4672 = vadd.xlane.f32.xlu0 %v4671
      %v4673 = vpop.xlane.xlu0 %4672
      %v4674 = vsel %vm800, %v4655, 0.0
      %4675 = vadd.xlane.f32.xlu0 %v4674
      %v4676 = vpop.xlane.xlu0 %4675
      %v4677 = vsel %vm800, %v4656, 0.0
      %4678 = vadd.xlane.f32.xlu0 %v4677
      %v4679 = vpop.xlane.xlu0 %4678
      %v4680 = vsel %vm800, %v4657, 0.0
      %4681 = vadd.xlane.f32.xlu0 %v4680
      %v4682 = vpop.xlane.xlu0 %4681
      %v4683 = vsel %vm800, %v4658, 0.0
      %4684 = vadd.xlane.f32.xlu0 %v4683
      %v4685 = vpop.xlane.xlu0 %4684
      %v4686 = vsel %vm800, %v4659, 0.0
      %4687 = vadd.xlane.f32.xlu0 %v4686
      %v4688 = vpop.xlane.xlu0 %4687
      %v4689 = vsel %vm800, %v4660, 0.0
      %4690 = vadd.xlane.f32.xlu0 %v4689
      %v4691 = vpop.xlane.xlu0 %4690
      %v4692 = vsel %vm800, %v4661, 0.0
      %4693 = vadd.xlane.f32.xlu0 %v4692
      %v4694 = vpop.xlane.xlu0 %4693
      %v4695 = vsel %vm800, %v4662, 0.0
      %4696 = vadd.xlane.f32.xlu0 %v4695
      %v4697 = vpop.xlane.xlu0 %4696
      %v4698 = vsel %vm800, %v4663, 0.0
      %4699 = vadd.xlane.f32.xlu0 %v4698
      %v4700 = vpop.xlane.xlu0 %4699
      %v4701 = vsel %vm800, %v4664, 0.0
      %4702 = vadd.xlane.f32.xlu0 %v4701
      %v4703 = vpop.xlane.xlu0 %4702
      %v4704 = vsel %vm800, %v4665, 0.0
      %4705 = vadd.xlane.f32.xlu0 %v4704
      %v4706 = vpop.xlane.xlu0 %4705
      %v4707 = vsel %vm800, %v4666, 0.0
      %4708 = vadd.xlane.f32.xlu0 %v4707
      %v4709 = vpop.xlane.xlu0 %4708
      %v4710 = vsel %vm800, %v4667, 0.0
      %4711 = vadd.xlane.f32.xlu0 %v4710
      %v4712 = vpop.xlane.xlu0 %4711
      %v4713 = vsel %vm800, %v4668, 0.0
      %4714 = vadd.xlane.f32.xlu0 %v4713
      %v4715 = vpop.xlane.xlu0 %4714
      %v4716 = vmul.f32 %v4673, %v846
      %v4717 = vmul.f32 %v4676, %v846
      %v4718 = vmul.f32 %v4679, %v846
      %v4719 = vmul.f32 %v4682, %v846
      %v4720 = vmul.f32 %v4685, %v846
      %v4721 = vmul.f32 %v4688, %v846
      %v4722 = vmul.f32 %v4691, %v846
      %v4723 = vmul.f32 %v4694, %v846
      %v4724 = vmul.f32 %v4697, %v846
      %v4725 = vmul.f32 %v4700, %v846
      %v4726 = vmul.f32 %v4703, %v846
      %v4727 = vmul.f32 %v4706, %v846
      %v4728 = vmul.f32 %v4709, %v846
      %v4729 = vmul.f32 %v4712, %v846
      %v4730 = vmul.f32 %v4715, %v846
      %v4731 = vsub.f32 %v4654, %v4716
      %v4732 = vsub.f32 %v4655, %v4717
      %v4733 = vsub.f32 %v4656, %v4718
      %v4734 = vsub.f32 %v4657, %v4719
      %v4735 = vsub.f32 %v4658, %v4720
      %v4736 = vsub.f32 %v4659, %v4721
      %v4737 = vsub.f32 %v4660, %v4722
      %v4738 = vsub.f32 %v4661, %v4723
      %v4739 = vsub.f32 %v4662, %v4724
      %v4740 = vsub.f32 %v4663, %v4725
      %v4741 = vsub.f32 %v4664, %v4726
      %v4742 = vsub.f32 %v4665, %v4727
      %v4743 = vsub.f32 %v4666, %v4728
      %v4744 = vsub.f32 %v4667, %v4729
      %v4745 = vsub.f32 %v4668, %v4730
      %v4746 = vmul.f32 %v4731, %v4731
      %v4747 = vmul.f32 %v4732, %v4732
      %v4748 = vmul.f32 %v4733, %v4733
      %v4749 = vmul.f32 %v4734, %v4734
      %v4750 = vmul.f32 %v4735, %v4735
      %v4751 = vmul.f32 %v4736, %v4736
      %v4752 = vmul.f32 %v4737, %v4737
      %v4753 = vmul.f32 %v4738, %v4738
      %v4754 = vmul.f32 %v4739, %v4739
      %v4755 = vmul.f32 %v4740, %v4740
      %v4756 = vmul.f32 %v4741, %v4741
      %v4757 = vmul.f32 %v4742, %v4742
      %v4758 = vmul.f32 %v4743, %v4743
      %v4759 = vmul.f32 %v4744, %v4744
      %v4760 = vmul.f32 %v4745, %v4745
      %v4761 = vsel %vm800, %v4746, 0.0
      %4762 = vadd.xlane.f32.xlu0 %v4761
      %v4763 = vpop.xlane.xlu0 %4762
      %v4764 = vsel %vm800, %v4747, 0.0
      %4765 = vadd.xlane.f32.xlu0 %v4764
      %v4766 = vpop.xlane.xlu0 %4765
      %v4767 = vsel %vm800, %v4748, 0.0
      %4768 = vadd.xlane.f32.xlu0 %v4767
      %v4769 = vpop.xlane.xlu0 %4768
      %v4770 = vsel %vm800, %v4749, 0.0
      %4771 = vadd.xlane.f32.xlu0 %v4770
      %v4772 = vpop.xlane.xlu0 %4771
      %v4773 = vsel %vm800, %v4750, 0.0
      %4774 = vadd.xlane.f32.xlu0 %v4773
      %v4775 = vpop.xlane.xlu0 %4774
      %v4776 = vsel %vm800, %v4751, 0.0
      %4777 = vadd.xlane.f32.xlu0 %v4776
      %v4778 = vpop.xlane.xlu0 %4777
      %v4779 = vsel %vm800, %v4752, 0.0
      %4780 = vadd.xlane.f32.xlu0 %v4779
      %v4781 = vpop.xlane.xlu0 %4780
      %v4782 = vsel %vm800, %v4753, 0.0
      %4783 = vadd.xlane.f32.xlu0 %v4782
      %v4784 = vpop.xlane.xlu0 %4783
      %v4785 = vsel %vm800, %v4754, 0.0
      %4786 = vadd.xlane.f32.xlu0 %v4785
      %v4787 = vpop.xlane.xlu0 %4786
      %v4788 = vsel %vm800, %v4755, 0.0
      %4789 = vadd.xlane.f32.xlu0 %v4788
      %v4790 = vpop.xlane.xlu0 %4789
      %v4791 = vsel %vm800, %v4756, 0.0
      %4792 = vadd.xlane.f32.xlu0 %v4791
      %v4793 = vpop.xlane.xlu0 %4792
      %v4794 = vsel %vm800, %v4757, 0.0
      %4795 = vadd.xlane.f32.xlu0 %v4794
      %v4796 = vpop.xlane.xlu0 %4795
      %v4797 = vsel %vm800, %v4758, 0.0
      %4798 = vadd.xlane.f32.xlu0 %v4797
      %v4799 = vpop.xlane.xlu0 %4798
      %v4800 = vsel %vm800, %v4759, 0.0
      %4801 = vadd.xlane.f32.xlu0 %v4800
      %v4802 = vpop.xlane.xlu0 %4801
      %v4803 = vsel %vm800, %v4760, 0.0
      %4804 = vadd.xlane.f32.xlu0 %v4803
      %v4805 = vpop.xlane.xlu0 %4804
      %v4806 = vmul.f32 %v4763, %v846
      %v4807 = vmul.f32 %v4766, %v846
      %v4808 = vmul.f32 %v4769, %v846
      %v4809 = vmul.f32 %v4772, %v846
      %v4810 = vmul.f32 %v4775, %v846
      %v4811 = vmul.f32 %v4778, %v846
      %v4812 = vmul.f32 %v4781, %v846
      %v4813 = vmul.f32 %v4784, %v846
      %v4814 = vmul.f32 %v4787, %v846
      %v4815 = vmul.f32 %v4790, %v846
      %v4816 = vmul.f32 %v4793, %v846
      %v4817 = vmul.f32 %v4796, %v846
      %v4818 = vmul.f32 %v4799, %v846
      %v4819 = vmul.f32 %v4802, %v846
      %v4820 = vmul.f32 %v4805, %v846
      %v4821 = vadd.f32 %v4806, 1e-05
      %v4822 = vadd.f32 %v4807, 1e-05
      %v4823 = vadd.f32 %v4808, 1e-05
      %v4824 = vadd.f32 %v4809, 1e-05
      %v4825 = vadd.f32 %v4810, 1e-05
      %v4826 = vadd.f32 %v4811, 1e-05
      %v4827 = vadd.f32 %v4812, 1e-05
      %v4828 = vadd.f32 %v4813, 1e-05
      %v4829 = vadd.f32 %v4814, 1e-05
      %v4830 = vadd.f32 %v4815, 1e-05
      %v4831 = vadd.f32 %v4816, 1e-05
      %v4832 = vadd.f32 %v4817, 1e-05
      %v4833 = vadd.f32 %v4818, 1e-05
      %v4834 = vadd.f32 %v4819, 1e-05
      %v4835 = vadd.f32 %v4820, 1e-05
      %v4836 = vrsqrt.pop %v4821
      %v4837 = vrsqrt.pop %v4822
      %v4838 = vrsqrt.pop %v4823
      %v4839 = vrsqrt.pop %v4824
      %v4840 = vrsqrt.pop %v4825
      %v4841 = vrsqrt.pop %v4826
      %v4842 = vrsqrt.pop %v4827
      %v4843 = vrsqrt.pop %v4828
      %v4844 = vrsqrt.pop %v4829
      %v4845 = vrsqrt.pop %v4830
      %v4846 = vrsqrt.pop %v4831
      %v4847 = vrsqrt.pop %v4832
      %v4848 = vrsqrt.pop %v4833
      %v4849 = vrsqrt.pop %v4834
      %v4850 = vrsqrt.pop %v4835
      %v4851 = vmul.f32 %v4731, %v4836
      %v4852 = vmul.f32 %v4732, %v4837
      %v4853 = vmul.f32 %v4733, %v4838
      %v4854 = vmul.f32 %v4734, %v4839
      %v4855 = vmul.f32 %v4735, %v4840
      %v4856 = vmul.f32 %v4736, %v4841
      %v4857 = vmul.f32 %v4737, %v4842
      %v4858 = vmul.f32 %v4738, %v4843
      %v4859 = vmul.f32 %v4739, %v4844
      %v4860 = vmul.f32 %v4740, %v4845
      %v4861 = vmul.f32 %v4741, %v4846
      %v4862 = vmul.f32 %v4742, %v4847
      %v4863 = vmul.f32 %v4743, %v4848
      %v4864 = vmul.f32 %v4744, %v4849
      %v4865 = vmul.f32 %v4745, %v4850
      %v4867 = vlaneseq
      %v4868 = vshrl.u32 %v4867, 7
      %v4869 = vsub.s32 0, %v4868
      %v4870 = vrot.slane %v4669, %v4869
      %v4872 = vmul.f32 %v4851, %v4870
      %v4873 = vmul.f32 %v4852, %v4870
      %v4874 = vmul.f32 %v4853, %v4870
      %v4875 = vmul.f32 %v4854, %v4870
      %v4876 = vmul.f32 %v4855, %v4870
      %v4877 = vmul.f32 %v4856, %v4870
      %v4878 = vmul.f32 %v4857, %v4870
      %v4879 = vmul.f32 %v4858, %v4870
      %v4880 = vmul.f32 %v4859, %v4870
      %v4881 = vmul.f32 %v4860, %v4870
      %v4882 = vmul.f32 %v4861, %v4870
      %v4883 = vmul.f32 %v4862, %v4870
      %v4884 = vmul.f32 %v4863, %v4870
      %v4885 = vmul.f32 %v4864, %v4870
      %v4886 = vmul.f32 %v4865, %v4870
      %v4888 = vlaneseq
      %v4889 = vshrl.u32 %v4888, 7
      %v4890 = vsub.s32 0, %v4889
      %v4891 = vrot.slane %v4670, %v4890
      %v4893 = vadd.f32 %v4872, %v4891
      %v4894 = vadd.f32 %v4873, %v4891
      %v4895 = vadd.f32 %v4874, %v4891
      %v4896 = vadd.f32 %v4875, %v4891
      %v4897 = vadd.f32 %v4876, %v4891
      %v4898 = vadd.f32 %v4877, %v4891
      %v4899 = vadd.f32 %v4878, %v4891
      %v4900 = vadd.f32 %v4879, %v4891
      %v4901 = vadd.f32 %v4880, %v4891
      %v4902 = vadd.f32 %v4881, %v4891
      %v4903 = vadd.f32 %v4882, %v4891
      %v4904 = vadd.f32 %v4883, %v4891
      %v4905 = vadd.f32 %v4884, %v4891
      %v4906 = vadd.f32 %v4885, %v4891
      %v4907 = vadd.f32 %v4886, %v4891
      %v4908 = vld [vmem:[%s14] sm:$0xff]
      %v4909 = vld [vmem:[%s14 + $0x8] sm:$0xff]
      %v4910 = vld [vmem:[%s14 + $0x10] sm:$0xff]
      %v4911 = vld [vmem:[%s14 + $0x18] sm:$0xff]
      %v4912 = vld [vmem:[%s15] sm:$0x1]
      %v4914 = vlaneseq
      %v4915 = vshrl.u32 %v4914, 7
      %v4916 = vsub.s32 0, %v4915
      %v4917 = vrot.slane %v4912, %v4916
      %v4920 = vsel %vm800, %v4893, 0
      %v4923 = vsel %vm800, %v4894, 0
      %v4926 = vsel %vm800, %v4895, 0
      %v4929 = vsel %vm800, %v4896, 0
      %v4932 = vsel %vm800, %v4897, 0
      %v4935 = vsel %vm800, %v4898, 0
      %v4938 = vsel %vm800, %v4899, 0
      %v4941 = vsel %vm800, %v4900, 0
      %v4944 = vsel %vm800, %v4901, 0
      %v4947 = vsel %vm800, %v4902, 0
      %v4950 = vsel %vm800, %v4903, 0
      %v4953 = vsel %vm800, %v4904, 0
      %v4956 = vsel %vm800, %v4905, 0
      %v4959 = vsel %vm800, %v4906, 0
      %v4962 = vsel %vm800, %v4907, 0
      %4964 = vmatprep.subr.mxu0 0.0
      %4965 = vmatpush1.msra.mxu0 %v4908
      %4966 = vmatprep.subr.mxu0 0.0
      %4967 = vmatpush1.msra.mxu0 %v4909
      %4968 = vmatprep.subr.mxu0 0.0
      %4969 = vmatpush1.msra.mxu0 %v4910
      %4970 = vmatprep.subr.mxu0 0.0
      %4971 = vmatpush1.msra.mxu0 %v4911
      %4972 = vmatprep.subr.mxu0 0.0
      %4973 = vmatpush1.msra.mxu0 0.0
      %4974 = vmatprep.subr.mxu0 0.0
      %4975 = vmatpush1.msra.mxu0 0.0
      %4976 = vmatprep.subr.mxu0 0.0
      %4977 = vmatpush1.msra.mxu0 0.0
      %4978 = vmatprep.subr.mxu0 0.0
      %4979 = vmatpush1.msra.mxu0 0.0
      %4980 = vmatprep.subr.mxu0 0.0
      %4981 = vmatpush1.msra.mxu0 0.0
      %4982 = vmatprep.subr.mxu0 0.0
      %4983 = vmatpush1.msra.mxu0 0.0
      %4984 = vmatprep.subr.mxu0 0.0
      %4985 = vmatpush1.msra.mxu0 0.0
      %4986 = vmatprep.subr.mxu0 0.0
      %4987 = vmatpush1.msra.mxu0 0.0
      %4988 = vmatprep.subr.mxu0 0.0
      %4989 = vmatpush1.msra.mxu0 0.0
      %4990 = vmatprep.subr.mxu0 0.0
      %4991 = vmatpush1.msra.mxu0 0.0
      %4992 = vmatprep.subr.mxu0 0.0
      %4993 = vmatpush1.msra.mxu0 0.0
      %4994 = vmatprep.subr.mxu0 0.0
      %4995 = vmatpush1.msra.mxu0 0.0
      %4996 = vmatprep.subr.mxu0 0.0
      %4997 = vmatpush1.msra.mxu0 0.0
      %4998 = vmatprep.subr.mxu0 0.0
      %4999 = vmatpush1.msra.mxu0 0.0
      %5000 = vmatprep.subr.mxu0 0.0
      %5001 = vmatpush1.msra.mxu0 0.0
      %5002 = vmatprep.subr.mxu0 0.0
      %5003 = vmatpush1.msra.mxu0 0.0
      %5004 = vmatprep.subr.mxu0 0.0
      %5005 = vmatpush1.msra.mxu0 0.0
      %5006 = vmatprep.subr.mxu0 0.0
      %5007 = vmatpush1.msra.mxu0 0.0
      %5008 = vmatprep.subr.mxu0 0.0
      %5009 = vmatpush1.msra.mxu0 0.0
      %5010 = vmatprep.subr.mxu0 0.0
      %5011 = vmatpush1.msra.mxu0 0.0
      %5012 = vmatprep.subr.mxu0 0.0
      %5013 = vmatpush1.msra.mxu0 0.0
      %5014 = vmatprep.subr.mxu0 0.0
      %5015 = vmatpush1.msra.mxu0 0.0
      %5016 = vmatprep.subr.mxu0 0.0
      %5017 = vmatpush1.msra.mxu0 0.0
      %5018 = vmatprep.subr.mxu0 0.0
      %5019 = vmatpush1.msra.mxu0 0.0
      %5020 = vmatprep.subr.mxu0 0.0
      %5021 = vmatpush1.msra.mxu0 0.0
      %5022 = vmatprep.subr.mxu0 0.0
      %5023 = vmatpush1.msra.mxu0 0.0
      %5024 = vmatprep.subr.mxu0 0.0
      %5025 = vmatpush1.msra.mxu0 0.0
      %5026 = vmatprep.subr.mxu0 0.0
      %5027 = vmatpush1.msra.mxu0 0.0
      %5028 = vmatprep.mubr.f32.mxu0 0.0
      %5029 = vmatmul.mubr.f32.gmra.mrb[0].mxu0 %v4920
      %v5030 = vpop.f32.mrb[0].mxu0
      %v5031 = vadd.f32 %v4917, %v5030
      %v5032 = vpop.f32.mrb[0].mxu0
      %5033 = vmatprep.mubr.f32.mxu0 0.0
      %5034 = vmatmul.mubr.f32.gmra.mrb[0].mxu0 %v4923
      %v5035 = vpop.f32.mrb[0].mxu0
      %v5036 = vadd.f32 %v4917, %v5035
      %v5037 = vpop.f32.mrb[0].mxu0
      %5038 = vmatprep.mubr.f32.mxu0 0.0
      %5039 = vmatmul.mubr.f32.gmra.mrb[0].mxu0 %v4926
      %v5040 = vpop.f32.mrb[0].mxu0
      %v5041 = vadd.f32 %v4917, %v5040
      %v5042 = vpop.f32.mrb[0].mxu0
      %5043 = vmatprep.mubr.f32.mxu0 0.0
      %5044 = vmatmul.mubr.f32.gmra.mrb[0].mxu0 %v4929
      %v5045 = vpop.f32.mrb[0].mxu0
      %v5046 = vadd.f32 %v4917, %v5045
      %v5047 = vpop.f32.mrb[0].mxu0
      %5048 = vmatprep.mubr.f32.mxu0 0.0
      %5049 = vmatmul.mubr.f32.gmra.mrb[0].mxu0 %v4932
      %v5050 = vpop.f32.mrb[0].mxu0
      %v5051 = vadd.f32 %v4917, %v5050
      %v5052 = vpop.f32.mrb[0].mxu0
      %5053 = vmatprep.mubr.f32.mxu0 0.0
      %5054 = vmatmul.mubr.f32.gmra.mrb[0].mxu0 %v4935
      %v5055 = vpop.f32.mrb[0].mxu0
      %v5056 = vadd.f32 %v4917, %v5055
      %v5057 = vpop.f32.mrb[0].mxu0
      %5058 = vmatprep.mubr.f32.mxu0 0.0
      %5059 = vmatmul.mubr.f32.gmra.mrb[0].mxu0 %v4938
      %v5060 = vpop.f32.mrb[0].mxu0
      %v5061 = vadd.f32 %v4917, %v5060
      %v5062 = vpop.f32.mrb[0].mxu0
      %5063 = vmatprep.mubr.f32.mxu0 0.0
      %5064 = vmatmul.mubr.f32.gmra.mrb[0].mxu0 %v4941
      %v5065 = vpop.f32.mrb[0].mxu0
      %v5066 = vadd.f32 %v4917, %v5065
      %v5067 = vpop.f32.mrb[0].mxu0
      %5068 = vmatprep.mubr.f32.mxu0 0.0
      %5069 = vmatmul.mubr.f32.gmra.mrb[0].mxu0 %v4944
      %v5070 = vpop.f32.mrb[0].mxu0
      %v5071 = vadd.f32 %v4917, %v5070
      %v5072 = vpop.f32.mrb[0].mxu0
      %5073 = vmatprep.mubr.f32.mxu0 0.0
      %5074 = vmatmul.mubr.f32.gmra.mrb[0].mxu0 %v4947
      %v5075 = vpop.f32.mrb[0].mxu0
      %v5076 = vadd.f32 %v4917, %v5075
      %v5077 = vpop.f32.mrb[0].mxu0
      %5078 = vmatprep.mubr.f32.mxu0 0.0
      %5079 = vmatmul.mubr.f32.gmra.mrb[0].mxu0 %v4950
      %v5080 = vpop.f32.mrb[0].mxu0
      %v5081 = vadd.f32 %v4917, %v5080
      %v5082 = vpop.f32.mrb[0].mxu0
      %5083 = vmatprep.mubr.f32.mxu0 0.0
      %5084 = vmatmul.mubr.f32.gmra.mrb[0].mxu0 %v4953
      %v5085 = vpop.f32.mrb[0].mxu0
      %v5086 = vadd.f32 %v4917, %v5085
      %v5087 = vpop.f32.mrb[0].mxu0
      %5088 = vmatprep.mubr.f32.mxu0 0.0
      %5089 = vmatmul.mubr.f32.gmra.mrb[0].mxu0 %v4956
      %v5090 = vpop.f32.mrb[0].mxu0
      %v5091 = vadd.f32 %v4917, %v5090
      %v5092 = vpop.f32.mrb[0].mxu0
      %5093 = vmatprep.mubr.f32.mxu0 0.0
      %5094 = vmatmul.mubr.f32.gmra.mrb[0].mxu0 %v4959
      %v5095 = vpop.f32.mrb[0].mxu0
      %v5096 = vadd.f32 %v4917, %v5095
      %v5097 = vpop.f32.mrb[0].mxu0
      %5098 = vmatprep.mubr.f32.mxu0 0.0
      %5099 = vmatmul.mubr.f32.gmra.mrb[0].mxu0 %v4962
      %v5100 = vpop.f32.mrb[0].mxu0
      %v5101 = vadd.f32 %v4917, %v5100
      %v5102 = vpop.f32.mrb[0].mxu0
      %5103 = vdwg.mxu0
      %v5104 = vmul.f32 %v5031, %v5031
      %v5105 = vmul.f32 %v5036, %v5036
      %v5106 = vmul.f32 %v5041, %v5041
      %v5107 = vmul.f32 %v5046, %v5046
      %v5108 = vmul.f32 %v5051, %v5051
      %v5109 = vmul.f32 %v5056, %v5056
      %v5110 = vmul.f32 %v5061, %v5061
      %v5111 = vmul.f32 %v5066, %v5066
      %v5112 = vmul.f32 %v5071, %v5071
      %v5113 = vmul.f32 %v5076, %v5076
      %v5114 = vmul.f32 %v5081, %v5081
      %v5115 = vmul.f32 %v5086, %v5086
      %v5116 = vmul.f32 %v5091, %v5091
      %v5117 = vmul.f32 %v5096, %v5096
      %v5118 = vmul.f32 %v5101, %v5101
      %v5119 = vmul.f32 %v5031, %v5104
      %v5120 = vmul.f32 %v5036, %v5105
      %v5121 = vmul.f32 %v5041, %v5106
      %v5122 = vmul.f32 %v5046, %v5107
      %v5123 = vmul.f32 %v5051, %v5108
      %v5124 = vmul.f32 %v5056, %v5109
      %v5125 = vmul.f32 %v5061, %v5110
      %v5126 = vmul.f32 %v5066, %v5111
      %v5127 = vmul.f32 %v5071, %v5112
      %v5128 = vmul.f32 %v5076, %v5113
      %v5129 = vmul.f32 %v5081, %v5114
      %v5130 = vmul.f32 %v5086, %v5115
      %v5131 = vmul.f32 %v5091, %v5116
      %v5132 = vmul.f32 %v5096, %v5117
      %v5133 = vmul.f32 %v5101, %v5118
      %v5134 = vmul.f32 %v5119, 0.044715
      %v5135 = vmul.f32 %v5120, 0.044715
      %v5136 = vmul.f32 %v5121, 0.044715
      %v5137 = vmul.f32 %v5122, 0.044715
      %v5138 = vmul.f32 %v5123, 0.044715
      %v5139 = vmul.f32 %v5124, 0.044715
      %v5140 = vmul.f32 %v5125, 0.044715
      %v5141 = vmul.f32 %v5126, 0.044715
      %v5142 = vmul.f32 %v5127, 0.044715
      %v5143 = vmul.f32 %v5128, 0.044715
      %v5144 = vmul.f32 %v5129, 0.044715
      %v5145 = vmul.f32 %v5130, 0.044715
      %v5146 = vmul.f32 %v5131, 0.044715
      %v5147 = vmul.f32 %v5132, 0.044715
      %v5148 = vmul.f32 %v5133, 0.044715
      %v5149 = vadd.f32 %v5031, %v5134
      %v5150 = vadd.f32 %v5036, %v5135
      %v5151 = vadd.f32 %v5041, %v5136
      %v5152 = vadd.f32 %v5046, %v5137
      %v5153 = vadd.f32 %v5051, %v5138
      %v5154 = vadd.f32 %v5056, %v5139
      %v5155 = vadd.f32 %v5061, %v5140
      %v5156 = vadd.f32 %v5066, %v5141
      %v5157 = vadd.f32 %v5071, %v5142
      %v5158 = vadd.f32 %v5076, %v5143
      %v5159 = vadd.f32 %v5081, %v5144
      %v5160 = vadd.f32 %v5086, %v5145
      %v5161 = vadd.f32 %v5091, %v5146
      %v5162 = vadd.f32 %v5096, %v5147
      %v5163 = vadd.f32 %v5101, %v5148
      %v5164 = vmul.f32 %v5149, 0.7978846
      %v5165 = vmul.f32 %v5150, 0.7978846
      %v5166 = vmul.f32 %v5151, 0.7978846
      %v5167 = vmul.f32 %v5152, 0.7978846
      %v5168 = vmul.f32 %v5153, 0.7978846
      %v5169 = vmul.f32 %v5154, 0.7978846
      %v5170 = vmul.f32 %v5155, 0.7978846
      %v5171 = vmul.f32 %v5156, 0.7978846
      %v5172 = vmul.f32 %v5157, 0.7978846
      %v5173 = vmul.f32 %v5158, 0.7978846
      %v5174 = vmul.f32 %v5159, 0.7978846
      %v5175 = vmul.f32 %v5160, 0.7978846
      %v5176 = vmul.f32 %v5161, 0.7978846
      %v5177 = vmul.f32 %v5162, 0.7978846
      %v5178 = vmul.f32 %v5163, 0.7978846
      %v5179 = vtanh.pop %v5164
      %v5180 = vtanh.pop %v5165
      %v5181 = vtanh.pop %v5166
      %v5182 = vtanh.pop %v5167
      %v5183 = vtanh.pop %v5168
      %v5184 = vtanh.pop %v5169
      %v5185 = vtanh.pop %v5170
      %v5186 = vtanh.pop %v5171
      %v5187 = vtanh.pop %v5172
      %v5188 = vtanh.pop %v5173
      %v5189 = vtanh.pop %v5174
      %v5190 = vtanh.pop %v5175
      %v5191 = vtanh.pop %v5176
      %v5192 = vtanh.pop %v5177
      %v5193 = vtanh.pop %v5178
      %v5194 = vadd.f32 %v5179, 1.0
      %v5195 = vadd.f32 %v5180, 1.0
      %v5196 = vadd.f32 %v5181, 1.0
      %v5197 = vadd.f32 %v5182, 1.0
      %v5198 = vadd.f32 %v5183, 1.0
      %v5199 = vadd.f32 %v5184, 1.0
      %v5200 = vadd.f32 %v5185, 1.0
      %v5201 = vadd.f32 %v5186, 1.0
      %v5202 = vadd.f32 %v5187, 1.0
      %v5203 = vadd.f32 %v5188, 1.0
      %v5204 = vadd.f32 %v5189, 1.0
      %v5205 = vadd.f32 %v5190, 1.0
      %v5206 = vadd.f32 %v5191, 1.0
      %v5207 = vadd.f32 %v5192, 1.0
      %v5208 = vadd.f32 %v5193, 1.0
      %v5209 = vmul.f32 %v5194, 0.5
      %v5210 = vmul.f32 %v5195, 0.5
      %v5211 = vmul.f32 %v5196, 0.5
      %v5212 = vmul.f32 %v5197, 0.5
      %v5213 = vmul.f32 %v5198, 0.5
      %v5214 = vmul.f32 %v5199, 0.5
      %v5215 = vmul.f32 %v5200, 0.5
      %v5216 = vmul.f32 %v5201, 0.5
      %v5217 = vmul.f32 %v5202, 0.5
      %v5218 = vmul.f32 %v5203, 0.5
      %v5219 = vmul.f32 %v5204, 0.5
      %v5220 = vmul.f32 %v5205, 0.5
      %v5221 = vmul.f32 %v5206, 0.5
      %v5222 = vmul.f32 %v5207, 0.5
      %v5223 = vmul.f32 %v5208, 0.5
      %v5224 = vmul.f32 %v5031, %v5209
      %v5225 = vmul.f32 %v5036, %v5210
      %v5226 = vmul.f32 %v5041, %v5211
      %v5227 = vmul.f32 %v5046, %v5212
      %v5228 = vmul.f32 %v5051, %v5213
      %v5229 = vmul.f32 %v5056, %v5214
      %v5230 = vmul.f32 %v5061, %v5215
      %v5231 = vmul.f32 %v5066, %v5216
      %v5232 = vmul.f32 %v5071, %v5217
      %v5233 = vmul.f32 %v5076, %v5218
      %v5234 = vmul.f32 %v5081, %v5219
      %v5235 = vmul.f32 %v5086, %v5220
      %v5236 = vmul.f32 %v5091, %v5221
      %v5237 = vmul.f32 %v5096, %v5222
      %v5238 = vmul.f32 %v5101, %v5223
      %v5239 = vld [vmem:[%s16] sm:$0xff]
      %v5240 = vld [vmem:[%s16 + $0x8] sm:$0xff]
      %v5241 = vld [vmem:[%s16 + $0x10] sm:$0xff]
      %v5242 = vld [vmem:[%s16 + $0x18] sm:$0xff]
      %v5243 = vld [vmem:[%s16 + $0x20] sm:$0xff]
      %v5244 = vld [vmem:[%s16 + $0x28] sm:$0xff]
      %v5245 = vld [vmem:[%s16 + $0x30] sm:$0xff]
      %v5246 = vld [vmem:[%s16 + $0x38] sm:$0xff]
      %vm5247 = vcmask 523264
      %v5249 = vsel %vm5247, %v5224, 0
      %v5252 = vsel %vm5247, %v5225, 0
      %v5255 = vsel %vm5247, %v5226, 0
      %v5258 = vsel %vm5247, %v5227, 0
      %v5261 = vsel %vm5247, %v5228, 0
      %v5264 = vsel %vm5247, %v5229, 0
      %v5267 = vsel %vm5247, %v5230, 0
      %v5270 = vsel %vm5247, %v5231, 0
      %v5273 = vsel %vm5247, %v5232, 0
      %v5276 = vsel %vm5247, %v5233, 0
      %v5279 = vsel %vm5247, %v5234, 0
      %v5282 = vsel %vm5247, %v5235, 0
      %v5285 = vsel %vm5247, %v5236, 0
      %v5288 = vsel %vm5247, %v5237, 0
      %v5291 = vsel %vm5247, %v5238, 0
      %5293 = vmatprep.subr.mxu0 0.0
      %5294 = vmatpush1.msra.mxu0 %v5239
      %5295 = vmatprep.subr.mxu0 0.0
      %5296 = vmatpush1.msra.mxu0 %v5240
      %5297 = vmatprep.subr.mxu0 0.0
      %5298 = vmatpush1.msra.mxu0 %v5241
      %5299 = vmatprep.subr.mxu0 0.0
      %5300 = vmatpush1.msra.mxu0 %v5242
      %5301 = vmatprep.subr.mxu0 0.0
      %5302 = vmatpush1.msra.mxu0 %v5243
      %5303 = vmatprep.subr.mxu0 0.0
      %5304 = vmatpush1.msra.mxu0 %v5244
      %5305 = vmatprep.subr.mxu0 0.0
      %5306 = vmatpush1.msra.mxu0 %v5245
      %5307 = vmatprep.subr.mxu0 0.0
      %5308 = vmatpush1.msra.mxu0 %v5246
      %5309 = vmatprep.subr.mxu0 0.0
      %5310 = vmatpush1.msra.mxu0 0.0
      %5311 = vmatprep.subr.mxu0 0.0
      %5312 = vmatpush1.msra.mxu0 0.0
      %5313 = vmatprep.subr.mxu0 0.0
      %5314 = vmatpush1.msra.mxu0 0.0
      %5315 = vmatprep.subr.mxu0 0.0
      %5316 = vmatpush1.msra.mxu0 0.0
      %5317 = vmatprep.subr.mxu0 0.0
      %5318 = vmatpush1.msra.mxu0 0.0
      %5319 = vmatprep.subr.mxu0 0.0
      %5320 = vmatpush1.msra.mxu0 0.0
      %5321 = vmatprep.subr.mxu0 0.0
      %5322 = vmatpush1.msra.mxu0 0.0
      %5323 = vmatprep.subr.mxu0 0.0
      %5324 = vmatpush1.msra.mxu0 0.0
      %5325 = vmatprep.subr.mxu0 0.0
      %5326 = vmatpush1.msra.mxu0 0.0
      %5327 = vmatprep.subr.mxu0 0.0
      %5328 = vmatpush1.msra.mxu0 0.0
      %5329 = vmatprep.subr.mxu0 0.0
      %5330 = vmatpush1.msra.mxu0 0.0
      %5331 = vmatprep.subr.mxu0 0.0
      %5332 = vmatpush1.msra.mxu0 0.0
      %5333 = vmatprep.subr.mxu0 0.0
      %5334 = vmatpush1.msra.mxu0 0.0
      %5335 = vmatprep.subr.mxu0 0.0
      %5336 = vmatpush1.msra.mxu0 0.0
      %5337 = vmatprep.subr.mxu0 0.0
      %5338 = vmatpush1.msra.mxu0 0.0
      %5339 = vmatprep.subr.mxu0 0.0
      %5340 = vmatpush1.msra.mxu0 0.0
      %5341 = vmatprep.subr.mxu0 0.0
      %5342 = vmatpush1.msra.mxu0 0.0
      %5343 = vmatprep.subr.mxu0 0.0
      %5344 = vmatpush1.msra.mxu0 0.0
      %5345 = vmatprep.subr.mxu0 0.0
      %5346 = vmatpush1.msra.mxu0 0.0
      %5347 = vmatprep.subr.mxu0 0.0
      %5348 = vmatpush1.msra.mxu0 0.0
      %5349 = vmatprep.subr.mxu0 0.0
      %5350 = vmatpush1.msra.mxu0 0.0
      %5351 = vmatprep.subr.mxu0 0.0
      %5352 = vmatpush1.msra.mxu0 0.0
      %5353 = vmatprep.subr.mxu0 0.0
      %5354 = vmatpush1.msra.mxu0 0.0
      %5355 = vmatprep.subr.mxu0 0.0
      %5356 = vmatpush1.msra.mxu0 0.0
      %5357 = vmatprep.mubr.f32.mxu0 0.0
      %5358 = vmatmul.mubr.f32.gmra.mrb[0].mxu0 %v5249
      %v5359 = vpop.f32.mrb[0].mxu0
      %v5360 = vadd.f32 0.0, %v5359
      %v5361 = vpop.f32.mrb[0].mxu0
      %5362 = vmatprep.mubr.f32.mxu0 0.0
      %5363 = vmatmul.mubr.f32.gmra.mrb[0].mxu0 %v5252
      %v5364 = vpop.f32.mrb[0].mxu0
      %v5365 = vadd.f32 0.0, %v5364
      %v5366 = vpop.f32.mrb[0].mxu0
      %5367 = vmatprep.mubr.f32.mxu0 0.0
      %5368 = vmatmul.mubr.f32.gmra.mrb[0].mxu0 %v5255
      %v5369 = vpop.f32.mrb[0].mxu0
      %v5370 = vadd.f32 0.0, %v5369
      %v5371 = vpop.f32.mrb[0].mxu0
      %5372 = vmatprep.mubr.f32.mxu0 0.0
      %5373 = vmatmul.mubr.f32.gmra.mrb[0].mxu0 %v5258
      %v5374 = vpop.f32.mrb[0].mxu0
      %v5375 = vadd.f32 0.0, %v5374
      %v5376 = vpop.f32.mrb[0].mxu0
      %5377 = vmatprep.mubr.f32.mxu0 0.0
      %5378 = vmatmul.mubr.f32.gmra.mrb[0].mxu0 %v5261
      %v5379 = vpop.f32.mrb[0].mxu0
      %v5380 = vadd.f32 0.0, %v5379
      %v5381 = vpop.f32.mrb[0].mxu0
      %5382 = vmatprep.mubr.f32.mxu0 0.0
      %5383 = vmatmul.mubr.f32.gmra.mrb[0].mxu0 %v5264
      %v5384 = vpop.f32.mrb[0].mxu0
      %v5385 = vadd.f32 0.0, %v5384
      %v5386 = vpop.f32.mrb[0].mxu0
      %5387 = vmatprep.mubr.f32.mxu0 0.0
      %5388 = vmatmul.mubr.f32.gmra.mrb[0].mxu0 %v5267
      %v5389 = vpop.f32.mrb[0].mxu0
      %v5390 = vadd.f32 0.0, %v5389
      %v5391 = vpop.f32.mrb[0].mxu0
      %5392 = vmatprep.mubr.f32.mxu0 0.0
      %5393 = vmatmul.mubr.f32.gmra.mrb[0].mxu0 %v5270
      %v5394 = vpop.f32.mrb[0].mxu0
      %v5395 = vadd.f32 0.0, %v5394
      %v5396 = vpop.f32.mrb[0].mxu0
      %5397 = vmatprep.mubr.f32.mxu0 0.0
      %5398 = vmatmul.mubr.f32.gmra.mrb[0].mxu0 %v5273
      %v5399 = vpop.f32.mrb[0].mxu0
      %v5400 = vadd.f32 0.0, %v5399
      %v5401 = vpop.f32.mrb[0].mxu0
      %5402 = vmatprep.mubr.f32.mxu0 0.0
      %5403 = vmatmul.mubr.f32.gmra.mrb[0].mxu0 %v5276
      %v5404 = vpop.f32.mrb[0].mxu0
      %v5405 = vadd.f32 0.0, %v5404
      %v5406 = vpop.f32.mrb[0].mxu0
      %5407 = vmatprep.mubr.f32.mxu0 0.0
      %5408 = vmatmul.mubr.f32.gmra.mrb[0].mxu0 %v5279
      %v5409 = vpop.f32.mrb[0].mxu0
      %v5410 = vadd.f32 0.0, %v5409
      %v5411 = vpop.f32.mrb[0].mxu0
      %5412 = vmatprep.mubr.f32.mxu0 0.0
      %5413 = vmatmul.mubr.f32.gmra.mrb[0].mxu0 %v5282
      %v5414 = vpop.f32.mrb[0].mxu0
      %v5415 = vadd.f32 0.0, %v5414
      %v5416 = vpop.f32.mrb[0].mxu0
      %5417 = vmatprep.mubr.f32.mxu0 0.0
      %5418 = vmatmul.mubr.f32.gmra.mrb[0].mxu0 %v5285
      %v5419 = vpop.f32.mrb[0].mxu0
      %v5420 = vadd.f32 0.0, %v5419
      %v5421 = vpop.f32.mrb[0].mxu0
      %5422 = vmatprep.mubr.f32.mxu0 0.0
      %5423 = vmatmul.mubr.f32.gmra.mrb[0].mxu0 %v5288
      %v5424 = vpop.f32.mrb[0].mxu0
      %v5425 = vadd.f32 0.0, %v5424
      %v5426 = vpop.f32.mrb[0].mxu0
      %5427 = vmatprep.mubr.f32.mxu0 0.0
      %5428 = vmatmul.mubr.f32.gmra.mrb[0].mxu0 %v5291
      %v5429 = vpop.f32.mrb[0].mxu0
      %v5430 = vadd.f32 0.0, %v5429
      %v5431 = vpop.f32.mrb[0].mxu0
      %5432 = vdwg.mxu0
      %v5433 = vadd.f32 %v4654, %v5360
      %v5434 = vadd.f32 %v4655, %v5365
      %v5435 = vadd.f32 %v4656, %v5370
      %v5436 = vadd.f32 %v4657, %v5375
      %v5437 = vadd.f32 %v4658, %v5380
      %v5438 = vadd.f32 %v4659, %v5385
      %v5439 = vadd.f32 %v4660, %v5390
      %v5440 = vadd.f32 %v4661, %v5395
      %v5441 = vadd.f32 %v4662, %v5400
      %v5442 = vadd.f32 %v4663, %v5405
      %v5443 = vadd.f32 %v4664, %v5410
      %v5444 = vadd.f32 %v4665, %v5415
      %v5445 = vadd.f32 %v4666, %v5420
      %v5446 = vadd.f32 %v4667, %v5425
      %v5447 = vadd.f32 %v4668, %v5430
      %v5448 = vld [vmem:[%s17] sm:$0x1]
      %v5450 = vlaneseq
      %v5451 = vshrl.u32 %v5450, 7
      %v5452 = vsub.s32 0, %v5451
      %v5453 = vrot.slane %v5448, %v5452
      %v5455 = vadd.f32 %v5433, %v5453
      %v5456 = vadd.f32 %v5434, %v5453
      %v5457 = vadd.f32 %v5435, %v5453
      %v5458 = vadd.f32 %v5436, %v5453
      %v5459 = vadd.f32 %v5437, %v5453
      %v5460 = vadd.f32 %v5438, %v5453
      %v5461 = vadd.f32 %v5439, %v5453
      %v5462 = vadd.f32 %v5440, %v5453
      %v5463 = vadd.f32 %v5441, %v5453
      %v5464 = vadd.f32 %v5442, %v5453
      %v5465 = vadd.f32 %v5443, %v5453
      %v5466 = vadd.f32 %v5444, %v5453
      %v5467 = vadd.f32 %v5445, %v5453
      %v5468 = vadd.f32 %v5446, %v5453
      %v5469 = vadd.f32 %v5447, %v5453
      %s5470 = scalar_lea.vmem %s6, 1
      %v5471 = vld [vmem:[%s5470] sm:$0x1]
      %s5472 = scalar_lea.vmem %s7, 1
      %v5473 = vld [vmem:[%s5472] sm:$0x1]
      %v5474 = vsel %vm800, %v5455, 0.0
      %5475 = vadd.xlane.f32.xlu0 %v5474
      %v5476 = vpop.xlane.xlu0 %5475
      %v5477 = vsel %vm800, %v5456, 0.0
      %5478 = vadd.xlane.f32.xlu0 %v5477
      %v5479 = vpop.xlane.xlu0 %5478
      %v5480 = vsel %vm800, %v5457, 0.0
      %5481 = vadd.xlane.f32.xlu0 %v5480
      %v5482 = vpop.xlane.xlu0 %5481
      %v5483 = vsel %vm800, %v5458, 0.0
      %5484 = vadd.xlane.f32.xlu0 %v5483
      %v5485 = vpop.xlane.xlu0 %5484
      %v5486 = vsel %vm800, %v5459, 0.0
      %5487 = vadd.xlane.f32.xlu0 %v5486
      %v5488 = vpop.xlane.xlu0 %5487
      %v5489 = vsel %vm800, %v5460, 0.0
      %5490 = vadd.xlane.f32.xlu0 %v5489
      %v5491 = vpop.xlane.xlu0 %5490
      %v5492 = vsel %vm800, %v5461, 0.0
      %5493 = vadd.xlane.f32.xlu0 %v5492
      %v5494 = vpop.xlane.xlu0 %5493
      %v5495 = vsel %vm800, %v5462, 0.0
      %5496 = vadd.xlane.f32.xlu0 %v5495
      %v5497 = vpop.xlane.xlu0 %5496
      %v5498 = vsel %vm800, %v5463, 0.0
      %5499 = vadd.xlane.f32.xlu0 %v5498
      %v5500 = vpop.xlane.xlu0 %5499
      %v5501 = vsel %vm800, %v5464, 0.0
      %5502 = vadd.xlane.f32.xlu0 %v5501
      %v5503 = vpop.xlane.xlu0 %5502
      %v5504 = vsel %vm800, %v5465, 0.0
      %5505 = vadd.xlane.f32.xlu0 %v5504
      %v5506 = vpop.xlane.xlu0 %5505
      %v5507 = vsel %vm800, %v5466, 0.0
      %5508 = vadd.xlane.f32.xlu0 %v5507
      %v5509 = vpop.xlane.xlu0 %5508
      %v5510 = vsel %vm800, %v5467, 0.0
      %5511 = vadd.xlane.f32.xlu0 %v5510
      %v5512 = vpop.xlane.xlu0 %5511
      %v5513 = vsel %vm800, %v5468, 0.0
      %5514 = vadd.xlane.f32.xlu0 %v5513
      %v5515 = vpop.xlane.xlu0 %5514
      %v5516 = vsel %vm800, %v5469, 0.0
      %5517 = vadd.xlane.f32.xlu0 %v5516
      %v5518 = vpop.xlane.xlu0 %5517
      %v5519 = vmul.f32 %v5476, %v846
      %v5520 = vmul.f32 %v5479, %v846
      %v5521 = vmul.f32 %v5482, %v846
      %v5522 = vmul.f32 %v5485, %v846
      %v5523 = vmul.f32 %v5488, %v846
      %v5524 = vmul.f32 %v5491, %v846
      %v5525 = vmul.f32 %v5494, %v846
      %v5526 = vmul.f32 %v5497, %v846
      %v5527 = vmul.f32 %v5500, %v846
      %v5528 = vmul.f32 %v5503, %v846
      %v5529 = vmul.f32 %v5506, %v846
      %v5530 = vmul.f32 %v5509, %v846
      %v5531 = vmul.f32 %v5512, %v846
      %v5532 = vmul.f32 %v5515, %v846
      %v5533 = vmul.f32 %v5518, %v846
      %v5534 = vsub.f32 %v5455, %v5519
      %v5535 = vsub.f32 %v5456, %v5520
      %v5536 = vsub.f32 %v5457, %v5521
      %v5537 = vsub.f32 %v5458, %v5522
      %v5538 = vsub.f32 %v5459, %v5523
      %v5539 = vsub.f32 %v5460, %v5524
      %v5540 = vsub.f32 %v5461, %v5525
      %v5541 = vsub.f32 %v5462, %v5526
      %v5542 = vsub.f32 %v5463, %v5527
      %v5543 = vsub.f32 %v5464, %v5528
      %v5544 = vsub.f32 %v5465, %v5529
      %v5545 = vsub.f32 %v5466, %v5530
      %v5546 = vsub.f32 %v5467, %v5531
      %v5547 = vsub.f32 %v5468, %v5532
      %v5548 = vsub.f32 %v5469, %v5533
      %v5549 = vmul.f32 %v5534, %v5534
      %v5550 = vmul.f32 %v5535, %v5535
      %v5551 = vmul.f32 %v5536, %v5536
      %v5552 = vmul.f32 %v5537, %v5537
      %v5553 = vmul.f32 %v5538, %v5538
      %v5554 = vmul.f32 %v5539, %v5539
      %v5555 = vmul.f32 %v5540, %v5540
      %v5556 = vmul.f32 %v5541, %v5541
      %v5557 = vmul.f32 %v5542, %v5542
      %v5558 = vmul.f32 %v5543, %v5543
      %v5559 = vmul.f32 %v5544, %v5544
      %v5560 = vmul.f32 %v5545, %v5545
      %v5561 = vmul.f32 %v5546, %v5546
      %v5562 = vmul.f32 %v5547, %v5547
      %v5563 = vmul.f32 %v5548, %v5548
      %v5564 = vsel %vm800, %v5549, 0.0
      %5565 = vadd.xlane.f32.xlu0 %v5564
      %v5566 = vpop.xlane.xlu0 %5565
      %v5567 = vsel %vm800, %v5550, 0.0
      %5568 = vadd.xlane.f32.xlu0 %v5567
      %v5569 = vpop.xlane.xlu0 %5568
      %v5570 = vsel %vm800, %v5551, 0.0
      %5571 = vadd.xlane.f32.xlu0 %v5570
      %v5572 = vpop.xlane.xlu0 %5571
      %v5573 = vsel %vm800, %v5552, 0.0
      %5574 = vadd.xlane.f32.xlu0 %v5573
      %v5575 = vpop.xlane.xlu0 %5574
      %v5576 = vsel %vm800, %v5553, 0.0
      %5577 = vadd.xlane.f32.xlu0 %v5576
      %v5578 = vpop.xlane.xlu0 %5577
      %v5579 = vsel %vm800, %v5554, 0.0
      %5580 = vadd.xlane.f32.xlu0 %v5579
      %v5581 = vpop.xlane.xlu0 %5580
      %v5582 = vsel %vm800, %v5555, 0.0
      %5583 = vadd.xlane.f32.xlu0 %v5582
      %v5584 = vpop.xlane.xlu0 %5583
      %v5585 = vsel %vm800, %v5556, 0.0
      %5586 = vadd.xlane.f32.xlu0 %v5585
      %v5587 = vpop.xlane.xlu0 %5586
      %v5588 = vsel %vm800, %v5557, 0.0
      %5589 = vadd.xlane.f32.xlu0 %v5588
      %v5590 = vpop.xlane.xlu0 %5589
      %v5591 = vsel %vm800, %v5558, 0.0
      %5592 = vadd.xlane.f32.xlu0 %v5591
      %v5593 = vpop.xlane.xlu0 %5592
      %v5594 = vsel %vm800, %v5559, 0.0
      %5595 = vadd.xlane.f32.xlu0 %v5594
      %v5596 = vpop.xlane.xlu0 %5595
      %v5597 = vsel %vm800, %v5560, 0.0
      %5598 = vadd.xlane.f32.xlu0 %v5597
      %v5599 = vpop.xlane.xlu0 %5598
      %v5600 = vsel %vm800, %v5561, 0.0
      %5601 = vadd.xlane.f32.xlu0 %v5600
      %v5602 = vpop.xlane.xlu0 %5601
      %v5603 = vsel %vm800, %v5562, 0.0
      %5604 = vadd.xlane.f32.xlu0 %v5603
      %v5605 = vpop.xlane.xlu0 %5604
      %v5606 = vsel %vm800, %v5563, 0.0
      %5607 = vadd.xlane.f32.xlu0 %v5606
      %v5608 = vpop.xlane.xlu0 %5607
      %v5609 = vmul.f32 %v5566, %v846
      %v5610 = vmul.f32 %v5569, %v846
      %v5611 = vmul.f32 %v5572, %v846
      %v5612 = vmul.f32 %v5575, %v846
      %v5613 = vmul.f32 %v5578, %v846
      %v5614 = vmul.f32 %v5581, %v846
      %v5615 = vmul.f32 %v5584, %v846
      %v5616 = vmul.f32 %v5587, %v846
      %v5617 = vmul.f32 %v5590, %v846
      %v5618 = vmul.f32 %v5593, %v846
      %v5619 = vmul.f32 %v5596, %v846
      %v5620 = vmul.f32 %v5599, %v846
      %v5621 = vmul.f32 %v5602, %v846
      %v5622 = vmul.f32 %v5605, %v846
      %v5623 = vmul.f32 %v5608, %v846
      %v5624 = vadd.f32 %v5609, 1e-05
      %v5625 = vadd.f32 %v5610, 1e-05
      %v5626 = vadd.f32 %v5611, 1e-05
      %v5627 = vadd.f32 %v5612, 1e-05
      %v5628 = vadd.f32 %v5613, 1e-05
      %v5629 = vadd.f32 %v5614, 1e-05
      %v5630 = vadd.f32 %v5615, 1e-05
      %v5631 = vadd.f32 %v5616, 1e-05
      %v5632 = vadd.f32 %v5617, 1e-05
      %v5633 = vadd.f32 %v5618, 1e-05
      %v5634 = vadd.f32 %v5619, 1e-05
      %v5635 = vadd.f32 %v5620, 1e-05
      %v5636 = vadd.f32 %v5621, 1e-05
      %v5637 = vadd.f32 %v5622, 1e-05
      %v5638 = vadd.f32 %v5623, 1e-05
      %v5639 = vrsqrt.pop %v5624
      %v5640 = vrsqrt.pop %v5625
      %v5641 = vrsqrt.pop %v5626
      %v5642 = vrsqrt.pop %v5627
      %v5643 = vrsqrt.pop %v5628
      %v5644 = vrsqrt.pop %v5629
      %v5645 = vrsqrt.pop %v5630
      %v5646 = vrsqrt.pop %v5631
      %v5647 = vrsqrt.pop %v5632
      %v5648 = vrsqrt.pop %v5633
      %v5649 = vrsqrt.pop %v5634
      %v5650 = vrsqrt.pop %v5635
      %v5651 = vrsqrt.pop %v5636
      %v5652 = vrsqrt.pop %v5637
      %v5653 = vrsqrt.pop %v5638
      %v5654 = vmul.f32 %v5534, %v5639
      %v5655 = vmul.f32 %v5535, %v5640
      %v5656 = vmul.f32 %v5536, %v5641
      %v5657 = vmul.f32 %v5537, %v5642
      %v5658 = vmul.f32 %v5538, %v5643
      %v5659 = vmul.f32 %v5539, %v5644
      %v5660 = vmul.f32 %v5540, %v5645
      %v5661 = vmul.f32 %v5541, %v5646
      %v5662 = vmul.f32 %v5542, %v5647
      %v5663 = vmul.f32 %v5543, %v5648
      %v5664 = vmul.f32 %v5544, %v5649
      %v5665 = vmul.f32 %v5545, %v5650
      %v5666 = vmul.f32 %v5546, %v5651
      %v5667 = vmul.f32 %v5547, %v5652
      %v5668 = vmul.f32 %v5548, %v5653
      %v5670 = vlaneseq
      %v5671 = vshrl.u32 %v5670, 7
      %v5672 = vsub.s32 0, %v5671
      %v5673 = vrot.slane %v5471, %v5672
      %v5675 = vmul.f32 %v5654, %v5673
      %v5676 = vmul.f32 %v5655, %v5673
      %v5677 = vmul.f32 %v5656, %v5673
      %v5678 = vmul.f32 %v5657, %v5673
      %v5679 = vmul.f32 %v5658, %v5673
      %v5680 = vmul.f32 %v5659, %v5673
      %v5681 = vmul.f32 %v5660, %v5673
      %v5682 = vmul.f32 %v5661, %v5673
      %v5683 = vmul.f32 %v5662, %v5673
      %v5684 = vmul.f32 %v5663, %v5673
      %v5685 = vmul.f32 %v5664, %v5673
      %v5686 = vmul.f32 %v5665, %v5673
      %v5687 = vmul.f32 %v5666, %v5673
      %v5688 = vmul.f32 %v5667, %v5673
      %v5689 = vmul.f32 %v5668, %v5673
      %v5691 = vlaneseq
      %v5692 = vshrl.u32 %v5691, 7
      %v5693 = vsub.s32 0, %v5692
      %v5694 = vrot.slane %v5473, %v5693
      %v5696 = vadd.f32 %v5675, %v5694
      %v5697 = vadd.f32 %v5676, %v5694
      %v5698 = vadd.f32 %v5677, %v5694
      %v5699 = vadd.f32 %v5678, %v5694
      %v5700 = vadd.f32 %v5679, %v5694
      %v5701 = vadd.f32 %v5680, %v5694
      %v5702 = vadd.f32 %v5681, %v5694
      %v5703 = vadd.f32 %v5682, %v5694
      %v5704 = vadd.f32 %v5683, %v5694
      %v5705 = vadd.f32 %v5684, %v5694
      %v5706 = vadd.f32 %v5685, %v5694
      %v5707 = vadd.f32 %v5686, %v5694
      %v5708 = vadd.f32 %v5687, %v5694
      %v5709 = vadd.f32 %v5688, %v5694
      %v5710 = vadd.f32 %v5689, %v5694
      %s5711 = scalar_lea.vmem %s8, 32
      %v5712 = vld [vmem:[%s5711] sm:$0xff]
      %v5713 = vld [vmem:[%s5711 + $0x8] sm:$0xff]
      %v5714 = vld [vmem:[%s5711 + $0x10] sm:$0xff]
      %v5715 = vld [vmem:[%s5711 + $0x18] sm:$0xff]
      %s5716 = scalar_lea.vmem %s9, 1
      %v5717 = vld [vmem:[%s5716] sm:$0x1]
      %v5719 = vlaneseq
      %v5720 = vshrl.u32 %v5719, 7
      %v5721 = vsub.s32 0, %v5720
      %v5722 = vrot.slane %v5717, %v5721
      %v5725 = vsel %vm800, %v5696, 0
      %v5728 = vsel %vm800, %v5697, 0
      %v5731 = vsel %vm800, %v5698, 0
      %v5734 = vsel %vm800, %v5699, 0
      %v5737 = vsel %vm800, %v5700, 0
      %v5740 = vsel %vm800, %v5701, 0
      %v5743 = vsel %vm800, %v5702, 0
      %v5746 = vsel %vm800, %v5703, 0
      %v5749 = vsel %vm800, %v5704, 0
      %v5752 = vsel %vm800, %v5705, 0
      %v5755 = vsel %vm800, %v5706, 0
      %v5758 = vsel %vm800, %v5707, 0
      %v5761 = vsel %vm800, %v5708, 0
      %v5764 = vsel %vm800, %v5709, 0
      %v5767 = vsel %vm800, %v5710, 0
      %5769 = vmatprep.subr.mxu0 0.0
      %5770 = vmatpush1.msra.mxu0 %v5712
      %5771 = vmatprep.subr.mxu0 0.0
      %5772 = vmatpush1.msra.mxu0 %v5713
      %5773 = vmatprep.subr.mxu0 0.0
      %5774 = vmatpush1.msra.mxu0 %v5714
      %5775 = vmatprep.subr.mxu0 0.0
      %5776 = vmatpush1.msra.mxu0 %v5715
      %5777 = vmatprep.subr.mxu0 0.0
      %5778 = vmatpush1.msra.mxu0 0.0
      %5779 = vmatprep.subr.mxu0 0.0
      %5780 = vmatpush1.msra.mxu0 0.0
      %5781 = vmatprep.subr.mxu0 0.0
      %5782 = vmatpush1.msra.mxu0 0.0
      %5783 = vmatprep.subr.mxu0 0.0
      %5784 = vmatpush1.msra.mxu0 0.0
      %5785 = vmatprep.subr.mxu0 0.0
      %5786 = vmatpush1.msra.mxu0 0.0
      %5787 = vmatprep.subr.mxu0 0.0
      %5788 = vmatpush1.msra.mxu0 0.0
      %5789 = vmatprep.subr.mxu0 0.0
      %5790 = vmatpush1.msra.mxu0 0.0
      %5791 = vmatprep.subr.mxu0 0.0
      %5792 = vmatpush1.msra.mxu0 0.0
      %5793 = vmatprep.subr.mxu0 0.0
      %5794 = vmatpush1.msra.mxu0 0.0
      %5795 = vmatprep.subr.mxu0 0.0
      %5796 = vmatpush1.msra.mxu0 0.0
      %5797 = vmatprep.subr.mxu0 0.0
      %5798 = vmatpush1.msra.mxu0 0.0
      %5799 = vmatprep.subr.mxu0 0.0
      %5800 = vmatpush1.msra.mxu0 0.0
      %5801 = vmatprep.subr.mxu0 0.0
      %5802 = vmatpush1.msra.mxu0 0.0
      %5803 = vmatprep.subr.mxu0 0.0
      %5804 = vmatpush1.msra.mxu0 0.0
      %5805 = vmatprep.subr.mxu0 0.0
      %5806 = vmatpush1.msra.mxu0 0.0
      %5807 = vmatprep.subr.mxu0 0.0
      %5808 = vmatpush1.msra.mxu0 0.0
      %5809 = vmatprep.subr.mxu0 0.0
      %5810 = vmatpush1.msra.mxu0 0.0
      %5811 = vmatprep.subr.mxu0 0.0
      %5812 = vmatpush1.msra.mxu0 0.0
      %5813 = vmatprep.subr.mxu0 0.0
      %5814 = vmatpush1.msra.mxu0 0.0
      %5815 = vmatprep.subr.mxu0 0.0
      %5816 = vmatpush1.msra.mxu0 0.0
      %5817 = vmatprep.subr.mxu0 0.0
      %5818 = vmatpush1.msra.mxu0 0.0
      %5819 = vmatprep.subr.mxu0 0.0
      %5820 = vmatpush1.msra.mxu0 0.0
      %5821 = vmatprep.subr.mxu0 0.0
      %5822 = vmatpush1.msra.mxu0 0.0
      %5823 = vmatprep.subr.mxu0 0.0
      %5824 = vmatpush1.msra.mxu0 0.0
      %5825 = vmatprep.subr.mxu0 0.0
      %5826 = vmatpush1.msra.mxu0 0.0
      %5827 = vmatprep.subr.mxu0 0.0
      %5828 = vmatpush1.msra.mxu0 0.0
      %5829 = vmatprep.subr.mxu0 0.0
      %5830 = vmatpush1.msra.mxu0 0.0
      %5831 = vmatprep.subr.mxu0 0.0
      %5832 = vmatpush1.msra.mxu0 0.0
      %5833 = vmatprep.mubr.f32.mxu0 0.0
      %5834 = vmatmul.mubr.f32.gmra.mrb[0].mxu0 %v5725
      %v5835 = vpop.f32.mrb[0].mxu0
      %v5836 = vadd.f32 %v5722, %v5835
      %v5837 = vpop.f32.mrb[0].mxu0
      %5838 = vmatprep.mubr.f32.mxu0 0.0
      %5839 = vmatmul.mubr.f32.gmra.mrb[0].mxu0 %v5728
      %v5840 = vpop.f32.mrb[0].mxu0
      %v5841 = vadd.f32 %v5722, %v5840
      %v5842 = vpop.f32.mrb[0].mxu0
      %5843 = vmatprep.mubr.f32.mxu0 0.0
      %5844 = vmatmul.mubr.f32.gmra.mrb[0].mxu0 %v5731
      %v5845 = vpop.f32.mrb[0].mxu0
      %v5846 = vadd.f32 %v5722, %v5845
      %v5847 = vpop.f32.mrb[0].mxu0
      %5848 = vmatprep.mubr.f32.mxu0 0.0
      %5849 = vmatmul.mubr.f32.gmra.mrb[0].mxu0 %v5734
      %v5850 = vpop.f32.mrb[0].mxu0
      %v5851 = vadd.f32 %v5722, %v5850
      %v5852 = vpop.f32.mrb[0].mxu0
      %5853 = vmatprep.mubr.f32.mxu0 0.0
      %5854 = vmatmul.mubr.f32.gmra.mrb[0].mxu0 %v5737
      %v5855 = vpop.f32.mrb[0].mxu0
      %v5856 = vadd.f32 %v5722, %v5855
      %v5857 = vpop.f32.mrb[0].mxu0
      %5858 = vmatprep.mubr.f32.mxu0 0.0
      %5859 = vmatmul.mubr.f32.gmra.mrb[0].mxu0 %v5740
      %v5860 = vpop.f32.mrb[0].mxu0
      %v5861 = vadd.f32 %v5722, %v5860
      %v5862 = vpop.f32.mrb[0].mxu0
      %5863 = vmatprep.mubr.f32.mxu0 0.0
      %5864 = vmatmul.mubr.f32.gmra.mrb[0].mxu0 %v5743
      %v5865 = vpop.f32.mrb[0].mxu0
      %v5866 = vadd.f32 %v5722, %v5865
      %v5867 = vpop.f32.mrb[0].mxu0
      %5868 = vmatprep.mubr.f32.mxu0 0.0
      %5869 = vmatmul.mubr.f32.gmra.mrb[0].mxu0 %v5746
      %v5870 = vpop.f32.mrb[0].mxu0
      %v5871 = vadd.f32 %v5722, %v5870
      %v5872 = vpop.f32.mrb[0].mxu0
      %5873 = vmatprep.mubr.f32.mxu0 0.0
      %5874 = vmatmul.mubr.f32.gmra.mrb[0].mxu0 %v5749
      %v5875 = vpop.f32.mrb[0].mxu0
      %v5876 = vadd.f32 %v5722, %v5875
      %v5877 = vpop.f32.mrb[0].mxu0
      %5878 = vmatprep.mubr.f32.mxu0 0.0
      %5879 = vmatmul.mubr.f32.gmra.mrb[0].mxu0 %v5752
      %v5880 = vpop.f32.mrb[0].mxu0
      %v5881 = vadd.f32 %v5722, %v5880
      %v5882 = vpop.f32.mrb[0].mxu0
      %5883 = vmatprep.mubr.f32.mxu0 0.0
      %5884 = vmatmul.mubr.f32.gmra.mrb[0].mxu0 %v5755
      %v5885 = vpop.f32.mrb[0].mxu0
      %v5886 = vadd.f32 %v5722, %v5885
      %v5887 = vpop.f32.mrb[0].mxu0
      %5888 = vmatprep.mubr.f32.mxu0 0.0
      %5889 = vmatmul.mubr.f32.gmra.mrb[0].mxu0 %v5758
      %v5890 = vpop.f32.mrb[0].mxu0
      %v5891 = vadd.f32 %v5722, %v5890
      %v5892 = vpop.f32.mrb[0].mxu0
      %5893 = vmatprep.mubr.f32.mxu0 0.0
      %5894 = vmatmul.mubr.f32.gmra.mrb[0].mxu0 %v5761
      %v5895 = vpop.f32.mrb[0].mxu0
      %v5896 = vadd.f32 %v5722, %v5895
      %v5897 = vpop.f32.mrb[0].mxu0
      %5898 = vmatprep.mubr.f32.mxu0 0.0
      %5899 = vmatmul.mubr.f32.gmra.mrb[0].mxu0 %v5764
      %v5900 = vpop.f32.mrb[0].mxu0
      %v5901 = vadd.f32 %v5722, %v5900
      %v5902 = vpop.f32.mrb[0].mxu0
      %5903 = vmatprep.mubr.f32.mxu0 0.0
      %5904 = vmatmul.mubr.f32.gmra.mrb[0].mxu0 %v5767
      %v5905 = vpop.f32.mrb[0].mxu0
      %v5906 = vadd.f32 %v5722, %v5905
      %v5907 = vpop.f32.mrb[0].mxu0
      %5908 = vdwg.mxu0
      %5924 = vrot.lane.b32.xlu0 %v5836, 96
      %v5925 = vpop.permute.xlu0 %5924
      %5926 = vrot.lane.b32.xlu0 %v5841, 96
      %v5927 = vpop.permute.xlu0 %5926
      %5928 = vrot.lane.b32.xlu0 %v5846, 96
      %v5929 = vpop.permute.xlu0 %5928
      %5930 = vrot.lane.b32.xlu0 %v5851, 96
      %v5931 = vpop.permute.xlu0 %5930
      %5932 = vrot.lane.b32.xlu0 %v5856, 96
      %v5933 = vpop.permute.xlu0 %5932
      %5934 = vrot.lane.b32.xlu0 %v5861, 96
      %v5935 = vpop.permute.xlu0 %5934
      %5936 = vrot.lane.b32.xlu0 %v5866, 96
      %v5937 = vpop.permute.xlu0 %5936
      %5938 = vrot.lane.b32.xlu0 %v5871, 96
      %v5939 = vpop.permute.xlu0 %5938
      %5940 = vrot.lane.b32.xlu0 %v5876, 96
      %v5941 = vpop.permute.xlu0 %5940
      %5942 = vrot.lane.b32.xlu0 %v5881, 96
      %v5943 = vpop.permute.xlu0 %5942
      %5944 = vrot.lane.b32.xlu0 %v5886, 96
      %v5945 = vpop.permute.xlu0 %5944
      %5946 = vrot.lane.b32.xlu0 %v5891, 96
      %v5947 = vpop.permute.xlu0 %5946
      %5948 = vrot.lane.b32.xlu0 %v5896, 96
      %v5949 = vpop.permute.xlu0 %5948
      %5950 = vrot.lane.b32.xlu0 %v5901, 96
      %v5951 = vpop.permute.xlu0 %5950
      %5952 = vrot.lane.b32.xlu0 %v5906, 96
      %v5953 = vpop.permute.xlu0 %5952
      %v5954 = vsel %vm1534, %v5836, 0
      %v5956 = vsel %vm1534, %v5841, 0
      %v5958 = vsel %vm1534, %v5846, 0
      %v5960 = vsel %vm1534, %v5851, 0
      %v5962 = vsel %vm1534, %v5856, 0
      %v5964 = vsel %vm1534, %v5861, 0
      %v5966 = vsel %vm1534, %v5866, 0
      %v5968 = vsel %vm1534, %v5871, 0
      %v5970 = vsel %vm1534, %v5876, 0
      %v5972 = vsel %vm1534, %v5881, 0
      %v5974 = vsel %vm1534, %v5886, 0
      %v5976 = vsel %vm1534, %v5891, 0
      %v5978 = vsel %vm1534, %v5896, 0
      %v5980 = vsel %vm1534, %v5901, 0
      %v5982 = vsel %vm1534, %v5906, 0
      %v5984 = vsel %vm1534, %v5925, 0
      %v5986 = vsel %vm1534, %v5927, 0
      %v5988 = vsel %vm1534, %v5929, 0
      %v5990 = vsel %vm1534, %v5931, 0
      %v5992 = vsel %vm1534, %v5933, 0
      %v5994 = vsel %vm1534, %v5935, 0
      %v5996 = vsel %vm1534, %v5937, 0
      %v5998 = vsel %vm1534, %v5939, 0
      %v6000 = vsel %vm1534, %v5941, 0
      %v6002 = vsel %vm1534, %v5943, 0
      %v6004 = vsel %vm1534, %v5945, 0
      %v6006 = vsel %vm1534, %v5947, 0
      %v6008 = vsel %vm1534, %v5949, 0
      %v6010 = vsel %vm1534, %v5951, 0
      %v6012 = vsel %vm1534, %v5953, 0
      %6014 = vmatprep.subr.mxu0 0.0
      %6015 = vmatpush1.xpose.msra.mxu0 %v5984
      %6016 = vmatprep.subr.mxu0 0.0
      %6017 = vmatpush1.xpose.msra.mxu0 %v5986
      %6018 = vmatprep.subr.mxu0 0.0
      %6019 = vmatpush1.xpose.msra.mxu0 %v5988
      %6020 = vmatprep.subr.mxu0 0.0
      %6021 = vmatpush1.xpose.msra.mxu0 %v5990
      %6022 = vmatprep.subr.mxu0 0.0
      %6023 = vmatpush1.xpose.msra.mxu0 %v5992
      %6024 = vmatprep.subr.mxu0 0.0
      %6025 = vmatpush1.xpose.msra.mxu0 %v5994
      %6026 = vmatprep.subr.mxu0 0.0
      %6027 = vmatpush1.xpose.msra.mxu0 %v5996
      %6028 = vmatprep.subr.mxu0 0.0
      %6029 = vmatpush1.xpose.msra.mxu0 %v5998
      %6030 = vmatprep.subr.mxu0 0.0
      %6031 = vmatpush1.xpose.msra.mxu0 %v6000
      %6032 = vmatprep.subr.mxu0 0.0
      %6033 = vmatpush1.xpose.msra.mxu0 %v6002
      %6034 = vmatprep.subr.mxu0 0.0
      %6035 = vmatpush1.xpose.msra.mxu0 %v6004
      %6036 = vmatprep.subr.mxu0 0.0
      %6037 = vmatpush1.xpose.msra.mxu0 %v6006
      %6038 = vmatprep.subr.mxu0 0.0
      %6039 = vmatpush1.xpose.msra.mxu0 %v6008
      %6040 = vmatprep.subr.mxu0 0.0
      %6041 = vmatpush1.xpose.msra.mxu0 %v6010
      %6042 = vmatprep.subr.mxu0 0.0
      %6043 = vmatpush1.xpose.msra.mxu0 %v6012
      %6044 = vmatprep.subr.mxu0 0.0
      %6045 = vmatpush1.xpose.msra.mxu0 0.0
      %6046 = vmatprep.subr.mxu0 0.0
      %6047 = vmatpush1.xpose.msra.mxu0 0.0
      %6048 = vmatprep.subr.mxu0 0.0
      %6049 = vmatpush1.xpose.msra.mxu0 0.0
      %6050 = vmatprep.subr.mxu0 0.0
      %6051 = vmatpush1.xpose.msra.mxu0 0.0
      %6052 = vmatprep.subr.mxu0 0.0
      %6053 = vmatpush1.xpose.msra.mxu0 0.0
      %6054 = vmatprep.subr.mxu0 0.0
      %6055 = vmatpush1.xpose.msra.mxu0 0.0
      %6056 = vmatprep.subr.mxu0 0.0
      %6057 = vmatpush1.xpose.msra.mxu0 0.0
      %6058 = vmatprep.subr.mxu0 0.0
      %6059 = vmatpush1.xpose.msra.mxu0 0.0
      %6060 = vmatprep.subr.mxu0 0.0
      %6061 = vmatpush1.xpose.msra.mxu0 0.0
      %6062 = vmatprep.subr.mxu0 0.0
      %6063 = vmatpush1.xpose.msra.mxu0 0.0
      %6064 = vmatprep.subr.mxu0 0.0
      %6065 = vmatpush1.xpose.msra.mxu0 0.0
      %6066 = vmatprep.subr.mxu0 0.0
      %6067 = vmatpush1.xpose.msra.mxu0 0.0
      %6068 = vmatprep.subr.mxu0 0.0
      %6069 = vmatpush1.xpose.msra.mxu0 0.0
      %6070 = vmatprep.subr.mxu0 0.0
      %6071 = vmatpush1.xpose.msra.mxu0 0.0
      %6072 = vmatprep.subr.mxu0 0.0
      %6073 = vmatpush1.xpose.msra.mxu0 0.0
      %6074 = vmatprep.subr.mxu0 0.0
      %6075 = vmatpush1.xpose.msra.mxu0 0.0
      %6076 = vmatprep.subr.mxu0 0.0
      %6077 = vmatpush1.xpose.msra.mxu0 0.0
      %6078 = vmatprep.mubr.f32.mxu0 0.0
      %6079 = vmatmul.mubr.f32.gmra.mrb[0].mxu0 %v5954
      %v6080 = vpop.f32.mrb[0].mxu0
      %v6081 = vadd.f32 0.0, %v6080
      %v6082 = vpop.f32.mrb[0].mxu0
      %6083 = vmatprep.mubr.f32.mxu0 0.0
      %6084 = vmatmul.mubr.f32.gmra.mrb[0].mxu0 %v5956
      %v6085 = vpop.f32.mrb[0].mxu0
      %v6086 = vadd.f32 0.0, %v6085
      %v6087 = vpop.f32.mrb[0].mxu0
      %6088 = vmatprep.mubr.f32.mxu0 0.0
      %6089 = vmatmul.mubr.f32.gmra.mrb[0].mxu0 %v5958
      %v6090 = vpop.f32.mrb[0].mxu0
      %v6091 = vadd.f32 0.0, %v6090
      %v6092 = vpop.f32.mrb[0].mxu0
      %6093 = vmatprep.mubr.f32.mxu0 0.0
      %6094 = vmatmul.mubr.f32.gmra.mrb[0].mxu0 %v5960
      %v6095 = vpop.f32.mrb[0].mxu0
      %v6096 = vadd.f32 0.0, %v6095
      %v6097 = vpop.f32.mrb[0].mxu0
      %6098 = vmatprep.mubr.f32.mxu0 0.0
      %6099 = vmatmul.mubr.f32.gmra.mrb[0].mxu0 %v5962
      %v6100 = vpop.f32.mrb[0].mxu0
      %v6101 = vadd.f32 0.0, %v6100
      %v6102 = vpop.f32.mrb[0].mxu0
      %6103 = vmatprep.mubr.f32.mxu0 0.0
      %6104 = vmatmul.mubr.f32.gmra.mrb[0].mxu0 %v5964
      %v6105 = vpop.f32.mrb[0].mxu0
      %v6106 = vadd.f32 0.0, %v6105
      %v6107 = vpop.f32.mrb[0].mxu0
      %6108 = vmatprep.mubr.f32.mxu0 0.0
      %6109 = vmatmul.mubr.f32.gmra.mrb[0].mxu0 %v5966
      %v6110 = vpop.f32.mrb[0].mxu0
      %v6111 = vadd.f32 0.0, %v6110
      %v6112 = vpop.f32.mrb[0].mxu0
      %6113 = vmatprep.mubr.f32.mxu0 0.0
      %6114 = vmatmul.mubr.f32.gmra.mrb[0].mxu0 %v5968
      %v6115 = vpop.f32.mrb[0].mxu0
      %v6116 = vadd.f32 0.0, %v6115
      %v6117 = vpop.f32.mrb[0].mxu0
      %6118 = vmatprep.mubr.f32.mxu0 0.0
      %6119 = vmatmul.mubr.f32.gmra.mrb[0].mxu0 %v5970
      %v6120 = vpop.f32.mrb[0].mxu0
      %v6121 = vadd.f32 0.0, %v6120
      %v6122 = vpop.f32.mrb[0].mxu0
      %6123 = vmatprep.mubr.f32.mxu0 0.0
      %6124 = vmatmul.mubr.f32.gmra.mrb[0].mxu0 %v5972
      %v6125 = vpop.f32.mrb[0].mxu0
      %v6126 = vadd.f32 0.0, %v6125
      %v6127 = vpop.f32.mrb[0].mxu0
      %6128 = vmatprep.mubr.f32.mxu0 0.0
      %6129 = vmatmul.mubr.f32.gmra.mrb[0].mxu0 %v5974
      %v6130 = vpop.f32.mrb[0].mxu0
      %v6131 = vadd.f32 0.0, %v6130
      %v6132 = vpop.f32.mrb[0].mxu0
      %6133 = vmatprep.mubr.f32.mxu0 0.0
      %6134 = vmatmul.mubr.f32.gmra.mrb[0].mxu0 %v5976
      %v6135 = vpop.f32.mrb[0].mxu0
      %v6136 = vadd.f32 0.0, %v6135
      %v6137 = vpop.f32.mrb[0].mxu0
      %6138 = vmatprep.mubr.f32.mxu0 0.0
      %6139 = vmatmul.mubr.f32.gmra.mrb[0].mxu0 %v5978
      %v6140 = vpop.f32.mrb[0].mxu0
      %v6141 = vadd.f32 0.0, %v6140
      %v6142 = vpop.f32.mrb[0].mxu0
      %6143 = vmatprep.mubr.f32.mxu0 0.0
      %6144 = vmatmul.mubr.f32.gmra.mrb[0].mxu0 %v5980
      %v6145 = vpop.f32.mrb[0].mxu0
      %v6146 = vadd.f32 0.0, %v6145
      %v6147 = vpop.f32.mrb[0].mxu0
      %6148 = vmatprep.mubr.f32.mxu0 0.0
      %6149 = vmatmul.mubr.f32.gmra.mrb[0].mxu0 %v5982
      %v6150 = vpop.f32.mrb[0].mxu0
      %v6151 = vadd.f32 0.0, %v6150
      %v6152 = vpop.f32.mrb[0].mxu0
      %6153 = vdwg.mxu0
      %v6154 = vmul.f32 %v6081, 0.35355338
      %v6155 = vmul.f32 %v6086, 0.35355338
      %v6156 = vmul.f32 %v6091, 0.35355338
      %v6157 = vmul.f32 %v6096, 0.35355338
      %v6158 = vmul.f32 %v6101, 0.35355338
      %v6159 = vmul.f32 %v6106, 0.35355338
      %v6160 = vmul.f32 %v6111, 0.35355338
      %v6161 = vmul.f32 %v6116, 0.35355338
      %v6162 = vmul.f32 %v6121, 0.35355338
      %v6163 = vmul.f32 %v6126, 0.35355338
      %v6164 = vmul.f32 %v6131, 0.35355338
      %v6165 = vmul.f32 %v6136, 0.35355338
      %v6166 = vmul.f32 %v6141, 0.35355338
      %v6167 = vmul.f32 %v6146, 0.35355338
      %v6168 = vmul.f32 %v6151, 0.35355338
      %v6169 = vadd.f32 %v6154, %v1039
      %v6170 = vadd.f32 %v6155, %v1040
      %v6171 = vadd.f32 %v6156, %v1041
      %v6172 = vadd.f32 %v6157, %v1042
      %v6173 = vadd.f32 %v6158, %v1043
      %v6174 = vadd.f32 %v6159, %v1044
      %v6175 = vadd.f32 %v6160, %v1045
      %v6176 = vadd.f32 %v6161, %v1046
      %v6177 = vadd.f32 %v6162, %v1047
      %v6178 = vadd.f32 %v6163, %v1048
      %v6179 = vadd.f32 %v6164, %v1049
      %v6180 = vadd.f32 %v6165, %v1050
      %v6181 = vadd.f32 %v6166, %v1051
      %v6182 = vadd.f32 %v6167, %v1052
      %v6183 = vadd.f32 %v6168, %v1053
      %v6184 = vsel %vm1765, %v6169, -inf
      %6185 = vmax.xlane.f32.xlu0 %v6184
      %v6186 = vpop.xlane.xlu0 %6185
      %v6187 = vsel %vm1765, %v6170, -inf
      %6188 = vmax.xlane.f32.xlu0 %v6187
      %v6189 = vpop.xlane.xlu0 %6188
      %v6190 = vsel %vm1765, %v6171, -inf
      %6191 = vmax.xlane.f32.xlu0 %v6190
      %v6192 = vpop.xlane.xlu0 %6191
      %v6193 = vsel %vm1765, %v6172, -inf
      %6194 = vmax.xlane.f32.xlu0 %v6193
      %v6195 = vpop.xlane.xlu0 %6194
      %v6196 = vsel %vm1765, %v6173, -inf
      %6197 = vmax.xlane.f32.xlu0 %v6196
      %v6198 = vpop.xlane.xlu0 %6197
      %v6199 = vsel %vm1765, %v6174, -inf
      %6200 = vmax.xlane.f32.xlu0 %v6199
      %v6201 = vpop.xlane.xlu0 %6200
      %v6202 = vsel %vm1765, %v6175, -inf
      %6203 = vmax.xlane.f32.xlu0 %v6202
      %v6204 = vpop.xlane.xlu0 %6203
      %v6205 = vsel %vm1765, %v6176, -inf
      %6206 = vmax.xlane.f32.xlu0 %v6205
      %v6207 = vpop.xlane.xlu0 %6206
      %v6208 = vsel %vm1765, %v6177, -inf
      %6209 = vmax.xlane.f32.xlu0 %v6208
      %v6210 = vpop.xlane.xlu0 %6209
      %v6211 = vsel %vm1765, %v6178, -inf
      %6212 = vmax.xlane.f32.xlu0 %v6211
      %v6213 = vpop.xlane.xlu0 %6212
      %v6214 = vsel %vm1765, %v6179, -inf
      %6215 = vmax.xlane.f32.xlu0 %v6214
      %v6216 = vpop.xlane.xlu0 %6215
      %v6217 = vsel %vm1765, %v6180, -inf
      %6218 = vmax.xlane.f32.xlu0 %v6217
      %v6219 = vpop.xlane.xlu0 %6218
      %v6220 = vsel %vm1765, %v6181, -inf
      %6221 = vmax.xlane.f32.xlu0 %v6220
      %v6222 = vpop.xlane.xlu0 %6221
      %v6223 = vsel %vm1765, %v6182, -inf
      %6224 = vmax.xlane.f32.xlu0 %v6223
      %v6225 = vpop.xlane.xlu0 %6224
      %v6226 = vsel %vm1765, %v6183, -inf
      %6227 = vmax.xlane.f32.xlu0 %v6226
      %v6228 = vpop.xlane.xlu0 %6227
      %v6229 = vsub.f32 %v6169, %v6186
      %v6230 = vsub.f32 %v6170, %v6189
      %v6231 = vsub.f32 %v6171, %v6192
      %v6232 = vsub.f32 %v6172, %v6195
      %v6233 = vsub.f32 %v6173, %v6198
      %v6234 = vsub.f32 %v6174, %v6201
      %v6235 = vsub.f32 %v6175, %v6204
      %v6236 = vsub.f32 %v6176, %v6207
      %v6237 = vsub.f32 %v6177, %v6210
      %v6238 = vsub.f32 %v6178, %v6213
      %v6239 = vsub.f32 %v6179, %v6216
      %v6240 = vsub.f32 %v6180, %v6219
      %v6241 = vsub.f32 %v6181, %v6222
      %v6242 = vsub.f32 %v6182, %v6225
      %v6243 = vsub.f32 %v6183, %v6228
      %v6244 = vmul.f32 %v6229, 1.442695
      %v6245 = vpow.pop %v6244
      %v6246 = vmul.f32 %v6230, 1.442695
      %v6247 = vpow.pop %v6246
      %v6248 = vmul.f32 %v6231, 1.442695
      %v6249 = vpow.pop %v6248
      %v6250 = vmul.f32 %v6232, 1.442695
      %v6251 = vpow.pop %v6250
      %v6252 = vmul.f32 %v6233, 1.442695
      %v6253 = vpow.pop %v6252
      %v6254 = vmul.f32 %v6234, 1.442695
      %v6255 = vpow.pop %v6254
      %v6256 = vmul.f32 %v6235, 1.442695
      %v6257 = vpow.pop %v6256
      %v6258 = vmul.f32 %v6236, 1.442695
      %v6259 = vpow.pop %v6258
      %v6260 = vmul.f32 %v6237, 1.442695
      %v6261 = vpow.pop %v6260
      %v6262 = vmul.f32 %v6238, 1.442695
      %v6263 = vpow.pop %v6262
      %v6264 = vmul.f32 %v6239, 1.442695
      %v6265 = vpow.pop %v6264
      %v6266 = vmul.f32 %v6240, 1.442695
      %v6267 = vpow.pop %v6266
      %v6268 = vmul.f32 %v6241, 1.442695
      %v6269 = vpow.pop %v6268
      %v6270 = vmul.f32 %v6242, 1.442695
      %v6271 = vpow.pop %v6270
      %v6272 = vmul.f32 %v6243, 1.442695
      %v6273 = vpow.pop %v6272
      %v6274 = vsel %vm1765, %v6245, 0.0
      %6275 = vadd.xlane.f32.xlu0 %v6274
      %v6276 = vpop.xlane.xlu0 %6275
      %v6277 = vsel %vm1765, %v6247, 0.0
      %6278 = vadd.xlane.f32.xlu0 %v6277
      %v6279 = vpop.xlane.xlu0 %6278
      %v6280 = vsel %vm1765, %v6249, 0.0
      %6281 = vadd.xlane.f32.xlu0 %v6280
      %v6282 = vpop.xlane.xlu0 %6281
      %v6283 = vsel %vm1765, %v6251, 0.0
      %6284 = vadd.xlane.f32.xlu0 %v6283
      %v6285 = vpop.xlane.xlu0 %6284
      %v6286 = vsel %vm1765, %v6253, 0.0
      %6287 = vadd.xlane.f32.xlu0 %v6286
      %v6288 = vpop.xlane.xlu0 %6287
      %v6289 = vsel %vm1765, %v6255, 0.0
      %6290 = vadd.xlane.f32.xlu0 %v6289
      %v6291 = vpop.xlane.xlu0 %6290
      %v6292 = vsel %vm1765, %v6257, 0.0
      %6293 = vadd.xlane.f32.xlu0 %v6292
      %v6294 = vpop.xlane.xlu0 %6293
      %v6295 = vsel %vm1765, %v6259, 0.0
      %6296 = vadd.xlane.f32.xlu0 %v6295
      %v6297 = vpop.xlane.xlu0 %6296
      %v6298 = vsel %vm1765, %v6261, 0.0
      %6299 = vadd.xlane.f32.xlu0 %v6298
      %v6300 = vpop.xlane.xlu0 %6299
      %v6301 = vsel %vm1765, %v6263, 0.0
      %6302 = vadd.xlane.f32.xlu0 %v6301
      %v6303 = vpop.xlane.xlu0 %6302
      %v6304 = vsel %vm1765, %v6265, 0.0
      %6305 = vadd.xlane.f32.xlu0 %v6304
      %v6306 = vpop.xlane.xlu0 %6305
      %v6307 = vsel %vm1765, %v6267, 0.0
      %6308 = vadd.xlane.f32.xlu0 %v6307
      %v6309 = vpop.xlane.xlu0 %6308
      %v6310 = vsel %vm1765, %v6269, 0.0
      %6311 = vadd.xlane.f32.xlu0 %v6310
      %v6312 = vpop.xlane.xlu0 %6311
      %v6313 = vsel %vm1765, %v6271, 0.0
      %6314 = vadd.xlane.f32.xlu0 %v6313
      %v6315 = vpop.xlane.xlu0 %6314
      %v6316 = vsel %vm1765, %v6273, 0.0
      %6317 = vadd.xlane.f32.xlu0 %v6316
      %v6318 = vpop.xlane.xlu0 %6317
      %v6319 = vrcp.pop %v6276
      %v6320 = vrcp.pop %v6279
      %v6321 = vrcp.pop %v6282
      %v6322 = vrcp.pop %v6285
      %v6323 = vrcp.pop %v6288
      %v6324 = vrcp.pop %v6291
      %v6325 = vrcp.pop %v6294
      %v6326 = vrcp.pop %v6297
      %v6327 = vrcp.pop %v6300
      %v6328 = vrcp.pop %v6303
      %v6329 = vrcp.pop %v6306
      %v6330 = vrcp.pop %v6309
      %v6331 = vrcp.pop %v6312
      %v6332 = vrcp.pop %v6315
      %v6333 = vrcp.pop %v6318
      %v6334 = vmul.f32 %v6245, %v6319
      %v6335 = vmul.f32 %v6247, %v6320
      %v6336 = vmul.f32 %v6249, %v6321
      %v6337 = vmul.f32 %v6251, %v6322
      %v6338 = vmul.f32 %v6253, %v6323
      %v6339 = vmul.f32 %v6255, %v6324
      %v6340 = vmul.f32 %v6257, %v6325
      %v6341 = vmul.f32 %v6259, %v6326
      %v6342 = vmul.f32 %v6261, %v6327
      %v6343 = vmul.f32 %v6263, %v6328
      %v6344 = vmul.f32 %v6265, %v6329
      %v6345 = vmul.f32 %v6267, %v6330
      %v6346 = vmul.f32 %v6269, %v6331
      %v6347 = vmul.f32 %v6271, %v6332
      %v6348 = vmul.f32 %v6273, %v6333
      %6349 = vrot.lane.b32.xlu0 %v5836, 64
      %v6350 = vpop.permute.xlu0 %6349
      %6351 = vrot.lane.b32.xlu0 %v5841, 64
      %v6352 = vpop.permute.xlu0 %6351
      %6353 = vrot.lane.b32.xlu0 %v5846, 64
      %v6354 = vpop.permute.xlu0 %6353
      %6355 = vrot.lane.b32.xlu0 %v5851, 64
      %v6356 = vpop.permute.xlu0 %6355
      %6357 = vrot.lane.b32.xlu0 %v5856, 64
      %v6358 = vpop.permute.xlu0 %6357
      %6359 = vrot.lane.b32.xlu0 %v5861, 64
      %v6360 = vpop.permute.xlu0 %6359
      %6361 = vrot.lane.b32.xlu0 %v5866, 64
      %v6362 = vpop.permute.xlu0 %6361
      %6363 = vrot.lane.b32.xlu0 %v5871, 64
      %v6364 = vpop.permute.xlu0 %6363
      %6365 = vrot.lane.b32.xlu0 %v5876, 64
      %v6366 = vpop.permute.xlu0 %6365
      %6367 = vrot.lane.b32.xlu0 %v5881, 64
      %v6368 = vpop.permute.xlu0 %6367
      %6369 = vrot.lane.b32.xlu0 %v5886, 64
      %v6370 = vpop.permute.xlu0 %6369
      %6371 = vrot.lane.b32.xlu0 %v5891, 64
      %v6372 = vpop.permute.xlu0 %6371
      %6373 = vrot.lane.b32.xlu0 %v5896, 64
      %v6374 = vpop.permute.xlu0 %6373
      %6375 = vrot.lane.b32.xlu0 %v5901, 64
      %v6376 = vpop.permute.xlu0 %6375
      %6377 = vrot.lane.b32.xlu0 %v5906, 64
      %v6378 = vpop.permute.xlu0 %6377
      %v6395 = vsel %vm1765, %v6334, 0
      %v6398 = vsel %vm1765, %v6335, 0
      %v6401 = vsel %vm1765, %v6336, 0
      %v6404 = vsel %vm1765, %v6337, 0
      %v6407 = vsel %vm1765, %v6338, 0
      %v6410 = vsel %vm1765, %v6339, 0
      %v6413 = vsel %vm1765, %v6340, 0
      %v6416 = vsel %vm1765, %v6341, 0
      %v6419 = vsel %vm1765, %v6342, 0
      %v6422 = vsel %vm1765, %v6343, 0
      %v6425 = vsel %vm1765, %v6344, 0
      %v6428 = vsel %vm1765, %v6345, 0
      %v6431 = vsel %vm1765, %v6346, 0
      %v6434 = vsel %vm1765, %v6347, 0
      %v6437 = vsel %vm1765, %v6348, 0
      %6439 = vmatprep.subr.mxu0 0.0
      %6440 = vmatpush1.msra.mxu0 %v6350
      %6441 = vmatprep.subr.mxu0 0.0
      %6442 = vmatpush1.msra.mxu0 %v6352
      %6443 = vmatprep.subr.mxu0 0.0
      %6444 = vmatpush1.msra.mxu0 %v6354
      %6445 = vmatprep.subr.mxu0 0.0
      %6446 = vmatpush1.msra.mxu0 %v6356
      %6447 = vmatprep.subr.mxu0 0.0
      %6448 = vmatpush1.msra.mxu0 %v6358
      %6449 = vmatprep.subr.mxu0 0.0
      %6450 = vmatpush1.msra.mxu0 %v6360
      %6451 = vmatprep.subr.mxu0 0.0
      %6452 = vmatpush1.msra.mxu0 %v6362
      %6453 = vmatprep.subr.mxu0 0.0
      %6454 = vmatpush1.msra.mxu0 %v6364
      %6455 = vmatprep.subr.mxu0 0.0
      %6456 = vmatpush1.msra.mxu0 %v6366
      %6457 = vmatprep.subr.mxu0 0.0
      %6458 = vmatpush1.msra.mxu0 %v6368
      %6459 = vmatprep.subr.mxu0 0.0
      %6460 = vmatpush1.msra.mxu0 %v6370
      %6461 = vmatprep.subr.mxu0 0.0
      %6462 = vmatpush1.msra.mxu0 %v6372
      %6463 = vmatprep.subr.mxu0 0.0
      %6464 = vmatpush1.msra.mxu0 %v6374
      %6465 = vmatprep.subr.mxu0 0.0
      %6466 = vmatpush1.msra.mxu0 %v6376
      %6467 = vmatprep.subr.mxu0 0.0
      %6468 = vmatpush1.msra.mxu0 %v6378
      %6469 = vmatprep.subr.mxu0 0.0
      %6470 = vmatpush1.msra.mxu0 0.0
      %6471 = vmatprep.subr.mxu0 0.0
      %6472 = vmatpush1.msra.mxu0 0.0
      %6473 = vmatprep.subr.mxu0 0.0
      %6474 = vmatpush1.msra.mxu0 0.0
      %6475 = vmatprep.subr.mxu0 0.0
      %6476 = vmatpush1.msra.mxu0 0.0
      %6477 = vmatprep.subr.mxu0 0.0
      %6478 = vmatpush1.msra.mxu0 0.0
      %6479 = vmatprep.subr.mxu0 0.0
      %6480 = vmatpush1.msra.mxu0 0.0
      %6481 = vmatprep.subr.mxu0 0.0
      %6482 = vmatpush1.msra.mxu0 0.0
      %6483 = vmatprep.subr.mxu0 0.0
      %6484 = vmatpush1.msra.mxu0 0.0
      %6485 = vmatprep.subr.mxu0 0.0
      %6486 = vmatpush1.msra.mxu0 0.0
      %6487 = vmatprep.subr.mxu0 0.0
      %6488 = vmatpush1.msra.mxu0 0.0
      %6489 = vmatprep.subr.mxu0 0.0
      %6490 = vmatpush1.msra.mxu0 0.0
      %6491 = vmatprep.subr.mxu0 0.0
      %6492 = vmatpush1.msra.mxu0 0.0
      %6493 = vmatprep.subr.mxu0 0.0
      %6494 = vmatpush1.msra.mxu0 0.0
      %6495 = vmatprep.subr.mxu0 0.0
      %6496 = vmatpush1.msra.mxu0 0.0
      %6497 = vmatprep.subr.mxu0 0.0
      %6498 = vmatpush1.msra.mxu0 0.0
      %6499 = vmatprep.subr.mxu0 0.0
      %6500 = vmatpush1.msra.mxu0 0.0
      %6501 = vmatprep.subr.mxu0 0.0
      %6502 = vmatpush1.msra.mxu0 0.0
      %6503 = vmatprep.mubr.f32.mxu0 0.0
      %6504 = vmatmul.mubr.f32.gmra.mrb[0].mxu0 %v6395
      %v6505 = vpop.f32.mrb[0].mxu0
      %v6506 = vadd.f32 0.0, %v6505
      %v6507 = vpop.f32.mrb[0].mxu0
      %6508 = vmatprep.mubr.f32.mxu0 0.0
      %6509 = vmatmul.mubr.f32.gmra.mrb[0].mxu0 %v6398
      %v6510 = vpop.f32.mrb[0].mxu0
      %v6511 = vadd.f32 0.0, %v6510
      %v6512 = vpop.f32.mrb[0].mxu0
      %6513 = vmatprep.mubr.f32.mxu0 0.0
      %6514 = vmatmul.mubr.f32.gmra.mrb[0].mxu0 %v6401
      %v6515 = vpop.f32.mrb[0].mxu0
      %v6516 = vadd.f32 0.0, %v6515
      %v6517 = vpop.f32.mrb[0].mxu0
      %6518 = vmatprep.mubr.f32.mxu0 0.0
      %6519 = vmatmul.mubr.f32.gmra.mrb[0].mxu0 %v6404
      %v6520 = vpop.f32.mrb[0].mxu0
      %v6521 = vadd.f32 0.0, %v6520
      %v6522 = vpop.f32.mrb[0].mxu0
      %6523 = vmatprep.mubr.f32.mxu0 0.0
      %6524 = vmatmul.mubr.f32.gmra.mrb[0].mxu0 %v6407
      %v6525 = vpop.f32.mrb[0].mxu0
      %v6526 = vadd.f32 0.0, %v6525
      %v6527 = vpop.f32.mrb[0].mxu0
      %6528 = vmatprep.mubr.f32.mxu0 0.0
      %6529 = vmatmul.mubr.f32.gmra.mrb[0].mxu0 %v6410
      %v6530 = vpop.f32.mrb[0].mxu0
      %v6531 = vadd.f32 0.0, %v6530
      %v6532 = vpop.f32.mrb[0].mxu0
      %6533 = vmatprep.mubr.f32.mxu0 0.0
      %6534 = vmatmul.mubr.f32.gmra.mrb[0].mxu0 %v6413
      %v6535 = vpop.f32.mrb[0].mxu0
      %v6536 = vadd.f32 0.0, %v6535
      %v6537 = vpop.f32.mrb[0].mxu0
      %6538 = vmatprep.mubr.f32.mxu0 0.0
      %6539 = vmatmul.mubr.f32.gmra.mrb[0].mxu0 %v6416
      %v6540 = vpop.f32.mrb[0].mxu0
      %v6541 = vadd.f32 0.0, %v6540
      %v6542 = vpop.f32.mrb[0].mxu0
      %6543 = vmatprep.mubr.f32.mxu0 0.0
      %6544 = vmatmul.mubr.f32.gmra.mrb[0].mxu0 %v6419
      %v6545 = vpop.f32.mrb[0].mxu0
      %v6546 = vadd.f32 0.0, %v6545
      %v6547 = vpop.f32.mrb[0].mxu0
      %6548 = vmatprep.mubr.f32.mxu0 0.0
      %6549 = vmatmul.mubr.f32.gmra.mrb[0].mxu0 %v6422
      %v6550 = vpop.f32.mrb[0].mxu0
      %v6551 = vadd.f32 0.0, %v6550
      %v6552 = vpop.f32.mrb[0].mxu0
      %6553 = vmatprep.mubr.f32.mxu0 0.0
      %6554 = vmatmul.mubr.f32.gmra.mrb[0].mxu0 %v6425
      %v6555 = vpop.f32.mrb[0].mxu0
      %v6556 = vadd.f32 0.0, %v6555
      %v6557 = vpop.f32.mrb[0].mxu0
      %6558 = vmatprep.mubr.f32.mxu0 0.0
      %6559 = vmatmul.mubr.f32.gmra.mrb[0].mxu0 %v6428
      %v6560 = vpop.f32.mrb[0].mxu0
      %v6561 = vadd.f32 0.0, %v6560
      %v6562 = vpop.f32.mrb[0].mxu0
      %6563 = vmatprep.mubr.f32.mxu0 0.0
      %6564 = vmatmul.mubr.f32.gmra.mrb[0].mxu0 %v6431
      %v6565 = vpop.f32.mrb[0].mxu0
      %v6566 = vadd.f32 0.0, %v6565
      %v6567 = vpop.f32.mrb[0].mxu0
      %6568 = vmatprep.mubr.f32.mxu0 0.0
      %6569 = vmatmul.mubr.f32.gmra.mrb[0].mxu0 %v6434
      %v6570 = vpop.f32.mrb[0].mxu0
      %v6571 = vadd.f32 0.0, %v6570
      %v6572 = vpop.f32.mrb[0].mxu0
      %6573 = vmatprep.mubr.f32.mxu0 0.0
      %6574 = vmatmul.mubr.f32.gmra.mrb[0].mxu0 %v6437
      %v6575 = vpop.f32.mrb[0].mxu0
      %v6576 = vadd.f32 0.0, %v6575
      %v6577 = vpop.f32.mrb[0].mxu0
      %6578 = vdwg.mxu0
      %6579 = vrot.lane.b32.xlu0 %v5836, 120
      %v6580 = vpop.permute.xlu0 %6579
      %6581 = vrot.lane.b32.xlu0 %v5841, 120
      %v6582 = vpop.permute.xlu0 %6581
      %6583 = vrot.lane.b32.xlu0 %v5846, 120
      %v6584 = vpop.permute.xlu0 %6583
      %6585 = vrot.lane.b32.xlu0 %v5851, 120
      %v6586 = vpop.permute.xlu0 %6585
      %6587 = vrot.lane.b32.xlu0 %v5856, 120
      %v6588 = vpop.permute.xlu0 %6587
      %6589 = vrot.lane.b32.xlu0 %v5861, 120
      %v6590 = vpop.permute.xlu0 %6589
      %6591 = vrot.lane.b32.xlu0 %v5866, 120
      %v6592 = vpop.permute.xlu0 %6591
      %6593 = vrot.lane.b32.xlu0 %v5871, 120
      %v6594 = vpop.permute.xlu0 %6593
      %6595 = vrot.lane.b32.xlu0 %v5876, 120
      %v6596 = vpop.permute.xlu0 %6595
      %6597 = vrot.lane.b32.xlu0 %v5881, 120
      %v6598 = vpop.permute.xlu0 %6597
      %6599 = vrot.lane.b32.xlu0 %v5886, 120
      %v6600 = vpop.permute.xlu0 %6599
      %6601 = vrot.lane.b32.xlu0 %v5891, 120
      %v6602 = vpop.permute.xlu0 %6601
      %6603 = vrot.lane.b32.xlu0 %v5896, 120
      %v6604 = vpop.permute.xlu0 %6603
      %6605 = vrot.lane.b32.xlu0 %v5901, 120
      %v6606 = vpop.permute.xlu0 %6605
      %6607 = vrot.lane.b32.xlu0 %v5906, 120
      %v6608 = vpop.permute.xlu0 %6607
      %6609 = vrot.lane.b32.xlu0 %v5836, 88
      %v6610 = vpop.permute.xlu0 %6609
      %6611 = vrot.lane.b32.xlu0 %v5841, 88
      %v6612 = vpop.permute.xlu0 %6611
      %6613 = vrot.lane.b32.xlu0 %v5846, 88
      %v6614 = vpop.permute.xlu0 %6613
      %6615 = vrot.lane.b32.xlu0 %v5851, 88
      %v6616 = vpop.permute.xlu0 %6615
      %6617 = vrot.lane.b32.xlu0 %v5856, 88
      %v6618 = vpop.permute.xlu0 %6617
      %6619 = vrot.lane.b32.xlu0 %v5861, 88
      %v6620 = vpop.permute.xlu0 %6619
      %6621 = vrot.lane.b32.xlu0 %v5866, 88
      %v6622 = vpop.permute.xlu0 %6621
      %6623 = vrot.lane.b32.xlu0 %v5871, 88
      %v6624 = vpop.permute.xlu0 %6623
      %6625 = vrot.lane.b32.xlu0 %v5876, 88
      %v6626 = vpop.permute.xlu0 %6625
      %6627 = vrot.lane.b32.xlu0 %v5881, 88
      %v6628 = vpop.permute.xlu0 %6627
      %6629 = vrot.lane.b32.xlu0 %v5886, 88
      %v6630 = vpop.permute.xlu0 %6629
      %6631 = vrot.lane.b32.xlu0 %v5891, 88
      %v6632 = vpop.permute.xlu0 %6631
      %6633 = vrot.lane.b32.xlu0 %v5896, 88
      %v6634 = vpop.permute.xlu0 %6633
      %6635 = vrot.lane.b32.xlu0 %v5901, 88
      %v6636 = vpop.permute.xlu0 %6635
      %6637 = vrot.lane.b32.xlu0 %v5906, 88
      %v6638 = vpop.permute.xlu0 %6637
      %v6639 = vsel %vm1534, %v6580, 0
      %v6641 = vsel %vm1534, %v6582, 0
      %v6643 = vsel %vm1534, %v6584, 0
      %v6645 = vsel %vm1534, %v6586, 0
      %v6647 = vsel %vm1534, %v6588, 0
      %v6649 = vsel %vm1534, %v6590, 0
      %v6651 = vsel %vm1534, %v6592, 0
      %v6653 = vsel %vm1534, %v6594, 0
      %v6655 = vsel %vm1534, %v6596, 0
      %v6657 = vsel %vm1534, %v6598, 0
      %v6659 = vsel %vm1534, %v6600, 0
      %v6661 = vsel %vm1534, %v6602, 0
      %v6663 = vsel %vm1534, %v6604, 0
      %v6665 = vsel %vm1534, %v6606, 0
      %v6667 = vsel %vm1534, %v6608, 0
      %v6669 = vsel %vm1534, %v6610, 0
      %v6671 = vsel %vm1534, %v6612, 0
      %v6673 = vsel %vm1534, %v6614, 0
      %v6675 = vsel %vm1534, %v6616, 0
      %v6677 = vsel %vm1534, %v6618, 0
      %v6679 = vsel %vm1534, %v6620, 0
      %v6681 = vsel %vm1534, %v6622, 0
      %v6683 = vsel %vm1534, %v6624, 0
      %v6685 = vsel %vm1534, %v6626, 0
      %v6687 = vsel %vm1534, %v6628, 0
      %v6689 = vsel %vm1534, %v6630, 0
      %v6691 = vsel %vm1534, %v6632, 0
      %v6693 = vsel %vm1534, %v6634, 0
      %v6695 = vsel %vm1534, %v6636, 0
      %v6697 = vsel %vm1534, %v6638, 0
      %6699 = vmatprep.subr.mxu0 0.0
      %6700 = vmatpush1.xpose.msra.mxu0 %v6669
      %6701 = vmatprep.subr.mxu0 0.0
      %6702 = vmatpush1.xpose.msra.mxu0 %v6671
      %6703 = vmatprep.subr.mxu0 0.0
      %6704 = vmatpush1.xpose.msra.mxu0 %v6673
      %6705 = vmatprep.subr.mxu0 0.0
      %6706 = vmatpush1.xpose.msra.mxu0 %v6675
      %6707 = vmatprep.subr.mxu0 0.0
      %6708 = vmatpush1.xpose.msra.mxu0 %v6677
      %6709 = vmatprep.subr.mxu0 0.0
      %6710 = vmatpush1.xpose.msra.mxu0 %v6679
      %6711 = vmatprep.subr.mxu0 0.0
      %6712 = vmatpush1.xpose.msra.mxu0 %v6681
      %6713 = vmatprep.subr.mxu0 0.0
      %6714 = vmatpush1.xpose.msra.mxu0 %v6683
      %6715 = vmatprep.subr.mxu0 0.0
      %6716 = vmatpush1.xpose.msra.mxu0 %v6685
      %6717 = vmatprep.subr.mxu0 0.0
      %6718 = vmatpush1.xpose.msra.mxu0 %v6687
      %6719 = vmatprep.subr.mxu0 0.0
      %6720 = vmatpush1.xpose.msra.mxu0 %v6689
      %6721 = vmatprep.subr.mxu0 0.0
      %6722 = vmatpush1.xpose.msra.mxu0 %v6691
      %6723 = vmatprep.subr.mxu0 0.0
      %6724 = vmatpush1.xpose.msra.mxu0 %v6693
      %6725 = vmatprep.subr.mxu0 0.0
      %6726 = vmatpush1.xpose.msra.mxu0 %v6695
      %6727 = vmatprep.subr.mxu0 0.0
      %6728 = vmatpush1.xpose.msra.mxu0 %v6697
      %6729 = vmatprep.subr.mxu0 0.0
      %6730 = vmatpush1.xpose.msra.mxu0 0.0
      %6731 = vmatprep.subr.mxu0 0.0
      %6732 = vmatpush1.xpose.msra.mxu0 0.0
      %6733 = vmatprep.subr.mxu0 0.0
      %6734 = vmatpush1.xpose.msra.mxu0 0.0
      %6735 = vmatprep.subr.mxu0 0.0
      %6736 = vmatpush1.xpose.msra.mxu0 0.0
      %6737 = vmatprep.subr.mxu0 0.0
      %6738 = vmatpush1.xpose.msra.mxu0 0.0
      %6739 = vmatprep.subr.mxu0 0.0
      %6740 = vmatpush1.xpose.msra.mxu0 0.0
      %6741 = vmatprep.subr.mxu0 0.0
      %6742 = vmatpush1.xpose.msra.mxu0 0.0
      %6743 = vmatprep.subr.mxu0 0.0
      %6744 = vmatpush1.xpose.msra.mxu0 0.0
      %6745 = vmatprep.subr.mxu0 0.0
      %6746 = vmatpush1.xpose.msra.mxu0 0.0
      %6747 = vmatprep.subr.mxu0 0.0
      %6748 = vmatpush1.xpose.msra.mxu0 0.0
      %6749 = vmatprep.subr.mxu0 0.0
      %6750 = vmatpush1.xpose.msra.mxu0 0.0
      %6751 = vmatprep.subr.mxu0 0.0
      %6752 = vmatpush1.xpose.msra.mxu0 0.0
      %6753 = vmatprep.subr.mxu0 0.0
      %6754 = vmatpush1.xpose.msra.mxu0 0.0
      %6755 = vmatprep.subr.mxu0 0.0
      %6756 = vmatpush1.xpose.msra.mxu0 0.0
      %6757 = vmatprep.subr.mxu0 0.0
      %6758 = vmatpush1.xpose.msra.mxu0 0.0
      %6759 = vmatprep.subr.mxu0 0.0
      %6760 = vmatpush1.xpose.msra.mxu0 0.0
      %6761 = vmatprep.subr.mxu0 0.0
      %6762 = vmatpush1.xpose.msra.mxu0 0.0
      %6763 = vmatprep.mubr.f32.mxu0 0.0
      %6764 = vmatmul.mubr.f32.gmra.mrb[0].mxu0 %v6639
      %v6765 = vpop.f32.mrb[0].mxu0
      %v6766 = vadd.f32 0.0, %v6765
      %v6767 = vpop.f32.mrb[0].mxu0
      %6768 = vmatprep.mubr.f32.mxu0 0.0
      %6769 = vmatmul.mubr.f32.gmra.mrb[0].mxu0 %v6641
      %v6770 = vpop.f32.mrb[0].mxu0
      %v6771 = vadd.f32 0.0, %v6770
      %v6772 = vpop.f32.mrb[0].mxu0
      %6773 = vmatprep.mubr.f32.mxu0 0.0
      %6774 = vmatmul.mubr.f32.gmra.mrb[0].mxu0 %v6643
      %v6775 = vpop.f32.mrb[0].mxu0
      %v6776 = vadd.f32 0.0, %v6775
      %v6777 = vpop.f32.mrb[0].mxu0
      %6778 = vmatprep.mubr.f32.mxu0 0.0
      %6779 = vmatmul.mubr.f32.gmra.mrb[0].mxu0 %v6645
      %v6780 = vpop.f32.mrb[0].mxu0
      %v6781 = vadd.f32 0.0, %v6780
      %v6782 = vpop.f32.mrb[0].mxu0
      %6783 = vmatprep.mubr.f32.mxu0 0.0
      %6784 = vmatmul.mubr.f32.gmra.mrb[0].mxu0 %v6647
      %v6785 = vpop.f32.mrb[0].mxu0
      %v6786 = vadd.f32 0.0, %v6785
      %v6787 = vpop.f32.mrb[0].mxu0
      %6788 = vmatprep.mubr.f32.mxu0 0.0
      %6789 = vmatmul.mubr.f32.gmra.mrb[0].mxu0 %v6649
      %v6790 = vpop.f32.mrb[0].mxu0
      %v6791 = vadd.f32 0.0, %v6790
      %v6792 = vpop.f32.mrb[0].mxu0
      %6793 = vmatprep.mubr.f32.mxu0 0.0
      %6794 = vmatmul.mubr.f32.gmra.mrb[0].mxu0 %v6651
      %v6795 = vpop.f32.mrb[0].mxu0
      %v6796 = vadd.f32 0.0, %v6795
      %v6797 = vpop.f32.mrb[0].mxu0
      %6798 = vmatprep.mubr.f32.mxu0 0.0
      %6799 = vmatmul.mubr.f32.gmra.mrb[0].mxu0 %v6653
      %v6800 = vpop.f32.mrb[0].mxu0
      %v6801 = vadd.f32 0.0, %v6800
      %v6802 = vpop.f32.mrb[0].mxu0
      %6803 = vmatprep.mubr.f32.mxu0 0.0
      %6804 = vmatmul.mubr.f32.gmra.mrb[0].mxu0 %v6655
      %v6805 = vpop.f32.mrb[0].mxu0
      %v6806 = vadd.f32 0.0, %v6805
      %v6807 = vpop.f32.mrb[0].mxu0
      %6808 = vmatprep.mubr.f32.mxu0 0.0
      %6809 = vmatmul.mubr.f32.gmra.mrb[0].mxu0 %v6657
      %v6810 = vpop.f32.mrb[0].mxu0
      %v6811 = vadd.f32 0.0, %v6810
      %v6812 = vpop.f32.mrb[0].mxu0
      %6813 = vmatprep.mubr.f32.mxu0 0.0
      %6814 = vmatmul.mubr.f32.gmra.mrb[0].mxu0 %v6659
      %v6815 = vpop.f32.mrb[0].mxu0
      %v6816 = vadd.f32 0.0, %v6815
      %v6817 = vpop.f32.mrb[0].mxu0
      %6818 = vmatprep.mubr.f32.mxu0 0.0
      %6819 = vmatmul.mubr.f32.gmra.mrb[0].mxu0 %v6661
      %v6820 = vpop.f32.mrb[0].mxu0
      %v6821 = vadd.f32 0.0, %v6820
      %v6822 = vpop.f32.mrb[0].mxu0
      %6823 = vmatprep.mubr.f32.mxu0 0.0
      %6824 = vmatmul.mubr.f32.gmra.mrb[0].mxu0 %v6663
      %v6825 = vpop.f32.mrb[0].mxu0
      %v6826 = vadd.f32 0.0, %v6825
      %v6827 = vpop.f32.mrb[0].mxu0
      %6828 = vmatprep.mubr.f32.mxu0 0.0
      %6829 = vmatmul.mubr.f32.gmra.mrb[0].mxu0 %v6665
      %v6830 = vpop.f32.mrb[0].mxu0
      %v6831 = vadd.f32 0.0, %v6830
      %v6832 = vpop.f32.mrb[0].mxu0
      %6833 = vmatprep.mubr.f32.mxu0 0.0
      %6834 = vmatmul.mubr.f32.gmra.mrb[0].mxu0 %v6667
      %v6835 = vpop.f32.mrb[0].mxu0
      %v6836 = vadd.f32 0.0, %v6835
      %v6837 = vpop.f32.mrb[0].mxu0
      %6838 = vdwg.mxu0
      %v6839 = vmul.f32 %v6766, 0.35355338
      %v6840 = vmul.f32 %v6771, 0.35355338
      %v6841 = vmul.f32 %v6776, 0.35355338
      %v6842 = vmul.f32 %v6781, 0.35355338
      %v6843 = vmul.f32 %v6786, 0.35355338
      %v6844 = vmul.f32 %v6791, 0.35355338
      %v6845 = vmul.f32 %v6796, 0.35355338
      %v6846 = vmul.f32 %v6801, 0.35355338
      %v6847 = vmul.f32 %v6806, 0.35355338
      %v6848 = vmul.f32 %v6811, 0.35355338
      %v6849 = vmul.f32 %v6816, 0.35355338
      %v6850 = vmul.f32 %v6821, 0.35355338
      %v6851 = vmul.f32 %v6826, 0.35355338
      %v6852 = vmul.f32 %v6831, 0.35355338
      %v6853 = vmul.f32 %v6836, 0.35355338
      %v6854 = vadd.f32 %v6839, %v1039
      %v6855 = vadd.f32 %v6840, %v1040
      %v6856 = vadd.f32 %v6841, %v1041
      %v6857 = vadd.f32 %v6842, %v1042
      %v6858 = vadd.f32 %v6843, %v1043
      %v6859 = vadd.f32 %v6844, %v1044
      %v6860 = vadd.f32 %v6845, %v1045
      %v6861 = vadd.f32 %v6846, %v1046
      %v6862 = vadd.f32 %v6847, %v1047
      %v6863 = vadd.f32 %v6848, %v1048
      %v6864 = vadd.f32 %v6849, %v1049
      %v6865 = vadd.f32 %v6850, %v1050
      %v6866 = vadd.f32 %v6851, %v1051
      %v6867 = vadd.f32 %v6852, %v1052
      %v6868 = vadd.f32 %v6853, %v1053
      %v6869 = vsel %vm1765, %v6854, -inf
      %6870 = vmax.xlane.f32.xlu0 %v6869
      %v6871 = vpop.xlane.xlu0 %6870
      %v6872 = vsel %vm1765, %v6855, -inf
      %6873 = vmax.xlane.f32.xlu0 %v6872
      %v6874 = vpop.xlane.xlu0 %6873
      %v6875 = vsel %vm1765, %v6856, -inf
      %6876 = vmax.xlane.f32.xlu0 %v6875
      %v6877 = vpop.xlane.xlu0 %6876
      %v6878 = vsel %vm1765, %v6857, -inf
      %6879 = vmax.xlane.f32.xlu0 %v6878
      %v6880 = vpop.xlane.xlu0 %6879
      %v6881 = vsel %vm1765, %v6858, -inf
      %6882 = vmax.xlane.f32.xlu0 %v6881
      %v6883 = vpop.xlane.xlu0 %6882
      %v6884 = vsel %vm1765, %v6859, -inf
      %6885 = vmax.xlane.f32.xlu0 %v6884
      %v6886 = vpop.xlane.xlu0 %6885
      %v6887 = vsel %vm1765, %v6860, -inf
      %6888 = vmax.xlane.f32.xlu0 %v6887
      %v6889 = vpop.xlane.xlu0 %6888
      %v6890 = vsel %vm1765, %v6861, -inf
      %6891 = vmax.xlane.f32.xlu0 %v6890
      %v6892 = vpop.xlane.xlu0 %6891
      %v6893 = vsel %vm1765, %v6862, -inf
      %6894 = vmax.xlane.f32.xlu0 %v6893
      %v6895 = vpop.xlane.xlu0 %6894
      %v6896 = vsel %vm1765, %v6863, -inf
      %6897 = vmax.xlane.f32.xlu0 %v6896
      %v6898 = vpop.xlane.xlu0 %6897
      %v6899 = vsel %vm1765, %v6864, -inf
      %6900 = vmax.xlane.f32.xlu0 %v6899
      %v6901 = vpop.xlane.xlu0 %6900
      %v6902 = vsel %vm1765, %v6865, -inf
      %6903 = vmax.xlane.f32.xlu0 %v6902
      %v6904 = vpop.xlane.xlu0 %6903
      %v6905 = vsel %vm1765, %v6866, -inf
      %6906 = vmax.xlane.f32.xlu0 %v6905
      %v6907 = vpop.xlane.xlu0 %6906
      %v6908 = vsel %vm1765, %v6867, -inf
      %6909 = vmax.xlane.f32.xlu0 %v6908
      %v6910 = vpop.xlane.xlu0 %6909
      %v6911 = vsel %vm1765, %v6868, -inf
      %6912 = vmax.xlane.f32.xlu0 %v6911
      %v6913 = vpop.xlane.xlu0 %6912
      %v6914 = vsub.f32 %v6854, %v6871
      %v6915 = vsub.f32 %v6855, %v6874
      %v6916 = vsub.f32 %v6856, %v6877
      %v6917 = vsub.f32 %v6857, %v6880
      %v6918 = vsub.f32 %v6858, %v6883
      %v6919 = vsub.f32 %v6859, %v6886
      %v6920 = vsub.f32 %v6860, %v6889
      %v6921 = vsub.f32 %v6861, %v6892
      %v6922 = vsub.f32 %v6862, %v6895
      %v6923 = vsub.f32 %v6863, %v6898
      %v6924 = vsub.f32 %v6864, %v6901
      %v6925 = vsub.f32 %v6865, %v6904
      %v6926 = vsub.f32 %v6866, %v6907
      %v6927 = vsub.f32 %v6867, %v6910
      %v6928 = vsub.f32 %v6868, %v6913
      %v6929 = vmul.f32 %v6914, 1.442695
      %v6930 = vpow.pop %v6929
      %v6931 = vmul.f32 %v6915, 1.442695
      %v6932 = vpow.pop %v6931
      %v6933 = vmul.f32 %v6916, 1.442695
      %v6934 = vpow.pop %v6933
      %v6935 = vmul.f32 %v6917, 1.442695
      %v6936 = vpow.pop %v6935
      %v6937 = vmul.f32 %v6918, 1.442695
      %v6938 = vpow.pop %v6937
      %v6939 = vmul.f32 %v6919, 1.442695
      %v6940 = vpow.pop %v6939
      %v6941 = vmul.f32 %v6920, 1.442695
      %v6942 = vpow.pop %v6941
      %v6943 = vmul.f32 %v6921, 1.442695
      %v6944 = vpow.pop %v6943
      %v6945 = vmul.f32 %v6922, 1.442695
      %v6946 = vpow.pop %v6945
      %v6947 = vmul.f32 %v6923, 1.442695
      %v6948 = vpow.pop %v6947
      %v6949 = vmul.f32 %v6924, 1.442695
      %v6950 = vpow.pop %v6949
      %v6951 = vmul.f32 %v6925, 1.442695
      %v6952 = vpow.pop %v6951
      %v6953 = vmul.f32 %v6926, 1.442695
      %v6954 = vpow.pop %v6953
      %v6955 = vmul.f32 %v6927, 1.442695
      %v6956 = vpow.pop %v6955
      %v6957 = vmul.f32 %v6928, 1.442695
      %v6958 = vpow.pop %v6957
      %v6959 = vsel %vm1765, %v6930, 0.0
      %6960 = vadd.xlane.f32.xlu0 %v6959
      %v6961 = vpop.xlane.xlu0 %6960
      %v6962 = vsel %vm1765, %v6932, 0.0
      %6963 = vadd.xlane.f32.xlu0 %v6962
      %v6964 = vpop.xlane.xlu0 %6963
      %v6965 = vsel %vm1765, %v6934, 0.0
      %6966 = vadd.xlane.f32.xlu0 %v6965
      %v6967 = vpop.xlane.xlu0 %6966
      %v6968 = vsel %vm1765, %v6936, 0.0
      %6969 = vadd.xlane.f32.xlu0 %v6968
      %v6970 = vpop.xlane.xlu0 %6969
      %v6971 = vsel %vm1765, %v6938, 0.0
      %6972 = vadd.xlane.f32.xlu0 %v6971
      %v6973 = vpop.xlane.xlu0 %6972
      %v6974 = vsel %vm1765, %v6940, 0.0
      %6975 = vadd.xlane.f32.xlu0 %v6974
      %v6976 = vpop.xlane.xlu0 %6975
      %v6977 = vsel %vm1765, %v6942, 0.0
      %6978 = vadd.xlane.f32.xlu0 %v6977
      %v6979 = vpop.xlane.xlu0 %6978
      %v6980 = vsel %vm1765, %v6944, 0.0
      %6981 = vadd.xlane.f32.xlu0 %v6980
      %v6982 = vpop.xlane.xlu0 %6981
      %v6983 = vsel %vm1765, %v6946, 0.0
      %6984 = vadd.xlane.f32.xlu0 %v6983
      %v6985 = vpop.xlane.xlu0 %6984
      %v6986 = vsel %vm1765, %v6948, 0.0
      %6987 = vadd.xlane.f32.xlu0 %v6986
      %v6988 = vpop.xlane.xlu0 %6987
      %v6989 = vsel %vm1765, %v6950, 0.0
      %6990 = vadd.xlane.f32.xlu0 %v6989
      %v6991 = vpop.xlane.xlu0 %6990
      %v6992 = vsel %vm1765, %v6952, 0.0
      %6993 = vadd.xlane.f32.xlu0 %v6992
      %v6994 = vpop.xlane.xlu0 %6993
      %v6995 = vsel %vm1765, %v6954, 0.0
      %6996 = vadd.xlane.f32.xlu0 %v6995
      %v6997 = vpop.xlane.xlu0 %6996
      %v6998 = vsel %vm1765, %v6956, 0.0
      %6999 = vadd.xlane.f32.xlu0 %v6998
      %v7000 = vpop.xlane.xlu0 %6999
      %v7001 = vsel %vm1765, %v6958, 0.0
      %7002 = vadd.xlane.f32.xlu0 %v7001
      %v7003 = vpop.xlane.xlu0 %7002
      %v7004 = vrcp.pop %v6961
      %v7005 = vrcp.pop %v6964
      %v7006 = vrcp.pop %v6967
      %v7007 = vrcp.pop %v6970
      %v7008 = vrcp.pop %v6973
      %v7009 = vrcp.pop %v6976
      %v7010 = vrcp.pop %v6979
      %v7011 = vrcp.pop %v6982
      %v7012 = vrcp.pop %v6985
      %v7013 = vrcp.pop %v6988
      %v7014 = vrcp.pop %v6991
      %v7015 = vrcp.pop %v6994
      %v7016 = vrcp.pop %v6997
      %v7017 = vrcp.pop %v7000
      %v7018 = vrcp.pop %v7003
      %v7019 = vmul.f32 %v6930, %v7004
      %v7020 = vmul.f32 %v6932, %v7005
      %v7021 = vmul.f32 %v6934, %v7006
      %v7022 = vmul.f32 %v6936, %v7007
      %v7023 = vmul.f32 %v6938, %v7008
      %v7024 = vmul.f32 %v6940, %v7009
      %v7025 = vmul.f32 %v6942, %v7010
      %v7026 = vmul.f32 %v6944, %v7011
      %v7027 = vmul.f32 %v6946, %v7012
      %v7028 = vmul.f32 %v6948, %v7013
      %v7029 = vmul.f32 %v6950, %v7014
      %v7030 = vmul.f32 %v6952, %v7015
      %v7031 = vmul.f32 %v6954, %v7016
      %v7032 = vmul.f32 %v6956, %v7017
      %v7033 = vmul.f32 %v6958, %v7018
      %7034 = vrot.lane.b32.xlu0 %v5836, 56
      %v7035 = vpop.permute.xlu0 %7034
      %7036 = vrot.lane.b32.xlu0 %v5841, 56
      %v7037 = vpop.permute.xlu0 %7036
      %7038 = vrot.lane.b32.xlu0 %v5846, 56
      %v7039 = vpop.permute.xlu0 %7038
      %7040 = vrot.lane.b32.xlu0 %v5851, 56
      %v7041 = vpop.permute.xlu0 %7040
      %7042 = vrot.lane.b32.xlu0 %v5856, 56
      %v7043 = vpop.permute.xlu0 %7042
      %7044 = vrot.lane.b32.xlu0 %v5861, 56
      %v7045 = vpop.permute.xlu0 %7044
      %7046 = vrot.lane.b32.xlu0 %v5866, 56
      %v7047 = vpop.permute.xlu0 %7046
      %7048 = vrot.lane.b32.xlu0 %v5871, 56
      %v7049 = vpop.permute.xlu0 %7048
      %7050 = vrot.lane.b32.xlu0 %v5876, 56
      %v7051 = vpop.permute.xlu0 %7050
      %7052 = vrot.lane.b32.xlu0 %v5881, 56
      %v7053 = vpop.permute.xlu0 %7052
      %7054 = vrot.lane.b32.xlu0 %v5886, 56
      %v7055 = vpop.permute.xlu0 %7054
      %7056 = vrot.lane.b32.xlu0 %v5891, 56
      %v7057 = vpop.permute.xlu0 %7056
      %7058 = vrot.lane.b32.xlu0 %v5896, 56
      %v7059 = vpop.permute.xlu0 %7058
      %7060 = vrot.lane.b32.xlu0 %v5901, 56
      %v7061 = vpop.permute.xlu0 %7060
      %7062 = vrot.lane.b32.xlu0 %v5906, 56
      %v7063 = vpop.permute.xlu0 %7062
      %v7080 = vsel %vm1765, %v7019, 0
      %v7083 = vsel %vm1765, %v7020, 0
      %v7086 = vsel %vm1765, %v7021, 0
      %v7089 = vsel %vm1765, %v7022, 0
      %v7092 = vsel %vm1765, %v7023, 0
      %v7095 = vsel %vm1765, %v7024, 0
      %v7098 = vsel %vm1765, %v7025, 0
      %v7101 = vsel %vm1765, %v7026, 0
      %v7104 = vsel %vm1765, %v7027, 0
      %v7107 = vsel %vm1765, %v7028, 0
      %v7110 = vsel %vm1765, %v7029, 0
      %v7113 = vsel %vm1765, %v7030, 0
      %v7116 = vsel %vm1765, %v7031, 0
      %v7119 = vsel %vm1765, %v7032, 0
      %v7122 = vsel %vm1765, %v7033, 0
      %7124 = vmatprep.subr.mxu0 0.0
      %7125 = vmatpush1.msra.mxu0 %v7035
      %7126 = vmatprep.subr.mxu0 0.0
      %7127 = vmatpush1.msra.mxu0 %v7037
      %7128 = vmatprep.subr.mxu0 0.0
      %7129 = vmatpush1.msra.mxu0 %v7039
      %7130 = vmatprep.subr.mxu0 0.0
      %7131 = vmatpush1.msra.mxu0 %v7041
      %7132 = vmatprep.subr.mxu0 0.0
      %7133 = vmatpush1.msra.mxu0 %v7043
      %7134 = vmatprep.subr.mxu0 0.0
      %7135 = vmatpush1.msra.mxu0 %v7045
      %7136 = vmatprep.subr.mxu0 0.0
      %7137 = vmatpush1.msra.mxu0 %v7047
      %7138 = vmatprep.subr.mxu0 0.0
      %7139 = vmatpush1.msra.mxu0 %v7049
      %7140 = vmatprep.subr.mxu0 0.0
      %7141 = vmatpush1.msra.mxu0 %v7051
      %7142 = vmatprep.subr.mxu0 0.0
      %7143 = vmatpush1.msra.mxu0 %v7053
      %7144 = vmatprep.subr.mxu0 0.0
      %7145 = vmatpush1.msra.mxu0 %v7055
      %7146 = vmatprep.subr.mxu0 0.0
      %7147 = vmatpush1.msra.mxu0 %v7057
      %7148 = vmatprep.subr.mxu0 0.0
      %7149 = vmatpush1.msra.mxu0 %v7059
      %7150 = vmatprep.subr.mxu0 0.0
      %7151 = vmatpush1.msra.mxu0 %v7061
      %7152 = vmatprep.subr.mxu0 0.0
      %7153 = vmatpush1.msra.mxu0 %v7063
      %7154 = vmatprep.subr.mxu0 0.0
      %7155 = vmatpush1.msra.mxu0 0.0
      %7156 = vmatprep.subr.mxu0 0.0
      %7157 = vmatpush1.msra.mxu0 0.0
      %7158 = vmatprep.subr.mxu0 0.0
      %7159 = vmatpush1.msra.mxu0 0.0
      %7160 = vmatprep.subr.mxu0 0.0
      %7161 = vmatpush1.msra.mxu0 0.0
      %7162 = vmatprep.subr.mxu0 0.0
      %7163 = vmatpush1.msra.mxu0 0.0
      %7164 = vmatprep.subr.mxu0 0.0
      %7165 = vmatpush1.msra.mxu0 0.0
      %7166 = vmatprep.subr.mxu0 0.0
      %7167 = vmatpush1.msra.mxu0 0.0
      %7168 = vmatprep.subr.mxu0 0.0
      %7169 = vmatpush1.msra.mxu0 0.0
      %7170 = vmatprep.subr.mxu0 0.0
      %7171 = vmatpush1.msra.mxu0 0.0
      %7172 = vmatprep.subr.mxu0 0.0
      %7173 = vmatpush1.msra.mxu0 0.0
      %7174 = vmatprep.subr.mxu0 0.0
      %7175 = vmatpush1.msra.mxu0 0.0
      %7176 = vmatprep.subr.mxu0 0.0
      %7177 = vmatpush1.msra.mxu0 0.0
      %7178 = vmatprep.subr.mxu0 0.0
      %7179 = vmatpush1.msra.mxu0 0.0
      %7180 = vmatprep.subr.mxu0 0.0
      %7181 = vmatpush1.msra.mxu0 0.0
      %7182 = vmatprep.subr.mxu0 0.0
      %7183 = vmatpush1.msra.mxu0 0.0
      %7184 = vmatprep.subr.mxu0 0.0
      %7185 = vmatpush1.msra.mxu0 0.0
      %7186 = vmatprep.subr.mxu0 0.0
      %7187 = vmatpush1.msra.mxu0 0.0
      %7188 = vmatprep.mubr.f32.mxu0 0.0
      %7189 = vmatmul.mubr.f32.gmra.mrb[0].mxu0 %v7080
      %v7190 = vpop.f32.mrb[0].mxu0
      %v7191 = vadd.f32 0.0, %v7190
      %v7192 = vpop.f32.mrb[0].mxu0
      %7193 = vmatprep.mubr.f32.mxu0 0.0
      %7194 = vmatmul.mubr.f32.gmra.mrb[0].mxu0 %v7083
      %v7195 = vpop.f32.mrb[0].mxu0
      %v7196 = vadd.f32 0.0, %v7195
      %v7197 = vpop.f32.mrb[0].mxu0
      %7198 = vmatprep.mubr.f32.mxu0 0.0
      %7199 = vmatmul.mubr.f32.gmra.mrb[0].mxu0 %v7086
      %v7200 = vpop.f32.mrb[0].mxu0
      %v7201 = vadd.f32 0.0, %v7200
      %v7202 = vpop.f32.mrb[0].mxu0
      %7203 = vmatprep.mubr.f32.mxu0 0.0
      %7204 = vmatmul.mubr.f32.gmra.mrb[0].mxu0 %v7089
      %v7205 = vpop.f32.mrb[0].mxu0
      %v7206 = vadd.f32 0.0, %v7205
      %v7207 = vpop.f32.mrb[0].mxu0
      %7208 = vmatprep.mubr.f32.mxu0 0.0
      %7209 = vmatmul.mubr.f32.gmra.mrb[0].mxu0 %v7092
      %v7210 = vpop.f32.mrb[0].mxu0
      %v7211 = vadd.f32 0.0, %v7210
      %v7212 = vpop.f32.mrb[0].mxu0
      %7213 = vmatprep.mubr.f32.mxu0 0.0
      %7214 = vmatmul.mubr.f32.gmra.mrb[0].mxu0 %v7095
      %v7215 = vpop.f32.mrb[0].mxu0
      %v7216 = vadd.f32 0.0, %v7215
      %v7217 = vpop.f32.mrb[0].mxu0
      %7218 = vmatprep.mubr.f32.mxu0 0.0
      %7219 = vmatmul.mubr.f32.gmra.mrb[0].mxu0 %v7098
      %v7220 = vpop.f32.mrb[0].mxu0
      %v7221 = vadd.f32 0.0, %v7220
      %v7222 = vpop.f32.mrb[0].mxu0
      %7223 = vmatprep.mubr.f32.mxu0 0.0
      %7224 = vmatmul.mubr.f32.gmra.mrb[0].mxu0 %v7101
      %v7225 = vpop.f32.mrb[0].mxu0
      %v7226 = vadd.f32 0.0, %v7225
      %v7227 = vpop.f32.mrb[0].mxu0
      %7228 = vmatprep.mubr.f32.mxu0 0.0
      %7229 = vmatmul.mubr.f32.gmra.mrb[0].mxu0 %v7104
      %v7230 = vpop.f32.mrb[0].mxu0
      %v7231 = vadd.f32 0.0, %v7230
      %v7232 = vpop.f32.mrb[0].mxu0
      %7233 = vmatprep.mubr.f32.mxu0 0.0
      %7234 = vmatmul.mubr.f32.gmra.mrb[0].mxu0 %v7107
      %v7235 = vpop.f32.mrb[0].mxu0
      %v7236 = vadd.f32 0.0, %v7235
      %v7237 = vpop.f32.mrb[0].mxu0
      %7238 = vmatprep.mubr.f32.mxu0 0.0
      %7239 = vmatmul.mubr.f32.gmra.mrb[0].mxu0 %v7110
      %v7240 = vpop.f32.mrb[0].mxu0
      %v7241 = vadd.f32 0.0, %v7240
      %v7242 = vpop.f32.mrb[0].mxu0
      %7243 = vmatprep.mubr.f32.mxu0 0.0
      %7244 = vmatmul.mubr.f32.gmra.mrb[0].mxu0 %v7113
      %v7245 = vpop.f32.mrb[0].mxu0
      %v7246 = vadd.f32 0.0, %v7245
      %v7247 = vpop.f32.mrb[0].mxu0
      %7248 = vmatprep.mubr.f32.mxu0 0.0
      %7249 = vmatmul.mubr.f32.gmra.mrb[0].mxu0 %v7116
      %v7250 = vpop.f32.mrb[0].mxu0
      %v7251 = vadd.f32 0.0, %v7250
      %v7252 = vpop.f32.mrb[0].mxu0
      %7253 = vmatprep.mubr.f32.mxu0 0.0
      %7254 = vmatmul.mubr.f32.gmra.mrb[0].mxu0 %v7119
      %v7255 = vpop.f32.mrb[0].mxu0
      %v7256 = vadd.f32 0.0, %v7255
      %v7257 = vpop.f32.mrb[0].mxu0
      %7258 = vmatprep.mubr.f32.mxu0 0.0
      %7259 = vmatmul.mubr.f32.gmra.mrb[0].mxu0 %v7122
      %v7260 = vpop.f32.mrb[0].mxu0
      %v7261 = vadd.f32 0.0, %v7260
      %v7262 = vpop.f32.mrb[0].mxu0
      %7263 = vdwg.mxu0
      %7264 = vrot.lane.b32.xlu0 %v5836, 112
      %v7265 = vpop.permute.xlu0 %7264
      %7266 = vrot.lane.b32.xlu0 %v5841, 112
      %v7267 = vpop.permute.xlu0 %7266
      %7268 = vrot.lane.b32.xlu0 %v5846, 112
      %v7269 = vpop.permute.xlu0 %7268
      %7270 = vrot.lane.b32.xlu0 %v5851, 112
      %v7271 = vpop.permute.xlu0 %7270
      %7272 = vrot.lane.b32.xlu0 %v5856, 112
      %v7273 = vpop.permute.xlu0 %7272
      %7274 = vrot.lane.b32.xlu0 %v5861, 112
      %v7275 = vpop.permute.xlu0 %7274
      %7276 = vrot.lane.b32.xlu0 %v5866, 112
      %v7277 = vpop.permute.xlu0 %7276
      %7278 = vrot.lane.b32.xlu0 %v5871, 112
      %v7279 = vpop.permute.xlu0 %7278
      %7280 = vrot.lane.b32.xlu0 %v5876, 112
      %v7281 = vpop.permute.xlu0 %7280
      %7282 = vrot.lane.b32.xlu0 %v5881, 112
      %v7283 = vpop.permute.xlu0 %7282
      %7284 = vrot.lane.b32.xlu0 %v5886, 112
      %v7285 = vpop.permute.xlu0 %7284
      %7286 = vrot.lane.b32.xlu0 %v5891, 112
      %v7287 = vpop.permute.xlu0 %7286
      %7288 = vrot.lane.b32.xlu0 %v5896, 112
      %v7289 = vpop.permute.xlu0 %7288
      %7290 = vrot.lane.b32.xlu0 %v5901, 112
      %v7291 = vpop.permute.xlu0 %7290
      %7292 = vrot.lane.b32.xlu0 %v5906, 112
      %v7293 = vpop.permute.xlu0 %7292
      %7294 = vrot.lane.b32.xlu0 %v5836, 80
      %v7295 = vpop.permute.xlu0 %7294
      %7296 = vrot.lane.b32.xlu0 %v5841, 80
      %v7297 = vpop.permute.xlu0 %7296
      %7298 = vrot.lane.b32.xlu0 %v5846, 80
      %v7299 = vpop.permute.xlu0 %7298
      %7300 = vrot.lane.b32.xlu0 %v5851, 80
      %v7301 = vpop.permute.xlu0 %7300
      %7302 = vrot.lane.b32.xlu0 %v5856, 80
      %v7303 = vpop.permute.xlu0 %7302
      %7304 = vrot.lane.b32.xlu0 %v5861, 80
      %v7305 = vpop.permute.xlu0 %7304
      %7306 = vrot.lane.b32.xlu0 %v5866, 80
      %v7307 = vpop.permute.xlu0 %7306
      %7308 = vrot.lane.b32.xlu0 %v5871, 80
      %v7309 = vpop.permute.xlu0 %7308
      %7310 = vrot.lane.b32.xlu0 %v5876, 80
      %v7311 = vpop.permute.xlu0 %7310
      %7312 = vrot.lane.b32.xlu0 %v5881, 80
      %v7313 = vpop.permute.xlu0 %7312
      %7314 = vrot.lane.b32.xlu0 %v5886, 80
      %v7315 = vpop.permute.xlu0 %7314
      %7316 = vrot.lane.b32.xlu0 %v5891, 80
      %v7317 = vpop.permute.xlu0 %7316
      %7318 = vrot.lane.b32.xlu0 %v5896, 80
      %v7319 = vpop.permute.xlu0 %7318
      %7320 = vrot.lane.b32.xlu0 %v5901, 80
      %v7321 = vpop.permute.xlu0 %7320
      %7322 = vrot.lane.b32.xlu0 %v5906, 80
      %v7323 = vpop.permute.xlu0 %7322
      %v7324 = vsel %vm1534, %v7265, 0
      %v7326 = vsel %vm1534, %v7267, 0
      %v7328 = vsel %vm1534, %v7269, 0
      %v7330 = vsel %vm1534, %v7271, 0
      %v7332 = vsel %vm1534, %v7273, 0
      %v7334 = vsel %vm1534, %v7275, 0
      %v7336 = vsel %vm1534, %v7277, 0
      %v7338 = vsel %vm1534, %v7279, 0
      %v7340 = vsel %vm1534, %v7281, 0
      %v7342 = vsel %vm1534, %v7283, 0
      %v7344 = vsel %vm1534, %v7285, 0
      %v7346 = vsel %vm1534, %v7287, 0
      %v7348 = vsel %vm1534, %v7289, 0
      %v7350 = vsel %vm1534, %v7291, 0
      %v7352 = vsel %vm1534, %v7293, 0
      %v7354 = vsel %vm1534, %v7295, 0
      %v7356 = vsel %vm1534, %v7297, 0
      %v7358 = vsel %vm1534, %v7299, 0
      %v7360 = vsel %vm1534, %v7301, 0
      %v7362 = vsel %vm1534, %v7303, 0
      %v7364 = vsel %vm1534, %v7305, 0
      %v7366 = vsel %vm1534, %v7307, 0
      %v7368 = vsel %vm1534, %v7309, 0
      %v7370 = vsel %vm1534, %v7311, 0
      %v7372 = vsel %vm1534, %v7313, 0
      %v7374 = vsel %vm1534, %v7315, 0
      %v7376 = vsel %vm1534, %v7317, 0
      %v7378 = vsel %vm1534, %v7319, 0
      %v7380 = vsel %vm1534, %v7321, 0
      %v7382 = vsel %vm1534, %v7323, 0
      %7384 = vmatprep.subr.mxu0 0.0
      %7385 = vmatpush1.xpose.msra.mxu0 %v7354
      %7386 = vmatprep.subr.mxu0 0.0
      %7387 = vmatpush1.xpose.msra.mxu0 %v7356
      %7388 = vmatprep.subr.mxu0 0.0
      %7389 = vmatpush1.xpose.msra.mxu0 %v7358
      %7390 = vmatprep.subr.mxu0 0.0
      %7391 = vmatpush1.xpose.msra.mxu0 %v7360
      %7392 = vmatprep.subr.mxu0 0.0
      %7393 = vmatpush1.xpose.msra.mxu0 %v7362
      %7394 = vmatprep.subr.mxu0 0.0
      %7395 = vmatpush1.xpose.msra.mxu0 %v7364
      %7396 = vmatprep.subr.mxu0 0.0
      %7397 = vmatpush1.xpose.msra.mxu0 %v7366
      %7398 = vmatprep.subr.mxu0 0.0
      %7399 = vmatpush1.xpose.msra.mxu0 %v7368
      %7400 = vmatprep.subr.mxu0 0.0
      %7401 = vmatpush1.xpose.msra.mxu0 %v7370
      %7402 = vmatprep.subr.mxu0 0.0
      %7403 = vmatpush1.xpose.msra.mxu0 %v7372
      %7404 = vmatprep.subr.mxu0 0.0
      %7405 = vmatpush1.xpose.msra.mxu0 %v7374
      %7406 = vmatprep.subr.mxu0 0.0
      %7407 = vmatpush1.xpose.msra.mxu0 %v7376
      %7408 = vmatprep.subr.mxu0 0.0
      %7409 = vmatpush1.xpose.msra.mxu0 %v7378
      %7410 = vmatprep.subr.mxu0 0.0
      %7411 = vmatpush1.xpose.msra.mxu0 %v7380
      %7412 = vmatprep.subr.mxu0 0.0
      %7413 = vmatpush1.xpose.msra.mxu0 %v7382
      %7414 = vmatprep.subr.mxu0 0.0
      %7415 = vmatpush1.xpose.msra.mxu0 0.0
      %7416 = vmatprep.subr.mxu0 0.0
      %7417 = vmatpush1.xpose.msra.mxu0 0.0
      %7418 = vmatprep.subr.mxu0 0.0
      %7419 = vmatpush1.xpose.msra.mxu0 0.0
      %7420 = vmatprep.subr.mxu0 0.0
      %7421 = vmatpush1.xpose.msra.mxu0 0.0
      %7422 = vmatprep.subr.mxu0 0.0
      %7423 = vmatpush1.xpose.msra.mxu0 0.0
      %7424 = vmatprep.subr.mxu0 0.0
      %7425 = vmatpush1.xpose.msra.mxu0 0.0
      %7426 = vmatprep.subr.mxu0 0.0
      %7427 = vmatpush1.xpose.msra.mxu0 0.0
      %7428 = vmatprep.subr.mxu0 0.0
      %7429 = vmatpush1.xpose.msra.mxu0 0.0
      %7430 = vmatprep.subr.mxu0 0.0
      %7431 = vmatpush1.xpose.msra.mxu0 0.0
      %7432 = vmatprep.subr.mxu0 0.0
      %7433 = vmatpush1.xpose.msra.mxu0 0.0
      %7434 = vmatprep.subr.mxu0 0.0
      %7435 = vmatpush1.xpose.msra.mxu0 0.0
      %7436 = vmatprep.subr.mxu0 0.0
      %7437 = vmatpush1.xpose.msra.mxu0 0.0
      %7438 = vmatprep.subr.mxu0 0.0
      %7439 = vmatpush1.xpose.msra.mxu0 0.0
      %7440 = vmatprep.subr.mxu0 0.0
      %7441 = vmatpush1.xpose.msra.mxu0 0.0
      %7442 = vmatprep.subr.mxu0 0.0
      %7443 = vmatpush1.xpose.msra.mxu0 0.0
      %7444 = vmatprep.subr.mxu0 0.0
      %7445 = vmatpush1.xpose.msra.mxu0 0.0
      %7446 = vmatprep.subr.mxu0 0.0
      %7447 = vmatpush1.xpose.msra.mxu0 0.0
      %7448 = vmatprep.mubr.f32.mxu0 0.0
      %7449 = vmatmul.mubr.f32.gmra.mrb[0].mxu0 %v7324
      %v7450 = vpop.f32.mrb[0].mxu0
      %v7451 = vadd.f32 0.0, %v7450
      %v7452 = vpop.f32.mrb[0].mxu0
      %7453 = vmatprep.mubr.f32.mxu0 0.0
      %7454 = vmatmul.mubr.f32.gmra.mrb[0].mxu0 %v7326
      %v7455 = vpop.f32.mrb[0].mxu0
      %v7456 = vadd.f32 0.0, %v7455
      %v7457 = vpop.f32.mrb[0].mxu0
      %7458 = vmatprep.mubr.f32.mxu0 0.0
      %7459 = vmatmul.mubr.f32.gmra.mrb[0].mxu0 %v7328
      %v7460 = vpop.f32.mrb[0].mxu0
      %v7461 = vadd.f32 0.0, %v7460
      %v7462 = vpop.f32.mrb[0].mxu0
      %7463 = vmatprep.mubr.f32.mxu0 0.0
      %7464 = vmatmul.mubr.f32.gmra.mrb[0].mxu0 %v7330
      %v7465 = vpop.f32.mrb[0].mxu0
      %v7466 = vadd.f32 0.0, %v7465
      %v7467 = vpop.f32.mrb[0].mxu0
      %7468 = vmatprep.mubr.f32.mxu0 0.0
      %7469 = vmatmul.mubr.f32.gmra.mrb[0].mxu0 %v7332
      %v7470 = vpop.f32.mrb[0].mxu0
      %v7471 = vadd.f32 0.0, %v7470
      %v7472 = vpop.f32.mrb[0].mxu0
      %7473 = vmatprep.mubr.f32.mxu0 0.0
      %7474 = vmatmul.mubr.f32.gmra.mrb[0].mxu0 %v7334
      %v7475 = vpop.f32.mrb[0].mxu0
      %v7476 = vadd.f32 0.0, %v7475
      %v7477 = vpop.f32.mrb[0].mxu0
      %7478 = vmatprep.mubr.f32.mxu0 0.0
      %7479 = vmatmul.mubr.f32.gmra.mrb[0].mxu0 %v7336
      %v7480 = vpop.f32.mrb[0].mxu0
      %v7481 = vadd.f32 0.0, %v7480
      %v7482 = vpop.f32.mrb[0].mxu0
      %7483 = vmatprep.mubr.f32.mxu0 0.0
      %7484 = vmatmul.mubr.f32.gmra.mrb[0].mxu0 %v7338
      %v7485 = vpop.f32.mrb[0].mxu0
      %v7486 = vadd.f32 0.0, %v7485
      %v7487 = vpop.f32.mrb[0].mxu0
      %7488 = vmatprep.mubr.f32.mxu0 0.0
      %7489 = vmatmul.mubr.f32.gmra.mrb[0].mxu0 %v7340
      %v7490 = vpop.f32.mrb[0].mxu0
      %v7491 = vadd.f32 0.0, %v7490
      %v7492 = vpop.f32.mrb[0].mxu0
      %7493 = vmatprep.mubr.f32.mxu0 0.0
      %7494 = vmatmul.mubr.f32.gmra.mrb[0].mxu0 %v7342
      %v7495 = vpop.f32.mrb[0].mxu0
      %v7496 = vadd.f32 0.0, %v7495
      %v7497 = vpop.f32.mrb[0].mxu0
      %7498 = vmatprep.mubr.f32.mxu0 0.0
      %7499 = vmatmul.mubr.f32.gmra.mrb[0].mxu0 %v7344
      %v7500 = vpop.f32.mrb[0].mxu0
      %v7501 = vadd.f32 0.0, %v7500
      %v7502 = vpop.f32.mrb[0].mxu0
      %7503 = vmatprep.mubr.f32.mxu0 0.0
      %7504 = vmatmul.mubr.f32.gmra.mrb[0].mxu0 %v7346
      %v7505 = vpop.f32.mrb[0].mxu0
      %v7506 = vadd.f32 0.0, %v7505
      %v7507 = vpop.f32.mrb[0].mxu0
      %7508 = vmatprep.mubr.f32.mxu0 0.0
      %7509 = vmatmul.mubr.f32.gmra.mrb[0].mxu0 %v7348
      %v7510 = vpop.f32.mrb[0].mxu0
      %v7511 = vadd.f32 0.0, %v7510
      %v7512 = vpop.f32.mrb[0].mxu0
      %7513 = vmatprep.mubr.f32.mxu0 0.0
      %7514 = vmatmul.mubr.f32.gmra.mrb[0].mxu0 %v7350
      %v7515 = vpop.f32.mrb[0].mxu0
      %v7516 = vadd.f32 0.0, %v7515
      %v7517 = vpop.f32.mrb[0].mxu0
      %7518 = vmatprep.mubr.f32.mxu0 0.0
      %7519 = vmatmul.mubr.f32.gmra.mrb[0].mxu0 %v7352
      %v7520 = vpop.f32.mrb[0].mxu0
      %v7521 = vadd.f32 0.0, %v7520
      %v7522 = vpop.f32.mrb[0].mxu0
      %7523 = vdwg.mxu0
      %v7524 = vmul.f32 %v7451, 0.35355338
      %v7525 = vmul.f32 %v7456, 0.35355338
      %v7526 = vmul.f32 %v7461, 0.35355338
      %v7527 = vmul.f32 %v7466, 0.35355338
      %v7528 = vmul.f32 %v7471, 0.35355338
      %v7529 = vmul.f32 %v7476, 0.35355338
      %v7530 = vmul.f32 %v7481, 0.35355338
      %v7531 = vmul.f32 %v7486, 0.35355338
      %v7532 = vmul.f32 %v7491, 0.35355338
      %v7533 = vmul.f32 %v7496, 0.35355338
      %v7534 = vmul.f32 %v7501, 0.35355338
      %v7535 = vmul.f32 %v7506, 0.35355338
      %v7536 = vmul.f32 %v7511, 0.35355338
      %v7537 = vmul.f32 %v7516, 0.35355338
      %v7538 = vmul.f32 %v7521, 0.35355338
      %v7539 = vadd.f32 %v7524, %v1039
      %v7540 = vadd.f32 %v7525, %v1040
      %v7541 = vadd.f32 %v7526, %v1041
      %v7542 = vadd.f32 %v7527, %v1042
      %v7543 = vadd.f32 %v7528, %v1043
      %v7544 = vadd.f32 %v7529, %v1044
      %v7545 = vadd.f32 %v7530, %v1045
      %v7546 = vadd.f32 %v7531, %v1046
      %v7547 = vadd.f32 %v7532, %v1047
      %v7548 = vadd.f32 %v7533, %v1048
      %v7549 = vadd.f32 %v7534, %v1049
      %v7550 = vadd.f32 %v7535, %v1050
      %v7551 = vadd.f32 %v7536, %v1051
      %v7552 = vadd.f32 %v7537, %v1052
      %v7553 = vadd.f32 %v7538, %v1053
      %v7554 = vsel %vm1765, %v7539, -inf
      %7555 = vmax.xlane.f32.xlu0 %v7554
      %v7556 = vpop.xlane.xlu0 %7555
      %v7557 = vsel %vm1765, %v7540, -inf
      %7558 = vmax.xlane.f32.xlu0 %v7557
      %v7559 = vpop.xlane.xlu0 %7558
      %v7560 = vsel %vm1765, %v7541, -inf
      %7561 = vmax.xlane.f32.xlu0 %v7560
      %v7562 = vpop.xlane.xlu0 %7561
      %v7563 = vsel %vm1765, %v7542, -inf
      %7564 = vmax.xlane.f32.xlu0 %v7563
      %v7565 = vpop.xlane.xlu0 %7564
      %v7566 = vsel %vm1765, %v7543, -inf
      %7567 = vmax.xlane.f32.xlu0 %v7566
      %v7568 = vpop.xlane.xlu0 %7567
      %v7569 = vsel %vm1765, %v7544, -inf
      %7570 = vmax.xlane.f32.xlu0 %v7569
      %v7571 = vpop.xlane.xlu0 %7570
      %v7572 = vsel %vm1765, %v7545, -inf
      %7573 = vmax.xlane.f32.xlu0 %v7572
      %v7574 = vpop.xlane.xlu0 %7573
      %v7575 = vsel %vm1765, %v7546, -inf
      %7576 = vmax.xlane.f32.xlu0 %v7575
      %v7577 = vpop.xlane.xlu0 %7576
      %v7578 = vsel %vm1765, %v7547, -inf
      %7579 = vmax.xlane.f32.xlu0 %v7578
      %v7580 = vpop.xlane.xlu0 %7579
      %v7581 = vsel %vm1765, %v7548, -inf
      %7582 = vmax.xlane.f32.xlu0 %v7581
      %v7583 = vpop.xlane.xlu0 %7582
      %v7584 = vsel %vm1765, %v7549, -inf
      %7585 = vmax.xlane.f32.xlu0 %v7584
      %v7586 = vpop.xlane.xlu0 %7585
      %v7587 = vsel %vm1765, %v7550, -inf
      %7588 = vmax.xlane.f32.xlu0 %v7587
      %v7589 = vpop.xlane.xlu0 %7588
      %v7590 = vsel %vm1765, %v7551, -inf
      %7591 = vmax.xlane.f32.xlu0 %v7590
      %v7592 = vpop.xlane.xlu0 %7591
      %v7593 = vsel %vm1765, %v7552, -inf
      %7594 = vmax.xlane.f32.xlu0 %v7593
      %v7595 = vpop.xlane.xlu0 %7594
      %v7596 = vsel %vm1765, %v7553, -inf
      %7597 = vmax.xlane.f32.xlu0 %v7596
      %v7598 = vpop.xlane.xlu0 %7597
      %v7599 = vsub.f32 %v7539, %v7556
      %v7600 = vsub.f32 %v7540, %v7559
      %v7601 = vsub.f32 %v7541, %v7562
      %v7602 = vsub.f32 %v7542, %v7565
      %v7603 = vsub.f32 %v7543, %v7568
      %v7604 = vsub.f32 %v7544, %v7571
      %v7605 = vsub.f32 %v7545, %v7574
      %v7606 = vsub.f32 %v7546, %v7577
      %v7607 = vsub.f32 %v7547, %v7580
      %v7608 = vsub.f32 %v7548, %v7583
      %v7609 = vsub.f32 %v7549, %v7586
      %v7610 = vsub.f32 %v7550, %v7589
      %v7611 = vsub.f32 %v7551, %v7592
      %v7612 = vsub.f32 %v7552, %v7595
      %v7613 = vsub.f32 %v7553, %v7598
      %v7614 = vmul.f32 %v7599, 1.442695
      %v7615 = vpow.pop %v7614
      %v7616 = vmul.f32 %v7600, 1.442695
      %v7617 = vpow.pop %v7616
      %v7618 = vmul.f32 %v7601, 1.442695
      %v7619 = vpow.pop %v7618
      %v7620 = vmul.f32 %v7602, 1.442695
      %v7621 = vpow.pop %v7620
      %v7622 = vmul.f32 %v7603, 1.442695
      %v7623 = vpow.pop %v7622
      %v7624 = vmul.f32 %v7604, 1.442695
      %v7625 = vpow.pop %v7624
      %v7626 = vmul.f32 %v7605, 1.442695
      %v7627 = vpow.pop %v7626
      %v7628 = vmul.f32 %v7606, 1.442695
      %v7629 = vpow.pop %v7628
      %v7630 = vmul.f32 %v7607, 1.442695
      %v7631 = vpow.pop %v7630
      %v7632 = vmul.f32 %v7608, 1.442695
      %v7633 = vpow.pop %v7632
      %v7634 = vmul.f32 %v7609, 1.442695
      %v7635 = vpow.pop %v7634
      %v7636 = vmul.f32 %v7610, 1.442695
      %v7637 = vpow.pop %v7636
      %v7638 = vmul.f32 %v7611, 1.442695
      %v7639 = vpow.pop %v7638
      %v7640 = vmul.f32 %v7612, 1.442695
      %v7641 = vpow.pop %v7640
      %v7642 = vmul.f32 %v7613, 1.442695
      %v7643 = vpow.pop %v7642
      %v7644 = vsel %vm1765, %v7615, 0.0
      %7645 = vadd.xlane.f32.xlu0 %v7644
      %v7646 = vpop.xlane.xlu0 %7645
      %v7647 = vsel %vm1765, %v7617, 0.0
      %7648 = vadd.xlane.f32.xlu0 %v7647
      %v7649 = vpop.xlane.xlu0 %7648
      %v7650 = vsel %vm1765, %v7619, 0.0
      %7651 = vadd.xlane.f32.xlu0 %v7650
      %v7652 = vpop.xlane.xlu0 %7651
      %v7653 = vsel %vm1765, %v7621, 0.0
      %7654 = vadd.xlane.f32.xlu0 %v7653
      %v7655 = vpop.xlane.xlu0 %7654
      %v7656 = vsel %vm1765, %v7623, 0.0
      %7657 = vadd.xlane.f32.xlu0 %v7656
      %v7658 = vpop.xlane.xlu0 %7657
      %v7659 = vsel %vm1765, %v7625, 0.0
      %7660 = vadd.xlane.f32.xlu0 %v7659
      %v7661 = vpop.xlane.xlu0 %7660
      %v7662 = vsel %vm1765, %v7627, 0.0
      %7663 = vadd.xlane.f32.xlu0 %v7662
      %v7664 = vpop.xlane.xlu0 %7663
      %v7665 = vsel %vm1765, %v7629, 0.0
      %7666 = vadd.xlane.f32.xlu0 %v7665
      %v7667 = vpop.xlane.xlu0 %7666
      %v7668 = vsel %vm1765, %v7631, 0.0
      %7669 = vadd.xlane.f32.xlu0 %v7668
      %v7670 = vpop.xlane.xlu0 %7669
      %v7671 = vsel %vm1765, %v7633, 0.0
      %7672 = vadd.xlane.f32.xlu0 %v7671
      %v7673 = vpop.xlane.xlu0 %7672
      %v7674 = vsel %vm1765, %v7635, 0.0
      %7675 = vadd.xlane.f32.xlu0 %v7674
      %v7676 = vpop.xlane.xlu0 %7675
      %v7677 = vsel %vm1765, %v7637, 0.0
      %7678 = vadd.xlane.f32.xlu0 %v7677
      %v7679 = vpop.xlane.xlu0 %7678
      %v7680 = vsel %vm1765, %v7639, 0.0
      %7681 = vadd.xlane.f32.xlu0 %v7680
      %v7682 = vpop.xlane.xlu0 %7681
      %v7683 = vsel %vm1765, %v7641, 0.0
      %7684 = vadd.xlane.f32.xlu0 %v7683
      %v7685 = vpop.xlane.xlu0 %7684
      %v7686 = vsel %vm1765, %v7643, 0.0
      %7687 = vadd.xlane.f32.xlu0 %v7686
      %v7688 = vpop.xlane.xlu0 %7687
      %v7689 = vrcp.pop %v7646
      %v7690 = vrcp.pop %v7649
      %v7691 = vrcp.pop %v7652
      %v7692 = vrcp.pop %v7655
      %v7693 = vrcp.pop %v7658
      %v7694 = vrcp.pop %v7661
      %v7695 = vrcp.pop %v7664
      %v7696 = vrcp.pop %v7667
      %v7697 = vrcp.pop %v7670
      %v7698 = vrcp.pop %v7673
      %v7699 = vrcp.pop %v7676
      %v7700 = vrcp.pop %v7679
      %v7701 = vrcp.pop %v7682
      %v7702 = vrcp.pop %v7685
      %v7703 = vrcp.pop %v7688
      %v7704 = vmul.f32 %v7615, %v7689
      %v7705 = vmul.f32 %v7617, %v7690
      %v7706 = vmul.f32 %v7619, %v7691
      %v7707 = vmul.f32 %v7621, %v7692
      %v7708 = vmul.f32 %v7623, %v7693
      %v7709 = vmul.f32 %v7625, %v7694
      %v7710 = vmul.f32 %v7627, %v7695
      %v7711 = vmul.f32 %v7629, %v7696
      %v7712 = vmul.f32 %v7631, %v7697
      %v7713 = vmul.f32 %v7633, %v7698
      %v7714 = vmul.f32 %v7635, %v7699
      %v7715 = vmul.f32 %v7637, %v7700
      %v7716 = vmul.f32 %v7639, %v7701
      %v7717 = vmul.f32 %v7641, %v7702
      %v7718 = vmul.f32 %v7643, %v7703
      %7719 = vrot.lane.b32.xlu0 %v5836, 48
      %v7720 = vpop.permute.xlu0 %7719
      %7721 = vrot.lane.b32.xlu0 %v5841, 48
      %v7722 = vpop.permute.xlu0 %7721
      %7723 = vrot.lane.b32.xlu0 %v5846, 48
      %v7724 = vpop.permute.xlu0 %7723
      %7725 = vrot.lane.b32.xlu0 %v5851, 48
      %v7726 = vpop.permute.xlu0 %7725
      %7727 = vrot.lane.b32.xlu0 %v5856, 48
      %v7728 = vpop.permute.xlu0 %7727
      %7729 = vrot.lane.b32.xlu0 %v5861, 48
      %v7730 = vpop.permute.xlu0 %7729
      %7731 = vrot.lane.b32.xlu0 %v5866, 48
      %v7732 = vpop.permute.xlu0 %7731
      %7733 = vrot.lane.b32.xlu0 %v5871, 48
      %v7734 = vpop.permute.xlu0 %7733
      %7735 = vrot.lane.b32.xlu0 %v5876, 48
      %v7736 = vpop.permute.xlu0 %7735
      %7737 = vrot.lane.b32.xlu0 %v5881, 48
      %v7738 = vpop.permute.xlu0 %7737
      %7739 = vrot.lane.b32.xlu0 %v5886, 48
      %v7740 = vpop.permute.xlu0 %7739
      %7741 = vrot.lane.b32.xlu0 %v5891, 48
      %v7742 = vpop.permute.xlu0 %7741
      %7743 = vrot.lane.b32.xlu0 %v5896, 48
      %v7744 = vpop.permute.xlu0 %7743
      %7745 = vrot.lane.b32.xlu0 %v5901, 48
      %v7746 = vpop.permute.xlu0 %7745
      %7747 = vrot.lane.b32.xlu0 %v5906, 48
      %v7748 = vpop.permute.xlu0 %7747
      %v7765 = vsel %vm1765, %v7704, 0
      %v7768 = vsel %vm1765, %v7705, 0
      %v7771 = vsel %vm1765, %v7706, 0
      %v7774 = vsel %vm1765, %v7707, 0
      %v7777 = vsel %vm1765, %v7708, 0
      %v7780 = vsel %vm1765, %v7709, 0
      %v7783 = vsel %vm1765, %v7710, 0
      %v7786 = vsel %vm1765, %v7711, 0
      %v7789 = vsel %vm1765, %v7712, 0
      %v7792 = vsel %vm1765, %v7713, 0
      %v7795 = vsel %vm1765, %v7714, 0
      %v7798 = vsel %vm1765, %v7715, 0
      %v7801 = vsel %vm1765, %v7716, 0
      %v7804 = vsel %vm1765, %v7717, 0
      %v7807 = vsel %vm1765, %v7718, 0
      %7809 = vmatprep.subr.mxu0 0.0
      %7810 = vmatpush1.msra.mxu0 %v7720
      %7811 = vmatprep.subr.mxu0 0.0
      %7812 = vmatpush1.msra.mxu0 %v7722
      %7813 = vmatprep.subr.mxu0 0.0
      %7814 = vmatpush1.msra.mxu0 %v7724
      %7815 = vmatprep.subr.mxu0 0.0
      %7816 = vmatpush1.msra.mxu0 %v7726
      %7817 = vmatprep.subr.mxu0 0.0
      %7818 = vmatpush1.msra.mxu0 %v7728
      %7819 = vmatprep.subr.mxu0 0.0
      %7820 = vmatpush1.msra.mxu0 %v7730
      %7821 = vmatprep.subr.mxu0 0.0
      %7822 = vmatpush1.msra.mxu0 %v7732
      %7823 = vmatprep.subr.mxu0 0.0
      %7824 = vmatpush1.msra.mxu0 %v7734
      %7825 = vmatprep.subr.mxu0 0.0
      %7826 = vmatpush1.msra.mxu0 %v7736
      %7827 = vmatprep.subr.mxu0 0.0
      %7828 = vmatpush1.msra.mxu0 %v7738
      %7829 = vmatprep.subr.mxu0 0.0
      %7830 = vmatpush1.msra.mxu0 %v7740
      %7831 = vmatprep.subr.mxu0 0.0
      %7832 = vmatpush1.msra.mxu0 %v7742
      %7833 = vmatprep.subr.mxu0 0.0
      %7834 = vmatpush1.msra.mxu0 %v7744
      %7835 = vmatprep.subr.mxu0 0.0
      %7836 = vmatpush1.msra.mxu0 %v7746
      %7837 = vmatprep.subr.mxu0 0.0
      %7838 = vmatpush1.msra.mxu0 %v7748
      %7839 = vmatprep.subr.mxu0 0.0
      %7840 = vmatpush1.msra.mxu0 0.0
      %7841 = vmatprep.subr.mxu0 0.0
      %7842 = vmatpush1.msra.mxu0 0.0
      %7843 = vmatprep.subr.mxu0 0.0
      %7844 = vmatpush1.msra.mxu0 0.0
      %7845 = vmatprep.subr.mxu0 0.0
      %7846 = vmatpush1.msra.mxu0 0.0
      %7847 = vmatprep.subr.mxu0 0.0
      %7848 = vmatpush1.msra.mxu0 0.0
      %7849 = vmatprep.subr.mxu0 0.0
      %7850 = vmatpush1.msra.mxu0 0.0
      %7851 = vmatprep.subr.mxu0 0.0
      %7852 = vmatpush1.msra.mxu0 0.0
      %7853 = vmatprep.subr.mxu0 0.0
      %7854 = vmatpush1.msra.mxu0 0.0
      %7855 = vmatprep.subr.mxu0 0.0
      %7856 = vmatpush1.msra.mxu0 0.0
      %7857 = vmatprep.subr.mxu0 0.0
      %7858 = vmatpush1.msra.mxu0 0.0
      %7859 = vmatprep.subr.mxu0 0.0
      %7860 = vmatpush1.msra.mxu0 0.0
      %7861 = vmatprep.subr.mxu0 0.0
      %7862 = vmatpush1.msra.mxu0 0.0
      %7863 = vmatprep.subr.mxu0 0.0
      %7864 = vmatpush1.msra.mxu0 0.0
      %7865 = vmatprep.subr.mxu0 0.0
      %7866 = vmatpush1.msra.mxu0 0.0
      %7867 = vmatprep.subr.mxu0 0.0
      %7868 = vmatpush1.msra.mxu0 0.0
      %7869 = vmatprep.subr.mxu0 0.0
      %7870 = vmatpush1.msra.mxu0 0.0
      %7871 = vmatprep.subr.mxu0 0.0
      %7872 = vmatpush1.msra.mxu0 0.0
      %7873 = vmatprep.mubr.f32.mxu0 0.0
      %7874 = vmatmul.mubr.f32.gmra.mrb[0].mxu0 %v7765
      %v7875 = vpop.f32.mrb[0].mxu0
      %v7876 = vadd.f32 0.0, %v7875
      %v7877 = vpop.f32.mrb[0].mxu0
      %7878 = vmatprep.mubr.f32.mxu0 0.0
      %7879 = vmatmul.mubr.f32.gmra.mrb[0].mxu0 %v7768
      %v7880 = vpop.f32.mrb[0].mxu0
      %v7881 = vadd.f32 0.0, %v7880
      %v7882 = vpop.f32.mrb[0].mxu0
      %7883 = vmatprep.mubr.f32.mxu0 0.0
      %7884 = vmatmul.mubr.f32.gmra.mrb[0].mxu0 %v7771
      %v7885 = vpop.f32.mrb[0].mxu0
      %v7886 = vadd.f32 0.0, %v7885
      %v7887 = vpop.f32.mrb[0].mxu0
      %7888 = vmatprep.mubr.f32.mxu0 0.0
      %7889 = vmatmul.mubr.f32.gmra.mrb[0].mxu0 %v7774
      %v7890 = vpop.f32.mrb[0].mxu0
      %v7891 = vadd.f32 0.0, %v7890
      %v7892 = vpop.f32.mrb[0].mxu0
      %7893 = vmatprep.mubr.f32.mxu0 0.0
      %7894 = vmatmul.mubr.f32.gmra.mrb[0].mxu0 %v7777
      %v7895 = vpop.f32.mrb[0].mxu0
      %v7896 = vadd.f32 0.0, %v7895
      %v7897 = vpop.f32.mrb[0].mxu0
      %7898 = vmatprep.mubr.f32.mxu0 0.0
      %7899 = vmatmul.mubr.f32.gmra.mrb[0].mxu0 %v7780
      %v7900 = vpop.f32.mrb[0].mxu0
      %v7901 = vadd.f32 0.0, %v7900
      %v7902 = vpop.f32.mrb[0].mxu0
      %7903 = vmatprep.mubr.f32.mxu0 0.0
      %7904 = vmatmul.mubr.f32.gmra.mrb[0].mxu0 %v7783
      %v7905 = vpop.f32.mrb[0].mxu0
      %v7906 = vadd.f32 0.0, %v7905
      %v7907 = vpop.f32.mrb[0].mxu0
      %7908 = vmatprep.mubr.f32.mxu0 0.0
      %7909 = vmatmul.mubr.f32.gmra.mrb[0].mxu0 %v7786
      %v7910 = vpop.f32.mrb[0].mxu0
      %v7911 = vadd.f32 0.0, %v7910
      %v7912 = vpop.f32.mrb[0].mxu0
      %7913 = vmatprep.mubr.f32.mxu0 0.0
      %7914 = vmatmul.mubr.f32.gmra.mrb[0].mxu0 %v7789
      %v7915 = vpop.f32.mrb[0].mxu0
      %v7916 = vadd.f32 0.0, %v7915
      %v7917 = vpop.f32.mrb[0].mxu0
      %7918 = vmatprep.mubr.f32.mxu0 0.0
      %7919 = vmatmul.mubr.f32.gmra.mrb[0].mxu0 %v7792
      %v7920 = vpop.f32.mrb[0].mxu0
      %v7921 = vadd.f32 0.0, %v7920
      %v7922 = vpop.f32.mrb[0].mxu0
      %7923 = vmatprep.mubr.f32.mxu0 0.0
      %7924 = vmatmul.mubr.f32.gmra.mrb[0].mxu0 %v7795
      %v7925 = vpop.f32.mrb[0].mxu0
      %v7926 = vadd.f32 0.0, %v7925
      %v7927 = vpop.f32.mrb[0].mxu0
      %7928 = vmatprep.mubr.f32.mxu0 0.0
      %7929 = vmatmul.mubr.f32.gmra.mrb[0].mxu0 %v7798
      %v7930 = vpop.f32.mrb[0].mxu0
      %v7931 = vadd.f32 0.0, %v7930
      %v7932 = vpop.f32.mrb[0].mxu0
      %7933 = vmatprep.mubr.f32.mxu0 0.0
      %7934 = vmatmul.mubr.f32.gmra.mrb[0].mxu0 %v7801
      %v7935 = vpop.f32.mrb[0].mxu0
      %v7936 = vadd.f32 0.0, %v7935
      %v7937 = vpop.f32.mrb[0].mxu0
      %7938 = vmatprep.mubr.f32.mxu0 0.0
      %7939 = vmatmul.mubr.f32.gmra.mrb[0].mxu0 %v7804
      %v7940 = vpop.f32.mrb[0].mxu0
      %v7941 = vadd.f32 0.0, %v7940
      %v7942 = vpop.f32.mrb[0].mxu0
      %7943 = vmatprep.mubr.f32.mxu0 0.0
      %7944 = vmatmul.mubr.f32.gmra.mrb[0].mxu0 %v7807
      %v7945 = vpop.f32.mrb[0].mxu0
      %v7946 = vadd.f32 0.0, %v7945
      %v7947 = vpop.f32.mrb[0].mxu0
      %7948 = vdwg.mxu0
      %7949 = vrot.lane.b32.xlu0 %v5836, 104
      %v7950 = vpop.permute.xlu0 %7949
      %7951 = vrot.lane.b32.xlu0 %v5841, 104
      %v7952 = vpop.permute.xlu0 %7951
      %7953 = vrot.lane.b32.xlu0 %v5846, 104
      %v7954 = vpop.permute.xlu0 %7953
      %7955 = vrot.lane.b32.xlu0 %v5851, 104
      %v7956 = vpop.permute.xlu0 %7955
      %7957 = vrot.lane.b32.xlu0 %v5856, 104
      %v7958 = vpop.permute.xlu0 %7957
      %7959 = vrot.lane.b32.xlu0 %v5861, 104
      %v7960 = vpop.permute.xlu0 %7959
      %7961 = vrot.lane.b32.xlu0 %v5866, 104
      %v7962 = vpop.permute.xlu0 %7961
      %7963 = vrot.lane.b32.xlu0 %v5871, 104
      %v7964 = vpop.permute.xlu0 %7963
      %7965 = vrot.lane.b32.xlu0 %v5876, 104
      %v7966 = vpop.permute.xlu0 %7965
      %7967 = vrot.lane.b32.xlu0 %v5881, 104
      %v7968 = vpop.permute.xlu0 %7967
      %7969 = vrot.lane.b32.xlu0 %v5886, 104
      %v7970 = vpop.permute.xlu0 %7969
      %7971 = vrot.lane.b32.xlu0 %v5891, 104
      %v7972 = vpop.permute.xlu0 %7971
      %7973 = vrot.lane.b32.xlu0 %v5896, 104
      %v7974 = vpop.permute.xlu0 %7973
      %7975 = vrot.lane.b32.xlu0 %v5901, 104
      %v7976 = vpop.permute.xlu0 %7975
      %7977 = vrot.lane.b32.xlu0 %v5906, 104
      %v7978 = vpop.permute.xlu0 %7977
      %7979 = vrot.lane.b32.xlu0 %v5836, 72
      %v7980 = vpop.permute.xlu0 %7979
      %7981 = vrot.lane.b32.xlu0 %v5841, 72
      %v7982 = vpop.permute.xlu0 %7981
      %7983 = vrot.lane.b32.xlu0 %v5846, 72
      %v7984 = vpop.permute.xlu0 %7983
      %7985 = vrot.lane.b32.xlu0 %v5851, 72
      %v7986 = vpop.permute.xlu0 %7985
      %7987 = vrot.lane.b32.xlu0 %v5856, 72
      %v7988 = vpop.permute.xlu0 %7987
      %7989 = vrot.lane.b32.xlu0 %v5861, 72
      %v7990 = vpop.permute.xlu0 %7989
      %7991 = vrot.lane.b32.xlu0 %v5866, 72
      %v7992 = vpop.permute.xlu0 %7991
      %7993 = vrot.lane.b32.xlu0 %v5871, 72
      %v7994 = vpop.permute.xlu0 %7993
      %7995 = vrot.lane.b32.xlu0 %v5876, 72
      %v7996 = vpop.permute.xlu0 %7995
      %7997 = vrot.lane.b32.xlu0 %v5881, 72
      %v7998 = vpop.permute.xlu0 %7997
      %7999 = vrot.lane.b32.xlu0 %v5886, 72
      %v8000 = vpop.permute.xlu0 %7999
      %8001 = vrot.lane.b32.xlu0 %v5891, 72
      %v8002 = vpop.permute.xlu0 %8001
      %8003 = vrot.lane.b32.xlu0 %v5896, 72
      %v8004 = vpop.permute.xlu0 %8003
      %8005 = vrot.lane.b32.xlu0 %v5901, 72
      %v8006 = vpop.permute.xlu0 %8005
      %8007 = vrot.lane.b32.xlu0 %v5906, 72
      %v8008 = vpop.permute.xlu0 %8007
      %v8009 = vsel %vm1534, %v7950, 0
      %v8011 = vsel %vm1534, %v7952, 0
      %v8013 = vsel %vm1534, %v7954, 0
      %v8015 = vsel %vm1534, %v7956, 0
      %v8017 = vsel %vm1534, %v7958, 0
      %v8019 = vsel %vm1534, %v7960, 0
      %v8021 = vsel %vm1534, %v7962, 0
      %v8023 = vsel %vm1534, %v7964, 0
      %v8025 = vsel %vm1534, %v7966, 0
      %v8027 = vsel %vm1534, %v7968, 0
      %v8029 = vsel %vm1534, %v7970, 0
      %v8031 = vsel %vm1534, %v7972, 0
      %v8033 = vsel %vm1534, %v7974, 0
      %v8035 = vsel %vm1534, %v7976, 0
      %v8037 = vsel %vm1534, %v7978, 0
      %v8039 = vsel %vm1534, %v7980, 0
      %v8041 = vsel %vm1534, %v7982, 0
      %v8043 = vsel %vm1534, %v7984, 0
      %v8045 = vsel %vm1534, %v7986, 0
      %v8047 = vsel %vm1534, %v7988, 0
      %v8049 = vsel %vm1534, %v7990, 0
      %v8051 = vsel %vm1534, %v7992, 0
      %v8053 = vsel %vm1534, %v7994, 0
      %v8055 = vsel %vm1534, %v7996, 0
      %v8057 = vsel %vm1534, %v7998, 0
      %v8059 = vsel %vm1534, %v8000, 0
      %v8061 = vsel %vm1534, %v8002, 0
      %v8063 = vsel %vm1534, %v8004, 0
      %v8065 = vsel %vm1534, %v8006, 0
      %v8067 = vsel %vm1534, %v8008, 0
      %8069 = vmatprep.subr.mxu0 0.0
      %8070 = vmatpush1.xpose.msra.mxu0 %v8039
      %8071 = vmatprep.subr.mxu0 0.0
      %8072 = vmatpush1.xpose.msra.mxu0 %v8041
      %8073 = vmatprep.subr.mxu0 0.0
      %8074 = vmatpush1.xpose.msra.mxu0 %v8043
      %8075 = vmatprep.subr.mxu0 0.0
      %8076 = vmatpush1.xpose.msra.mxu0 %v8045
      %8077 = vmatprep.subr.mxu0 0.0
      %8078 = vmatpush1.xpose.msra.mxu0 %v8047
      %8079 = vmatprep.subr.mxu0 0.0
      %8080 = vmatpush1.xpose.msra.mxu0 %v8049
      %8081 = vmatprep.subr.mxu0 0.0
      %8082 = vmatpush1.xpose.msra.mxu0 %v8051
      %8083 = vmatprep.subr.mxu0 0.0
      %8084 = vmatpush1.xpose.msra.mxu0 %v8053
      %8085 = vmatprep.subr.mxu0 0.0
      %8086 = vmatpush1.xpose.msra.mxu0 %v8055
      %8087 = vmatprep.subr.mxu0 0.0
      %8088 = vmatpush1.xpose.msra.mxu0 %v8057
      %8089 = vmatprep.subr.mxu0 0.0
      %8090 = vmatpush1.xpose.msra.mxu0 %v8059
      %8091 = vmatprep.subr.mxu0 0.0
      %8092 = vmatpush1.xpose.msra.mxu0 %v8061
      %8093 = vmatprep.subr.mxu0 0.0
      %8094 = vmatpush1.xpose.msra.mxu0 %v8063
      %8095 = vmatprep.subr.mxu0 0.0
      %8096 = vmatpush1.xpose.msra.mxu0 %v8065
      %8097 = vmatprep.subr.mxu0 0.0
      %8098 = vmatpush1.xpose.msra.mxu0 %v8067
      %8099 = vmatprep.subr.mxu0 0.0
      %8100 = vmatpush1.xpose.msra.mxu0 0.0
      %8101 = vmatprep.subr.mxu0 0.0
      %8102 = vmatpush1.xpose.msra.mxu0 0.0
      %8103 = vmatprep.subr.mxu0 0.0
      %8104 = vmatpush1.xpose.msra.mxu0 0.0
      %8105 = vmatprep.subr.mxu0 0.0
      %8106 = vmatpush1.xpose.msra.mxu0 0.0
      %8107 = vmatprep.subr.mxu0 0.0
      %8108 = vmatpush1.xpose.msra.mxu0 0.0
      %8109 = vmatprep.subr.mxu0 0.0
      %8110 = vmatpush1.xpose.msra.mxu0 0.0
      %8111 = vmatprep.subr.mxu0 0.0
      %8112 = vmatpush1.xpose.msra.mxu0 0.0
      %8113 = vmatprep.subr.mxu0 0.0
      %8114 = vmatpush1.xpose.msra.mxu0 0.0
      %8115 = vmatprep.subr.mxu0 0.0
      %8116 = vmatpush1.xpose.msra.mxu0 0.0
      %8117 = vmatprep.subr.mxu0 0.0
      %8118 = vmatpush1.xpose.msra.mxu0 0.0
      %8119 = vmatprep.subr.mxu0 0.0
      %8120 = vmatpush1.xpose.msra.mxu0 0.0
      %8121 = vmatprep.subr.mxu0 0.0
      %8122 = vmatpush1.xpose.msra.mxu0 0.0
      %8123 = vmatprep.subr.mxu0 0.0
      %8124 = vmatpush1.xpose.msra.mxu0 0.0
      %8125 = vmatprep.subr.mxu0 0.0
      %8126 = vmatpush1.xpose.msra.mxu0 0.0
      %8127 = vmatprep.subr.mxu0 0.0
      %8128 = vmatpush1.xpose.msra.mxu0 0.0
      %8129 = vmatprep.subr.mxu0 0.0
      %8130 = vmatpush1.xpose.msra.mxu0 0.0
      %8131 = vmatprep.subr.mxu0 0.0
      %8132 = vmatpush1.xpose.msra.mxu0 0.0
      %8133 = vmatprep.mubr.f32.mxu0 0.0
      %8134 = vmatmul.mubr.f32.gmra.mrb[0].mxu0 %v8009
      %v8135 = vpop.f32.mrb[0].mxu0
      %v8136 = vadd.f32 0.0, %v8135
      %v8137 = vpop.f32.mrb[0].mxu0
      %8138 = vmatprep.mubr.f32.mxu0 0.0
      %8139 = vmatmul.mubr.f32.gmra.mrb[0].mxu0 %v8011
      %v8140 = vpop.f32.mrb[0].mxu0
      %v8141 = vadd.f32 0.0, %v8140
      %v8142 = vpop.f32.mrb[0].mxu0
      %8143 = vmatprep.mubr.f32.mxu0 0.0
      %8144 = vmatmul.mubr.f32.gmra.mrb[0].mxu0 %v8013
      %v8145 = vpop.f32.mrb[0].mxu0
      %v8146 = vadd.f32 0.0, %v8145
      %v8147 = vpop.f32.mrb[0].mxu0
      %8148 = vmatprep.mubr.f32.mxu0 0.0
      %8149 = vmatmul.mubr.f32.gmra.mrb[0].mxu0 %v8015
      %v8150 = vpop.f32.mrb[0].mxu0
      %v8151 = vadd.f32 0.0, %v8150
      %v8152 = vpop.f32.mrb[0].mxu0
      %8153 = vmatprep.mubr.f32.mxu0 0.0
      %8154 = vmatmul.mubr.f32.gmra.mrb[0].mxu0 %v8017
      %v8155 = vpop.f32.mrb[0].mxu0
      %v8156 = vadd.f32 0.0, %v8155
      %v8157 = vpop.f32.mrb[0].mxu0
      %8158 = vmatprep.mubr.f32.mxu0 0.0
      %8159 = vmatmul.mubr.f32.gmra.mrb[0].mxu0 %v8019
      %v8160 = vpop.f32.mrb[0].mxu0
      %v8161 = vadd.f32 0.0, %v8160
      %v8162 = vpop.f32.mrb[0].mxu0
      %8163 = vmatprep.mubr.f32.mxu0 0.0
      %8164 = vmatmul.mubr.f32.gmra.mrb[0].mxu0 %v8021
      %v8165 = vpop.f32.mrb[0].mxu0
      %v8166 = vadd.f32 0.0, %v8165
      %v8167 = vpop.f32.mrb[0].mxu0
      %8168 = vmatprep.mubr.f32.mxu0 0.0
      %8169 = vmatmul.mubr.f32.gmra.mrb[0].mxu0 %v8023
      %v8170 = vpop.f32.mrb[0].mxu0
      %v8171 = vadd.f32 0.0, %v8170
      %v8172 = vpop.f32.mrb[0].mxu0
      %8173 = vmatprep.mubr.f32.mxu0 0.0
      %8174 = vmatmul.mubr.f32.gmra.mrb[0].mxu0 %v8025
      %v8175 = vpop.f32.mrb[0].mxu0
      %v8176 = vadd.f32 0.0, %v8175
      %v8177 = vpop.f32.mrb[0].mxu0
      %8178 = vmatprep.mubr.f32.mxu0 0.0
      %8179 = vmatmul.mubr.f32.gmra.mrb[0].mxu0 %v8027
      %v8180 = vpop.f32.mrb[0].mxu0
      %v8181 = vadd.f32 0.0, %v8180
      %v8182 = vpop.f32.mrb[0].mxu0
      %8183 = vmatprep.mubr.f32.mxu0 0.0
      %8184 = vmatmul.mubr.f32.gmra.mrb[0].mxu0 %v8029
      %v8185 = vpop.f32.mrb[0].mxu0
      %v8186 = vadd.f32 0.0, %v8185
      %v8187 = vpop.f32.mrb[0].mxu0
      %8188 = vmatprep.mubr.f32.mxu0 0.0
      %8189 = vmatmul.mubr.f32.gmra.mrb[0].mxu0 %v8031
      %v8190 = vpop.f32.mrb[0].mxu0
      %v8191 = vadd.f32 0.0, %v8190
      %v8192 = vpop.f32.mrb[0].mxu0
      %8193 = vmatprep.mubr.f32.mxu0 0.0
      %8194 = vmatmul.mubr.f32.gmra.mrb[0].mxu0 %v8033
      %v8195 = vpop.f32.mrb[0].mxu0
      %v8196 = vadd.f32 0.0, %v8195
      %v8197 = vpop.f32.mrb[0].mxu0
      %8198 = vmatprep.mubr.f32.mxu0 0.0
      %8199 = vmatmul.mubr.f32.gmra.mrb[0].mxu0 %v8035
      %v8200 = vpop.f32.mrb[0].mxu0
      %v8201 = vadd.f32 0.0, %v8200
      %v8202 = vpop.f32.mrb[0].mxu0
      %8203 = vmatprep.mubr.f32.mxu0 0.0
      %8204 = vmatmul.mubr.f32.gmra.mrb[0].mxu0 %v8037
      %v8205 = vpop.f32.mrb[0].mxu0
      %v8206 = vadd.f32 0.0, %v8205
      %v8207 = vpop.f32.mrb[0].mxu0
      %8208 = vdwg.mxu0
      %v8209 = vmul.f32 %v8136, 0.35355338
      %v8210 = vmul.f32 %v8141, 0.35355338
      %v8211 = vmul.f32 %v8146, 0.35355338
      %v8212 = vmul.f32 %v8151, 0.35355338
      %v8213 = vmul.f32 %v8156, 0.35355338
      %v8214 = vmul.f32 %v8161, 0.35355338
      %v8215 = vmul.f32 %v8166, 0.35355338
      %v8216 = vmul.f32 %v8171, 0.35355338
      %v8217 = vmul.f32 %v8176, 0.35355338
      %v8218 = vmul.f32 %v8181, 0.35355338
      %v8219 = vmul.f32 %v8186, 0.35355338
      %v8220 = vmul.f32 %v8191, 0.35355338
      %v8221 = vmul.f32 %v8196, 0.35355338
      %v8222 = vmul.f32 %v8201, 0.35355338
      %v8223 = vmul.f32 %v8206, 0.35355338
      %v8224 = vadd.f32 %v8209, %v1039
      %v8225 = vadd.f32 %v8210, %v1040
      %v8226 = vadd.f32 %v8211, %v1041
      %v8227 = vadd.f32 %v8212, %v1042
      %v8228 = vadd.f32 %v8213, %v1043
      %v8229 = vadd.f32 %v8214, %v1044
      %v8230 = vadd.f32 %v8215, %v1045
      %v8231 = vadd.f32 %v8216, %v1046
      %v8232 = vadd.f32 %v8217, %v1047
      %v8233 = vadd.f32 %v8218, %v1048
      %v8234 = vadd.f32 %v8219, %v1049
      %v8235 = vadd.f32 %v8220, %v1050
      %v8236 = vadd.f32 %v8221, %v1051
      %v8237 = vadd.f32 %v8222, %v1052
      %v8238 = vadd.f32 %v8223, %v1053
      %v8239 = vsel %vm1765, %v8224, -inf
      %8240 = vmax.xlane.f32.xlu0 %v8239
      %v8241 = vpop.xlane.xlu0 %8240
      %v8242 = vsel %vm1765, %v8225, -inf
      %8243 = vmax.xlane.f32.xlu0 %v8242
      %v8244 = vpop.xlane.xlu0 %8243
      %v8245 = vsel %vm1765, %v8226, -inf
      %8246 = vmax.xlane.f32.xlu0 %v8245
      %v8247 = vpop.xlane.xlu0 %8246
      %v8248 = vsel %vm1765, %v8227, -inf
      %8249 = vmax.xlane.f32.xlu0 %v8248
      %v8250 = vpop.xlane.xlu0 %8249
      %v8251 = vsel %vm1765, %v8228, -inf
      %8252 = vmax.xlane.f32.xlu0 %v8251
      %v8253 = vpop.xlane.xlu0 %8252
      %v8254 = vsel %vm1765, %v8229, -inf
      %8255 = vmax.xlane.f32.xlu0 %v8254
      %v8256 = vpop.xlane.xlu0 %8255
      %v8257 = vsel %vm1765, %v8230, -inf
      %8258 = vmax.xlane.f32.xlu0 %v8257
      %v8259 = vpop.xlane.xlu0 %8258
      %v8260 = vsel %vm1765, %v8231, -inf
      %8261 = vmax.xlane.f32.xlu0 %v8260
      %v8262 = vpop.xlane.xlu0 %8261
      %v8263 = vsel %vm1765, %v8232, -inf
      %8264 = vmax.xlane.f32.xlu0 %v8263
      %v8265 = vpop.xlane.xlu0 %8264
      %v8266 = vsel %vm1765, %v8233, -inf
      %8267 = vmax.xlane.f32.xlu0 %v8266
      %v8268 = vpop.xlane.xlu0 %8267
      %v8269 = vsel %vm1765, %v8234, -inf
      %8270 = vmax.xlane.f32.xlu0 %v8269
      %v8271 = vpop.xlane.xlu0 %8270
      %v8272 = vsel %vm1765, %v8235, -inf
      %8273 = vmax.xlane.f32.xlu0 %v8272
      %v8274 = vpop.xlane.xlu0 %8273
      %v8275 = vsel %vm1765, %v8236, -inf
      %8276 = vmax.xlane.f32.xlu0 %v8275
      %v8277 = vpop.xlane.xlu0 %8276
      %v8278 = vsel %vm1765, %v8237, -inf
      %8279 = vmax.xlane.f32.xlu0 %v8278
      %v8280 = vpop.xlane.xlu0 %8279
      %v8281 = vsel %vm1765, %v8238, -inf
      %8282 = vmax.xlane.f32.xlu0 %v8281
      %v8283 = vpop.xlane.xlu0 %8282
      %v8284 = vsub.f32 %v8224, %v8241
      %v8285 = vsub.f32 %v8225, %v8244
      %v8286 = vsub.f32 %v8226, %v8247
      %v8287 = vsub.f32 %v8227, %v8250
      %v8288 = vsub.f32 %v8228, %v8253
      %v8289 = vsub.f32 %v8229, %v8256
      %v8290 = vsub.f32 %v8230, %v8259
      %v8291 = vsub.f32 %v8231, %v8262
      %v8292 = vsub.f32 %v8232, %v8265
      %v8293 = vsub.f32 %v8233, %v8268
      %v8294 = vsub.f32 %v8234, %v8271
      %v8295 = vsub.f32 %v8235, %v8274
      %v8296 = vsub.f32 %v8236, %v8277
      %v8297 = vsub.f32 %v8237, %v8280
      %v8298 = vsub.f32 %v8238, %v8283
      %v8299 = vmul.f32 %v8284, 1.442695
      %v8300 = vpow.pop %v8299
      %v8301 = vmul.f32 %v8285, 1.442695
      %v8302 = vpow.pop %v8301
      %v8303 = vmul.f32 %v8286, 1.442695
      %v8304 = vpow.pop %v8303
      %v8305 = vmul.f32 %v8287, 1.442695
      %v8306 = vpow.pop %v8305
      %v8307 = vmul.f32 %v8288, 1.442695
      %v8308 = vpow.pop %v8307
      %v8309 = vmul.f32 %v8289, 1.442695
      %v8310 = vpow.pop %v8309
      %v8311 = vmul.f32 %v8290, 1.442695
      %v8312 = vpow.pop %v8311
      %v8313 = vmul.f32 %v8291, 1.442695
      %v8314 = vpow.pop %v8313
      %v8315 = vmul.f32 %v8292, 1.442695
      %v8316 = vpow.pop %v8315
      %v8317 = vmul.f32 %v8293, 1.442695
      %v8318 = vpow.pop %v8317
      %v8319 = vmul.f32 %v8294, 1.442695
      %v8320 = vpow.pop %v8319
      %v8321 = vmul.f32 %v8295, 1.442695
      %v8322 = vpow.pop %v8321
      %v8323 = vmul.f32 %v8296, 1.442695
      %v8324 = vpow.pop %v8323
      %v8325 = vmul.f32 %v8297, 1.442695
      %v8326 = vpow.pop %v8325
      %v8327 = vmul.f32 %v8298, 1.442695
      %v8328 = vpow.pop %v8327
      %v8329 = vsel %vm1765, %v8300, 0.0
      %8330 = vadd.xlane.f32.xlu0 %v8329
      %v8331 = vpop.xlane.xlu0 %8330
      %v8332 = vsel %vm1765, %v8302, 0.0
      %8333 = vadd.xlane.f32.xlu0 %v8332
      %v8334 = vpop.xlane.xlu0 %8333
      %v8335 = vsel %vm1765, %v8304, 0.0
      %8336 = vadd.xlane.f32.xlu0 %v8335
      %v8337 = vpop.xlane.xlu0 %8336
      %v8338 = vsel %vm1765, %v8306, 0.0
      %8339 = vadd.xlane.f32.xlu0 %v8338
      %v8340 = vpop.xlane.xlu0 %8339
      %v8341 = vsel %vm1765, %v8308, 0.0
      %8342 = vadd.xlane.f32.xlu0 %v8341
      %v8343 = vpop.xlane.xlu0 %8342
      %v8344 = vsel %vm1765, %v8310, 0.0
      %8345 = vadd.xlane.f32.xlu0 %v8344
      %v8346 = vpop.xlane.xlu0 %8345
      %v8347 = vsel %vm1765, %v8312, 0.0
      %8348 = vadd.xlane.f32.xlu0 %v8347
      %v8349 = vpop.xlane.xlu0 %8348
      %v8350 = vsel %vm1765, %v8314, 0.0
      %8351 = vadd.xlane.f32.xlu0 %v8350
      %v8352 = vpop.xlane.xlu0 %8351
      %v8353 = vsel %vm1765, %v8316, 0.0
      %8354 = vadd.xlane.f32.xlu0 %v8353
      %v8355 = vpop.xlane.xlu0 %8354
      %v8356 = vsel %vm1765, %v8318, 0.0
      %8357 = vadd.xlane.f32.xlu0 %v8356
      %v8358 = vpop.xlane.xlu0 %8357
      %v8359 = vsel %vm1765, %v8320, 0.0
      %8360 = vadd.xlane.f32.xlu0 %v8359
      %v8361 = vpop.xlane.xlu0 %8360
      %v8362 = vsel %vm1765, %v8322, 0.0
      %8363 = vadd.xlane.f32.xlu0 %v8362
      %v8364 = vpop.xlane.xlu0 %8363
      %v8365 = vsel %vm1765, %v8324, 0.0
      %8366 = vadd.xlane.f32.xlu0 %v8365
      %v8367 = vpop.xlane.xlu0 %8366
      %v8368 = vsel %vm1765, %v8326, 0.0
      %8369 = vadd.xlane.f32.xlu0 %v8368
      %v8370 = vpop.xlane.xlu0 %8369
      %v8371 = vsel %vm1765, %v8328, 0.0
      %8372 = vadd.xlane.f32.xlu0 %v8371
      %v8373 = vpop.xlane.xlu0 %8372
      %v8374 = vrcp.pop %v8331
      %v8375 = vrcp.pop %v8334
      %v8376 = vrcp.pop %v8337
      %v8377 = vrcp.pop %v8340
      %v8378 = vrcp.pop %v8343
      %v8379 = vrcp.pop %v8346
      %v8380 = vrcp.pop %v8349
      %v8381 = vrcp.pop %v8352
      %v8382 = vrcp.pop %v8355
      %v8383 = vrcp.pop %v8358
      %v8384 = vrcp.pop %v8361
      %v8385 = vrcp.pop %v8364
      %v8386 = vrcp.pop %v8367
      %v8387 = vrcp.pop %v8370
      %v8388 = vrcp.pop %v8373
      %v8389 = vmul.f32 %v8300, %v8374
      %v8390 = vmul.f32 %v8302, %v8375
      %v8391 = vmul.f32 %v8304, %v8376
      %v8392 = vmul.f32 %v8306, %v8377
      %v8393 = vmul.f32 %v8308, %v8378
      %v8394 = vmul.f32 %v8310, %v8379
      %v8395 = vmul.f32 %v8312, %v8380
      %v8396 = vmul.f32 %v8314, %v8381
      %v8397 = vmul.f32 %v8316, %v8382
      %v8398 = vmul.f32 %v8318, %v8383
      %v8399 = vmul.f32 %v8320, %v8384
      %v8400 = vmul.f32 %v8322, %v8385
      %v8401 = vmul.f32 %v8324, %v8386
      %v8402 = vmul.f32 %v8326, %v8387
      %v8403 = vmul.f32 %v8328, %v8388
      %8404 = vrot.lane.b32.xlu0 %v5836, 40
      %v8405 = vpop.permute.xlu0 %8404
      %8406 = vrot.lane.b32.xlu0 %v5841, 40
      %v8407 = vpop.permute.xlu0 %8406
      %8408 = vrot.lane.b32.xlu0 %v5846, 40
      %v8409 = vpop.permute.xlu0 %8408
      %8410 = vrot.lane.b32.xlu0 %v5851, 40
      %v8411 = vpop.permute.xlu0 %8410
      %8412 = vrot.lane.b32.xlu0 %v5856, 40
      %v8413 = vpop.permute.xlu0 %8412
      %8414 = vrot.lane.b32.xlu0 %v5861, 40
      %v8415 = vpop.permute.xlu0 %8414
      %8416 = vrot.lane.b32.xlu0 %v5866, 40
      %v8417 = vpop.permute.xlu0 %8416
      %8418 = vrot.lane.b32.xlu0 %v5871, 40
      %v8419 = vpop.permute.xlu0 %8418
      %8420 = vrot.lane.b32.xlu0 %v5876, 40
      %v8421 = vpop.permute.xlu0 %8420
      %8422 = vrot.lane.b32.xlu0 %v5881, 40
      %v8423 = vpop.permute.xlu0 %8422
      %8424 = vrot.lane.b32.xlu0 %v5886, 40
      %v8425 = vpop.permute.xlu0 %8424
      %8426 = vrot.lane.b32.xlu0 %v5891, 40
      %v8427 = vpop.permute.xlu0 %8426
      %8428 = vrot.lane.b32.xlu0 %v5896, 40
      %v8429 = vpop.permute.xlu0 %8428
      %8430 = vrot.lane.b32.xlu0 %v5901, 40
      %v8431 = vpop.permute.xlu0 %8430
      %8432 = vrot.lane.b32.xlu0 %v5906, 40
      %v8433 = vpop.permute.xlu0 %8432
      %v8450 = vsel %vm1765, %v8389, 0
      %v8453 = vsel %vm1765, %v8390, 0
      %v8456 = vsel %vm1765, %v8391, 0
      %v8459 = vsel %vm1765, %v8392, 0
      %v8462 = vsel %vm1765, %v8393, 0
      %v8465 = vsel %vm1765, %v8394, 0
      %v8468 = vsel %vm1765, %v8395, 0
      %v8471 = vsel %vm1765, %v8396, 0
      %v8474 = vsel %vm1765, %v8397, 0
      %v8477 = vsel %vm1765, %v8398, 0
      %v8480 = vsel %vm1765, %v8399, 0
      %v8483 = vsel %vm1765, %v8400, 0
      %v8486 = vsel %vm1765, %v8401, 0
      %v8489 = vsel %vm1765, %v8402, 0
      %v8492 = vsel %vm1765, %v8403, 0
      %8494 = vmatprep.subr.mxu0 0.0
      %8495 = vmatpush1.msra.mxu0 %v8405
      %8496 = vmatprep.subr.mxu0 0.0
      %8497 = vmatpush1.msra.mxu0 %v8407
      %8498 = vmatprep.subr.mxu0 0.0
      %8499 = vmatpush1.msra.mxu0 %v8409
      %8500 = vmatprep.subr.mxu0 0.0
      %8501 = vmatpush1.msra.mxu0 %v8411
      %8502 = vmatprep.subr.mxu0 0.0
      %8503 = vmatpush1.msra.mxu0 %v8413
      %8504 = vmatprep.subr.mxu0 0.0
      %8505 = vmatpush1.msra.mxu0 %v8415
      %8506 = vmatprep.subr.mxu0 0.0
      %8507 = vmatpush1.msra.mxu0 %v8417
      %8508 = vmatprep.subr.mxu0 0.0
      %8509 = vmatpush1.msra.mxu0 %v8419
      %8510 = vmatprep.subr.mxu0 0.0
      %8511 = vmatpush1.msra.mxu0 %v8421
      %8512 = vmatprep.subr.mxu0 0.0
      %8513 = vmatpush1.msra.mxu0 %v8423
      %8514 = vmatprep.subr.mxu0 0.0
      %8515 = vmatpush1.msra.mxu0 %v8425
      %8516 = vmatprep.subr.mxu0 0.0
      %8517 = vmatpush1.msra.mxu0 %v8427
      %8518 = vmatprep.subr.mxu0 0.0
      %8519 = vmatpush1.msra.mxu0 %v8429
      %8520 = vmatprep.subr.mxu0 0.0
      %8521 = vmatpush1.msra.mxu0 %v8431
      %8522 = vmatprep.subr.mxu0 0.0
      %8523 = vmatpush1.msra.mxu0 %v8433
      %8524 = vmatprep.subr.mxu0 0.0
      %8525 = vmatpush1.msra.mxu0 0.0
      %8526 = vmatprep.subr.mxu0 0.0
      %8527 = vmatpush1.msra.mxu0 0.0
      %8528 = vmatprep.subr.mxu0 0.0
      %8529 = vmatpush1.msra.mxu0 0.0
      %8530 = vmatprep.subr.mxu0 0.0
      %8531 = vmatpush1.msra.mxu0 0.0
      %8532 = vmatprep.subr.mxu0 0.0
      %8533 = vmatpush1.msra.mxu0 0.0
      %8534 = vmatprep.subr.mxu0 0.0
      %8535 = vmatpush1.msra.mxu0 0.0
      %8536 = vmatprep.subr.mxu0 0.0
      %8537 = vmatpush1.msra.mxu0 0.0
      %8538 = vmatprep.subr.mxu0 0.0
      %8539 = vmatpush1.msra.mxu0 0.0
      %8540 = vmatprep.subr.mxu0 0.0
      %8541 = vmatpush1.msra.mxu0 0.0
      %8542 = vmatprep.subr.mxu0 0.0
      %8543 = vmatpush1.msra.mxu0 0.0
      %8544 = vmatprep.subr.mxu0 0.0
      %8545 = vmatpush1.msra.mxu0 0.0
      %8546 = vmatprep.subr.mxu0 0.0
      %8547 = vmatpush1.msra.mxu0 0.0
      %8548 = vmatprep.subr.mxu0 0.0
      %8549 = vmatpush1.msra.mxu0 0.0
      %8550 = vmatprep.subr.mxu0 0.0
      %8551 = vmatpush1.msra.mxu0 0.0
      %8552 = vmatprep.subr.mxu0 0.0
      %8553 = vmatpush1.msra.mxu0 0.0
      %8554 = vmatprep.subr.mxu0 0.0
      %8555 = vmatpush1.msra.mxu0 0.0
      %8556 = vmatprep.subr.mxu0 0.0
      %8557 = vmatpush1.msra.mxu0 0.0
      %8558 = vmatprep.mubr.f32.mxu0 0.0
      %8559 = vmatmul.mubr.f32.gmra.mrb[0].mxu0 %v8450
      %v8560 = vpop.f32.mrb[0].mxu0
      %v8561 = vadd.f32 0.0, %v8560
      %v8562 = vpop.f32.mrb[0].mxu0
      %8563 = vmatprep.mubr.f32.mxu0 0.0
      %8564 = vmatmul.mubr.f32.gmra.mrb[0].mxu0 %v8453
      %v8565 = vpop.f32.mrb[0].mxu0
      %v8566 = vadd.f32 0.0, %v8565
      %v8567 = vpop.f32.mrb[0].mxu0
      %8568 = vmatprep.mubr.f32.mxu0 0.0
      %8569 = vmatmul.mubr.f32.gmra.mrb[0].mxu0 %v8456
      %v8570 = vpop.f32.mrb[0].mxu0
      %v8571 = vadd.f32 0.0, %v8570
      %v8572 = vpop.f32.mrb[0].mxu0
      %8573 = vmatprep.mubr.f32.mxu0 0.0
      %8574 = vmatmul.mubr.f32.gmra.mrb[0].mxu0 %v8459
      %v8575 = vpop.f32.mrb[0].mxu0
      %v8576 = vadd.f32 0.0, %v8575
      %v8577 = vpop.f32.mrb[0].mxu0
      %8578 = vmatprep.mubr.f32.mxu0 0.0
      %8579 = vmatmul.mubr.f32.gmra.mrb[0].mxu0 %v8462
      %v8580 = vpop.f32.mrb[0].mxu0
      %v8581 = vadd.f32 0.0, %v8580
      %v8582 = vpop.f32.mrb[0].mxu0
      %8583 = vmatprep.mubr.f32.mxu0 0.0
      %8584 = vmatmul.mubr.f32.gmra.mrb[0].mxu0 %v8465
      %v8585 = vpop.f32.mrb[0].mxu0
      %v8586 = vadd.f32 0.0, %v8585
      %v8587 = vpop.f32.mrb[0].mxu0
      %8588 = vmatprep.mubr.f32.mxu0 0.0
      %8589 = vmatmul.mubr.f32.gmra.mrb[0].mxu0 %v8468
      %v8590 = vpop.f32.mrb[0].mxu0
      %v8591 = vadd.f32 0.0, %v8590
      %v8592 = vpop.f32.mrb[0].mxu0
      %8593 = vmatprep.mubr.f32.mxu0 0.0
      %8594 = vmatmul.mubr.f32.gmra.mrb[0].mxu0 %v8471
      %v8595 = vpop.f32.mrb[0].mxu0
      %v8596 = vadd.f32 0.0, %v8595
      %v8597 = vpop.f32.mrb[0].mxu0
      %8598 = vmatprep.mubr.f32.mxu0 0.0
      %8599 = vmatmul.mubr.f32.gmra.mrb[0].mxu0 %v8474
      %v8600 = vpop.f32.mrb[0].mxu0
      %v8601 = vadd.f32 0.0, %v8600
      %v8602 = vpop.f32.mrb[0].mxu0
      %8603 = vmatprep.mubr.f32.mxu0 0.0
      %8604 = vmatmul.mubr.f32.gmra.mrb[0].mxu0 %v8477
      %v8605 = vpop.f32.mrb[0].mxu0
      %v8606 = vadd.f32 0.0, %v8605
      %v8607 = vpop.f32.mrb[0].mxu0
      %8608 = vmatprep.mubr.f32.mxu0 0.0
      %8609 = vmatmul.mubr.f32.gmra.mrb[0].mxu0 %v8480
      %v8610 = vpop.f32.mrb[0].mxu0
      %v8611 = vadd.f32 0.0, %v8610
      %v8612 = vpop.f32.mrb[0].mxu0
      %8613 = vmatprep.mubr.f32.mxu0 0.0
      %8614 = vmatmul.mubr.f32.gmra.mrb[0].mxu0 %v8483
      %v8615 = vpop.f32.mrb[0].mxu0
      %v8616 = vadd.f32 0.0, %v8615
      %v8617 = vpop.f32.mrb[0].mxu0
      %8618 = vmatprep.mubr.f32.mxu0 0.0
      %8619 = vmatmul.mubr.f32.gmra.mrb[0].mxu0 %v8486
      %v8620 = vpop.f32.mrb[0].mxu0
      %v8621 = vadd.f32 0.0, %v8620
      %v8622 = vpop.f32.mrb[0].mxu0
      %8623 = vmatprep.mubr.f32.mxu0 0.0
      %8624 = vmatmul.mubr.f32.gmra.mrb[0].mxu0 %v8489
      %v8625 = vpop.f32.mrb[0].mxu0
      %v8626 = vadd.f32 0.0, %v8625
      %v8627 = vpop.f32.mrb[0].mxu0
      %8628 = vmatprep.mubr.f32.mxu0 0.0
      %8629 = vmatmul.mubr.f32.gmra.mrb[0].mxu0 %v8492
      %v8630 = vpop.f32.mrb[0].mxu0
      %v8631 = vadd.f32 0.0, %v8630
      %v8632 = vpop.f32.mrb[0].mxu0
      %8633 = vdwg.mxu0
      %8649 = vrot.lane.b32.xlu0 %v7191, 8
      %v8650 = vpop.permute.xlu0 %8649
      %8651 = vrot.lane.b32.xlu0 %v7196, 8
      %v8652 = vpop.permute.xlu0 %8651
      %8653 = vrot.lane.b32.xlu0 %v7201, 8
      %v8654 = vpop.permute.xlu0 %8653
      %8655 = vrot.lane.b32.xlu0 %v7206, 8
      %v8656 = vpop.permute.xlu0 %8655
      %8657 = vrot.lane.b32.xlu0 %v7211, 8
      %v8658 = vpop.permute.xlu0 %8657
      %8659 = vrot.lane.b32.xlu0 %v7216, 8
      %v8660 = vpop.permute.xlu0 %8659
      %8661 = vrot.lane.b32.xlu0 %v7221, 8
      %v8662 = vpop.permute.xlu0 %8661
      %8663 = vrot.lane.b32.xlu0 %v7226, 8
      %v8664 = vpop.permute.xlu0 %8663
      %8665 = vrot.lane.b32.xlu0 %v7231, 8
      %v8666 = vpop.permute.xlu0 %8665
      %8667 = vrot.lane.b32.xlu0 %v7236, 8
      %v8668 = vpop.permute.xlu0 %8667
      %8669 = vrot.lane.b32.xlu0 %v7241, 8
      %v8670 = vpop.permute.xlu0 %8669
      %8671 = vrot.lane.b32.xlu0 %v7246, 8
      %v8672 = vpop.permute.xlu0 %8671
      %8673 = vrot.lane.b32.xlu0 %v7251, 8
      %v8674 = vpop.permute.xlu0 %8673
      %8675 = vrot.lane.b32.xlu0 %v7256, 8
      %v8676 = vpop.permute.xlu0 %8675
      %8677 = vrot.lane.b32.xlu0 %v7261, 8
      %v8678 = vpop.permute.xlu0 %8677
      %8709 = vrot.lane.b32.xlu0 %v7876, 16
      %v8710 = vpop.permute.xlu0 %8709
      %8711 = vrot.lane.b32.xlu0 %v7881, 16
      %v8712 = vpop.permute.xlu0 %8711
      %8713 = vrot.lane.b32.xlu0 %v7886, 16
      %v8714 = vpop.permute.xlu0 %8713
      %8715 = vrot.lane.b32.xlu0 %v7891, 16
      %v8716 = vpop.permute.xlu0 %8715
      %8717 = vrot.lane.b32.xlu0 %v7896, 16
      %v8718 = vpop.permute.xlu0 %8717
      %8719 = vrot.lane.b32.xlu0 %v7901, 16
      %v8720 = vpop.permute.xlu0 %8719
      %8721 = vrot.lane.b32.xlu0 %v7906, 16
      %v8722 = vpop.permute.xlu0 %8721
      %8723 = vrot.lane.b32.xlu0 %v7911, 16
      %v8724 = vpop.permute.xlu0 %8723
      %8725 = vrot.lane.b32.xlu0 %v7916, 16
      %v8726 = vpop.permute.xlu0 %8725
      %8727 = vrot.lane.b32.xlu0 %v7921, 16
      %v8728 = vpop.permute.xlu0 %8727
      %8729 = vrot.lane.b32.xlu0 %v7926, 16
      %v8730 = vpop.permute.xlu0 %8729
      %8731 = vrot.lane.b32.xlu0 %v7931, 16
      %v8732 = vpop.permute.xlu0 %8731
      %8733 = vrot.lane.b32.xlu0 %v7936, 16
      %v8734 = vpop.permute.xlu0 %8733
      %8735 = vrot.lane.b32.xlu0 %v7941, 16
      %v8736 = vpop.permute.xlu0 %8735
      %8737 = vrot.lane.b32.xlu0 %v7946, 16
      %v8738 = vpop.permute.xlu0 %8737
      %8769 = vrot.lane.b32.xlu0 %v8561, 24
      %v8770 = vpop.permute.xlu0 %8769
      %8771 = vrot.lane.b32.xlu0 %v8566, 24
      %v8772 = vpop.permute.xlu0 %8771
      %8773 = vrot.lane.b32.xlu0 %v8571, 24
      %v8774 = vpop.permute.xlu0 %8773
      %8775 = vrot.lane.b32.xlu0 %v8576, 24
      %v8776 = vpop.permute.xlu0 %8775
      %8777 = vrot.lane.b32.xlu0 %v8581, 24
      %v8778 = vpop.permute.xlu0 %8777
      %8779 = vrot.lane.b32.xlu0 %v8586, 24
      %v8780 = vpop.permute.xlu0 %8779
      %8781 = vrot.lane.b32.xlu0 %v8591, 24
      %v8782 = vpop.permute.xlu0 %8781
      %8783 = vrot.lane.b32.xlu0 %v8596, 24
      %v8784 = vpop.permute.xlu0 %8783
      %8785 = vrot.lane.b32.xlu0 %v8601, 24
      %v8786 = vpop.permute.xlu0 %8785
      %8787 = vrot.lane.b32.xlu0 %v8606, 24
      %v8788 = vpop.permute.xlu0 %8787
      %8789 = vrot.lane.b32.xlu0 %v8611, 24
      %v8790 = vpop.permute.xlu0 %8789
      %8791 = vrot.lane.b32.xlu0 %v8616, 24
      %v8792 = vpop.permute.xlu0 %8791
      %8793 = vrot.lane.b32.xlu0 %v8621, 24
      %v8794 = vpop.permute.xlu0 %8793
      %8795 = vrot.lane.b32.xlu0 %v8626, 24
      %v8796 = vpop.permute.xlu0 %8795
      %8797 = vrot.lane.b32.xlu0 %v8631, 24
      %v8798 = vpop.permute.xlu0 %8797
      %v8814 = vsel %vm1534, %v6506, %v8650
      %v8815 = vsel %vm1534, %v6511, %v8652
      %v8816 = vsel %vm1534, %v6516, %v8654
      %v8817 = vsel %vm1534, %v6521, %v8656
      %v8818 = vsel %vm1534, %v6526, %v8658
      %v8819 = vsel %vm1534, %v6531, %v8660
      %v8820 = vsel %vm1534, %v6536, %v8662
      %v8821 = vsel %vm1534, %v6541, %v8664
      %v8822 = vsel %vm1534, %v6546, %v8666
      %v8823 = vsel %vm1534, %v6551, %v8668
      %v8824 = vsel %vm1534, %v6556, %v8670
      %v8825 = vsel %vm1534, %v6561, %v8672
      %v8826 = vsel %vm1534, %v6566, %v8674
      %v8827 = vsel %vm1534, %v6571, %v8676
      %v8828 = vsel %vm1534, %v6576, %v8678
      %v8829 = vsel %vm4411, %v8814, %v8710
      %v8830 = vsel %vm4411, %v8815, %v8712
      %v8831 = vsel %vm4411, %v8816, %v8714
      %v8832 = vsel %vm4411, %v8817, %v8716
      %v8833 = vsel %vm4411, %v8818, %v8718
      %v8834 = vsel %vm4411, %v8819, %v8720
      %v8835 = vsel %vm4411, %v8820, %v8722
      %v8836 = vsel %vm4411, %v8821, %v8724
      %v8837 = vsel %vm4411, %v8822, %v8726
      %v8838 = vsel %vm4411, %v8823, %v8728
      %v8839 = vsel %vm4411, %v8824, %v8730
      %v8840 = vsel %vm4411, %v8825, %v8732
      %v8841 = vsel %vm4411, %v8826, %v8734
      %v8842 = vsel %vm4411, %v8827, %v8736
      %v8843 = vsel %vm4411, %v8828, %v8738
      %v8844 = vsel %vm4427, %v8829, %v8770
      %v8845 = vsel %vm4427, %v8830, %v8772
      %v8846 = vsel %vm4427, %v8831, %v8774
      %v8847 = vsel %vm4427, %v8832, %v8776
      %v8848 = vsel %vm4427, %v8833, %v8778
      %v8849 = vsel %vm4427, %v8834, %v8780
      %v8850 = vsel %vm4427, %v8835, %v8782
      %v8851 = vsel %vm4427, %v8836, %v8784
      %v8852 = vsel %vm4427, %v8837, %v8786
      %v8853 = vsel %vm4427, %v8838, %v8788
      %v8854 = vsel %vm4427, %v8839, %v8790
      %v8855 = vsel %vm4427, %v8840, %v8792
      %v8856 = vsel %vm4427, %v8841, %v8794
      %v8857 = vsel %vm4427, %v8842, %v8796
      %v8858 = vsel %vm4427, %v8843, %v8798
      %s8859 = scalar_lea.vmem %s10, 32
      %v8860 = vld [vmem:[%s8859] sm:$0xff]
      %v8861 = vld [vmem:[%s8859 + $0x8] sm:$0xff]
      %v8862 = vld [vmem:[%s8859 + $0x10] sm:$0xff]
      %v8863 = vld [vmem:[%s8859 + $0x18] sm:$0xff]
      %v8865 = vsel %vm800, %v8844, 0
      %v8868 = vsel %vm800, %v8845, 0
      %v8871 = vsel %vm800, %v8846, 0
      %v8874 = vsel %vm800, %v8847, 0
      %v8877 = vsel %vm800, %v8848, 0
      %v8880 = vsel %vm800, %v8849, 0
      %v8883 = vsel %vm800, %v8850, 0
      %v8886 = vsel %vm800, %v8851, 0
      %v8889 = vsel %vm800, %v8852, 0
      %v8892 = vsel %vm800, %v8853, 0
      %v8895 = vsel %vm800, %v8854, 0
      %v8898 = vsel %vm800, %v8855, 0
      %v8901 = vsel %vm800, %v8856, 0
      %v8904 = vsel %vm800, %v8857, 0
      %v8907 = vsel %vm800, %v8858, 0
      %8909 = vmatprep.subr.mxu0 0.0
      %8910 = vmatpush1.msra.mxu0 %v8860
      %8911 = vmatprep.subr.mxu0 0.0
      %8912 = vmatpush1.msra.mxu0 %v8861
      %8913 = vmatprep.subr.mxu0 0.0
      %8914 = vmatpush1.msra.mxu0 %v8862
      %8915 = vmatprep.subr.mxu0 0.0
      %8916 = vmatpush1.msra.mxu0 %v8863
      %8917 = vmatprep.subr.mxu0 0.0
      %8918 = vmatpush1.msra.mxu0 0.0
      %8919 = vmatprep.subr.mxu0 0.0
      %8920 = vmatpush1.msra.mxu0 0.0
      %8921 = vmatprep.subr.mxu0 0.0
      %8922 = vmatpush1.msra.mxu0 0.0
      %8923 = vmatprep.subr.mxu0 0.0
      %8924 = vmatpush1.msra.mxu0 0.0
      %8925 = vmatprep.subr.mxu0 0.0
      %8926 = vmatpush1.msra.mxu0 0.0
      %8927 = vmatprep.subr.mxu0 0.0
      %8928 = vmatpush1.msra.mxu0 0.0
      %8929 = vmatprep.subr.mxu0 0.0
      %8930 = vmatpush1.msra.mxu0 0.0
      %8931 = vmatprep.subr.mxu0 0.0
      %8932 = vmatpush1.msra.mxu0 0.0
      %8933 = vmatprep.subr.mxu0 0.0
      %8934 = vmatpush1.msra.mxu0 0.0
      %8935 = vmatprep.subr.mxu0 0.0
      %8936 = vmatpush1.msra.mxu0 0.0
      %8937 = vmatprep.subr.mxu0 0.0
      %8938 = vmatpush1.msra.mxu0 0.0
      %8939 = vmatprep.subr.mxu0 0.0
      %8940 = vmatpush1.msra.mxu0 0.0
      %8941 = vmatprep.subr.mxu0 0.0
      %8942 = vmatpush1.msra.mxu0 0.0
      %8943 = vmatprep.subr.mxu0 0.0
      %8944 = vmatpush1.msra.mxu0 0.0
      %8945 = vmatprep.subr.mxu0 0.0
      %8946 = vmatpush1.msra.mxu0 0.0
      %8947 = vmatprep.subr.mxu0 0.0
      %8948 = vmatpush1.msra.mxu0 0.0
      %8949 = vmatprep.subr.mxu0 0.0
      %8950 = vmatpush1.msra.mxu0 0.0
      %8951 = vmatprep.subr.mxu0 0.0
      %8952 = vmatpush1.msra.mxu0 0.0
      %8953 = vmatprep.subr.mxu0 0.0
      %8954 = vmatpush1.msra.mxu0 0.0
      %8955 = vmatprep.subr.mxu0 0.0
      %8956 = vmatpush1.msra.mxu0 0.0
      %8957 = vmatprep.subr.mxu0 0.0
      %8958 = vmatpush1.msra.mxu0 0.0
      %8959 = vmatprep.subr.mxu0 0.0
      %8960 = vmatpush1.msra.mxu0 0.0
      %8961 = vmatprep.subr.mxu0 0.0
      %8962 = vmatpush1.msra.mxu0 0.0
      %8963 = vmatprep.subr.mxu0 0.0
      %8964 = vmatpush1.msra.mxu0 0.0
      %8965 = vmatprep.subr.mxu0 0.0
      %8966 = vmatpush1.msra.mxu0 0.0
      %8967 = vmatprep.subr.mxu0 0.0
      %8968 = vmatpush1.msra.mxu0 0.0
      %8969 = vmatprep.subr.mxu0 0.0
      %8970 = vmatpush1.msra.mxu0 0.0
      %8971 = vmatprep.subr.mxu0 0.0
      %8972 = vmatpush1.msra.mxu0 0.0
      %8973 = vmatprep.mubr.f32.mxu0 0.0
      %8974 = vmatmul.mubr.f32.gmra.mrb[0].mxu0 %v8865
      %v8975 = vpop.f32.mrb[0].mxu0
      %v8976 = vadd.f32 0.0, %v8975
      %v8977 = vpop.f32.mrb[0].mxu0
      %8978 = vmatprep.mubr.f32.mxu0 0.0
      %8979 = vmatmul.mubr.f32.gmra.mrb[0].mxu0 %v8868
      %v8980 = vpop.f32.mrb[0].mxu0
      %v8981 = vadd.f32 0.0, %v8980
      %v8982 = vpop.f32.mrb[0].mxu0
      %8983 = vmatprep.mubr.f32.mxu0 0.0
      %8984 = vmatmul.mubr.f32.gmra.mrb[0].mxu0 %v8871
      %v8985 = vpop.f32.mrb[0].mxu0
      %v8986 = vadd.f32 0.0, %v8985
      %v8987 = vpop.f32.mrb[0].mxu0
      %8988 = vmatprep.mubr.f32.mxu0 0.0
      %8989 = vmatmul.mubr.f32.gmra.mrb[0].mxu0 %v8874
      %v8990 = vpop.f32.mrb[0].mxu0
      %v8991 = vadd.f32 0.0, %v8990
      %v8992 = vpop.f32.mrb[0].mxu0
      %8993 = vmatprep.mubr.f32.mxu0 0.0
      %8994 = vmatmul.mubr.f32.gmra.mrb[0].mxu0 %v8877
      %v8995 = vpop.f32.mrb[0].mxu0
      %v8996 = vadd.f32 0.0, %v8995
      %v8997 = vpop.f32.mrb[0].mxu0
      %8998 = vmatprep.mubr.f32.mxu0 0.0
      %8999 = vmatmul.mubr.f32.gmra.mrb[0].mxu0 %v8880
      %v9000 = vpop.f32.mrb[0].mxu0
      %v9001 = vadd.f32 0.0, %v9000
      %v9002 = vpop.f32.mrb[0].mxu0
      %9003 = vmatprep.mubr.f32.mxu0 0.0
      %9004 = vmatmul.mubr.f32.gmra.mrb[0].mxu0 %v8883
      %v9005 = vpop.f32.mrb[0].mxu0
      %v9006 = vadd.f32 0.0, %v9005
      %v9007 = vpop.f32.mrb[0].mxu0
      %9008 = vmatprep.mubr.f32.mxu0 0.0
      %9009 = vmatmul.mubr.f32.gmra.mrb[0].mxu0 %v8886
      %v9010 = vpop.f32.mrb[0].mxu0
      %v9011 = vadd.f32 0.0, %v9010
      %v9012 = vpop.f32.mrb[0].mxu0
      %9013 = vmatprep.mubr.f32.mxu0 0.0
      %9014 = vmatmul.mubr.f32.gmra.mrb[0].mxu0 %v8889
      %v9015 = vpop.f32.mrb[0].mxu0
      %v9016 = vadd.f32 0.0, %v9015
      %v9017 = vpop.f32.mrb[0].mxu0
      %9018 = vmatprep.mubr.f32.mxu0 0.0
      %9019 = vmatmul.mubr.f32.gmra.mrb[0].mxu0 %v8892
      %v9020 = vpop.f32.mrb[0].mxu0
      %v9021 = vadd.f32 0.0, %v9020
      %v9022 = vpop.f32.mrb[0].mxu0
      %9023 = vmatprep.mubr.f32.mxu0 0.0
      %9024 = vmatmul.mubr.f32.gmra.mrb[0].mxu0 %v8895
      %v9025 = vpop.f32.mrb[0].mxu0
      %v9026 = vadd.f32 0.0, %v9025
      %v9027 = vpop.f32.mrb[0].mxu0
      %9028 = vmatprep.mubr.f32.mxu0 0.0
      %9029 = vmatmul.mubr.f32.gmra.mrb[0].mxu0 %v8898
      %v9030 = vpop.f32.mrb[0].mxu0
      %v9031 = vadd.f32 0.0, %v9030
      %v9032 = vpop.f32.mrb[0].mxu0
      %9033 = vmatprep.mubr.f32.mxu0 0.0
      %9034 = vmatmul.mubr.f32.gmra.mrb[0].mxu0 %v8901
      %v9035 = vpop.f32.mrb[0].mxu0
      %v9036 = vadd.f32 0.0, %v9035
      %v9037 = vpop.f32.mrb[0].mxu0
      %9038 = vmatprep.mubr.f32.mxu0 0.0
      %9039 = vmatmul.mubr.f32.gmra.mrb[0].mxu0 %v8904
      %v9040 = vpop.f32.mrb[0].mxu0
      %v9041 = vadd.f32 0.0, %v9040
      %v9042 = vpop.f32.mrb[0].mxu0
      %9043 = vmatprep.mubr.f32.mxu0 0.0
      %9044 = vmatmul.mubr.f32.gmra.mrb[0].mxu0 %v8907
      %v9045 = vpop.f32.mrb[0].mxu0
      %v9046 = vadd.f32 0.0, %v9045
      %v9047 = vpop.f32.mrb[0].mxu0
      %9048 = vdwg.mxu0
      %v9049 = vadd.f32 %v5455, %v8976
      %v9050 = vadd.f32 %v5456, %v8981
      %v9051 = vadd.f32 %v5457, %v8986
      %v9052 = vadd.f32 %v5458, %v8991
      %v9053 = vadd.f32 %v5459, %v8996
      %v9054 = vadd.f32 %v5460, %v9001
      %v9055 = vadd.f32 %v5461, %v9006
      %v9056 = vadd.f32 %v5462, %v9011
      %v9057 = vadd.f32 %v5463, %v9016
      %v9058 = vadd.f32 %v5464, %v9021
      %v9059 = vadd.f32 %v5465, %v9026
      %v9060 = vadd.f32 %v5466, %v9031
      %v9061 = vadd.f32 %v5467, %v9036
      %v9062 = vadd.f32 %v5468, %v9041
      %v9063 = vadd.f32 %v5469, %v9046
      %s9064 = scalar_lea.vmem %s11, 1
      %v9065 = vld [vmem:[%s9064] sm:$0x1]
      %v9067 = vlaneseq
      %v9068 = vshrl.u32 %v9067, 7
      %v9069 = vsub.s32 0, %v9068
      %v9070 = vrot.slane %v9065, %v9069
      %v9072 = vadd.f32 %v9049, %v9070
      %v9073 = vadd.f32 %v9050, %v9070
      %v9074 = vadd.f32 %v9051, %v9070
      %v9075 = vadd.f32 %v9052, %v9070
      %v9076 = vadd.f32 %v9053, %v9070
      %v9077 = vadd.f32 %v9054, %v9070
      %v9078 = vadd.f32 %v9055, %v9070
      %v9079 = vadd.f32 %v9056, %v9070
      %v9080 = vadd.f32 %v9057, %v9070
      %v9081 = vadd.f32 %v9058, %v9070
      %v9082 = vadd.f32 %v9059, %v9070
      %v9083 = vadd.f32 %v9060, %v9070
      %v9084 = vadd.f32 %v9061, %v9070
      %v9085 = vadd.f32 %v9062, %v9070
      %v9086 = vadd.f32 %v9063, %v9070
      %s9087 = scalar_lea.vmem %s12, 1
      %v9088 = vld [vmem:[%s9087] sm:$0x1]
      %s9089 = scalar_lea.vmem %s13, 1
      %v9090 = vld [vmem:[%s9089] sm:$0x1]
      %v9091 = vsel %vm800, %v9072, 0.0
      %9092 = vadd.xlane.f32.xlu0 %v9091
      %v9093 = vpop.xlane.xlu0 %9092
      %v9094 = vsel %vm800, %v9073, 0.0
      %9095 = vadd.xlane.f32.xlu0 %v9094
      %v9096 = vpop.xlane.xlu0 %9095
      %v9097 = vsel %vm800, %v9074, 0.0
      %9098 = vadd.xlane.f32.xlu0 %v9097
      %v9099 = vpop.xlane.xlu0 %9098
      %v9100 = vsel %vm800, %v9075, 0.0
      %9101 = vadd.xlane.f32.xlu0 %v9100
      %v9102 = vpop.xlane.xlu0 %9101
      %v9103 = vsel %vm800, %v9076, 0.0
      %9104 = vadd.xlane.f32.xlu0 %v9103
      %v9105 = vpop.xlane.xlu0 %9104
      %v9106 = vsel %vm800, %v9077, 0.0
      %9107 = vadd.xlane.f32.xlu0 %v9106
      %v9108 = vpop.xlane.xlu0 %9107
      %v9109 = vsel %vm800, %v9078, 0.0
      %9110 = vadd.xlane.f32.xlu0 %v9109
      %v9111 = vpop.xlane.xlu0 %9110
      %v9112 = vsel %vm800, %v9079, 0.0
      %9113 = vadd.xlane.f32.xlu0 %v9112
      %v9114 = vpop.xlane.xlu0 %9113
      %v9115 = vsel %vm800, %v9080, 0.0
      %9116 = vadd.xlane.f32.xlu0 %v9115
      %v9117 = vpop.xlane.xlu0 %9116
      %v9118 = vsel %vm800, %v9081, 0.0
      %9119 = vadd.xlane.f32.xlu0 %v9118
      %v9120 = vpop.xlane.xlu0 %9119
      %v9121 = vsel %vm800, %v9082, 0.0
      %9122 = vadd.xlane.f32.xlu0 %v9121
      %v9123 = vpop.xlane.xlu0 %9122
      %v9124 = vsel %vm800, %v9083, 0.0
      %9125 = vadd.xlane.f32.xlu0 %v9124
      %v9126 = vpop.xlane.xlu0 %9125
      %v9127 = vsel %vm800, %v9084, 0.0
      %9128 = vadd.xlane.f32.xlu0 %v9127
      %v9129 = vpop.xlane.xlu0 %9128
      %v9130 = vsel %vm800, %v9085, 0.0
      %9131 = vadd.xlane.f32.xlu0 %v9130
      %v9132 = vpop.xlane.xlu0 %9131
      %v9133 = vsel %vm800, %v9086, 0.0
      %9134 = vadd.xlane.f32.xlu0 %v9133
      %v9135 = vpop.xlane.xlu0 %9134
      %v9136 = vmul.f32 %v9093, %v846
      %v9137 = vmul.f32 %v9096, %v846
      %v9138 = vmul.f32 %v9099, %v846
      %v9139 = vmul.f32 %v9102, %v846
      %v9140 = vmul.f32 %v9105, %v846
      %v9141 = vmul.f32 %v9108, %v846
      %v9142 = vmul.f32 %v9111, %v846
      %v9143 = vmul.f32 %v9114, %v846
      %v9144 = vmul.f32 %v9117, %v846
      %v9145 = vmul.f32 %v9120, %v846
      %v9146 = vmul.f32 %v9123, %v846
      %v9147 = vmul.f32 %v9126, %v846
      %v9148 = vmul.f32 %v9129, %v846
      %v9149 = vmul.f32 %v9132, %v846
      %v9150 = vmul.f32 %v9135, %v846
      %v9151 = vsub.f32 %v9072, %v9136
      %v9152 = vsub.f32 %v9073, %v9137
      %v9153 = vsub.f32 %v9074, %v9138
      %v9154 = vsub.f32 %v9075, %v9139
      %v9155 = vsub.f32 %v9076, %v9140
      %v9156 = vsub.f32 %v9077, %v9141
      %v9157 = vsub.f32 %v9078, %v9142
      %v9158 = vsub.f32 %v9079, %v9143
      %v9159 = vsub.f32 %v9080, %v9144
      %v9160 = vsub.f32 %v9081, %v9145
      %v9161 = vsub.f32 %v9082, %v9146
      %v9162 = vsub.f32 %v9083, %v9147
      %v9163 = vsub.f32 %v9084, %v9148
      %v9164 = vsub.f32 %v9085, %v9149
      %v9165 = vsub.f32 %v9086, %v9150
      %v9166 = vmul.f32 %v9151, %v9151
      %v9167 = vmul.f32 %v9152, %v9152
      %v9168 = vmul.f32 %v9153, %v9153
      %v9169 = vmul.f32 %v9154, %v9154
      %v9170 = vmul.f32 %v9155, %v9155
      %v9171 = vmul.f32 %v9156, %v9156
      %v9172 = vmul.f32 %v9157, %v9157
      %v9173 = vmul.f32 %v9158, %v9158
      %v9174 = vmul.f32 %v9159, %v9159
      %v9175 = vmul.f32 %v9160, %v9160
      %v9176 = vmul.f32 %v9161, %v9161
      %v9177 = vmul.f32 %v9162, %v9162
      %v9178 = vmul.f32 %v9163, %v9163
      %v9179 = vmul.f32 %v9164, %v9164
      %v9180 = vmul.f32 %v9165, %v9165
      %v9181 = vsel %vm800, %v9166, 0.0
      %9182 = vadd.xlane.f32.xlu0 %v9181
      %v9183 = vpop.xlane.xlu0 %9182
      %v9184 = vsel %vm800, %v9167, 0.0
      %9185 = vadd.xlane.f32.xlu0 %v9184
      %v9186 = vpop.xlane.xlu0 %9185
      %v9187 = vsel %vm800, %v9168, 0.0
      %9188 = vadd.xlane.f32.xlu0 %v9187
      %v9189 = vpop.xlane.xlu0 %9188
      %v9190 = vsel %vm800, %v9169, 0.0
      %9191 = vadd.xlane.f32.xlu0 %v9190
      %v9192 = vpop.xlane.xlu0 %9191
      %v9193 = vsel %vm800, %v9170, 0.0
      %9194 = vadd.xlane.f32.xlu0 %v9193
      %v9195 = vpop.xlane.xlu0 %9194
      %v9196 = vsel %vm800, %v9171, 0.0
      %9197 = vadd.xlane.f32.xlu0 %v9196
      %v9198 = vpop.xlane.xlu0 %9197
      %v9199 = vsel %vm800, %v9172, 0.0
      %9200 = vadd.xlane.f32.xlu0 %v9199
      %v9201 = vpop.xlane.xlu0 %9200
      %v9202 = vsel %vm800, %v9173, 0.0
      %9203 = vadd.xlane.f32.xlu0 %v9202
      %v9204 = vpop.xlane.xlu0 %9203
      %v9205 = vsel %vm800, %v9174, 0.0
      %9206 = vadd.xlane.f32.xlu0 %v9205
      %v9207 = vpop.xlane.xlu0 %9206
      %v9208 = vsel %vm800, %v9175, 0.0
      %9209 = vadd.xlane.f32.xlu0 %v9208
      %v9210 = vpop.xlane.xlu0 %9209
      %v9211 = vsel %vm800, %v9176, 0.0
      %9212 = vadd.xlane.f32.xlu0 %v9211
      %v9213 = vpop.xlane.xlu0 %9212
      %v9214 = vsel %vm800, %v9177, 0.0
      %9215 = vadd.xlane.f32.xlu0 %v9214
      %v9216 = vpop.xlane.xlu0 %9215
      %v9217 = vsel %vm800, %v9178, 0.0
      %9218 = vadd.xlane.f32.xlu0 %v9217
      %v9219 = vpop.xlane.xlu0 %9218
      %v9220 = vsel %vm800, %v9179, 0.0
      %9221 = vadd.xlane.f32.xlu0 %v9220
      %v9222 = vpop.xlane.xlu0 %9221
      %v9223 = vsel %vm800, %v9180, 0.0
      %9224 = vadd.xlane.f32.xlu0 %v9223
      %v9225 = vpop.xlane.xlu0 %9224
      %v9226 = vmul.f32 %v9183, %v846
      %v9227 = vmul.f32 %v9186, %v846
      %v9228 = vmul.f32 %v9189, %v846
      %v9229 = vmul.f32 %v9192, %v846
      %v9230 = vmul.f32 %v9195, %v846
      %v9231 = vmul.f32 %v9198, %v846
      %v9232 = vmul.f32 %v9201, %v846
      %v9233 = vmul.f32 %v9204, %v846
      %v9234 = vmul.f32 %v9207, %v846
      %v9235 = vmul.f32 %v9210, %v846
      %v9236 = vmul.f32 %v9213, %v846
      %v9237 = vmul.f32 %v9216, %v846
      %v9238 = vmul.f32 %v9219, %v846
      %v9239 = vmul.f32 %v9222, %v846
      %v9240 = vmul.f32 %v9225, %v846
      %v9241 = vadd.f32 %v9226, 1e-05
      %v9242 = vadd.f32 %v9227, 1e-05
      %v9243 = vadd.f32 %v9228, 1e-05
      %v9244 = vadd.f32 %v9229, 1e-05
      %v9245 = vadd.f32 %v9230, 1e-05
      %v9246 = vadd.f32 %v9231, 1e-05
      %v9247 = vadd.f32 %v9232, 1e-05
      %v9248 = vadd.f32 %v9233, 1e-05
      %v9249 = vadd.f32 %v9234, 1e-05
      %v9250 = vadd.f32 %v9235, 1e-05
      %v9251 = vadd.f32 %v9236, 1e-05
      %v9252 = vadd.f32 %v9237, 1e-05
      %v9253 = vadd.f32 %v9238, 1e-05
      %v9254 = vadd.f32 %v9239, 1e-05
      %v9255 = vadd.f32 %v9240, 1e-05
      %v9256 = vrsqrt.pop %v9241
      %v9257 = vrsqrt.pop %v9242
      %v9258 = vrsqrt.pop %v9243
      %v9259 = vrsqrt.pop %v9244
      %v9260 = vrsqrt.pop %v9245
      %v9261 = vrsqrt.pop %v9246
      %v9262 = vrsqrt.pop %v9247
      %v9263 = vrsqrt.pop %v9248
      %v9264 = vrsqrt.pop %v9249
      %v9265 = vrsqrt.pop %v9250
      %v9266 = vrsqrt.pop %v9251
      %v9267 = vrsqrt.pop %v9252
      %v9268 = vrsqrt.pop %v9253
      %v9269 = vrsqrt.pop %v9254
      %v9270 = vrsqrt.pop %v9255
      %v9271 = vmul.f32 %v9151, %v9256
      %v9272 = vmul.f32 %v9152, %v9257
      %v9273 = vmul.f32 %v9153, %v9258
      %v9274 = vmul.f32 %v9154, %v9259
      %v9275 = vmul.f32 %v9155, %v9260
      %v9276 = vmul.f32 %v9156, %v9261
      %v9277 = vmul.f32 %v9157, %v9262
      %v9278 = vmul.f32 %v9158, %v9263
      %v9279 = vmul.f32 %v9159, %v9264
      %v9280 = vmul.f32 %v9160, %v9265
      %v9281 = vmul.f32 %v9161, %v9266
      %v9282 = vmul.f32 %v9162, %v9267
      %v9283 = vmul.f32 %v9163, %v9268
      %v9284 = vmul.f32 %v9164, %v9269
      %v9285 = vmul.f32 %v9165, %v9270
      %v9287 = vlaneseq
      %v9288 = vshrl.u32 %v9287, 7
      %v9289 = vsub.s32 0, %v9288
      %v9290 = vrot.slane %v9088, %v9289
      %v9292 = vmul.f32 %v9271, %v9290
      %v9293 = vmul.f32 %v9272, %v9290
      %v9294 = vmul.f32 %v9273, %v9290
      %v9295 = vmul.f32 %v9274, %v9290
      %v9296 = vmul.f32 %v9275, %v9290
      %v9297 = vmul.f32 %v9276, %v9290
      %v9298 = vmul.f32 %v9277, %v9290
      %v9299 = vmul.f32 %v9278, %v9290
      %v9300 = vmul.f32 %v9279, %v9290
      %v9301 = vmul.f32 %v9280, %v9290
      %v9302 = vmul.f32 %v9281, %v9290
      %v9303 = vmul.f32 %v9282, %v9290
      %v9304 = vmul.f32 %v9283, %v9290
      %v9305 = vmul.f32 %v9284, %v9290
      %v9306 = vmul.f32 %v9285, %v9290
      %v9308 = vlaneseq
      %v9309 = vshrl.u32 %v9308, 7
      %v9310 = vsub.s32 0, %v9309
      %v9311 = vrot.slane %v9090, %v9310
      %v9313 = vadd.f32 %v9292, %v9311
      %v9314 = vadd.f32 %v9293, %v9311
      %v9315 = vadd.f32 %v9294, %v9311
      %v9316 = vadd.f32 %v9295, %v9311
      %v9317 = vadd.f32 %v9296, %v9311
      %v9318 = vadd.f32 %v9297, %v9311
      %v9319 = vadd.f32 %v9298, %v9311
      %v9320 = vadd.f32 %v9299, %v9311
      %v9321 = vadd.f32 %v9300, %v9311
      %v9322 = vadd.f32 %v9301, %v9311
      %v9323 = vadd.f32 %v9302, %v9311
      %v9324 = vadd.f32 %v9303, %v9311
      %v9325 = vadd.f32 %v9304, %v9311
      %v9326 = vadd.f32 %v9305, %v9311
      %v9327 = vadd.f32 %v9306, %v9311
      %s9328 = scalar_lea.vmem %s14, 32
      %v9329 = vld [vmem:[%s9328] sm:$0xff]
      %v9330 = vld [vmem:[%s9328 + $0x8] sm:$0xff]
      %v9331 = vld [vmem:[%s9328 + $0x10] sm:$0xff]
      %v9332 = vld [vmem:[%s9328 + $0x18] sm:$0xff]
      %s9333 = scalar_lea.vmem %s15, 1
      %v9334 = vld [vmem:[%s9333] sm:$0x1]
      %v9336 = vlaneseq
      %v9337 = vshrl.u32 %v9336, 7
      %v9338 = vsub.s32 0, %v9337
      %v9339 = vrot.slane %v9334, %v9338
      %v9342 = vsel %vm800, %v9313, 0
      %v9345 = vsel %vm800, %v9314, 0
      %v9348 = vsel %vm800, %v9315, 0
      %v9351 = vsel %vm800, %v9316, 0
      %v9354 = vsel %vm800, %v9317, 0
      %v9357 = vsel %vm800, %v9318, 0
      %v9360 = vsel %vm800, %v9319, 0
      %v9363 = vsel %vm800, %v9320, 0
      %v9366 = vsel %vm800, %v9321, 0
      %v9369 = vsel %vm800, %v9322, 0
      %v9372 = vsel %vm800, %v9323, 0
      %v9375 = vsel %vm800, %v9324, 0
      %v9378 = vsel %vm800, %v9325, 0
      %v9381 = vsel %vm800, %v9326, 0
      %v9384 = vsel %vm800, %v9327, 0
      %9386 = vmatprep.subr.mxu0 0.0
      %9387 = vmatpush1.msra.mxu0 %v9329
      %9388 = vmatprep.subr.mxu0 0.0
      %9389 = vmatpush1.msra.mxu0 %v9330
      %9390 = vmatprep.subr.mxu0 0.0
      %9391 = vmatpush1.msra.mxu0 %v9331
      %9392 = vmatprep.subr.mxu0 0.0
      %9393 = vmatpush1.msra.mxu0 %v9332
      %9394 = vmatprep.subr.mxu0 0.0
      %9395 = vmatpush1.msra.mxu0 0.0
      %9396 = vmatprep.subr.mxu0 0.0
      %9397 = vmatpush1.msra.mxu0 0.0
      %9398 = vmatprep.subr.mxu0 0.0
      %9399 = vmatpush1.msra.mxu0 0.0
      %9400 = vmatprep.subr.mxu0 0.0
      %9401 = vmatpush1.msra.mxu0 0.0
      %9402 = vmatprep.subr.mxu0 0.0
      %9403 = vmatpush1.msra.mxu0 0.0
      %9404 = vmatprep.subr.mxu0 0.0
      %9405 = vmatpush1.msra.mxu0 0.0
      %9406 = vmatprep.subr.mxu0 0.0
      %9407 = vmatpush1.msra.mxu0 0.0
      %9408 = vmatprep.subr.mxu0 0.0
      %9409 = vmatpush1.msra.mxu0 0.0
      %9410 = vmatprep.subr.mxu0 0.0
      %9411 = vmatpush1.msra.mxu0 0.0
      %9412 = vmatprep.subr.mxu0 0.0
      %9413 = vmatpush1.msra.mxu0 0.0
      %9414 = vmatprep.subr.mxu0 0.0
      %9415 = vmatpush1.msra.mxu0 0.0
      %9416 = vmatprep.subr.mxu0 0.0
      %9417 = vmatpush1.msra.mxu0 0.0
      %9418 = vmatprep.subr.mxu0 0.0
      %9419 = vmatpush1.msra.mxu0 0.0
      %9420 = vmatprep.subr.mxu0 0.0
      %9421 = vmatpush1.msra.mxu0 0.0
      %9422 = vmatprep.subr.mxu0 0.0
      %9423 = vmatpush1.msra.mxu0 0.0
      %9424 = vmatprep.subr.mxu0 0.0
      %9425 = vmatpush1.msra.mxu0 0.0
      %9426 = vmatprep.subr.mxu0 0.0
      %9427 = vmatpush1.msra.mxu0 0.0
      %9428 = vmatprep.subr.mxu0 0.0
      %9429 = vmatpush1.msra.mxu0 0.0
      %9430 = vmatprep.subr.mxu0 0.0
      %9431 = vmatpush1.msra.mxu0 0.0
      %9432 = vmatprep.subr.mxu0 0.0
      %9433 = vmatpush1.msra.mxu0 0.0
      %9434 = vmatprep.subr.mxu0 0.0
      %9435 = vmatpush1.msra.mxu0 0.0
      %9436 = vmatprep.subr.mxu0 0.0
      %9437 = vmatpush1.msra.mxu0 0.0
      %9438 = vmatprep.subr.mxu0 0.0
      %9439 = vmatpush1.msra.mxu0 0.0
      %9440 = vmatprep.subr.mxu0 0.0
      %9441 = vmatpush1.msra.mxu0 0.0
      %9442 = vmatprep.subr.mxu0 0.0
      %9443 = vmatpush1.msra.mxu0 0.0
      %9444 = vmatprep.subr.mxu0 0.0
      %9445 = vmatpush1.msra.mxu0 0.0
      %9446 = vmatprep.subr.mxu0 0.0
      %9447 = vmatpush1.msra.mxu0 0.0
      %9448 = vmatprep.subr.mxu0 0.0
      %9449 = vmatpush1.msra.mxu0 0.0
      %9450 = vmatprep.mubr.f32.mxu0 0.0
      %9451 = vmatmul.mubr.f32.gmra.mrb[0].mxu0 %v9342
      %v9452 = vpop.f32.mrb[0].mxu0
      %v9453 = vadd.f32 %v9339, %v9452
      %v9454 = vpop.f32.mrb[0].mxu0
      %9455 = vmatprep.mubr.f32.mxu0 0.0
      %9456 = vmatmul.mubr.f32.gmra.mrb[0].mxu0 %v9345
      %v9457 = vpop.f32.mrb[0].mxu0
      %v9458 = vadd.f32 %v9339, %v9457
      %v9459 = vpop.f32.mrb[0].mxu0
      %9460 = vmatprep.mubr.f32.mxu0 0.0
      %9461 = vmatmul.mubr.f32.gmra.mrb[0].mxu0 %v9348
      %v9462 = vpop.f32.mrb[0].mxu0
      %v9463 = vadd.f32 %v9339, %v9462
      %v9464 = vpop.f32.mrb[0].mxu0
      %9465 = vmatprep.mubr.f32.mxu0 0.0
      %9466 = vmatmul.mubr.f32.gmra.mrb[0].mxu0 %v9351
      %v9467 = vpop.f32.mrb[0].mxu0
      %v9468 = vadd.f32 %v9339, %v9467
      %v9469 = vpop.f32.mrb[0].mxu0
      %9470 = vmatprep.mubr.f32.mxu0 0.0
      %9471 = vmatmul.mubr.f32.gmra.mrb[0].mxu0 %v9354
      %v9472 = vpop.f32.mrb[0].mxu0
      %v9473 = vadd.f32 %v9339, %v9472
      %v9474 = vpop.f32.mrb[0].mxu0
      %9475 = vmatprep.mubr.f32.mxu0 0.0
      %9476 = vmatmul.mubr.f32.gmra.mrb[0].mxu0 %v9357
      %v9477 = vpop.f32.mrb[0].mxu0
      %v9478 = vadd.f32 %v9339, %v9477
      %v9479 = vpop.f32.mrb[0].mxu0
      %9480 = vmatprep.mubr.f32.mxu0 0.0
      %9481 = vmatmul.mubr.f32.gmra.mrb[0].mxu0 %v9360
      %v9482 = vpop.f32.mrb[0].mxu0
      %v9483 = vadd.f32 %v9339, %v9482
      %v9484 = vpop.f32.mrb[0].mxu0
      %9485 = vmatprep.mubr.f32.mxu0 0.0
      %9486 = vmatmul.mubr.f32.gmra.mrb[0].mxu0 %v9363
      %v9487 = vpop.f32.mrb[0].mxu0
      %v9488 = vadd.f32 %v9339, %v9487
      %v9489 = vpop.f32.mrb[0].mxu0
      %9490 = vmatprep.mubr.f32.mxu0 0.0
      %9491 = vmatmul.mubr.f32.gmra.mrb[0].mxu0 %v9366
      %v9492 = vpop.f32.mrb[0].mxu0
      %v9493 = vadd.f32 %v9339, %v9492
      %v9494 = vpop.f32.mrb[0].mxu0
      %9495 = vmatprep.mubr.f32.mxu0 0.0
      %9496 = vmatmul.mubr.f32.gmra.mrb[0].mxu0 %v9369
      %v9497 = vpop.f32.mrb[0].mxu0
      %v9498 = vadd.f32 %v9339, %v9497
      %v9499 = vpop.f32.mrb[0].mxu0
      %9500 = vmatprep.mubr.f32.mxu0 0.0
      %9501 = vmatmul.mubr.f32.gmra.mrb[0].mxu0 %v9372
      %v9502 = vpop.f32.mrb[0].mxu0
      %v9503 = vadd.f32 %v9339, %v9502
      %v9504 = vpop.f32.mrb[0].mxu0
      %9505 = vmatprep.mubr.f32.mxu0 0.0
      %9506 = vmatmul.mubr.f32.gmra.mrb[0].mxu0 %v9375
      %v9507 = vpop.f32.mrb[0].mxu0
      %v9508 = vadd.f32 %v9339, %v9507
      %v9509 = vpop.f32.mrb[0].mxu0
      %9510 = vmatprep.mubr.f32.mxu0 0.0
      %9511 = vmatmul.mubr.f32.gmra.mrb[0].mxu0 %v9378
      %v9512 = vpop.f32.mrb[0].mxu0
      %v9513 = vadd.f32 %v9339, %v9512
      %v9514 = vpop.f32.mrb[0].mxu0
      %9515 = vmatprep.mubr.f32.mxu0 0.0
      %9516 = vmatmul.mubr.f32.gmra.mrb[0].mxu0 %v9381
      %v9517 = vpop.f32.mrb[0].mxu0
      %v9518 = vadd.f32 %v9339, %v9517
      %v9519 = vpop.f32.mrb[0].mxu0
      %9520 = vmatprep.mubr.f32.mxu0 0.0
      %9521 = vmatmul.mubr.f32.gmra.mrb[0].mxu0 %v9384
      %v9522 = vpop.f32.mrb[0].mxu0
      %v9523 = vadd.f32 %v9339, %v9522
      %v9524 = vpop.f32.mrb[0].mxu0
      %9525 = vdwg.mxu0
      %v9526 = vmul.f32 %v9453, %v9453
      %v9527 = vmul.f32 %v9458, %v9458
      %v9528 = vmul.f32 %v9463, %v9463
      %v9529 = vmul.f32 %v9468, %v9468
      %v9530 = vmul.f32 %v9473, %v9473
      %v9531 = vmul.f32 %v9478, %v9478
      %v9532 = vmul.f32 %v9483, %v9483
      %v9533 = vmul.f32 %v9488, %v9488
      %v9534 = vmul.f32 %v9493, %v9493
      %v9535 = vmul.f32 %v9498, %v9498
      %v9536 = vmul.f32 %v9503, %v9503
      %v9537 = vmul.f32 %v9508, %v9508
      %v9538 = vmul.f32 %v9513, %v9513
      %v9539 = vmul.f32 %v9518, %v9518
      %v9540 = vmul.f32 %v9523, %v9523
      %v9541 = vmul.f32 %v9453, %v9526
      %v9542 = vmul.f32 %v9458, %v9527
      %v9543 = vmul.f32 %v9463, %v9528
      %v9544 = vmul.f32 %v9468, %v9529
      %v9545 = vmul.f32 %v9473, %v9530
      %v9546 = vmul.f32 %v9478, %v9531
      %v9547 = vmul.f32 %v9483, %v9532
      %v9548 = vmul.f32 %v9488, %v9533
      %v9549 = vmul.f32 %v9493, %v9534
      %v9550 = vmul.f32 %v9498, %v9535
      %v9551 = vmul.f32 %v9503, %v9536
      %v9552 = vmul.f32 %v9508, %v9537
      %v9553 = vmul.f32 %v9513, %v9538
      %v9554 = vmul.f32 %v9518, %v9539
      %v9555 = vmul.f32 %v9523, %v9540
      %v9556 = vmul.f32 %v9541, 0.044715
      %v9557 = vmul.f32 %v9542, 0.044715
      %v9558 = vmul.f32 %v9543, 0.044715
      %v9559 = vmul.f32 %v9544, 0.044715
      %v9560 = vmul.f32 %v9545, 0.044715
      %v9561 = vmul.f32 %v9546, 0.044715
      %v9562 = vmul.f32 %v9547, 0.044715
      %v9563 = vmul.f32 %v9548, 0.044715
      %v9564 = vmul.f32 %v9549, 0.044715
      %v9565 = vmul.f32 %v9550, 0.044715
      %v9566 = vmul.f32 %v9551, 0.044715
      %v9567 = vmul.f32 %v9552, 0.044715
      %v9568 = vmul.f32 %v9553, 0.044715
      %v9569 = vmul.f32 %v9554, 0.044715
      %v9570 = vmul.f32 %v9555, 0.044715
      %v9571 = vadd.f32 %v9453, %v9556
      %v9572 = vadd.f32 %v9458, %v9557
      %v9573 = vadd.f32 %v9463, %v9558
      %v9574 = vadd.f32 %v9468, %v9559
      %v9575 = vadd.f32 %v9473, %v9560
      %v9576 = vadd.f32 %v9478, %v9561
      %v9577 = vadd.f32 %v9483, %v9562
      %v9578 = vadd.f32 %v9488, %v9563
      %v9579 = vadd.f32 %v9493, %v9564
      %v9580 = vadd.f32 %v9498, %v9565
      %v9581 = vadd.f32 %v9503, %v9566
      %v9582 = vadd.f32 %v9508, %v9567
      %v9583 = vadd.f32 %v9513, %v9568
      %v9584 = vadd.f32 %v9518, %v9569
      %v9585 = vadd.f32 %v9523, %v9570
      %v9586 = vmul.f32 %v9571, 0.7978846
      %v9587 = vmul.f32 %v9572, 0.7978846
      %v9588 = vmul.f32 %v9573, 0.7978846
      %v9589 = vmul.f32 %v9574, 0.7978846
      %v9590 = vmul.f32 %v9575, 0.7978846
      %v9591 = vmul.f32 %v9576, 0.7978846
      %v9592 = vmul.f32 %v9577, 0.7978846
      %v9593 = vmul.f32 %v9578, 0.7978846
      %v9594 = vmul.f32 %v9579, 0.7978846
      %v9595 = vmul.f32 %v9580, 0.7978846
      %v9596 = vmul.f32 %v9581, 0.7978846
      %v9597 = vmul.f32 %v9582, 0.7978846
      %v9598 = vmul.f32 %v9583, 0.7978846
      %v9599 = vmul.f32 %v9584, 0.7978846
      %v9600 = vmul.f32 %v9585, 0.7978846
      %v9601 = vtanh.pop %v9586
      %v9602 = vtanh.pop %v9587
      %v9603 = vtanh.pop %v9588
      %v9604 = vtanh.pop %v9589
      %v9605 = vtanh.pop %v9590
      %v9606 = vtanh.pop %v9591
      %v9607 = vtanh.pop %v9592
      %v9608 = vtanh.pop %v9593
      %v9609 = vtanh.pop %v9594
      %v9610 = vtanh.pop %v9595
      %v9611 = vtanh.pop %v9596
      %v9612 = vtanh.pop %v9597
      %v9613 = vtanh.pop %v9598
      %v9614 = vtanh.pop %v9599
      %v9615 = vtanh.pop %v9600
      %v9616 = vadd.f32 %v9601, 1.0
      %v9617 = vadd.f32 %v9602, 1.0
      %v9618 = vadd.f32 %v9603, 1.0
      %v9619 = vadd.f32 %v9604, 1.0
      %v9620 = vadd.f32 %v9605, 1.0
      %v9621 = vadd.f32 %v9606, 1.0
      %v9622 = vadd.f32 %v9607, 1.0
      %v9623 = vadd.f32 %v9608, 1.0
      %v9624 = vadd.f32 %v9609, 1.0
      %v9625 = vadd.f32 %v9610, 1.0
      %v9626 = vadd.f32 %v9611, 1.0
      %v9627 = vadd.f32 %v9612, 1.0
      %v9628 = vadd.f32 %v9613, 1.0
      %v9629 = vadd.f32 %v9614, 1.0
      %v9630 = vadd.f32 %v9615, 1.0
      %v9631 = vmul.f32 %v9616, 0.5
      %v9632 = vmul.f32 %v9617, 0.5
      %v9633 = vmul.f32 %v9618, 0.5
      %v9634 = vmul.f32 %v9619, 0.5
      %v9635 = vmul.f32 %v9620, 0.5
      %v9636 = vmul.f32 %v9621, 0.5
      %v9637 = vmul.f32 %v9622, 0.5
      %v9638 = vmul.f32 %v9623, 0.5
      %v9639 = vmul.f32 %v9624, 0.5
      %v9640 = vmul.f32 %v9625, 0.5
      %v9641 = vmul.f32 %v9626, 0.5
      %v9642 = vmul.f32 %v9627, 0.5
      %v9643 = vmul.f32 %v9628, 0.5
      %v9644 = vmul.f32 %v9629, 0.5
      %v9645 = vmul.f32 %v9630, 0.5
      %v9646 = vmul.f32 %v9453, %v9631
      %v9647 = vmul.f32 %v9458, %v9632
      %v9648 = vmul.f32 %v9463, %v9633
      %v9649 = vmul.f32 %v9468, %v9634
      %v9650 = vmul.f32 %v9473, %v9635
      %v9651 = vmul.f32 %v9478, %v9636
      %v9652 = vmul.f32 %v9483, %v9637
      %v9653 = vmul.f32 %v9488, %v9638
      %v9654 = vmul.f32 %v9493, %v9639
      %v9655 = vmul.f32 %v9498, %v9640
      %v9656 = vmul.f32 %v9503, %v9641
      %v9657 = vmul.f32 %v9508, %v9642
      %v9658 = vmul.f32 %v9513, %v9643
      %v9659 = vmul.f32 %v9518, %v9644
      %v9660 = vmul.f32 %v9523, %v9645
      %s9661 = scalar_lea.vmem %s16, 64
      %v9662 = vld [vmem:[%s9661] sm:$0xff]
      %v9663 = vld [vmem:[%s9661 + $0x8] sm:$0xff]
      %v9664 = vld [vmem:[%s9661 + $0x10] sm:$0xff]
      %v9665 = vld [vmem:[%s9661 + $0x18] sm:$0xff]
      %v9666 = vld [vmem:[%s9661 + $0x20] sm:$0xff]
      %v9667 = vld [vmem:[%s9661 + $0x28] sm:$0xff]
      %v9668 = vld [vmem:[%s9661 + $0x30] sm:$0xff]
      %v9669 = vld [vmem:[%s9661 + $0x38] sm:$0xff]
      %v9671 = vsel %vm5247, %v9646, 0
      %v9674 = vsel %vm5247, %v9647, 0
      %v9677 = vsel %vm5247, %v9648, 0
      %v9680 = vsel %vm5247, %v9649, 0
      %v9683 = vsel %vm5247, %v9650, 0
      %v9686 = vsel %vm5247, %v9651, 0
      %v9689 = vsel %vm5247, %v9652, 0
      %v9692 = vsel %vm5247, %v9653, 0
      %v9695 = vsel %vm5247, %v9654, 0
      %v9698 = vsel %vm5247, %v9655, 0
      %v9701 = vsel %vm5247, %v9656, 0
      %v9704 = vsel %vm5247, %v9657, 0
      %v9707 = vsel %vm5247, %v9658, 0
      %v9710 = vsel %vm5247, %v9659, 0
      %v9713 = vsel %vm5247, %v9660, 0
      %9715 = vmatprep.subr.mxu0 0.0
      %9716 = vmatpush1.msra.mxu0 %v9662
      %9717 = vmatprep.subr.mxu0 0.0
      %9718 = vmatpush1.msra.mxu0 %v9663
      %9719 = vmatprep.subr.mxu0 0.0
      %9720 = vmatpush1.msra.mxu0 %v9664
      %9721 = vmatprep.subr.mxu0 0.0
      %9722 = vmatpush1.msra.mxu0 %v9665
      %9723 = vmatprep.subr.mxu0 0.0
      %9724 = vmatpush1.msra.mxu0 %v9666
      %9725 = vmatprep.subr.mxu0 0.0
      %9726 = vmatpush1.msra.mxu0 %v9667
      %9727 = vmatprep.subr.mxu0 0.0
      %9728 = vmatpush1.msra.mxu0 %v9668
      %9729 = vmatprep.subr.mxu0 0.0
      %9730 = vmatpush1.msra.mxu0 %v9669
      %9731 = vmatprep.subr.mxu0 0.0
      %9732 = vmatpush1.msra.mxu0 0.0
      %9733 = vmatprep.subr.mxu0 0.0
      %9734 = vmatpush1.msra.mxu0 0.0
      %9735 = vmatprep.subr.mxu0 0.0
      %9736 = vmatpush1.msra.mxu0 0.0
      %9737 = vmatprep.subr.mxu0 0.0
      %9738 = vmatpush1.msra.mxu0 0.0
      %9739 = vmatprep.subr.mxu0 0.0
      %9740 = vmatpush1.msra.mxu0 0.0
      %9741 = vmatprep.subr.mxu0 0.0
      %9742 = vmatpush1.msra.mxu0 0.0
      %9743 = vmatprep.subr.mxu0 0.0
      %9744 = vmatpush1.msra.mxu0 0.0
      %9745 = vmatprep.subr.mxu0 0.0
      %9746 = vmatpush1.msra.mxu0 0.0
      %9747 = vmatprep.subr.mxu0 0.0
      %9748 = vmatpush1.msra.mxu0 0.0
      %9749 = vmatprep.subr.mxu0 0.0
      %9750 = vmatpush1.msra.mxu0 0.0
      %9751 = vmatprep.subr.mxu0 0.0
      %9752 = vmatpush1.msra.mxu0 0.0
      %9753 = vmatprep.subr.mxu0 0.0
      %9754 = vmatpush1.msra.mxu0 0.0
      %9755 = vmatprep.subr.mxu0 0.0
      %9756 = vmatpush1.msra.mxu0 0.0
      %9757 = vmatprep.subr.mxu0 0.0
      %9758 = vmatpush1.msra.mxu0 0.0
      %9759 = vmatprep.subr.mxu0 0.0
      %9760 = vmatpush1.msra.mxu0 0.0
      %9761 = vmatprep.subr.mxu0 0.0
      %9762 = vmatpush1.msra.mxu0 0.0
      %9763 = vmatprep.subr.mxu0 0.0
      %9764 = vmatpush1.msra.mxu0 0.0
      %9765 = vmatprep.subr.mxu0 0.0
      %9766 = vmatpush1.msra.mxu0 0.0
      %9767 = vmatprep.subr.mxu0 0.0
      %9768 = vmatpush1.msra.mxu0 0.0
      %9769 = vmatprep.subr.mxu0 0.0
      %9770 = vmatpush1.msra.mxu0 0.0
      %9771 = vmatprep.subr.mxu0 0.0
      %9772 = vmatpush1.msra.mxu0 0.0
      %9773 = vmatprep.subr.mxu0 0.0
      %9774 = vmatpush1.msra.mxu0 0.0
      %9775 = vmatprep.subr.mxu0 0.0
      %9776 = vmatpush1.msra.mxu0 0.0
      %9777 = vmatprep.subr.mxu0 0.0
      %9778 = vmatpush1.msra.mxu0 0.0
      %9779 = vmatprep.mubr.f32.mxu0 0.0
      %9780 = vmatmul.mubr.f32.gmra.mrb[0].mxu0 %v9671
      %v9781 = vpop.f32.mrb[0].mxu0
      %v9782 = vadd.f32 0.0, %v9781
      %v9783 = vpop.f32.mrb[0].mxu0
      %9784 = vmatprep.mubr.f32.mxu0 0.0
      %9785 = vmatmul.mubr.f32.gmra.mrb[0].mxu0 %v9674
      %v9786 = vpop.f32.mrb[0].mxu0
      %v9787 = vadd.f32 0.0, %v9786
      %v9788 = vpop.f32.mrb[0].mxu0
      %9789 = vmatprep.mubr.f32.mxu0 0.0
      %9790 = vmatmul.mubr.f32.gmra.mrb[0].mxu0 %v9677
      %v9791 = vpop.f32.mrb[0].mxu0
      %v9792 = vadd.f32 0.0, %v9791
      %v9793 = vpop.f32.mrb[0].mxu0
      %9794 = vmatprep.mubr.f32.mxu0 0.0
      %9795 = vmatmul.mubr.f32.gmra.mrb[0].mxu0 %v9680
      %v9796 = vpop.f32.mrb[0].mxu0
      %v9797 = vadd.f32 0.0, %v9796
      %v9798 = vpop.f32.mrb[0].mxu0
      %9799 = vmatprep.mubr.f32.mxu0 0.0
      %9800 = vmatmul.mubr.f32.gmra.mrb[0].mxu0 %v9683
      %v9801 = vpop.f32.mrb[0].mxu0
      %v9802 = vadd.f32 0.0, %v9801
      %v9803 = vpop.f32.mrb[0].mxu0
      %9804 = vmatprep.mubr.f32.mxu0 0.0
      %9805 = vmatmul.mubr.f32.gmra.mrb[0].mxu0 %v9686
      %v9806 = vpop.f32.mrb[0].mxu0
      %v9807 = vadd.f32 0.0, %v9806
      %v9808 = vpop.f32.mrb[0].mxu0
      %9809 = vmatprep.mubr.f32.mxu0 0.0
      %9810 = vmatmul.mubr.f32.gmra.mrb[0].mxu0 %v9689
      %v9811 = vpop.f32.mrb[0].mxu0
      %v9812 = vadd.f32 0.0, %v9811
      %v9813 = vpop.f32.mrb[0].mxu0
      %9814 = vmatprep.mubr.f32.mxu0 0.0
      %9815 = vmatmul.mubr.f32.gmra.mrb[0].mxu0 %v9692
      %v9816 = vpop.f32.mrb[0].mxu0
      %v9817 = vadd.f32 0.0, %v9816
      %v9818 = vpop.f32.mrb[0].mxu0
      %9819 = vmatprep.mubr.f32.mxu0 0.0
      %9820 = vmatmul.mubr.f32.gmra.mrb[0].mxu0 %v9695
      %v9821 = vpop.f32.mrb[0].mxu0
      %v9822 = vadd.f32 0.0, %v9821
      %v9823 = vpop.f32.mrb[0].mxu0
      %9824 = vmatprep.mubr.f32.mxu0 0.0
      %9825 = vmatmul.mubr.f32.gmra.mrb[0].mxu0 %v9698
      %v9826 = vpop.f32.mrb[0].mxu0
      %v9827 = vadd.f32 0.0, %v9826
      %v9828 = vpop.f32.mrb[0].mxu0
      %9829 = vmatprep.mubr.f32.mxu0 0.0
      %9830 = vmatmul.mubr.f32.gmra.mrb[0].mxu0 %v9701
      %v9831 = vpop.f32.mrb[0].mxu0
      %v9832 = vadd.f32 0.0, %v9831
      %v9833 = vpop.f32.mrb[0].mxu0
      %9834 = vmatprep.mubr.f32.mxu0 0.0
      %9835 = vmatmul.mubr.f32.gmra.mrb[0].mxu0 %v9704
      %v9836 = vpop.f32.mrb[0].mxu0
      %v9837 = vadd.f32 0.0, %v9836
      %v9838 = vpop.f32.mrb[0].mxu0
      %9839 = vmatprep.mubr.f32.mxu0 0.0
      %9840 = vmatmul.mubr.f32.gmra.mrb[0].mxu0 %v9707
      %v9841 = vpop.f32.mrb[0].mxu0
      %v9842 = vadd.f32 0.0, %v9841
      %v9843 = vpop.f32.mrb[0].mxu0
      %9844 = vmatprep.mubr.f32.mxu0 0.0
      %9845 = vmatmul.mubr.f32.gmra.mrb[0].mxu0 %v9710
      %v9846 = vpop.f32.mrb[0].mxu0
      %v9847 = vadd.f32 0.0, %v9846
      %v9848 = vpop.f32.mrb[0].mxu0
      %9849 = vmatprep.mubr.f32.mxu0 0.0
      %9850 = vmatmul.mubr.f32.gmra.mrb[0].mxu0 %v9713
      %v9851 = vpop.f32.mrb[0].mxu0
      %v9852 = vadd.f32 0.0, %v9851
      %v9853 = vpop.f32.mrb[0].mxu0
      %9854 = vdwg.mxu0
      %v9855 = vadd.f32 %v9072, %v9782
      %v9856 = vadd.f32 %v9073, %v9787
      %v9857 = vadd.f32 %v9074, %v9792
      %v9858 = vadd.f32 %v9075, %v9797
      %v9859 = vadd.f32 %v9076, %v9802
      %v9860 = vadd.f32 %v9077, %v9807
      %v9861 = vadd.f32 %v9078, %v9812
      %v9862 = vadd.f32 %v9079, %v9817
      %v9863 = vadd.f32 %v9080, %v9822
      %v9864 = vadd.f32 %v9081, %v9827
      %v9865 = vadd.f32 %v9082, %v9832
      %v9866 = vadd.f32 %v9083, %v9837
      %v9867 = vadd.f32 %v9084, %v9842
      %v9868 = vadd.f32 %v9085, %v9847
      %v9869 = vadd.f32 %v9086, %v9852
      %s9870 = scalar_lea.vmem %s17, 1
      %v9871 = vld [vmem:[%s9870] sm:$0x1]
      %v9873 = vlaneseq
      %v9874 = vshrl.u32 %v9873, 7
      %v9875 = vsub.s32 0, %v9874
      %v9876 = vrot.slane %v9871, %v9875
      %v9878 = vadd.f32 %v9855, %v9876
      %v9879 = vadd.f32 %v9856, %v9876
      %v9880 = vadd.f32 %v9857, %v9876
      %v9881 = vadd.f32 %v9858, %v9876
      %v9882 = vadd.f32 %v9859, %v9876
      %v9883 = vadd.f32 %v9860, %v9876
      %v9884 = vadd.f32 %v9861, %v9876
      %v9885 = vadd.f32 %v9862, %v9876
      %v9886 = vadd.f32 %v9863, %v9876
      %v9887 = vadd.f32 %v9864, %v9876
      %v9888 = vadd.f32 %v9865, %v9876
      %v9889 = vadd.f32 %v9866, %v9876
      %v9890 = vadd.f32 %v9867, %v9876
      %v9891 = vadd.f32 %v9868, %v9876
      %v9892 = vadd.f32 %v9869, %v9876
      %9893 = vst.msk [vmem:[%s575] sm:$0xff] %vm800, %v9878
      %9894 = vst.msk [vmem:[%s575 + $0x8] sm:$0xff] %vm800, %v9879
      %9895 = vst.msk [vmem:[%s575 + $0x10] sm:$0xff] %vm800, %v9880
      %9896 = vst.msk [vmem:[%s575 + $0x18] sm:$0xff] %vm800, %v9881
      %9897 = vst.msk [vmem:[%s575 + $0x20] sm:$0xff] %vm800, %v9882
      %9898 = vst.msk [vmem:[%s575 + $0x28] sm:$0xff] %vm800, %v9883
      %9899 = vst.msk [vmem:[%s575 + $0x30] sm:$0xff] %vm800, %v9884
      %9900 = vst.msk [vmem:[%s575 + $0x38] sm:$0xff] %vm800, %v9885
      %9901 = vst.msk [vmem:[%s575 + $0x40] sm:$0xff] %vm800, %v9886
      %9902 = vst.msk [vmem:[%s575 + $0x48] sm:$0xff] %vm800, %v9887
      %9903 = vst.msk [vmem:[%s575 + $0x50] sm:$0xff] %vm800, %v9888
      %9904 = vst.msk [vmem:[%s575 + $0x58] sm:$0xff] %vm800, %v9889
      %9905 = vst.msk [vmem:[%s575 + $0x60] sm:$0xff] %vm800, %v9890
      %9906 = vst.msk [vmem:[%s575 + $0x68] sm:$0xff] %vm800, %v9891
      %9907 = vst.msk [vmem:[%s575 + $0x70] sm:$0xff] %vm800, %v9892
      %p9908 = scmp.lt.s32.totalorder %s29, 1
      %s9909 = scalar_select %p9908, %s29, 1
      %s9910 = smul.addr %s9909, 15
      %s9911 = smul.addr %s9910, 8
      %s9912 = scalar_lea.vmem %s18, %s9911
      // Predicated region
      $region93: #{vision_tower_s2_forward.1} parent=91 // pred_check
        %p9913 = pneg %p430
      $region94: #{vision_tower_s2_forward.1} parent=91 // pred_check_branch
        %9915 = sbr.rel (%p9913) target = $region96
      $region95: #{vision_tower_s2_forward.1} parent=91 // pred_region
        _
      $region96: #{vision_tower_s2_forward.1} parent=91 // pred_fallthru
        _
    $region92: #{vision_tower_s2_forward.1} parent=5 // pred_fallthru
      _
    %p9916 = scmp.le.s32.totalorder 2, %s24
    // Predicated region
    $region97: #{vision_tower_s2_forward.1} parent=5 // pred_check
      %p9917 = pneg %p9916
    $region98: #{vision_tower_s2_forward.1} parent=5 // pred_check_branch
      %9919 = sbr.rel (%p9917) target = $region100
    $region99: #{vision_tower_s2_forward.1} parent=5 // pred_region
      %s9920 = ssub.s32 %s24, 2
      // Predicated region
      $region101: #{vision_tower_s2_forward.1} parent=99 // pred_check
        %p9921 = pneg %p436
      $region102: #{vision_tower_s2_forward.1} parent=99 // pred_check_branch
        %9923 = sbr.rel (%p9921) target = $region104
      $region103: #{vision_tower_s2_forward.1} parent=99 // pred_region
        %p9924 = scmp.lt.s32.totalorder %s30, 1
        %s9925 = scalar_select %p9924, %s30, 1
        %s9926 = smul.addr %s9925, 15
        %s9927 = smul.addr %s9926, 8
        %s9928 = scalar_lea.vmem %s18, %s9927
      $region104: #{vision_tower_s2_forward.1} parent=99 // pred_fallthru
        _
    $region100: #{vision_tower_s2_forward.1} parent=5 // pred_fallthru
      _
  $region6: #{vision_tower_s2_forward.1} parent=0 // loop_footer
    %s28 = sadd.s32 1, %s24
  $region7: #{vision_tower_s2_forward.1} parent=0 // loop_footer_branch
    %23 = sbr.rel target = $region3
  $region8: #{vision_tower_s2_forward.1} parent=0 // loop_exit
    _

</llo_original>
